<compile_context>
chip_gen: v7x
topology: tpu7x:2x2x1
jax: 0.10.0
libtpu: 0.0.40
codegen_flags: <defaults>
</compile_context>

<pallas_src>
import functools
import math

import jax
import jax.numpy as jnp
from jax.experimental import pallas as pl
from jax.experimental.pallas import tpu as pltpu


# ----------------------------------------------------------------------------- kernel

def _pos_encoding_kernel(x_ref, b_ref, out_ref, *, include_coord):
    """x_ref: (T, in_dim)   b_ref: (in_dim, F)   out_ref: (T, 2F [+ in_dim])."""
    T, in_dim = x_ref.shape
    F = b_ref.shape[1]

    x = x_ref[...].astype(jnp.float32)                       # (T, in_dim)
    b = b_ref[...].astype(jnp.float32) * (2.0 * math.pi)     # fold 2*pi into the tiny B once

    if in_dim <= 8:
        # VPU broadcast-accumulate: sum_d x[:, d:d+1] * b[d:d+1, :]  -> avoids MXU underfill at K=in_dim.
        xp = x[:, 0:1] * b[0:1, :]
        for d in range(1, in_dim):
            xp = xp + x[:, d:d + 1] * b[d:d + 1, :]
    else:
        xp = jnp.dot(x, b, preferred_element_type=jnp.float32)

    parts = [jnp.sin(xp), jnp.cos(xp)]
    if include_coord:
        parts = [x] + parts                                   # torch: cat([x, cat([sin, cos])])
    out_ref[...] = jnp.concatenate(parts, axis=-1).astype(out_ref.dtype)


# ----------------------------------------------------------------------------- wrapper

def pos_encoding(x, B, include_coord=False, *, row_tile=256):
    """x: (..., in_dim), B: (in_dim, num_frequencies). Returns (..., 2F [+ in_dim])."""
    in_dim = x.shape[-1]
    F = B.shape[-1]
    assert B.shape[0] == in_dim, (B.shape, in_dim)
    out_dim = 2 * F + (in_dim if include_coord else 0)

    lead = x.shape[:-1]
    N = math.prod(lead) if lead else 1
    x2 = x.reshape(N, in_dim)

    # Align rows to the sublane granule (8) and pick a tile that evenly divides the row count.
    n_pad8 = pl.cdiv(N, 8) * 8
    tile = min(row_tile, n_pad8)
    Np = pl.cdiv(n_pad8, tile) * tile
    if Np != N:  # only pads when shapes require it (no-op at the demo shapes)
        x2 = jnp.pad(x2, ((0, Np - N), (0, 0)))

    kernel = functools.partial(_pos_encoding_kernel, include_coord=include_coord)
    out = pl.pallas_call(
        kernel,
        out_shape=jax.ShapeDtypeStruct((Np, out_dim), x.dtype),
        grid=(Np // tile,),
        in_specs=[
            pl.BlockSpec((tile, in_dim), lambda i: (i, 0)),
            pl.BlockSpec((in_dim, F), lambda i: (0, 0)),
        ],
        out_specs=pl.BlockSpec((tile, out_dim), lambda i: (i, 0)),
        compiler_params=pltpu.CompilerParams(dimension_semantics=("parallel",)),
    )(x2, B)

    if Np != N:
        out = out[:N]
    return out.reshape(*lead, out_dim)


# ----------------------------------------------------------------------------- main

if __name__ == "__main__":
    key = jax.random.PRNGKey(0)
    kx, kb = jax.random.split(key)

    batch, seq, in_dim = 2, 256, 2          # 512 coordinate rows total -> 2 parallel grid steps
    num_frequencies, k = 64, 1.0
    x = jax.random.normal(kx, (batch, seq, in_dim), jnp.float32)
    B = jax.random.normal(kb, (in_dim, num_frequencies), jnp.float32) * k   # randn(in_dim, F) * k buffer

    fwd = jax.jit(pos_encoding, static_argnames=("include_coord", "row_tile"))

    def reference(x, B, include_coord):
        xp = (2.0 * math.pi) * x @ B
        out = jnp.concatenate([jnp.sin(xp), jnp.cos(xp)], axis=-1)
        if include_coord:
            out = jnp.concatenate([x, out], axis=-1)
        return out

    for include_coord in (False, True):
        out = jax.block_until_ready(fwd(x, B, include_coord=include_coord))
        ref = reference(x, B, include_coord)
        assert out.shape == ref.shape, (out.shape, ref.shape)
        assert bool(jnp.all(jnp.isfinite(out)))
        max_err = float(jnp.max(jnp.abs(out - ref)))
        assert max_err < 2e-3, max_err

    print("KERNEL_OK")
</pallas_src>

<mosaic_0001>
module attributes {stable_mosaic.version = 11 : i64} {
  func.func @_pos_encoding_kernel(%arg0: i32, %arg1: memref<256x2xf32, #tpu.memory_space<vmem>>, %arg2: memref<2x64xf32, #tpu.memory_space<vmem>>, %arg3: memref<256x128xf32, #tpu.memory_space<vmem>>) attributes {dimension_semantics = [#tpu.dimension_semantics<parallel>], iteration_bounds = array<i64: 2>, scalar_prefetch = 0 : i64, scratch_operands = 0 : i64, tpu.core_type = #tpu.core_type<tc>, window_params = [{transform_indices = @transform_0, window_bounds = array<i64: 256, 2>}, {pipeline_mode = #tpu.pipeline_mode<synchronous>, transform_indices = @transform_1, window_bounds = array<i64: 2, 64>}, {transform_indices = @transform_2, window_bounds = array<i64: 256, 128>}]} {
    %c0 = arith.constant 0 : index
    %c0_0 = arith.constant 0 : index
    %0 = vector.load %arg1[%c0, %c0_0] : memref<256x2xf32, #tpu.memory_space<vmem>>, vector<256x2xf32>
    %c0_1 = arith.constant 0 : index
    %c0_2 = arith.constant 0 : index
    %1 = vector.load %arg2[%c0_1, %c0_2] : memref<2x64xf32, #tpu.memory_space<vmem>>, vector<2x64xf32>
    %cst = arith.constant 6.28318548 : f32
    %2 = vector.broadcast %cst : f32 to vector<2x64xf32>
    %3 = arith.mulf %1, %2 : vector<2x64xf32>
    %4 = vector.extract_strided_slice %0 {offsets = [0, 0], sizes = [256, 1], strides = [1, 1]} : vector<256x2xf32> to vector<256x1xf32>
    %5 = vector.extract_strided_slice %3 {offsets = [0, 0], sizes = [1, 64], strides = [1, 1]} : vector<2x64xf32> to vector<1x64xf32>
    %6 = vector.broadcast %4 : vector<256x1xf32> to vector<256x64xf32>
    %7 = vector.broadcast %5 : vector<1x64xf32> to vector<256x64xf32>
    %8 = arith.mulf %6, %7 : vector<256x64xf32>
    %9 = vector.extract_strided_slice %0 {offsets = [0, 1], sizes = [256, 1], strides = [1, 1]} : vector<256x2xf32> to vector<256x1xf32>
    %10 = vector.extract_strided_slice %3 {offsets = [1, 0], sizes = [1, 64], strides = [1, 1]} : vector<2x64xf32> to vector<1x64xf32>
    %11 = vector.broadcast %9 : vector<256x1xf32> to vector<256x64xf32>
    %12 = vector.broadcast %10 : vector<1x64xf32> to vector<256x64xf32>
    %13 = arith.mulf %11, %12 : vector<256x64xf32>
    %14 = arith.addf %8, %13 : vector<256x64xf32>
    %15 = math.sin %14 : vector<256x64xf32>
    %16 = math.cos %14 : vector<256x64xf32>
    %17 = tpu.concatenate %15, %16 in 1 : vector<256x64xf32>, vector<256x64xf32> -> vector<256x128xf32>
    %c0_3 = arith.constant 0 : index
    %c0_4 = arith.constant 0 : index
    %18 = vector.load %arg3[%c0_3, %c0_4] : memref<256x128xf32, #tpu.memory_space<vmem>>, vector<256x128xf32>
    tpu.vector_store %arg3[%c0_3, %c0_4], %17 {strides = array<i32>} : memref<256x128xf32, #tpu.memory_space<vmem>>, vector<256x128xf32>,
    return
  }
  func.func @transform_0(%arg0: i32) -> (i32, i32) {
    %c0_i32 = arith.constant 0 : i32
    %c0_i32_0 = arith.constant 0 : i32
    return %arg0, %c0_i32 : i32, i32
  }
  func.func @transform_1(%arg0: i32) -> (i32, i32) {
    %c0_i32 = arith.constant 0 : i32
    %c0_i32_0 = arith.constant 0 : i32
    %c0_i32_1 = arith.constant 0 : i32
    return %c0_i32, %c0_i32_0 : i32, i32
  }
  func.func @transform_2(%arg0: i32) -> (i32, i32) {
    %c0_i32 = arith.constant 0 : i32
    %c0_i32_0 = arith.constant 0 : i32
    return %arg0, %c0_i32 : i32, i32
  }
}

</mosaic_0001>

<llo_original>
// kernel: pos_encoding.1
$region0: #{pos_encoding.1}
  #allocation0 [shape = 'u32[]', space=smem, size = 0x4, offset = 0x4, fixed_abs, tag = 'smem constant byte address 0x4 - core index']
  #allocation1 [shape = 'u32[144,128]{1,0:T(1,128)}', space=vmem, size = 0x12000, scoped, tag = 'internal scratch']
  %s0 = inlined_call_operand.vmem [shape: f32[512,2], index: 0, kind: input, shape index: {}]
  %s1 = inlined_call_operand.vmem [shape: f32[2,64], index: 1, kind: input, shape index: {}]
  %s2 = inlined_call_operand.hbm [shape: f32[512,128], index: 2, kind: output, shape index: {}]
  %s3 = sld [smem:[#allocation0]]
  $region41: #{pos_encoding.1} parent=0
    _
  %s5 = ssub.s32 1, %s3
  %s6 = scalar_select 0, %s5, %s3
  $region1: #{pos_encoding.1} parent=0
    #allocation2 [shape = 'u8[262144]{0}', space=vmem, size = 0x40000, scoped, tag = 'output window, operand 0']
    #allocation3 [shape = 's32[2]{0}', space=sflag, size = 0x8, scoped, tag = 'scoped memory for pos_encoding.1']
    %7 = vsyncpa [#allocation3], 0
    %s8 = scalar_lea.sflag [#allocation3], 1
    %9 = vsyncpa %s8, 0
    loop: start=0, step=1, limit=4
    $region2: #{pos_encoding.1} parent=1 // loop_pre_header
      _
    $region3: #{pos_encoding.1} parent=1 // loop_header
      %s11 = sphi 0, %s15
      %p12 = scmp.ge.s32.totalorder %s11, 4
      %s21 = sphi 0, %s23
      %s24 = sphi 0, %s21
      %s25 = sphi 0, %s24
      %s41 = sphi 0, %s25
      %s45 = sphi 0, %s45
      %s47 = sphi 0, %s45
      %s48 = sphi 0, %s47
      %s62 = sphi 0, %s48
      %s68 = sphi 0, %s70
      %s71 = sphi 0, %s68
      %s72 = sphi 0, %s71
      %s88 = sphi 0, %s72
    $region4: #{pos_encoding.1} parent=1 // loop_header_branch
      %14 = sbr.rel (%p12) target = $region8
    $region5: #{pos_encoding.1} parent=1 // loop_body
      %s16 = ssub.s32 %s11, 1
      %s17 = ssub.s32 %s11, 2
      %s18 = sadd.s32 %s11, 1
      %s19 = ssub.s32 %s11, %s18
      %p20 = scmp.eq.s32.totalorder %s19, 0
      %s22 = sadd.s32 %s21, 1
      %s23 = scalar_select %p20, %s21, %s22
      %p26 = pneg %p20
      %p27 = scmp.eq.s32.totalorder %s11, 1
      %p28 = por %p26, %p27
      %p29 = scmp.ne.s32.totalorder %s21, %s24
      %p30 = scmp.eq.s32.totalorder %s11, 0
      %p31 = por %p29, %p30
      %p32 = scmp.ne.s32.totalorder %s21, %s24
      %p33 = scmp.eq.s32.totalorder %s16, 1
      %p34 = por %p32, %p33
      %p35 = scmp.ne.s32.totalorder %s24, %s25
      %p36 = scmp.eq.s32.totalorder %s16, 0
      %p37 = por %p35, %p36
      %p38 = scmp.ne.s32.totalorder %s24, %s25
      %p39 = scmp.eq.s32.totalorder %s17, 1
      %p40 = por %p38, %p39
      %p42 = scmp.ne.s32.totalorder %s25, %s41
      %p43 = scmp.eq.s32.totalorder %s17, 0
      %p44 = por %p42, %p43
      %s46 = sadd.s32 %s45, 1
      %p49 = scmp.eq.s32.totalorder %s11, 1
      %p50 = scmp.ne.s32.totalorder %s45, %s47
      %p51 = scmp.eq.s32.totalorder %s11, 0
      %p52 = por %p50, %p51
      %p53 = scmp.ne.s32.totalorder %s45, %s47
      %p54 = scmp.eq.s32.totalorder %s16, 1
      %p55 = por %p53, %p54
      %p56 = scmp.ne.s32.totalorder %s47, %s48
      %p57 = scmp.eq.s32.totalorder %s16, 0
      %p58 = por %p56, %p57
      %p59 = scmp.ne.s32.totalorder %s47, %s48
      %p60 = scmp.eq.s32.totalorder %s17, 1
      %p61 = por %p59, %p60
      %p63 = scmp.ne.s32.totalorder %s48, %s62
      %p64 = scmp.eq.s32.totalorder %s17, 0
      %p65 = por %p63, %p64
      %s66 = ssub.s32 %s11, %s18
      %p67 = scmp.eq.s32.totalorder %s66, 0
      %s69 = sadd.s32 %s68, 1
      %s70 = scalar_select %p67, %s68, %s69
      %p73 = pneg %p67
      %p74 = scmp.eq.s32.totalorder %s11, 1
      %p75 = por %p73, %p74
      %p76 = scmp.ne.s32.totalorder %s68, %s71
      %p77 = scmp.eq.s32.totalorder %s11, 0
      %p78 = por %p76, %p77
      %p79 = scmp.ne.s32.totalorder %s68, %s71
      %p80 = scmp.eq.s32.totalorder %s16, 1
      %p81 = por %p79, %p80
      %p82 = scmp.ne.s32.totalorder %s71, %s72
      %p83 = scmp.eq.s32.totalorder %s16, 0
      %p84 = por %p82, %p83
      %p85 = scmp.ne.s32.totalorder %s71, %s72
      %p86 = scmp.eq.s32.totalorder %s17, 1
      %p87 = por %p85, %p86
      %p89 = scmp.ne.s32.totalorder %s72, %s88
      %p90 = scmp.eq.s32.totalorder %s17, 0
      %p91 = por %p89, %p90
      %p92 = scmp.le.s32.totalorder 1, %s11
      %p93 = scmp.lt.s32.totalorder %s11, 3
      %p94 = pnand %p92, %p93
      %p95 = pneg %p94
      // Predicated region
      $region9: #{pos_encoding.1} parent=5 // pred_check
        _
      $region10: #{pos_encoding.1} parent=5 // pred_check_branch
        %97 = sbr.rel (%p94) target = $region12
      $region11: #{pos_encoding.1} parent=5 // pred_region
        %s98 = ssub.s32 %s11, 1
        // Predicated region
        $region13: #{pos_encoding.1} parent=11 // pred_check
          %p99 = pneg %p58
        $region14: #{pos_encoding.1} parent=11 // pred_check_branch
          %101 = sbr.rel (%p99) target = $region16
        $region15: #{pos_encoding.1} parent=11 // pred_region
          _
        $region16: #{pos_encoding.1} parent=11 // pred_fallthru
          _
      $region12: #{pos_encoding.1} parent=5 // pred_fallthru
        _
      %p102 = scmp.lt.s32.totalorder %s11, 2
      // Predicated region
      $region17: #{pos_encoding.1} parent=5 // pred_check
        %p103 = pneg %p102
      $region18: #{pos_encoding.1} parent=5 // pred_check_branch
        %105 = sbr.rel (%p103) target = $region20
      $region19: #{pos_encoding.1} parent=5 // pred_region
        // Predicated region
        $region21: #{pos_encoding.1} parent=19 // pred_check
          %p106 = pneg %p31
        $region22: #{pos_encoding.1} parent=19 // pred_check_branch
          %108 = sbr.rel (%p106) target = $region24
        $region23: #{pos_encoding.1} parent=19 // pred_region
          %s109 = smul.u32 32, %s11
          %p110 = scmp.lt.s32.totalorder %s109, 63
          %s111 = scalar_select %p110, %s109, 63
          %s112 = smul.addr %s111, 8
          %s113 = scalar_lea.vmem %s0, %s112
          %s114 = smul.u32 32, %s11
        $region24: #{pos_encoding.1} parent=19 // pred_fallthru
          _
      $region20: #{pos_encoding.1} parent=5 // pred_fallthru
        _
      %p115 = scmp.le.s32.totalorder 1, %s11
      %p116 = scmp.lt.s32.totalorder %s11, 3
      %p117 = pnand %p115, %p116
      %p118 = pneg %p117
      // Predicated region
      $region25: #{pos_encoding.1} parent=5 // pred_check
        _
      $region26: #{pos_encoding.1} parent=5 // pred_check_branch
        %120 = sbr.rel (%p117) target = $region28
      $region27: #{pos_encoding.1} parent=5 // pred_region
        %s121 = ssub.s32 %s11, 1
        %s122 = smul.u32 32, %s16
        %p123 = scmp.lt.s32.totalorder %s122, 63
        %s124 = scalar_select %p123, %s122, 63
        %s125 = smul.addr %s124, 8
        %s126 = scalar_lea.vmem %s0, %s125
        %p127 = pneg %p37
        %p128 = pneg %p34
        %p129 = pneg %p58
        %p130 = pneg %p55
        %p131 = pneg %p84
        %p132 = pneg %p81
        %s133 = sand.u32 %s71, 1
        %s134 = scalar_lea.sflag [#allocation3], %s133
        %s135 = sand.u32 %s71, 1
        %s136 = smul.addr %s135, 256
        %s137 = scalar_lea.vmem [#allocation2], %s136
        %s138 = smul.u32 32, %s16
        %p139 = scmp.lt.s32.totalorder %s138, 63
        %s140 = scalar_select %p139, %s138, 63
        %s141 = smul.addr %s140, 8
        %s142 = scalar_lea.vmem %s0, %s141
        %s143 = smul.u32 32, %s16
        %s144 = smul.u32 32, %s16
        %v145 = vld [vmem:[%s142] sm:$0xff]
        %v146 = vld [vmem:[%s142 + $0x8] sm:$0xff]
        %v147 = vld [vmem:[%s142 + $0x10] sm:$0xff]
        %v148 = vld [vmem:[%s142 + $0x18] sm:$0xff]
        %v149 = vld [vmem:[%s142 + $0x20] sm:$0xff]
        %v150 = vld [vmem:[%s142 + $0x28] sm:$0xff]
        %v151 = vld [vmem:[%s142 + $0x30] sm:$0xff]
        %v152 = vld [vmem:[%s142 + $0x38] sm:$0xff]
        %v153 = vld [vmem:[%s142 + $0x40] sm:$0xff]
        %v154 = vld [vmem:[%s142 + $0x48] sm:$0xff]
        %v155 = vld [vmem:[%s142 + $0x50] sm:$0xff]
        %v156 = vld [vmem:[%s142 + $0x58] sm:$0xff]
        %v157 = vld [vmem:[%s142 + $0x60] sm:$0xff]
        %v158 = vld [vmem:[%s142 + $0x68] sm:$0xff]
        %v159 = vld [vmem:[%s142 + $0x70] sm:$0xff]
        %v160 = vld [vmem:[%s142 + $0x78] sm:$0xff]
        %v161 = vld [vmem:[%s142 + $0x80] sm:$0xff]
        %v162 = vld [vmem:[%s142 + $0x88] sm:$0xff]
        %v163 = vld [vmem:[%s142 + $0x90] sm:$0xff]
        %v164 = vld [vmem:[%s142 + $0x98] sm:$0xff]
        %v165 = vld [vmem:[%s142 + $0xa0] sm:$0xff]
        %v166 = vld [vmem:[%s142 + $0xa8] sm:$0xff]
        %v167 = vld [vmem:[%s142 + $0xb0] sm:$0xff]
        %v168 = vld [vmem:[%s142 + $0xb8] sm:$0xff]
        %v169 = vld [vmem:[%s142 + $0xc0] sm:$0xff]
        %v170 = vld [vmem:[%s142 + $0xc8] sm:$0xff]
        %v171 = vld [vmem:[%s142 + $0xd0] sm:$0xff]
        %v172 = vld [vmem:[%s142 + $0xd8] sm:$0xff]
        %v173 = vld [vmem:[%s142 + $0xe0] sm:$0xff]
        %v174 = vld [vmem:[%s142 + $0xe8] sm:$0xff]
        %v175 = vld [vmem:[%s142 + $0xf0] sm:$0xff]
        %v176 = vld [vmem:[%s142 + $0xf8] sm:$0xff]
        %v177 = vld [vmem:[%s1] sm:$0x3]
        %v178 = vmul.f32 %v177, 6.2831855
        %180 = vset.pattern.permute.xlu0 0
        %181 = vperm.xlu0 %180, %v145
        %v182 = vpop.permute.xlu0 %181
        %185 = vset.pattern.permute.xlu0 0
        %186 = vperm.xlu0 %185, %v146
        %v187 = vpop.permute.xlu0 %186
        %190 = vset.pattern.permute.xlu0 0
        %191 = vperm.xlu0 %190, %v147
        %v192 = vpop.permute.xlu0 %191
        %195 = vset.pattern.permute.xlu0 0
        %196 = vperm.xlu0 %195, %v148
        %v197 = vpop.permute.xlu0 %196
        %200 = vset.pattern.permute.xlu0 0
        %201 = vperm.xlu0 %200, %v149
        %v202 = vpop.permute.xlu0 %201
        %205 = vset.pattern.permute.xlu0 0
        %206 = vperm.xlu0 %205, %v150
        %v207 = vpop.permute.xlu0 %206
        %210 = vset.pattern.permute.xlu0 0
        %211 = vperm.xlu0 %210, %v151
        %v212 = vpop.permute.xlu0 %211
        %215 = vset.pattern.permute.xlu0 0
        %216 = vperm.xlu0 %215, %v152
        %v217 = vpop.permute.xlu0 %216
        %220 = vset.pattern.permute.xlu0 0
        %221 = vperm.xlu0 %220, %v153
        %v222 = vpop.permute.xlu0 %221
        %225 = vset.pattern.permute.xlu0 0
        %226 = vperm.xlu0 %225, %v154
        %v227 = vpop.permute.xlu0 %226
        %230 = vset.pattern.permute.xlu0 0
        %231 = vperm.xlu0 %230, %v155
        %v232 = vpop.permute.xlu0 %231
        %235 = vset.pattern.permute.xlu0 0
        %236 = vperm.xlu0 %235, %v156
        %v237 = vpop.permute.xlu0 %236
        %240 = vset.pattern.permute.xlu0 0
        %241 = vperm.xlu0 %240, %v157
        %v242 = vpop.permute.xlu0 %241
        %245 = vset.pattern.permute.xlu0 0
        %246 = vperm.xlu0 %245, %v158
        %v247 = vpop.permute.xlu0 %246
        %250 = vset.pattern.permute.xlu0 0
        %251 = vperm.xlu0 %250, %v159
        %v252 = vpop.permute.xlu0 %251
        %255 = vset.pattern.permute.xlu0 0
        %256 = vperm.xlu0 %255, %v160
        %v257 = vpop.permute.xlu0 %256
        %260 = vset.pattern.permute.xlu0 0
        %261 = vperm.xlu0 %260, %v161
        %v262 = vpop.permute.xlu0 %261
        %265 = vset.pattern.permute.xlu0 0
        %266 = vperm.xlu0 %265, %v162
        %v267 = vpop.permute.xlu0 %266
        %270 = vset.pattern.permute.xlu0 0
        %271 = vperm.xlu0 %270, %v163
        %v272 = vpop.permute.xlu0 %271
        %275 = vset.pattern.permute.xlu0 0
        %276 = vperm.xlu0 %275, %v164
        %v277 = vpop.permute.xlu0 %276
        %280 = vset.pattern.permute.xlu0 0
        %281 = vperm.xlu0 %280, %v165
        %v282 = vpop.permute.xlu0 %281
        %285 = vset.pattern.permute.xlu0 0
        %286 = vperm.xlu0 %285, %v166
        %v287 = vpop.permute.xlu0 %286
        %290 = vset.pattern.permute.xlu0 0
        %291 = vperm.xlu0 %290, %v167
        %v292 = vpop.permute.xlu0 %291
        %295 = vset.pattern.permute.xlu0 0
        %296 = vperm.xlu0 %295, %v168
        %v297 = vpop.permute.xlu0 %296
        %300 = vset.pattern.permute.xlu0 0
        %301 = vperm.xlu0 %300, %v169
        %v302 = vpop.permute.xlu0 %301
        %305 = vset.pattern.permute.xlu0 0
        %306 = vperm.xlu0 %305, %v170
        %v307 = vpop.permute.xlu0 %306
        %310 = vset.pattern.permute.xlu0 0
        %311 = vperm.xlu0 %310, %v171
        %v312 = vpop.permute.xlu0 %311
        %315 = vset.pattern.permute.xlu0 0
        %316 = vperm.xlu0 %315, %v172
        %v317 = vpop.permute.xlu0 %316
        %320 = vset.pattern.permute.xlu0 0
        %321 = vperm.xlu0 %320, %v173
        %v322 = vpop.permute.xlu0 %321
        %325 = vset.pattern.permute.xlu0 0
        %326 = vperm.xlu0 %325, %v174
        %v327 = vpop.permute.xlu0 %326
        %330 = vset.pattern.permute.xlu0 0
        %331 = vperm.xlu0 %330, %v175
        %v332 = vpop.permute.xlu0 %331
        %335 = vset.pattern.permute.xlu0 0
        %336 = vperm.xlu0 %335, %v176
        %v337 = vpop.permute.xlu0 %336
        %v339 = vlaneseq
        %v340 = vshrl.u32 %v339, 7
        %v341 = vsub.s32 0, %v340
        %v342 = vrot.slane %v178, %v341
        %v343 = vmul.f32 %v182, %v342
        %v344 = vmul.f32 %v187, %v342
        %v345 = vmul.f32 %v192, %v342
        %v346 = vmul.f32 %v197, %v342
        %v347 = vmul.f32 %v202, %v342
        %v348 = vmul.f32 %v207, %v342
        %v349 = vmul.f32 %v212, %v342
        %v350 = vmul.f32 %v217, %v342
        %v351 = vmul.f32 %v222, %v342
        %v352 = vmul.f32 %v227, %v342
        %v353 = vmul.f32 %v232, %v342
        %v354 = vmul.f32 %v237, %v342
        %v355 = vmul.f32 %v242, %v342
        %v356 = vmul.f32 %v247, %v342
        %v357 = vmul.f32 %v252, %v342
        %v358 = vmul.f32 %v257, %v342
        %v359 = vmul.f32 %v262, %v342
        %v360 = vmul.f32 %v267, %v342
        %v361 = vmul.f32 %v272, %v342
        %v362 = vmul.f32 %v277, %v342
        %v363 = vmul.f32 %v282, %v342
        %v364 = vmul.f32 %v287, %v342
        %v365 = vmul.f32 %v292, %v342
        %v366 = vmul.f32 %v297, %v342
        %v367 = vmul.f32 %v302, %v342
        %v368 = vmul.f32 %v307, %v342
        %v369 = vmul.f32 %v312, %v342
        %v370 = vmul.f32 %v317, %v342
        %v371 = vmul.f32 %v322, %v342
        %v372 = vmul.f32 %v327, %v342
        %v373 = vmul.f32 %v332, %v342
        %v374 = vmul.f32 %v337, %v342
        %375 = vset.pattern.permute.xlu0 1
        %376 = vperm.xlu0 %375, %v145
        %v377 = vpop.permute.xlu0 %376
        %379 = vset.pattern.permute.xlu0 1
        %380 = vperm.xlu0 %379, %v146
        %v381 = vpop.permute.xlu0 %380
        %383 = vset.pattern.permute.xlu0 1
        %384 = vperm.xlu0 %383, %v147
        %v385 = vpop.permute.xlu0 %384
        %387 = vset.pattern.permute.xlu0 1
        %388 = vperm.xlu0 %387, %v148
        %v389 = vpop.permute.xlu0 %388
        %391 = vset.pattern.permute.xlu0 1
        %392 = vperm.xlu0 %391, %v149
        %v393 = vpop.permute.xlu0 %392
        %395 = vset.pattern.permute.xlu0 1
        %396 = vperm.xlu0 %395, %v150
        %v397 = vpop.permute.xlu0 %396
        %399 = vset.pattern.permute.xlu0 1
        %400 = vperm.xlu0 %399, %v151
        %v401 = vpop.permute.xlu0 %400
        %403 = vset.pattern.permute.xlu0 1
        %404 = vperm.xlu0 %403, %v152
        %v405 = vpop.permute.xlu0 %404
        %407 = vset.pattern.permute.xlu0 1
        %408 = vperm.xlu0 %407, %v153
        %v409 = vpop.permute.xlu0 %408
        %411 = vset.pattern.permute.xlu0 1
        %412 = vperm.xlu0 %411, %v154
        %v413 = vpop.permute.xlu0 %412
        %415 = vset.pattern.permute.xlu0 1
        %416 = vperm.xlu0 %415, %v155
        %v417 = vpop.permute.xlu0 %416
        %419 = vset.pattern.permute.xlu0 1
        %420 = vperm.xlu0 %419, %v156
        %v421 = vpop.permute.xlu0 %420
        %423 = vset.pattern.permute.xlu0 1
        %424 = vperm.xlu0 %423, %v157
        %v425 = vpop.permute.xlu0 %424
        %427 = vset.pattern.permute.xlu0 1
        %428 = vperm.xlu0 %427, %v158
        %v429 = vpop.permute.xlu0 %428
        %431 = vset.pattern.permute.xlu0 1
        %432 = vperm.xlu0 %431, %v159
        %v433 = vpop.permute.xlu0 %432
        %435 = vset.pattern.permute.xlu0 1
        %436 = vperm.xlu0 %435, %v160
        %v437 = vpop.permute.xlu0 %436
        %439 = vset.pattern.permute.xlu0 1
        %440 = vperm.xlu0 %439, %v161
        %v441 = vpop.permute.xlu0 %440
        %443 = vset.pattern.permute.xlu0 1
        %444 = vperm.xlu0 %443, %v162
        %v445 = vpop.permute.xlu0 %444
        %447 = vset.pattern.permute.xlu0 1
        %448 = vperm.xlu0 %447, %v163
        %v449 = vpop.permute.xlu0 %448
        %451 = vset.pattern.permute.xlu0 1
        %452 = vperm.xlu0 %451, %v164
        %v453 = vpop.permute.xlu0 %452
        %455 = vset.pattern.permute.xlu0 1
        %456 = vperm.xlu0 %455, %v165
        %v457 = vpop.permute.xlu0 %456
        %459 = vset.pattern.permute.xlu0 1
        %460 = vperm.xlu0 %459, %v166
        %v461 = vpop.permute.xlu0 %460
        %463 = vset.pattern.permute.xlu0 1
        %464 = vperm.xlu0 %463, %v167
        %v465 = vpop.permute.xlu0 %464
        %467 = vset.pattern.permute.xlu0 1
        %468 = vperm.xlu0 %467, %v168
        %v469 = vpop.permute.xlu0 %468
        %471 = vset.pattern.permute.xlu0 1
        %472 = vperm.xlu0 %471, %v169
        %v473 = vpop.permute.xlu0 %472
        %475 = vset.pattern.permute.xlu0 1
        %476 = vperm.xlu0 %475, %v170
        %v477 = vpop.permute.xlu0 %476
        %479 = vset.pattern.permute.xlu0 1
        %480 = vperm.xlu0 %479, %v171
        %v481 = vpop.permute.xlu0 %480
        %483 = vset.pattern.permute.xlu0 1
        %484 = vperm.xlu0 %483, %v172
        %v485 = vpop.permute.xlu0 %484
        %487 = vset.pattern.permute.xlu0 1
        %488 = vperm.xlu0 %487, %v173
        %v489 = vpop.permute.xlu0 %488
        %491 = vset.pattern.permute.xlu0 1
        %492 = vperm.xlu0 %491, %v174
        %v493 = vpop.permute.xlu0 %492
        %495 = vset.pattern.permute.xlu0 1
        %496 = vperm.xlu0 %495, %v175
        %v497 = vpop.permute.xlu0 %496
        %499 = vset.pattern.permute.xlu0 1
        %500 = vperm.xlu0 %499, %v176
        %v501 = vpop.permute.xlu0 %500
        %v503 = vlaneseq
        %v504 = vshrl.u32 %v503, 7
        %v505 = vsub.s32 1, %v504
        %v506 = vrot.slane %v178, %v505
        %v507 = vmul.f32 %v377, %v506
        %v508 = vmul.f32 %v381, %v506
        %v509 = vmul.f32 %v385, %v506
        %v510 = vmul.f32 %v389, %v506
        %v511 = vmul.f32 %v393, %v506
        %v512 = vmul.f32 %v397, %v506
        %v513 = vmul.f32 %v401, %v506
        %v514 = vmul.f32 %v405, %v506
        %v515 = vmul.f32 %v409, %v506
        %v516 = vmul.f32 %v413, %v506
        %v517 = vmul.f32 %v417, %v506
        %v518 = vmul.f32 %v421, %v506
        %v519 = vmul.f32 %v425, %v506
        %v520 = vmul.f32 %v429, %v506
        %v521 = vmul.f32 %v433, %v506
        %v522 = vmul.f32 %v437, %v506
        %v523 = vmul.f32 %v441, %v506
        %v524 = vmul.f32 %v445, %v506
        %v525 = vmul.f32 %v449, %v506
        %v526 = vmul.f32 %v453, %v506
        %v527 = vmul.f32 %v457, %v506
        %v528 = vmul.f32 %v461, %v506
        %v529 = vmul.f32 %v465, %v506
        %v530 = vmul.f32 %v469, %v506
        %v531 = vmul.f32 %v473, %v506
        %v532 = vmul.f32 %v477, %v506
        %v533 = vmul.f32 %v481, %v506
        %v534 = vmul.f32 %v485, %v506
        %v535 = vmul.f32 %v489, %v506
        %v536 = vmul.f32 %v493, %v506
        %v537 = vmul.f32 %v497, %v506
        %v538 = vmul.f32 %v501, %v506
        %v539 = vadd.f32 %v343, %v507
        %v540 = vadd.f32 %v344, %v508
        %v541 = vadd.f32 %v345, %v509
        %v542 = vadd.f32 %v346, %v510
        %v543 = vadd.f32 %v347, %v511
        %v544 = vadd.f32 %v348, %v512
        %v545 = vadd.f32 %v349, %v513
        %v546 = vadd.f32 %v350, %v514
        %v547 = vadd.f32 %v351, %v515
        %v548 = vadd.f32 %v352, %v516
        %v549 = vadd.f32 %v353, %v517
        %v550 = vadd.f32 %v354, %v518
        %v551 = vadd.f32 %v355, %v519
        %v552 = vadd.f32 %v356, %v520
        %v553 = vadd.f32 %v357, %v521
        %v554 = vadd.f32 %v358, %v522
        %v555 = vadd.f32 %v359, %v523
        %v556 = vadd.f32 %v360, %v524
        %v557 = vadd.f32 %v361, %v525
        %v558 = vadd.f32 %v362, %v526
        %v559 = vadd.f32 %v363, %v527
        %v560 = vadd.f32 %v364, %v528
        %v561 = vadd.f32 %v365, %v529
        %v562 = vadd.f32 %v366, %v530
        %v563 = vadd.f32 %v367, %v531
        %v564 = vadd.f32 %v368, %v532
        %v565 = vadd.f32 %v369, %v533
        %v566 = vadd.f32 %v370, %v534
        %v567 = vadd.f32 %v371, %v535
        %v568 = vadd.f32 %v372, %v536
        %v569 = vadd.f32 %v373, %v537
        %v570 = vadd.f32 %v374, %v538
        %v571 = vand.u32 2147483647, %v539
        %vm572 = vcmp.le.f32.partialorder %v571, 0.7853982
        %vm573 = vcmp.lt.s32.totalorder %v539, 0
        %v574 = vand.u32 %v539, 2139095040
        %v575 = vshrl.u32 %v574, 23
        %v576 = vsub.s32 %v575, 127
        %v577 = vand.u32 2147483647, %v539
        %v578 = vand.u32 %v577, 8388607
        %v579 = vor.u32 %v578, 8388608
        %v580 = vsub.s32 0, %v579
        %v581 = vadd.s32 %v576, 1
        %vm582 = vcmp.gt.s32.totalorder %v581, 0
        %v583 = vsel %vm582, %v581, 0
        %v584 = vshrl.u32 %v583, 5
        %v585 = vand.u32 %v583, 31
        %v586 = vsub.s32 32, %v585
        %v587 = vshrl.u32 683565275, %v586
        %v588 = vshll.u32 683565275, %v585
        %v589 = vshrl.u32 2475754826, %v586
        %v590 = vor.u32 %v588, %v589
        %v591 = vshll.u32 2475754826, %v585
        %v592 = vshrl.u32 2131351028, %v586
        %v593 = vor.u32 %v591, %v592
        %v594 = vshll.u32 2131351028, %v585
        %v595 = vshrl.u32 2102212464, %v586
        %v596 = vor.u32 %v594, %v595
        %v597 = vshll.u32 2102212464, %v585
        %v598 = vshrl.u32 920167782, %v586
        %v599 = vor.u32 %v597, %v598
        %v600 = vshll.u32 920167782, %v585
        %v601 = vshrl.u32 1326507024, %v586
        %v602 = vor.u32 %v600, %v601
        %vm603 = vcmp.lt.s32.totalorder %v584, 1
        %vm604 = vcmp.lt.s32.totalorder %v584, 2
        %vm605 = vcmp.lt.s32.totalorder %v584, 3
        %vm606 = vcmp.lt.s32.totalorder %v584, 4
        %v607 = vsel %vm603, %v587, %v590
        %v608 = vsel %vm606, %v596, 2102212464
        %v609 = vsel %vm605, %v593, %v608
        %v610 = vsel %vm604, %v607, %v609
        %v611 = vsel %vm603, %v590, %v593
        %v612 = vsel %vm606, %v599, 920167782
        %v613 = vsel %vm605, %v596, %v612
        %v614 = vsel %vm604, %v611, %v613
        %v615 = vsel %vm603, %v593, %v596
        %v616 = vsel %vm606, %v602, 1326507024
        %v617 = vsel %vm605, %v599, %v616
        %v618 = vsel %vm604, %v615, %v617
        %v619 = vshll.u32 %v579, 8
        %v620 = vmul.u32.u64.compose %v619, %v618
        %v621 = vextract.low.u32 %v620
        %v622 = vextract.high.u32 %v620
        %v623 = vmul.u32.u64.compose %v619, %v614
        %v624 = vextract.low.u32 %v623
        %v625 = vextract.high.u32 %v623
        %v626 = vmul.u32 %v619, %v610
        %v627 = vadd.s32 %v622, %v624
        %vm628 = vc.u32 %v622, %v624
        %v629 = vadd.s32 %v625, 1
        %v630 = vsel %vm628, %v629, %v625
        %v631 = vadd.s32 %v626, %v630
        %v632 = vadd.s32 %v631, 536870912
        %v633 = vshrl.u32 %v632, 30
        %v634 = vshll.u32 %v633, 30
        %v635 = vsub.s32 %v631, %v634
        %vm636 = vcmp.lt.s32.totalorder %v635, 0
        %v637 = vsub.s32 0, %v635
        %v638 = vsel %vm636, %v637, %v635
        %v639 = vclz %v638
        %v640 = vsub.s32 %v639, 2
        %vm641 = vcmp.gt.s32.totalorder 0, %v640
        %v642 = vsel %vm641, 0, %v640
        %v643 = vsub.s32 32, %v642
        %v644 = vshll.u32 %v635, %v642
        %v645 = vshrl.u32 %v627, %v643
        %v646 = vor.u32 %v644, %v645
        %v647 = vsub.s32 4294967266, %v642
        %v648 = vadd.s32 %v647, 127
        %v649 = vshll.u32 %v648, 23
        %v650 = vor.u32 4788187, %v649
        %v651 = vand.u32 2147483647, %v650
        %v653 = vcvt.s32.f32 %v646
        %v654 = vmul.f32 %v653, %v651
        %v655 = vxor.u32 %v654, 2147483648
        %v656 = vsel %vm573, %v655, %v654
        %v657 = vsub.s32 4, %v633
        %v658 = vsel %vm573, %v657, %v633
        %v659 = vsel %vm572, %v539, %v656
        %v660 = vsel %vm572, 0, %v658
        %v661 = vcosq.f32.pop %v659
        %v662 = vsinq.f32.pop %v659
        %vm663 = vweird.f32 %v539
        %v664 = vadd.s32 %v660, 3
        %v665 = vand.u32 %v664, 3
        %vm666 = vcmp.lt.s32.totalorder %v665, 2
        %vm667 = vcmp.eq.s32.totalorder %v665, 0
        %v668 = vxor.u32 %v662, 2147483648
        %v669 = vsel %vm667, %v661, %v668
        %vm670 = vcmp.eq.s32.totalorder %v665, 2
        %v671 = vxor.u32 %v661, 2147483648
        %v672 = vsel %vm670, %v671, %v662
        %v673 = vsel %vm666, %v669, %v672
        %v674 = vsel %vm663, nan, %v673
        %v675 = vand.u32 2147483647, %v540
        %vm676 = vcmp.le.f32.partialorder %v675, 0.7853982
        %vm677 = vcmp.lt.s32.totalorder %v540, 0
        %v678 = vand.u32 %v540, 2139095040
        %v679 = vshrl.u32 %v678, 23
        %v680 = vsub.s32 %v679, 127
        %v681 = vand.u32 2147483647, %v540
        %v682 = vand.u32 %v681, 8388607
        %v683 = vor.u32 %v682, 8388608
        %v684 = vsub.s32 0, %v683
        %v685 = vadd.s32 %v680, 1
        %vm686 = vcmp.gt.s32.totalorder %v685, 0
        %v687 = vsel %vm686, %v685, 0
        %v688 = vshrl.u32 %v687, 5
        %v689 = vand.u32 %v687, 31
        %v690 = vsub.s32 32, %v689
        %v691 = vshrl.u32 683565275, %v690
        %v692 = vshll.u32 683565275, %v689
        %v693 = vshrl.u32 2475754826, %v690
        %v694 = vor.u32 %v692, %v693
        %v695 = vshll.u32 2475754826, %v689
        %v696 = vshrl.u32 2131351028, %v690
        %v697 = vor.u32 %v695, %v696
        %v698 = vshll.u32 2131351028, %v689
        %v699 = vshrl.u32 2102212464, %v690
        %v700 = vor.u32 %v698, %v699
        %v701 = vshll.u32 2102212464, %v689
        %v702 = vshrl.u32 920167782, %v690
        %v703 = vor.u32 %v701, %v702
        %v704 = vshll.u32 920167782, %v689
        %v705 = vshrl.u32 1326507024, %v690
        %v706 = vor.u32 %v704, %v705
        %vm707 = vcmp.lt.s32.totalorder %v688, 1
        %vm708 = vcmp.lt.s32.totalorder %v688, 2
        %vm709 = vcmp.lt.s32.totalorder %v688, 3
        %vm710 = vcmp.lt.s32.totalorder %v688, 4
        %v711 = vsel %vm707, %v691, %v694
        %v712 = vsel %vm710, %v700, 2102212464
        %v713 = vsel %vm709, %v697, %v712
        %v714 = vsel %vm708, %v711, %v713
        %v715 = vsel %vm707, %v694, %v697
        %v716 = vsel %vm710, %v703, 920167782
        %v717 = vsel %vm709, %v700, %v716
        %v718 = vsel %vm708, %v715, %v717
        %v719 = vsel %vm707, %v697, %v700
        %v720 = vsel %vm710, %v706, 1326507024
        %v721 = vsel %vm709, %v703, %v720
        %v722 = vsel %vm708, %v719, %v721
        %v723 = vshll.u32 %v683, 8
        %v724 = vmul.u32.u64.compose %v723, %v722
        %v725 = vextract.low.u32 %v724
        %v726 = vextract.high.u32 %v724
        %v727 = vmul.u32.u64.compose %v723, %v718
        %v728 = vextract.low.u32 %v727
        %v729 = vextract.high.u32 %v727
        %v730 = vmul.u32 %v723, %v714
        %v731 = vadd.s32 %v726, %v728
        %vm732 = vc.u32 %v726, %v728
        %v733 = vadd.s32 %v729, 1
        %v734 = vsel %vm732, %v733, %v729
        %v735 = vadd.s32 %v730, %v734
        %v736 = vadd.s32 %v735, 536870912
        %v737 = vshrl.u32 %v736, 30
        %v738 = vshll.u32 %v737, 30
        %v739 = vsub.s32 %v735, %v738
        %vm740 = vcmp.lt.s32.totalorder %v739, 0
        %v741 = vsub.s32 0, %v739
        %v742 = vsel %vm740, %v741, %v739
        %v743 = vclz %v742
        %v744 = vsub.s32 %v743, 2
        %vm745 = vcmp.gt.s32.totalorder 0, %v744
        %v746 = vsel %vm745, 0, %v744
        %v747 = vsub.s32 32, %v746
        %v748 = vshll.u32 %v739, %v746
        %v749 = vshrl.u32 %v731, %v747
        %v750 = vor.u32 %v748, %v749
        %v751 = vsub.s32 4294967266, %v746
        %v752 = vadd.s32 %v751, 127
        %v753 = vshll.u32 %v752, 23
        %v754 = vor.u32 4788187, %v753
        %v755 = vand.u32 2147483647, %v754
        %v757 = vcvt.s32.f32 %v750
        %v758 = vmul.f32 %v757, %v755
        %v759 = vxor.u32 %v758, 2147483648
        %v760 = vsel %vm677, %v759, %v758
        %v761 = vsub.s32 4, %v737
        %v762 = vsel %vm677, %v761, %v737
        %v763 = vsel %vm676, %v540, %v760
        %v764 = vsel %vm676, 0, %v762
        %v765 = vcosq.f32.pop %v763
        %v766 = vsinq.f32.pop %v763
        %vm767 = vweird.f32 %v540
        %v768 = vadd.s32 %v764, 3
        %v769 = vand.u32 %v768, 3
        %vm770 = vcmp.lt.s32.totalorder %v769, 2
        %vm771 = vcmp.eq.s32.totalorder %v769, 0
        %v772 = vxor.u32 %v766, 2147483648
        %v773 = vsel %vm771, %v765, %v772
        %vm774 = vcmp.eq.s32.totalorder %v769, 2
        %v775 = vxor.u32 %v765, 2147483648
        %v776 = vsel %vm774, %v775, %v766
        %v777 = vsel %vm770, %v773, %v776
        %v778 = vsel %vm767, nan, %v777
        %v779 = vand.u32 2147483647, %v541
        %vm780 = vcmp.le.f32.partialorder %v779, 0.7853982
        %vm781 = vcmp.lt.s32.totalorder %v541, 0
        %v782 = vand.u32 %v541, 2139095040
        %v783 = vshrl.u32 %v782, 23
        %v784 = vsub.s32 %v783, 127
        %v785 = vand.u32 2147483647, %v541
        %v786 = vand.u32 %v785, 8388607
        %v787 = vor.u32 %v786, 8388608
        %v788 = vsub.s32 0, %v787
        %v789 = vadd.s32 %v784, 1
        %vm790 = vcmp.gt.s32.totalorder %v789, 0
        %v791 = vsel %vm790, %v789, 0
        %v792 = vshrl.u32 %v791, 5
        %v793 = vand.u32 %v791, 31
        %v794 = vsub.s32 32, %v793
        %v795 = vshrl.u32 683565275, %v794
        %v796 = vshll.u32 683565275, %v793
        %v797 = vshrl.u32 2475754826, %v794
        %v798 = vor.u32 %v796, %v797
        %v799 = vshll.u32 2475754826, %v793
        %v800 = vshrl.u32 2131351028, %v794
        %v801 = vor.u32 %v799, %v800
        %v802 = vshll.u32 2131351028, %v793
        %v803 = vshrl.u32 2102212464, %v794
        %v804 = vor.u32 %v802, %v803
        %v805 = vshll.u32 2102212464, %v793
        %v806 = vshrl.u32 920167782, %v794
        %v807 = vor.u32 %v805, %v806
        %v808 = vshll.u32 920167782, %v793
        %v809 = vshrl.u32 1326507024, %v794
        %v810 = vor.u32 %v808, %v809
        %vm811 = vcmp.lt.s32.totalorder %v792, 1
        %vm812 = vcmp.lt.s32.totalorder %v792, 2
        %vm813 = vcmp.lt.s32.totalorder %v792, 3
        %vm814 = vcmp.lt.s32.totalorder %v792, 4
        %v815 = vsel %vm811, %v795, %v798
        %v816 = vsel %vm814, %v804, 2102212464
        %v817 = vsel %vm813, %v801, %v816
        %v818 = vsel %vm812, %v815, %v817
        %v819 = vsel %vm811, %v798, %v801
        %v820 = vsel %vm814, %v807, 920167782
        %v821 = vsel %vm813, %v804, %v820
        %v822 = vsel %vm812, %v819, %v821
        %v823 = vsel %vm811, %v801, %v804
        %v824 = vsel %vm814, %v810, 1326507024
        %v825 = vsel %vm813, %v807, %v824
        %v826 = vsel %vm812, %v823, %v825
        %v827 = vshll.u32 %v787, 8
        %v828 = vmul.u32.u64.compose %v827, %v826
        %v829 = vextract.low.u32 %v828
        %v830 = vextract.high.u32 %v828
        %v831 = vmul.u32.u64.compose %v827, %v822
        %v832 = vextract.low.u32 %v831
        %v833 = vextract.high.u32 %v831
        %v834 = vmul.u32 %v827, %v818
        %v835 = vadd.s32 %v830, %v832
        %vm836 = vc.u32 %v830, %v832
        %v837 = vadd.s32 %v833, 1
        %v838 = vsel %vm836, %v837, %v833
        %v839 = vadd.s32 %v834, %v838
        %v840 = vadd.s32 %v839, 536870912
        %v841 = vshrl.u32 %v840, 30
        %v842 = vshll.u32 %v841, 30
        %v843 = vsub.s32 %v839, %v842
        %vm844 = vcmp.lt.s32.totalorder %v843, 0
        %v845 = vsub.s32 0, %v843
        %v846 = vsel %vm844, %v845, %v843
        %v847 = vclz %v846
        %v848 = vsub.s32 %v847, 2
        %vm849 = vcmp.gt.s32.totalorder 0, %v848
        %v850 = vsel %vm849, 0, %v848
        %v851 = vsub.s32 32, %v850
        %v852 = vshll.u32 %v843, %v850
        %v853 = vshrl.u32 %v835, %v851
        %v854 = vor.u32 %v852, %v853
        %v855 = vsub.s32 4294967266, %v850
        %v856 = vadd.s32 %v855, 127
        %v857 = vshll.u32 %v856, 23
        %v858 = vor.u32 4788187, %v857
        %v859 = vand.u32 2147483647, %v858
        %v861 = vcvt.s32.f32 %v854
        %v862 = vmul.f32 %v861, %v859
        %v863 = vxor.u32 %v862, 2147483648
        %v864 = vsel %vm781, %v863, %v862
        %v865 = vsub.s32 4, %v841
        %v866 = vsel %vm781, %v865, %v841
        %v867 = vsel %vm780, %v541, %v864
        %v868 = vsel %vm780, 0, %v866
        %v869 = vcosq.f32.pop %v867
        %v870 = vsinq.f32.pop %v867
        %vm871 = vweird.f32 %v541
        %v872 = vadd.s32 %v868, 3
        %v873 = vand.u32 %v872, 3
        %vm874 = vcmp.lt.s32.totalorder %v873, 2
        %vm875 = vcmp.eq.s32.totalorder %v873, 0
        %v876 = vxor.u32 %v870, 2147483648
        %v877 = vsel %vm875, %v869, %v876
        %vm878 = vcmp.eq.s32.totalorder %v873, 2
        %v879 = vxor.u32 %v869, 2147483648
        %v880 = vsel %vm878, %v879, %v870
        %v881 = vsel %vm874, %v877, %v880
        %v882 = vsel %vm871, nan, %v881
        %v883 = vand.u32 2147483647, %v542
        %vm884 = vcmp.le.f32.partialorder %v883, 0.7853982
        %vm885 = vcmp.lt.s32.totalorder %v542, 0
        %v886 = vand.u32 %v542, 2139095040
        %v887 = vshrl.u32 %v886, 23
        %v888 = vsub.s32 %v887, 127
        %v889 = vand.u32 2147483647, %v542
        %v890 = vand.u32 %v889, 8388607
        %v891 = vor.u32 %v890, 8388608
        %v892 = vsub.s32 0, %v891
        %v893 = vadd.s32 %v888, 1
        %vm894 = vcmp.gt.s32.totalorder %v893, 0
        %v895 = vsel %vm894, %v893, 0
        %v896 = vshrl.u32 %v895, 5
        %v897 = vand.u32 %v895, 31
        %v898 = vsub.s32 32, %v897
        %v899 = vshrl.u32 683565275, %v898
        %v900 = vshll.u32 683565275, %v897
        %v901 = vshrl.u32 2475754826, %v898
        %v902 = vor.u32 %v900, %v901
        %v903 = vshll.u32 2475754826, %v897
        %v904 = vshrl.u32 2131351028, %v898
        %v905 = vor.u32 %v903, %v904
        %v906 = vshll.u32 2131351028, %v897
        %v907 = vshrl.u32 2102212464, %v898
        %v908 = vor.u32 %v906, %v907
        %v909 = vshll.u32 2102212464, %v897
        %v910 = vshrl.u32 920167782, %v898
        %v911 = vor.u32 %v909, %v910
        %v912 = vshll.u32 920167782, %v897
        %v913 = vshrl.u32 1326507024, %v898
        %v914 = vor.u32 %v912, %v913
        %vm915 = vcmp.lt.s32.totalorder %v896, 1
        %vm916 = vcmp.lt.s32.totalorder %v896, 2
        %vm917 = vcmp.lt.s32.totalorder %v896, 3
        %vm918 = vcmp.lt.s32.totalorder %v896, 4
        %v919 = vsel %vm915, %v899, %v902
        %v920 = vsel %vm918, %v908, 2102212464
        %v921 = vsel %vm917, %v905, %v920
        %v922 = vsel %vm916, %v919, %v921
        %v923 = vsel %vm915, %v902, %v905
        %v924 = vsel %vm918, %v911, 920167782
        %v925 = vsel %vm917, %v908, %v924
        %v926 = vsel %vm916, %v923, %v925
        %v927 = vsel %vm915, %v905, %v908
        %v928 = vsel %vm918, %v914, 1326507024
        %v929 = vsel %vm917, %v911, %v928
        %v930 = vsel %vm916, %v927, %v929
        %v931 = vshll.u32 %v891, 8
        %v932 = vmul.u32.u64.compose %v931, %v930
        %v933 = vextract.low.u32 %v932
        %v934 = vextract.high.u32 %v932
        %v935 = vmul.u32.u64.compose %v931, %v926
        %v936 = vextract.low.u32 %v935
        %v937 = vextract.high.u32 %v935
        %v938 = vmul.u32 %v931, %v922
        %v939 = vadd.s32 %v934, %v936
        %vm940 = vc.u32 %v934, %v936
        %v941 = vadd.s32 %v937, 1
        %v942 = vsel %vm940, %v941, %v937
        %v943 = vadd.s32 %v938, %v942
        %v944 = vadd.s32 %v943, 536870912
        %v945 = vshrl.u32 %v944, 30
        %v946 = vshll.u32 %v945, 30
        %v947 = vsub.s32 %v943, %v946
        %vm948 = vcmp.lt.s32.totalorder %v947, 0
        %v949 = vsub.s32 0, %v947
        %v950 = vsel %vm948, %v949, %v947
        %v951 = vclz %v950
        %v952 = vsub.s32 %v951, 2
        %vm953 = vcmp.gt.s32.totalorder 0, %v952
        %v954 = vsel %vm953, 0, %v952
        %v955 = vsub.s32 32, %v954
        %v956 = vshll.u32 %v947, %v954
        %v957 = vshrl.u32 %v939, %v955
        %v958 = vor.u32 %v956, %v957
        %v959 = vsub.s32 4294967266, %v954
        %v960 = vadd.s32 %v959, 127
        %v961 = vshll.u32 %v960, 23
        %v962 = vor.u32 4788187, %v961
        %v963 = vand.u32 2147483647, %v962
        %v965 = vcvt.s32.f32 %v958
        %v966 = vmul.f32 %v965, %v963
        %v967 = vxor.u32 %v966, 2147483648
        %v968 = vsel %vm885, %v967, %v966
        %v969 = vsub.s32 4, %v945
        %v970 = vsel %vm885, %v969, %v945
        %v971 = vsel %vm884, %v542, %v968
        %v972 = vsel %vm884, 0, %v970
        %v973 = vcosq.f32.pop %v971
        %v974 = vsinq.f32.pop %v971
        %vm975 = vweird.f32 %v542
        %v976 = vadd.s32 %v972, 3
        %v977 = vand.u32 %v976, 3
        %vm978 = vcmp.lt.s32.totalorder %v977, 2
        %vm979 = vcmp.eq.s32.totalorder %v977, 0
        %v980 = vxor.u32 %v974, 2147483648
        %v981 = vsel %vm979, %v973, %v980
        %vm982 = vcmp.eq.s32.totalorder %v977, 2
        %v983 = vxor.u32 %v973, 2147483648
        %v984 = vsel %vm982, %v983, %v974
        %v985 = vsel %vm978, %v981, %v984
        %v986 = vsel %vm975, nan, %v985
        %v987 = vand.u32 2147483647, %v543
        %vm988 = vcmp.le.f32.partialorder %v987, 0.7853982
        %vm989 = vcmp.lt.s32.totalorder %v543, 0
        %v990 = vand.u32 %v543, 2139095040
        %v991 = vshrl.u32 %v990, 23
        %v992 = vsub.s32 %v991, 127
        %v993 = vand.u32 2147483647, %v543
        %v994 = vand.u32 %v993, 8388607
        %v995 = vor.u32 %v994, 8388608
        %v996 = vsub.s32 0, %v995
        %v997 = vadd.s32 %v992, 1
        %vm998 = vcmp.gt.s32.totalorder %v997, 0
        %v999 = vsel %vm998, %v997, 0
        %v1000 = vshrl.u32 %v999, 5
        %v1001 = vand.u32 %v999, 31
        %v1002 = vsub.s32 32, %v1001
        %v1003 = vshrl.u32 683565275, %v1002
        %v1004 = vshll.u32 683565275, %v1001
        %v1005 = vshrl.u32 2475754826, %v1002
        %v1006 = vor.u32 %v1004, %v1005
        %v1007 = vshll.u32 2475754826, %v1001
        %v1008 = vshrl.u32 2131351028, %v1002
        %v1009 = vor.u32 %v1007, %v1008
        %v1010 = vshll.u32 2131351028, %v1001
        %v1011 = vshrl.u32 2102212464, %v1002
        %v1012 = vor.u32 %v1010, %v1011
        %v1013 = vshll.u32 2102212464, %v1001
        %v1014 = vshrl.u32 920167782, %v1002
        %v1015 = vor.u32 %v1013, %v1014
        %v1016 = vshll.u32 920167782, %v1001
        %v1017 = vshrl.u32 1326507024, %v1002
        %v1018 = vor.u32 %v1016, %v1017
        %vm1019 = vcmp.lt.s32.totalorder %v1000, 1
        %vm1020 = vcmp.lt.s32.totalorder %v1000, 2
        %vm1021 = vcmp.lt.s32.totalorder %v1000, 3
        %vm1022 = vcmp.lt.s32.totalorder %v1000, 4
        %v1023 = vsel %vm1019, %v1003, %v1006
        %v1024 = vsel %vm1022, %v1012, 2102212464
        %v1025 = vsel %vm1021, %v1009, %v1024
        %v1026 = vsel %vm1020, %v1023, %v1025
        %v1027 = vsel %vm1019, %v1006, %v1009
        %v1028 = vsel %vm1022, %v1015, 920167782
        %v1029 = vsel %vm1021, %v1012, %v1028
        %v1030 = vsel %vm1020, %v1027, %v1029
        %v1031 = vsel %vm1019, %v1009, %v1012
        %v1032 = vsel %vm1022, %v1018, 1326507024
        %v1033 = vsel %vm1021, %v1015, %v1032
        %v1034 = vsel %vm1020, %v1031, %v1033
        %v1035 = vshll.u32 %v995, 8
        %v1036 = vmul.u32.u64.compose %v1035, %v1034
        %v1037 = vextract.low.u32 %v1036
        %v1038 = vextract.high.u32 %v1036
        %v1039 = vmul.u32.u64.compose %v1035, %v1030
        %v1040 = vextract.low.u32 %v1039
        %v1041 = vextract.high.u32 %v1039
        %v1042 = vmul.u32 %v1035, %v1026
        %v1043 = vadd.s32 %v1038, %v1040
        %vm1044 = vc.u32 %v1038, %v1040
        %v1045 = vadd.s32 %v1041, 1
        %v1046 = vsel %vm1044, %v1045, %v1041
        %v1047 = vadd.s32 %v1042, %v1046
        %v1048 = vadd.s32 %v1047, 536870912
        %v1049 = vshrl.u32 %v1048, 30
        %v1050 = vshll.u32 %v1049, 30
        %v1051 = vsub.s32 %v1047, %v1050
        %vm1052 = vcmp.lt.s32.totalorder %v1051, 0
        %v1053 = vsub.s32 0, %v1051
        %v1054 = vsel %vm1052, %v1053, %v1051
        %v1055 = vclz %v1054
        %v1056 = vsub.s32 %v1055, 2
        %vm1057 = vcmp.gt.s32.totalorder 0, %v1056
        %v1058 = vsel %vm1057, 0, %v1056
        %v1059 = vsub.s32 32, %v1058
        %v1060 = vshll.u32 %v1051, %v1058
        %v1061 = vshrl.u32 %v1043, %v1059
        %v1062 = vor.u32 %v1060, %v1061
        %v1063 = vsub.s32 4294967266, %v1058
        %v1064 = vadd.s32 %v1063, 127
        %v1065 = vshll.u32 %v1064, 23
        %v1066 = vor.u32 4788187, %v1065
        %v1067 = vand.u32 2147483647, %v1066
        %v1069 = vcvt.s32.f32 %v1062
        %v1070 = vmul.f32 %v1069, %v1067
        %v1071 = vxor.u32 %v1070, 2147483648
        %v1072 = vsel %vm989, %v1071, %v1070
        %v1073 = vsub.s32 4, %v1049
        %v1074 = vsel %vm989, %v1073, %v1049
        %v1075 = vsel %vm988, %v543, %v1072
        %v1076 = vsel %vm988, 0, %v1074
        %v1077 = vcosq.f32.pop %v1075
        %v1078 = vsinq.f32.pop %v1075
        %vm1079 = vweird.f32 %v543
        %v1080 = vadd.s32 %v1076, 3
        %v1081 = vand.u32 %v1080, 3
        %vm1082 = vcmp.lt.s32.totalorder %v1081, 2
        %vm1083 = vcmp.eq.s32.totalorder %v1081, 0
        %v1084 = vxor.u32 %v1078, 2147483648
        %v1085 = vsel %vm1083, %v1077, %v1084
        %vm1086 = vcmp.eq.s32.totalorder %v1081, 2
        %v1087 = vxor.u32 %v1077, 2147483648
        %v1088 = vsel %vm1086, %v1087, %v1078
        %v1089 = vsel %vm1082, %v1085, %v1088
        %v1090 = vsel %vm1079, nan, %v1089
        %v1091 = vand.u32 2147483647, %v544
        %vm1092 = vcmp.le.f32.partialorder %v1091, 0.7853982
        %vm1093 = vcmp.lt.s32.totalorder %v544, 0
        %v1094 = vand.u32 %v544, 2139095040
        %v1095 = vshrl.u32 %v1094, 23
        %v1096 = vsub.s32 %v1095, 127
        %v1097 = vand.u32 2147483647, %v544
        %v1098 = vand.u32 %v1097, 8388607
        %v1099 = vor.u32 %v1098, 8388608
        %v1100 = vsub.s32 0, %v1099
        %v1101 = vadd.s32 %v1096, 1
        %vm1102 = vcmp.gt.s32.totalorder %v1101, 0
        %v1103 = vsel %vm1102, %v1101, 0
        %v1104 = vshrl.u32 %v1103, 5
        %v1105 = vand.u32 %v1103, 31
        %v1106 = vsub.s32 32, %v1105
        %v1107 = vshrl.u32 683565275, %v1106
        %v1108 = vshll.u32 683565275, %v1105
        %v1109 = vshrl.u32 2475754826, %v1106
        %v1110 = vor.u32 %v1108, %v1109
        %v1111 = vshll.u32 2475754826, %v1105
        %v1112 = vshrl.u32 2131351028, %v1106
        %v1113 = vor.u32 %v1111, %v1112
        %v1114 = vshll.u32 2131351028, %v1105
        %v1115 = vshrl.u32 2102212464, %v1106
        %v1116 = vor.u32 %v1114, %v1115
        %v1117 = vshll.u32 2102212464, %v1105
        %v1118 = vshrl.u32 920167782, %v1106
        %v1119 = vor.u32 %v1117, %v1118
        %v1120 = vshll.u32 920167782, %v1105
        %v1121 = vshrl.u32 1326507024, %v1106
        %v1122 = vor.u32 %v1120, %v1121
        %vm1123 = vcmp.lt.s32.totalorder %v1104, 1
        %vm1124 = vcmp.lt.s32.totalorder %v1104, 2
        %vm1125 = vcmp.lt.s32.totalorder %v1104, 3
        %vm1126 = vcmp.lt.s32.totalorder %v1104, 4
        %v1127 = vsel %vm1123, %v1107, %v1110
        %v1128 = vsel %vm1126, %v1116, 2102212464
        %v1129 = vsel %vm1125, %v1113, %v1128
        %v1130 = vsel %vm1124, %v1127, %v1129
        %v1131 = vsel %vm1123, %v1110, %v1113
        %v1132 = vsel %vm1126, %v1119, 920167782
        %v1133 = vsel %vm1125, %v1116, %v1132
        %v1134 = vsel %vm1124, %v1131, %v1133
        %v1135 = vsel %vm1123, %v1113, %v1116
        %v1136 = vsel %vm1126, %v1122, 1326507024
        %v1137 = vsel %vm1125, %v1119, %v1136
        %v1138 = vsel %vm1124, %v1135, %v1137
        %v1139 = vshll.u32 %v1099, 8
        %v1140 = vmul.u32.u64.compose %v1139, %v1138
        %v1141 = vextract.low.u32 %v1140
        %v1142 = vextract.high.u32 %v1140
        %v1143 = vmul.u32.u64.compose %v1139, %v1134
        %v1144 = vextract.low.u32 %v1143
        %v1145 = vextract.high.u32 %v1143
        %v1146 = vmul.u32 %v1139, %v1130
        %v1147 = vadd.s32 %v1142, %v1144
        %vm1148 = vc.u32 %v1142, %v1144
        %v1149 = vadd.s32 %v1145, 1
        %v1150 = vsel %vm1148, %v1149, %v1145
        %v1151 = vadd.s32 %v1146, %v1150
        %v1152 = vadd.s32 %v1151, 536870912
        %v1153 = vshrl.u32 %v1152, 30
        %v1154 = vshll.u32 %v1153, 30
        %v1155 = vsub.s32 %v1151, %v1154
        %vm1156 = vcmp.lt.s32.totalorder %v1155, 0
        %v1157 = vsub.s32 0, %v1155
        %v1158 = vsel %vm1156, %v1157, %v1155
        %v1159 = vclz %v1158
        %v1160 = vsub.s32 %v1159, 2
        %vm1161 = vcmp.gt.s32.totalorder 0, %v1160
        %v1162 = vsel %vm1161, 0, %v1160
        %v1163 = vsub.s32 32, %v1162
        %v1164 = vshll.u32 %v1155, %v1162
        %v1165 = vshrl.u32 %v1147, %v1163
        %v1166 = vor.u32 %v1164, %v1165
        %v1167 = vsub.s32 4294967266, %v1162
        %v1168 = vadd.s32 %v1167, 127
        %v1169 = vshll.u32 %v1168, 23
        %v1170 = vor.u32 4788187, %v1169
        %v1171 = vand.u32 2147483647, %v1170
        %v1173 = vcvt.s32.f32 %v1166
        %v1174 = vmul.f32 %v1173, %v1171
        %v1175 = vxor.u32 %v1174, 2147483648
        %v1176 = vsel %vm1093, %v1175, %v1174
        %v1177 = vsub.s32 4, %v1153
        %v1178 = vsel %vm1093, %v1177, %v1153
        %v1179 = vsel %vm1092, %v544, %v1176
        %v1180 = vsel %vm1092, 0, %v1178
        %v1181 = vcosq.f32.pop %v1179
        %v1182 = vsinq.f32.pop %v1179
        %vm1183 = vweird.f32 %v544
        %v1184 = vadd.s32 %v1180, 3
        %v1185 = vand.u32 %v1184, 3
        %vm1186 = vcmp.lt.s32.totalorder %v1185, 2
        %vm1187 = vcmp.eq.s32.totalorder %v1185, 0
        %v1188 = vxor.u32 %v1182, 2147483648
        %v1189 = vsel %vm1187, %v1181, %v1188
        %vm1190 = vcmp.eq.s32.totalorder %v1185, 2
        %v1191 = vxor.u32 %v1181, 2147483648
        %v1192 = vsel %vm1190, %v1191, %v1182
        %v1193 = vsel %vm1186, %v1189, %v1192
        %v1194 = vsel %vm1183, nan, %v1193
        %v1195 = vand.u32 2147483647, %v545
        %vm1196 = vcmp.le.f32.partialorder %v1195, 0.7853982
        %vm1197 = vcmp.lt.s32.totalorder %v545, 0
        %v1198 = vand.u32 %v545, 2139095040
        %v1199 = vshrl.u32 %v1198, 23
        %v1200 = vsub.s32 %v1199, 127
        %v1201 = vand.u32 2147483647, %v545
        %v1202 = vand.u32 %v1201, 8388607
        %v1203 = vor.u32 %v1202, 8388608
        %v1204 = vsub.s32 0, %v1203
        %v1205 = vadd.s32 %v1200, 1
        %vm1206 = vcmp.gt.s32.totalorder %v1205, 0
        %v1207 = vsel %vm1206, %v1205, 0
        %v1208 = vshrl.u32 %v1207, 5
        %v1209 = vand.u32 %v1207, 31
        %v1210 = vsub.s32 32, %v1209
        %v1211 = vshrl.u32 683565275, %v1210
        %v1212 = vshll.u32 683565275, %v1209
        %v1213 = vshrl.u32 2475754826, %v1210
        %v1214 = vor.u32 %v1212, %v1213
        %v1215 = vshll.u32 2475754826, %v1209
        %v1216 = vshrl.u32 2131351028, %v1210
        %v1217 = vor.u32 %v1215, %v1216
        %v1218 = vshll.u32 2131351028, %v1209
        %v1219 = vshrl.u32 2102212464, %v1210
        %v1220 = vor.u32 %v1218, %v1219
        %v1221 = vshll.u32 2102212464, %v1209
        %v1222 = vshrl.u32 920167782, %v1210
        %v1223 = vor.u32 %v1221, %v1222
        %v1224 = vshll.u32 920167782, %v1209
        %v1225 = vshrl.u32 1326507024, %v1210
        %v1226 = vor.u32 %v1224, %v1225
        %vm1227 = vcmp.lt.s32.totalorder %v1208, 1
        %vm1228 = vcmp.lt.s32.totalorder %v1208, 2
        %vm1229 = vcmp.lt.s32.totalorder %v1208, 3
        %vm1230 = vcmp.lt.s32.totalorder %v1208, 4
        %v1231 = vsel %vm1227, %v1211, %v1214
        %v1232 = vsel %vm1230, %v1220, 2102212464
        %v1233 = vsel %vm1229, %v1217, %v1232
        %v1234 = vsel %vm1228, %v1231, %v1233
        %v1235 = vsel %vm1227, %v1214, %v1217
        %v1236 = vsel %vm1230, %v1223, 920167782
        %v1237 = vsel %vm1229, %v1220, %v1236
        %v1238 = vsel %vm1228, %v1235, %v1237
        %v1239 = vsel %vm1227, %v1217, %v1220
        %v1240 = vsel %vm1230, %v1226, 1326507024
        %v1241 = vsel %vm1229, %v1223, %v1240
        %v1242 = vsel %vm1228, %v1239, %v1241
        %v1243 = vshll.u32 %v1203, 8
        %v1244 = vmul.u32.u64.compose %v1243, %v1242
        %v1245 = vextract.low.u32 %v1244
        %v1246 = vextract.high.u32 %v1244
        %v1247 = vmul.u32.u64.compose %v1243, %v1238
        %v1248 = vextract.low.u32 %v1247
        %v1249 = vextract.high.u32 %v1247
        %v1250 = vmul.u32 %v1243, %v1234
        %v1251 = vadd.s32 %v1246, %v1248
        %vm1252 = vc.u32 %v1246, %v1248
        %v1253 = vadd.s32 %v1249, 1
        %v1254 = vsel %vm1252, %v1253, %v1249
        %v1255 = vadd.s32 %v1250, %v1254
        %v1256 = vadd.s32 %v1255, 536870912
        %v1257 = vshrl.u32 %v1256, 30
        %v1258 = vshll.u32 %v1257, 30
        %v1259 = vsub.s32 %v1255, %v1258
        %vm1260 = vcmp.lt.s32.totalorder %v1259, 0
        %v1261 = vsub.s32 0, %v1259
        %v1262 = vsel %vm1260, %v1261, %v1259
        %v1263 = vclz %v1262
        %v1264 = vsub.s32 %v1263, 2
        %vm1265 = vcmp.gt.s32.totalorder 0, %v1264
        %v1266 = vsel %vm1265, 0, %v1264
        %v1267 = vsub.s32 32, %v1266
        %v1268 = vshll.u32 %v1259, %v1266
        %v1269 = vshrl.u32 %v1251, %v1267
        %v1270 = vor.u32 %v1268, %v1269
        %v1271 = vsub.s32 4294967266, %v1266
        %v1272 = vadd.s32 %v1271, 127
        %v1273 = vshll.u32 %v1272, 23
        %v1274 = vor.u32 4788187, %v1273
        %v1275 = vand.u32 2147483647, %v1274
        %v1277 = vcvt.s32.f32 %v1270
        %v1278 = vmul.f32 %v1277, %v1275
        %v1279 = vxor.u32 %v1278, 2147483648
        %v1280 = vsel %vm1197, %v1279, %v1278
        %v1281 = vsub.s32 4, %v1257
        %v1282 = vsel %vm1197, %v1281, %v1257
        %v1283 = vsel %vm1196, %v545, %v1280
        %v1284 = vsel %vm1196, 0, %v1282
        %v1285 = vcosq.f32.pop %v1283
        %v1286 = vsinq.f32.pop %v1283
        %vm1287 = vweird.f32 %v545
        %v1288 = vadd.s32 %v1284, 3
        %v1289 = vand.u32 %v1288, 3
        %vm1290 = vcmp.lt.s32.totalorder %v1289, 2
        %vm1291 = vcmp.eq.s32.totalorder %v1289, 0
        %v1292 = vxor.u32 %v1286, 2147483648
        %v1293 = vsel %vm1291, %v1285, %v1292
        %vm1294 = vcmp.eq.s32.totalorder %v1289, 2
        %v1295 = vxor.u32 %v1285, 2147483648
        %v1296 = vsel %vm1294, %v1295, %v1286
        %v1297 = vsel %vm1290, %v1293, %v1296
        %v1298 = vsel %vm1287, nan, %v1297
        %v1299 = vand.u32 2147483647, %v546
        %vm1300 = vcmp.le.f32.partialorder %v1299, 0.7853982
        %vm1301 = vcmp.lt.s32.totalorder %v546, 0
        %v1302 = vand.u32 %v546, 2139095040
        %v1303 = vshrl.u32 %v1302, 23
        %v1304 = vsub.s32 %v1303, 127
        %v1305 = vand.u32 2147483647, %v546
        %v1306 = vand.u32 %v1305, 8388607
        %v1307 = vor.u32 %v1306, 8388608
        %v1308 = vsub.s32 0, %v1307
        %v1309 = vadd.s32 %v1304, 1
        %vm1310 = vcmp.gt.s32.totalorder %v1309, 0
        %v1311 = vsel %vm1310, %v1309, 0
        %v1312 = vshrl.u32 %v1311, 5
        %v1313 = vand.u32 %v1311, 31
        %v1314 = vsub.s32 32, %v1313
        %v1315 = vshrl.u32 683565275, %v1314
        %v1316 = vshll.u32 683565275, %v1313
        %v1317 = vshrl.u32 2475754826, %v1314
        %v1318 = vor.u32 %v1316, %v1317
        %v1319 = vshll.u32 2475754826, %v1313
        %v1320 = vshrl.u32 2131351028, %v1314
        %v1321 = vor.u32 %v1319, %v1320
        %v1322 = vshll.u32 2131351028, %v1313
        %v1323 = vshrl.u32 2102212464, %v1314
        %v1324 = vor.u32 %v1322, %v1323
        %v1325 = vshll.u32 2102212464, %v1313
        %v1326 = vshrl.u32 920167782, %v1314
        %v1327 = vor.u32 %v1325, %v1326
        %v1328 = vshll.u32 920167782, %v1313
        %v1329 = vshrl.u32 1326507024, %v1314
        %v1330 = vor.u32 %v1328, %v1329
        %vm1331 = vcmp.lt.s32.totalorder %v1312, 1
        %vm1332 = vcmp.lt.s32.totalorder %v1312, 2
        %vm1333 = vcmp.lt.s32.totalorder %v1312, 3
        %vm1334 = vcmp.lt.s32.totalorder %v1312, 4
        %v1335 = vsel %vm1331, %v1315, %v1318
        %v1336 = vsel %vm1334, %v1324, 2102212464
        %v1337 = vsel %vm1333, %v1321, %v1336
        %v1338 = vsel %vm1332, %v1335, %v1337
        %v1339 = vsel %vm1331, %v1318, %v1321
        %v1340 = vsel %vm1334, %v1327, 920167782
        %v1341 = vsel %vm1333, %v1324, %v1340
        %v1342 = vsel %vm1332, %v1339, %v1341
        %v1343 = vsel %vm1331, %v1321, %v1324
        %v1344 = vsel %vm1334, %v1330, 1326507024
        %v1345 = vsel %vm1333, %v1327, %v1344
        %v1346 = vsel %vm1332, %v1343, %v1345
        %v1347 = vshll.u32 %v1307, 8
        %v1348 = vmul.u32.u64.compose %v1347, %v1346
        %v1349 = vextract.low.u32 %v1348
        %v1350 = vextract.high.u32 %v1348
        %v1351 = vmul.u32.u64.compose %v1347, %v1342
        %v1352 = vextract.low.u32 %v1351
        %v1353 = vextract.high.u32 %v1351
        %v1354 = vmul.u32 %v1347, %v1338
        %v1355 = vadd.s32 %v1350, %v1352
        %vm1356 = vc.u32 %v1350, %v1352
        %v1357 = vadd.s32 %v1353, 1
        %v1358 = vsel %vm1356, %v1357, %v1353
        %v1359 = vadd.s32 %v1354, %v1358
        %v1360 = vadd.s32 %v1359, 536870912
        %v1361 = vshrl.u32 %v1360, 30
        %v1362 = vshll.u32 %v1361, 30
        %v1363 = vsub.s32 %v1359, %v1362
        %vm1364 = vcmp.lt.s32.totalorder %v1363, 0
        %v1365 = vsub.s32 0, %v1363
        %v1366 = vsel %vm1364, %v1365, %v1363
        %v1367 = vclz %v1366
        %v1368 = vsub.s32 %v1367, 2
        %vm1369 = vcmp.gt.s32.totalorder 0, %v1368
        %v1370 = vsel %vm1369, 0, %v1368
        %v1371 = vsub.s32 32, %v1370
        %v1372 = vshll.u32 %v1363, %v1370
        %v1373 = vshrl.u32 %v1355, %v1371
        %v1374 = vor.u32 %v1372, %v1373
        %v1375 = vsub.s32 4294967266, %v1370
        %v1376 = vadd.s32 %v1375, 127
        %v1377 = vshll.u32 %v1376, 23
        %v1378 = vor.u32 4788187, %v1377
        %v1379 = vand.u32 2147483647, %v1378
        %v1381 = vcvt.s32.f32 %v1374
        %v1382 = vmul.f32 %v1381, %v1379
        %v1383 = vxor.u32 %v1382, 2147483648
        %v1384 = vsel %vm1301, %v1383, %v1382
        %v1385 = vsub.s32 4, %v1361
        %v1386 = vsel %vm1301, %v1385, %v1361
        %v1387 = vsel %vm1300, %v546, %v1384
        %v1388 = vsel %vm1300, 0, %v1386
        %v1389 = vcosq.f32.pop %v1387
        %v1390 = vsinq.f32.pop %v1387
        %vm1391 = vweird.f32 %v546
        %v1392 = vadd.s32 %v1388, 3
        %v1393 = vand.u32 %v1392, 3
        %vm1394 = vcmp.lt.s32.totalorder %v1393, 2
        %vm1395 = vcmp.eq.s32.totalorder %v1393, 0
        %v1396 = vxor.u32 %v1390, 2147483648
        %v1397 = vsel %vm1395, %v1389, %v1396
        %vm1398 = vcmp.eq.s32.totalorder %v1393, 2
        %v1399 = vxor.u32 %v1389, 2147483648
        %v1400 = vsel %vm1398, %v1399, %v1390
        %v1401 = vsel %vm1394, %v1397, %v1400
        %v1402 = vsel %vm1391, nan, %v1401
        %v1403 = vand.u32 2147483647, %v547
        %vm1404 = vcmp.le.f32.partialorder %v1403, 0.7853982
        %vm1405 = vcmp.lt.s32.totalorder %v547, 0
        %v1406 = vand.u32 %v547, 2139095040
        %v1407 = vshrl.u32 %v1406, 23
        %v1408 = vsub.s32 %v1407, 127
        %v1409 = vand.u32 2147483647, %v547
        %v1410 = vand.u32 %v1409, 8388607
        %v1411 = vor.u32 %v1410, 8388608
        %v1412 = vsub.s32 0, %v1411
        %v1413 = vadd.s32 %v1408, 1
        %vm1414 = vcmp.gt.s32.totalorder %v1413, 0
        %v1415 = vsel %vm1414, %v1413, 0
        %v1416 = vshrl.u32 %v1415, 5
        %v1417 = vand.u32 %v1415, 31
        %v1418 = vsub.s32 32, %v1417
        %v1419 = vshrl.u32 683565275, %v1418
        %v1420 = vshll.u32 683565275, %v1417
        %v1421 = vshrl.u32 2475754826, %v1418
        %v1422 = vor.u32 %v1420, %v1421
        %v1423 = vshll.u32 2475754826, %v1417
        %v1424 = vshrl.u32 2131351028, %v1418
        %v1425 = vor.u32 %v1423, %v1424
        %v1426 = vshll.u32 2131351028, %v1417
        %v1427 = vshrl.u32 2102212464, %v1418
        %v1428 = vor.u32 %v1426, %v1427
        %v1429 = vshll.u32 2102212464, %v1417
        %v1430 = vshrl.u32 920167782, %v1418
        %v1431 = vor.u32 %v1429, %v1430
        %v1432 = vshll.u32 920167782, %v1417
        %v1433 = vshrl.u32 1326507024, %v1418
        %v1434 = vor.u32 %v1432, %v1433
        %vm1435 = vcmp.lt.s32.totalorder %v1416, 1
        %vm1436 = vcmp.lt.s32.totalorder %v1416, 2
        %vm1437 = vcmp.lt.s32.totalorder %v1416, 3
        %vm1438 = vcmp.lt.s32.totalorder %v1416, 4
        %v1439 = vsel %vm1435, %v1419, %v1422
        %v1440 = vsel %vm1438, %v1428, 2102212464
        %v1441 = vsel %vm1437, %v1425, %v1440
        %v1442 = vsel %vm1436, %v1439, %v1441
        %v1443 = vsel %vm1435, %v1422, %v1425
        %v1444 = vsel %vm1438, %v1431, 920167782
        %v1445 = vsel %vm1437, %v1428, %v1444
        %v1446 = vsel %vm1436, %v1443, %v1445
        %v1447 = vsel %vm1435, %v1425, %v1428
        %v1448 = vsel %vm1438, %v1434, 1326507024
        %v1449 = vsel %vm1437, %v1431, %v1448
        %v1450 = vsel %vm1436, %v1447, %v1449
        %v1451 = vshll.u32 %v1411, 8
        %v1452 = vmul.u32.u64.compose %v1451, %v1450
        %v1453 = vextract.low.u32 %v1452
        %v1454 = vextract.high.u32 %v1452
        %v1455 = vmul.u32.u64.compose %v1451, %v1446
        %v1456 = vextract.low.u32 %v1455
        %v1457 = vextract.high.u32 %v1455
        %v1458 = vmul.u32 %v1451, %v1442
        %v1459 = vadd.s32 %v1454, %v1456
        %vm1460 = vc.u32 %v1454, %v1456
        %v1461 = vadd.s32 %v1457, 1
        %v1462 = vsel %vm1460, %v1461, %v1457
        %v1463 = vadd.s32 %v1458, %v1462
        %v1464 = vadd.s32 %v1463, 536870912
        %v1465 = vshrl.u32 %v1464, 30
        %v1466 = vshll.u32 %v1465, 30
        %v1467 = vsub.s32 %v1463, %v1466
        %vm1468 = vcmp.lt.s32.totalorder %v1467, 0
        %v1469 = vsub.s32 0, %v1467
        %v1470 = vsel %vm1468, %v1469, %v1467
        %v1471 = vclz %v1470
        %v1472 = vsub.s32 %v1471, 2
        %vm1473 = vcmp.gt.s32.totalorder 0, %v1472
        %v1474 = vsel %vm1473, 0, %v1472
        %v1475 = vsub.s32 32, %v1474
        %v1476 = vshll.u32 %v1467, %v1474
        %v1477 = vshrl.u32 %v1459, %v1475
        %v1478 = vor.u32 %v1476, %v1477
        %v1479 = vsub.s32 4294967266, %v1474
        %v1480 = vadd.s32 %v1479, 127
        %v1481 = vshll.u32 %v1480, 23
        %v1482 = vor.u32 4788187, %v1481
        %v1483 = vand.u32 2147483647, %v1482
        %v1485 = vcvt.s32.f32 %v1478
        %v1486 = vmul.f32 %v1485, %v1483
        %v1487 = vxor.u32 %v1486, 2147483648
        %v1488 = vsel %vm1405, %v1487, %v1486
        %v1489 = vsub.s32 4, %v1465
        %v1490 = vsel %vm1405, %v1489, %v1465
        %v1491 = vsel %vm1404, %v547, %v1488
        %v1492 = vsel %vm1404, 0, %v1490
        %v1493 = vcosq.f32.pop %v1491
        %v1494 = vsinq.f32.pop %v1491
        %vm1495 = vweird.f32 %v547
        %v1496 = vadd.s32 %v1492, 3
        %v1497 = vand.u32 %v1496, 3
        %vm1498 = vcmp.lt.s32.totalorder %v1497, 2
        %vm1499 = vcmp.eq.s32.totalorder %v1497, 0
        %v1500 = vxor.u32 %v1494, 2147483648
        %v1501 = vsel %vm1499, %v1493, %v1500
        %vm1502 = vcmp.eq.s32.totalorder %v1497, 2
        %v1503 = vxor.u32 %v1493, 2147483648
        %v1504 = vsel %vm1502, %v1503, %v1494
        %v1505 = vsel %vm1498, %v1501, %v1504
        %v1506 = vsel %vm1495, nan, %v1505
        %v1507 = vand.u32 2147483647, %v548
        %vm1508 = vcmp.le.f32.partialorder %v1507, 0.7853982
        %vm1509 = vcmp.lt.s32.totalorder %v548, 0
        %v1510 = vand.u32 %v548, 2139095040
        %v1511 = vshrl.u32 %v1510, 23
        %v1512 = vsub.s32 %v1511, 127
        %v1513 = vand.u32 2147483647, %v548
        %v1514 = vand.u32 %v1513, 8388607
        %v1515 = vor.u32 %v1514, 8388608
        %v1516 = vsub.s32 0, %v1515
        %v1517 = vadd.s32 %v1512, 1
        %vm1518 = vcmp.gt.s32.totalorder %v1517, 0
        %v1519 = vsel %vm1518, %v1517, 0
        %v1520 = vshrl.u32 %v1519, 5
        %v1521 = vand.u32 %v1519, 31
        %v1522 = vsub.s32 32, %v1521
        %v1523 = vshrl.u32 683565275, %v1522
        %v1524 = vshll.u32 683565275, %v1521
        %v1525 = vshrl.u32 2475754826, %v1522
        %v1526 = vor.u32 %v1524, %v1525
        %v1527 = vshll.u32 2475754826, %v1521
        %v1528 = vshrl.u32 2131351028, %v1522
        %v1529 = vor.u32 %v1527, %v1528
        %v1530 = vshll.u32 2131351028, %v1521
        %v1531 = vshrl.u32 2102212464, %v1522
        %v1532 = vor.u32 %v1530, %v1531
        %v1533 = vshll.u32 2102212464, %v1521
        %v1534 = vshrl.u32 920167782, %v1522
        %v1535 = vor.u32 %v1533, %v1534
        %v1536 = vshll.u32 920167782, %v1521
        %v1537 = vshrl.u32 1326507024, %v1522
        %v1538 = vor.u32 %v1536, %v1537
        %vm1539 = vcmp.lt.s32.totalorder %v1520, 1
        %vm1540 = vcmp.lt.s32.totalorder %v1520, 2
        %vm1541 = vcmp.lt.s32.totalorder %v1520, 3
        %vm1542 = vcmp.lt.s32.totalorder %v1520, 4
        %v1543 = vsel %vm1539, %v1523, %v1526
        %v1544 = vsel %vm1542, %v1532, 2102212464
        %v1545 = vsel %vm1541, %v1529, %v1544
        %v1546 = vsel %vm1540, %v1543, %v1545
        %v1547 = vsel %vm1539, %v1526, %v1529
        %v1548 = vsel %vm1542, %v1535, 920167782
        %v1549 = vsel %vm1541, %v1532, %v1548
        %v1550 = vsel %vm1540, %v1547, %v1549
        %v1551 = vsel %vm1539, %v1529, %v1532
        %v1552 = vsel %vm1542, %v1538, 1326507024
        %v1553 = vsel %vm1541, %v1535, %v1552
        %v1554 = vsel %vm1540, %v1551, %v1553
        %v1555 = vshll.u32 %v1515, 8
        %v1556 = vmul.u32.u64.compose %v1555, %v1554
        %v1557 = vextract.low.u32 %v1556
        %v1558 = vextract.high.u32 %v1556
        %v1559 = vmul.u32.u64.compose %v1555, %v1550
        %v1560 = vextract.low.u32 %v1559
        %v1561 = vextract.high.u32 %v1559
        %v1562 = vmul.u32 %v1555, %v1546
        %v1563 = vadd.s32 %v1558, %v1560
        %vm1564 = vc.u32 %v1558, %v1560
        %v1565 = vadd.s32 %v1561, 1
        %v1566 = vsel %vm1564, %v1565, %v1561
        %v1567 = vadd.s32 %v1562, %v1566
        %v1568 = vadd.s32 %v1567, 536870912
        %v1569 = vshrl.u32 %v1568, 30
        %v1570 = vshll.u32 %v1569, 30
        %v1571 = vsub.s32 %v1567, %v1570
        %vm1572 = vcmp.lt.s32.totalorder %v1571, 0
        %v1573 = vsub.s32 0, %v1571
        %v1574 = vsel %vm1572, %v1573, %v1571
        %v1575 = vclz %v1574
        %v1576 = vsub.s32 %v1575, 2
        %vm1577 = vcmp.gt.s32.totalorder 0, %v1576
        %v1578 = vsel %vm1577, 0, %v1576
        %v1579 = vsub.s32 32, %v1578
        %v1580 = vshll.u32 %v1571, %v1578
        %v1581 = vshrl.u32 %v1563, %v1579
        %v1582 = vor.u32 %v1580, %v1581
        %v1583 = vsub.s32 4294967266, %v1578
        %v1584 = vadd.s32 %v1583, 127
        %v1585 = vshll.u32 %v1584, 23
        %v1586 = vor.u32 4788187, %v1585
        %v1587 = vand.u32 2147483647, %v1586
        %v1589 = vcvt.s32.f32 %v1582
        %v1590 = vmul.f32 %v1589, %v1587
        %v1591 = vxor.u32 %v1590, 2147483648
        %v1592 = vsel %vm1509, %v1591, %v1590
        %v1593 = vsub.s32 4, %v1569
        %v1594 = vsel %vm1509, %v1593, %v1569
        %v1595 = vsel %vm1508, %v548, %v1592
        %v1596 = vsel %vm1508, 0, %v1594
        %v1597 = vcosq.f32.pop %v1595
        %v1598 = vsinq.f32.pop %v1595
        %vm1599 = vweird.f32 %v548
        %v1600 = vadd.s32 %v1596, 3
        %v1601 = vand.u32 %v1600, 3
        %vm1602 = vcmp.lt.s32.totalorder %v1601, 2
        %vm1603 = vcmp.eq.s32.totalorder %v1601, 0
        %v1604 = vxor.u32 %v1598, 2147483648
        %v1605 = vsel %vm1603, %v1597, %v1604
        %vm1606 = vcmp.eq.s32.totalorder %v1601, 2
        %v1607 = vxor.u32 %v1597, 2147483648
        %v1608 = vsel %vm1606, %v1607, %v1598
        %v1609 = vsel %vm1602, %v1605, %v1608
        %v1610 = vsel %vm1599, nan, %v1609
        %v1611 = vand.u32 2147483647, %v549
        %vm1612 = vcmp.le.f32.partialorder %v1611, 0.7853982
        %vm1613 = vcmp.lt.s32.totalorder %v549, 0
        %v1614 = vand.u32 %v549, 2139095040
        %v1615 = vshrl.u32 %v1614, 23
        %v1616 = vsub.s32 %v1615, 127
        %v1617 = vand.u32 2147483647, %v549
        %v1618 = vand.u32 %v1617, 8388607
        %v1619 = vor.u32 %v1618, 8388608
        %v1620 = vsub.s32 0, %v1619
        %v1621 = vadd.s32 %v1616, 1
        %vm1622 = vcmp.gt.s32.totalorder %v1621, 0
        %v1623 = vsel %vm1622, %v1621, 0
        %v1624 = vshrl.u32 %v1623, 5
        %v1625 = vand.u32 %v1623, 31
        %v1626 = vsub.s32 32, %v1625
        %v1627 = vshrl.u32 683565275, %v1626
        %v1628 = vshll.u32 683565275, %v1625
        %v1629 = vshrl.u32 2475754826, %v1626
        %v1630 = vor.u32 %v1628, %v1629
        %v1631 = vshll.u32 2475754826, %v1625
        %v1632 = vshrl.u32 2131351028, %v1626
        %v1633 = vor.u32 %v1631, %v1632
        %v1634 = vshll.u32 2131351028, %v1625
        %v1635 = vshrl.u32 2102212464, %v1626
        %v1636 = vor.u32 %v1634, %v1635
        %v1637 = vshll.u32 2102212464, %v1625
        %v1638 = vshrl.u32 920167782, %v1626
        %v1639 = vor.u32 %v1637, %v1638
        %v1640 = vshll.u32 920167782, %v1625
        %v1641 = vshrl.u32 1326507024, %v1626
        %v1642 = vor.u32 %v1640, %v1641
        %vm1643 = vcmp.lt.s32.totalorder %v1624, 1
        %vm1644 = vcmp.lt.s32.totalorder %v1624, 2
        %vm1645 = vcmp.lt.s32.totalorder %v1624, 3
        %vm1646 = vcmp.lt.s32.totalorder %v1624, 4
        %v1647 = vsel %vm1643, %v1627, %v1630
        %v1648 = vsel %vm1646, %v1636, 2102212464
        %v1649 = vsel %vm1645, %v1633, %v1648
        %v1650 = vsel %vm1644, %v1647, %v1649
        %v1651 = vsel %vm1643, %v1630, %v1633
        %v1652 = vsel %vm1646, %v1639, 920167782
        %v1653 = vsel %vm1645, %v1636, %v1652
        %v1654 = vsel %vm1644, %v1651, %v1653
        %v1655 = vsel %vm1643, %v1633, %v1636
        %v1656 = vsel %vm1646, %v1642, 1326507024
        %v1657 = vsel %vm1645, %v1639, %v1656
        %v1658 = vsel %vm1644, %v1655, %v1657
        %v1659 = vshll.u32 %v1619, 8
        %v1660 = vmul.u32.u64.compose %v1659, %v1658
        %v1661 = vextract.low.u32 %v1660
        %v1662 = vextract.high.u32 %v1660
        %v1663 = vmul.u32.u64.compose %v1659, %v1654
        %v1664 = vextract.low.u32 %v1663
        %v1665 = vextract.high.u32 %v1663
        %v1666 = vmul.u32 %v1659, %v1650
        %v1667 = vadd.s32 %v1662, %v1664
        %vm1668 = vc.u32 %v1662, %v1664
        %v1669 = vadd.s32 %v1665, 1
        %v1670 = vsel %vm1668, %v1669, %v1665
        %v1671 = vadd.s32 %v1666, %v1670
        %v1672 = vadd.s32 %v1671, 536870912
        %v1673 = vshrl.u32 %v1672, 30
        %v1674 = vshll.u32 %v1673, 30
        %v1675 = vsub.s32 %v1671, %v1674
        %vm1676 = vcmp.lt.s32.totalorder %v1675, 0
        %v1677 = vsub.s32 0, %v1675
        %v1678 = vsel %vm1676, %v1677, %v1675
        %v1679 = vclz %v1678
        %v1680 = vsub.s32 %v1679, 2
        %vm1681 = vcmp.gt.s32.totalorder 0, %v1680
        %v1682 = vsel %vm1681, 0, %v1680
        %v1683 = vsub.s32 32, %v1682
        %v1684 = vshll.u32 %v1675, %v1682
        %v1685 = vshrl.u32 %v1667, %v1683
        %v1686 = vor.u32 %v1684, %v1685
        %v1687 = vsub.s32 4294967266, %v1682
        %v1688 = vadd.s32 %v1687, 127
        %v1689 = vshll.u32 %v1688, 23
        %v1690 = vor.u32 4788187, %v1689
        %v1691 = vand.u32 2147483647, %v1690
        %v1693 = vcvt.s32.f32 %v1686
        %v1694 = vmul.f32 %v1693, %v1691
        %v1695 = vxor.u32 %v1694, 2147483648
        %v1696 = vsel %vm1613, %v1695, %v1694
        %v1697 = vsub.s32 4, %v1673
        %v1698 = vsel %vm1613, %v1697, %v1673
        %v1699 = vsel %vm1612, %v549, %v1696
        %v1700 = vsel %vm1612, 0, %v1698
        %v1701 = vcosq.f32.pop %v1699
        %v1702 = vsinq.f32.pop %v1699
        %vm1703 = vweird.f32 %v549
        %v1704 = vadd.s32 %v1700, 3
        %v1705 = vand.u32 %v1704, 3
        %vm1706 = vcmp.lt.s32.totalorder %v1705, 2
        %vm1707 = vcmp.eq.s32.totalorder %v1705, 0
        %v1708 = vxor.u32 %v1702, 2147483648
        %v1709 = vsel %vm1707, %v1701, %v1708
        %vm1710 = vcmp.eq.s32.totalorder %v1705, 2
        %v1711 = vxor.u32 %v1701, 2147483648
        %v1712 = vsel %vm1710, %v1711, %v1702
        %v1713 = vsel %vm1706, %v1709, %v1712
        %v1714 = vsel %vm1703, nan, %v1713
        %v1715 = vand.u32 2147483647, %v550
        %vm1716 = vcmp.le.f32.partialorder %v1715, 0.7853982
        %vm1717 = vcmp.lt.s32.totalorder %v550, 0
        %v1718 = vand.u32 %v550, 2139095040
        %v1719 = vshrl.u32 %v1718, 23
        %v1720 = vsub.s32 %v1719, 127
        %v1721 = vand.u32 2147483647, %v550
        %v1722 = vand.u32 %v1721, 8388607
        %v1723 = vor.u32 %v1722, 8388608
        %v1724 = vsub.s32 0, %v1723
        %v1725 = vadd.s32 %v1720, 1
        %vm1726 = vcmp.gt.s32.totalorder %v1725, 0
        %v1727 = vsel %vm1726, %v1725, 0
        %v1728 = vshrl.u32 %v1727, 5
        %v1729 = vand.u32 %v1727, 31
        %v1730 = vsub.s32 32, %v1729
        %v1731 = vshrl.u32 683565275, %v1730
        %v1732 = vshll.u32 683565275, %v1729
        %v1733 = vshrl.u32 2475754826, %v1730
        %v1734 = vor.u32 %v1732, %v1733
        %v1735 = vshll.u32 2475754826, %v1729
        %v1736 = vshrl.u32 2131351028, %v1730
        %v1737 = vor.u32 %v1735, %v1736
        %v1738 = vshll.u32 2131351028, %v1729
        %v1739 = vshrl.u32 2102212464, %v1730
        %v1740 = vor.u32 %v1738, %v1739
        %v1741 = vshll.u32 2102212464, %v1729
        %v1742 = vshrl.u32 920167782, %v1730
        %v1743 = vor.u32 %v1741, %v1742
        %v1744 = vshll.u32 920167782, %v1729
        %v1745 = vshrl.u32 1326507024, %v1730
        %v1746 = vor.u32 %v1744, %v1745
        %vm1747 = vcmp.lt.s32.totalorder %v1728, 1
        %vm1748 = vcmp.lt.s32.totalorder %v1728, 2
        %vm1749 = vcmp.lt.s32.totalorder %v1728, 3
        %vm1750 = vcmp.lt.s32.totalorder %v1728, 4
        %v1751 = vsel %vm1747, %v1731, %v1734
        %v1752 = vsel %vm1750, %v1740, 2102212464
        %v1753 = vsel %vm1749, %v1737, %v1752
        %v1754 = vsel %vm1748, %v1751, %v1753
        %v1755 = vsel %vm1747, %v1734, %v1737
        %v1756 = vsel %vm1750, %v1743, 920167782
        %v1757 = vsel %vm1749, %v1740, %v1756
        %v1758 = vsel %vm1748, %v1755, %v1757
        %v1759 = vsel %vm1747, %v1737, %v1740
        %v1760 = vsel %vm1750, %v1746, 1326507024
        %v1761 = vsel %vm1749, %v1743, %v1760
        %v1762 = vsel %vm1748, %v1759, %v1761
        %v1763 = vshll.u32 %v1723, 8
        %v1764 = vmul.u32.u64.compose %v1763, %v1762
        %v1765 = vextract.low.u32 %v1764
        %v1766 = vextract.high.u32 %v1764
        %v1767 = vmul.u32.u64.compose %v1763, %v1758
        %v1768 = vextract.low.u32 %v1767
        %v1769 = vextract.high.u32 %v1767
        %v1770 = vmul.u32 %v1763, %v1754
        %v1771 = vadd.s32 %v1766, %v1768
        %vm1772 = vc.u32 %v1766, %v1768
        %v1773 = vadd.s32 %v1769, 1
        %v1774 = vsel %vm1772, %v1773, %v1769
        %v1775 = vadd.s32 %v1770, %v1774
        %v1776 = vadd.s32 %v1775, 536870912
        %v1777 = vshrl.u32 %v1776, 30
        %v1778 = vshll.u32 %v1777, 30
        %v1779 = vsub.s32 %v1775, %v1778
        %vm1780 = vcmp.lt.s32.totalorder %v1779, 0
        %v1781 = vsub.s32 0, %v1779
        %v1782 = vsel %vm1780, %v1781, %v1779
        %v1783 = vclz %v1782
        %v1784 = vsub.s32 %v1783, 2
        %vm1785 = vcmp.gt.s32.totalorder 0, %v1784
        %v1786 = vsel %vm1785, 0, %v1784
        %v1787 = vsub.s32 32, %v1786
        %v1788 = vshll.u32 %v1779, %v1786
        %v1789 = vshrl.u32 %v1771, %v1787
        %v1790 = vor.u32 %v1788, %v1789
        %v1791 = vsub.s32 4294967266, %v1786
        %v1792 = vadd.s32 %v1791, 127
        %v1793 = vshll.u32 %v1792, 23
        %v1794 = vor.u32 4788187, %v1793
        %v1795 = vand.u32 2147483647, %v1794
        %v1797 = vcvt.s32.f32 %v1790
        %v1798 = vmul.f32 %v1797, %v1795
        %v1799 = vxor.u32 %v1798, 2147483648
        %v1800 = vsel %vm1717, %v1799, %v1798
        %v1801 = vsub.s32 4, %v1777
        %v1802 = vsel %vm1717, %v1801, %v1777
        %v1803 = vsel %vm1716, %v550, %v1800
        %v1804 = vsel %vm1716, 0, %v1802
        %v1805 = vcosq.f32.pop %v1803
        %v1806 = vsinq.f32.pop %v1803
        %vm1807 = vweird.f32 %v550
        %v1808 = vadd.s32 %v1804, 3
        %v1809 = vand.u32 %v1808, 3
        %vm1810 = vcmp.lt.s32.totalorder %v1809, 2
        %vm1811 = vcmp.eq.s32.totalorder %v1809, 0
        %v1812 = vxor.u32 %v1806, 2147483648
        %v1813 = vsel %vm1811, %v1805, %v1812
        %vm1814 = vcmp.eq.s32.totalorder %v1809, 2
        %v1815 = vxor.u32 %v1805, 2147483648
        %v1816 = vsel %vm1814, %v1815, %v1806
        %v1817 = vsel %vm1810, %v1813, %v1816
        %v1818 = vsel %vm1807, nan, %v1817
        %v1819 = vand.u32 2147483647, %v551
        %vm1820 = vcmp.le.f32.partialorder %v1819, 0.7853982
        %vm1821 = vcmp.lt.s32.totalorder %v551, 0
        %v1822 = vand.u32 %v551, 2139095040
        %v1823 = vshrl.u32 %v1822, 23
        %v1824 = vsub.s32 %v1823, 127
        %v1825 = vand.u32 2147483647, %v551
        %v1826 = vand.u32 %v1825, 8388607
        %v1827 = vor.u32 %v1826, 8388608
        %v1828 = vsub.s32 0, %v1827
        %v1829 = vadd.s32 %v1824, 1
        %vm1830 = vcmp.gt.s32.totalorder %v1829, 0
        %v1831 = vsel %vm1830, %v1829, 0
        %v1832 = vshrl.u32 %v1831, 5
        %v1833 = vand.u32 %v1831, 31
        %v1834 = vsub.s32 32, %v1833
        %v1835 = vshrl.u32 683565275, %v1834
        %v1836 = vshll.u32 683565275, %v1833
        %v1837 = vshrl.u32 2475754826, %v1834
        %v1838 = vor.u32 %v1836, %v1837
        %v1839 = vshll.u32 2475754826, %v1833
        %v1840 = vshrl.u32 2131351028, %v1834
        %v1841 = vor.u32 %v1839, %v1840
        %v1842 = vshll.u32 2131351028, %v1833
        %v1843 = vshrl.u32 2102212464, %v1834
        %v1844 = vor.u32 %v1842, %v1843
        %v1845 = vshll.u32 2102212464, %v1833
        %v1846 = vshrl.u32 920167782, %v1834
        %v1847 = vor.u32 %v1845, %v1846
        %v1848 = vshll.u32 920167782, %v1833
        %v1849 = vshrl.u32 1326507024, %v1834
        %v1850 = vor.u32 %v1848, %v1849
        %vm1851 = vcmp.lt.s32.totalorder %v1832, 1
        %vm1852 = vcmp.lt.s32.totalorder %v1832, 2
        %vm1853 = vcmp.lt.s32.totalorder %v1832, 3
        %vm1854 = vcmp.lt.s32.totalorder %v1832, 4
        %v1855 = vsel %vm1851, %v1835, %v1838
        %v1856 = vsel %vm1854, %v1844, 2102212464
        %v1857 = vsel %vm1853, %v1841, %v1856
        %v1858 = vsel %vm1852, %v1855, %v1857
        %v1859 = vsel %vm1851, %v1838, %v1841
        %v1860 = vsel %vm1854, %v1847, 920167782
        %v1861 = vsel %vm1853, %v1844, %v1860
        %v1862 = vsel %vm1852, %v1859, %v1861
        %v1863 = vsel %vm1851, %v1841, %v1844
        %v1864 = vsel %vm1854, %v1850, 1326507024
        %v1865 = vsel %vm1853, %v1847, %v1864
        %v1866 = vsel %vm1852, %v1863, %v1865
        %v1867 = vshll.u32 %v1827, 8
        %v1868 = vmul.u32.u64.compose %v1867, %v1866
        %v1869 = vextract.low.u32 %v1868
        %v1870 = vextract.high.u32 %v1868
        %v1871 = vmul.u32.u64.compose %v1867, %v1862
        %v1872 = vextract.low.u32 %v1871
        %v1873 = vextract.high.u32 %v1871
        %v1874 = vmul.u32 %v1867, %v1858
        %v1875 = vadd.s32 %v1870, %v1872
        %vm1876 = vc.u32 %v1870, %v1872
        %v1877 = vadd.s32 %v1873, 1
        %v1878 = vsel %vm1876, %v1877, %v1873
        %v1879 = vadd.s32 %v1874, %v1878
        %v1880 = vadd.s32 %v1879, 536870912
        %v1881 = vshrl.u32 %v1880, 30
        %v1882 = vshll.u32 %v1881, 30
        %v1883 = vsub.s32 %v1879, %v1882
        %vm1884 = vcmp.lt.s32.totalorder %v1883, 0
        %v1885 = vsub.s32 0, %v1883
        %v1886 = vsel %vm1884, %v1885, %v1883
        %v1887 = vclz %v1886
        %v1888 = vsub.s32 %v1887, 2
        %vm1889 = vcmp.gt.s32.totalorder 0, %v1888
        %v1890 = vsel %vm1889, 0, %v1888
        %v1891 = vsub.s32 32, %v1890
        %v1892 = vshll.u32 %v1883, %v1890
        %v1893 = vshrl.u32 %v1875, %v1891
        %v1894 = vor.u32 %v1892, %v1893
        %v1895 = vsub.s32 4294967266, %v1890
        %v1896 = vadd.s32 %v1895, 127
        %v1897 = vshll.u32 %v1896, 23
        %v1898 = vor.u32 4788187, %v1897
        %v1899 = vand.u32 2147483647, %v1898
        %v1901 = vcvt.s32.f32 %v1894
        %v1902 = vmul.f32 %v1901, %v1899
        %v1903 = vxor.u32 %v1902, 2147483648
        %v1904 = vsel %vm1821, %v1903, %v1902
        %v1905 = vsub.s32 4, %v1881
        %v1906 = vsel %vm1821, %v1905, %v1881
        %v1907 = vsel %vm1820, %v551, %v1904
        %v1908 = vsel %vm1820, 0, %v1906
        %v1909 = vcosq.f32.pop %v1907
        %v1910 = vsinq.f32.pop %v1907
        %vm1911 = vweird.f32 %v551
        %v1912 = vadd.s32 %v1908, 3
        %v1913 = vand.u32 %v1912, 3
        %vm1914 = vcmp.lt.s32.totalorder %v1913, 2
        %vm1915 = vcmp.eq.s32.totalorder %v1913, 0
        %v1916 = vxor.u32 %v1910, 2147483648
        %v1917 = vsel %vm1915, %v1909, %v1916
        %vm1918 = vcmp.eq.s32.totalorder %v1913, 2
        %v1919 = vxor.u32 %v1909, 2147483648
        %v1920 = vsel %vm1918, %v1919, %v1910
        %v1921 = vsel %vm1914, %v1917, %v1920
        %v1922 = vsel %vm1911, nan, %v1921
        %v1923 = vand.u32 2147483647, %v552
        %vm1924 = vcmp.le.f32.partialorder %v1923, 0.7853982
        %vm1925 = vcmp.lt.s32.totalorder %v552, 0
        %v1926 = vand.u32 %v552, 2139095040
        %v1927 = vshrl.u32 %v1926, 23
        %v1928 = vsub.s32 %v1927, 127
        %v1929 = vand.u32 2147483647, %v552
        %v1930 = vand.u32 %v1929, 8388607
        %v1931 = vor.u32 %v1930, 8388608
        %v1932 = vsub.s32 0, %v1931
        %v1933 = vadd.s32 %v1928, 1
        %vm1934 = vcmp.gt.s32.totalorder %v1933, 0
        %v1935 = vsel %vm1934, %v1933, 0
        %v1936 = vshrl.u32 %v1935, 5
        %v1937 = vand.u32 %v1935, 31
        %v1938 = vsub.s32 32, %v1937
        %v1939 = vshrl.u32 683565275, %v1938
        %v1940 = vshll.u32 683565275, %v1937
        %v1941 = vshrl.u32 2475754826, %v1938
        %v1942 = vor.u32 %v1940, %v1941
        %v1943 = vshll.u32 2475754826, %v1937
        %v1944 = vshrl.u32 2131351028, %v1938
        %v1945 = vor.u32 %v1943, %v1944
        %v1946 = vshll.u32 2131351028, %v1937
        %v1947 = vshrl.u32 2102212464, %v1938
        %v1948 = vor.u32 %v1946, %v1947
        %v1949 = vshll.u32 2102212464, %v1937
        %v1950 = vshrl.u32 920167782, %v1938
        %v1951 = vor.u32 %v1949, %v1950
        %v1952 = vshll.u32 920167782, %v1937
        %v1953 = vshrl.u32 1326507024, %v1938
        %v1954 = vor.u32 %v1952, %v1953
        %vm1955 = vcmp.lt.s32.totalorder %v1936, 1
        %vm1956 = vcmp.lt.s32.totalorder %v1936, 2
        %vm1957 = vcmp.lt.s32.totalorder %v1936, 3
        %vm1958 = vcmp.lt.s32.totalorder %v1936, 4
        %v1959 = vsel %vm1955, %v1939, %v1942
        %v1960 = vsel %vm1958, %v1948, 2102212464
        %v1961 = vsel %vm1957, %v1945, %v1960
        %v1962 = vsel %vm1956, %v1959, %v1961
        %v1963 = vsel %vm1955, %v1942, %v1945
        %v1964 = vsel %vm1958, %v1951, 920167782
        %v1965 = vsel %vm1957, %v1948, %v1964
        %v1966 = vsel %vm1956, %v1963, %v1965
        %v1967 = vsel %vm1955, %v1945, %v1948
        %v1968 = vsel %vm1958, %v1954, 1326507024
        %v1969 = vsel %vm1957, %v1951, %v1968
        %v1970 = vsel %vm1956, %v1967, %v1969
        %v1971 = vshll.u32 %v1931, 8
        %v1972 = vmul.u32.u64.compose %v1971, %v1970
        %v1973 = vextract.low.u32 %v1972
        %v1974 = vextract.high.u32 %v1972
        %v1975 = vmul.u32.u64.compose %v1971, %v1966
        %v1976 = vextract.low.u32 %v1975
        %v1977 = vextract.high.u32 %v1975
        %v1978 = vmul.u32 %v1971, %v1962
        %v1979 = vadd.s32 %v1974, %v1976
        %vm1980 = vc.u32 %v1974, %v1976
        %v1981 = vadd.s32 %v1977, 1
        %v1982 = vsel %vm1980, %v1981, %v1977
        %v1983 = vadd.s32 %v1978, %v1982
        %v1984 = vadd.s32 %v1983, 536870912
        %v1985 = vshrl.u32 %v1984, 30
        %v1986 = vshll.u32 %v1985, 30
        %v1987 = vsub.s32 %v1983, %v1986
        %vm1988 = vcmp.lt.s32.totalorder %v1987, 0
        %v1989 = vsub.s32 0, %v1987
        %v1990 = vsel %vm1988, %v1989, %v1987
        %v1991 = vclz %v1990
        %v1992 = vsub.s32 %v1991, 2
        %vm1993 = vcmp.gt.s32.totalorder 0, %v1992
        %v1994 = vsel %vm1993, 0, %v1992
        %v1995 = vsub.s32 32, %v1994
        %v1996 = vshll.u32 %v1987, %v1994
        %v1997 = vshrl.u32 %v1979, %v1995
        %v1998 = vor.u32 %v1996, %v1997
        %v1999 = vsub.s32 4294967266, %v1994
        %v2000 = vadd.s32 %v1999, 127
        %v2001 = vshll.u32 %v2000, 23
        %v2002 = vor.u32 4788187, %v2001
        %v2003 = vand.u32 2147483647, %v2002
        %v2005 = vcvt.s32.f32 %v1998
        %v2006 = vmul.f32 %v2005, %v2003
        %v2007 = vxor.u32 %v2006, 2147483648
        %v2008 = vsel %vm1925, %v2007, %v2006
        %v2009 = vsub.s32 4, %v1985
        %v2010 = vsel %vm1925, %v2009, %v1985
        %v2011 = vsel %vm1924, %v552, %v2008
        %v2012 = vsel %vm1924, 0, %v2010
        %v2013 = vcosq.f32.pop %v2011
        %v2014 = vsinq.f32.pop %v2011
        %vm2015 = vweird.f32 %v552
        %v2016 = vadd.s32 %v2012, 3
        %v2017 = vand.u32 %v2016, 3
        %vm2018 = vcmp.lt.s32.totalorder %v2017, 2
        %vm2019 = vcmp.eq.s32.totalorder %v2017, 0
        %v2020 = vxor.u32 %v2014, 2147483648
        %v2021 = vsel %vm2019, %v2013, %v2020
        %vm2022 = vcmp.eq.s32.totalorder %v2017, 2
        %v2023 = vxor.u32 %v2013, 2147483648
        %v2024 = vsel %vm2022, %v2023, %v2014
        %v2025 = vsel %vm2018, %v2021, %v2024
        %v2026 = vsel %vm2015, nan, %v2025
        %v2027 = vand.u32 2147483647, %v553
        %vm2028 = vcmp.le.f32.partialorder %v2027, 0.7853982
        %vm2029 = vcmp.lt.s32.totalorder %v553, 0
        %v2030 = vand.u32 %v553, 2139095040
        %v2031 = vshrl.u32 %v2030, 23
        %v2032 = vsub.s32 %v2031, 127
        %v2033 = vand.u32 2147483647, %v553
        %v2034 = vand.u32 %v2033, 8388607
        %v2035 = vor.u32 %v2034, 8388608
        %v2036 = vsub.s32 0, %v2035
        %v2037 = vadd.s32 %v2032, 1
        %vm2038 = vcmp.gt.s32.totalorder %v2037, 0
        %v2039 = vsel %vm2038, %v2037, 0
        %v2040 = vshrl.u32 %v2039, 5
        %v2041 = vand.u32 %v2039, 31
        %v2042 = vsub.s32 32, %v2041
        %v2043 = vshrl.u32 683565275, %v2042
        %v2044 = vshll.u32 683565275, %v2041
        %v2045 = vshrl.u32 2475754826, %v2042
        %v2046 = vor.u32 %v2044, %v2045
        %v2047 = vshll.u32 2475754826, %v2041
        %v2048 = vshrl.u32 2131351028, %v2042
        %v2049 = vor.u32 %v2047, %v2048
        %v2050 = vshll.u32 2131351028, %v2041
        %v2051 = vshrl.u32 2102212464, %v2042
        %v2052 = vor.u32 %v2050, %v2051
        %v2053 = vshll.u32 2102212464, %v2041
        %v2054 = vshrl.u32 920167782, %v2042
        %v2055 = vor.u32 %v2053, %v2054
        %v2056 = vshll.u32 920167782, %v2041
        %v2057 = vshrl.u32 1326507024, %v2042
        %v2058 = vor.u32 %v2056, %v2057
        %vm2059 = vcmp.lt.s32.totalorder %v2040, 1
        %vm2060 = vcmp.lt.s32.totalorder %v2040, 2
        %vm2061 = vcmp.lt.s32.totalorder %v2040, 3
        %vm2062 = vcmp.lt.s32.totalorder %v2040, 4
        %v2063 = vsel %vm2059, %v2043, %v2046
        %v2064 = vsel %vm2062, %v2052, 2102212464
        %v2065 = vsel %vm2061, %v2049, %v2064
        %v2066 = vsel %vm2060, %v2063, %v2065
        %v2067 = vsel %vm2059, %v2046, %v2049
        %v2068 = vsel %vm2062, %v2055, 920167782
        %v2069 = vsel %vm2061, %v2052, %v2068
        %v2070 = vsel %vm2060, %v2067, %v2069
        %v2071 = vsel %vm2059, %v2049, %v2052
        %v2072 = vsel %vm2062, %v2058, 1326507024
        %v2073 = vsel %vm2061, %v2055, %v2072
        %v2074 = vsel %vm2060, %v2071, %v2073
        %v2075 = vshll.u32 %v2035, 8
        %v2076 = vmul.u32.u64.compose %v2075, %v2074
        %v2077 = vextract.low.u32 %v2076
        %v2078 = vextract.high.u32 %v2076
        %v2079 = vmul.u32.u64.compose %v2075, %v2070
        %v2080 = vextract.low.u32 %v2079
        %v2081 = vextract.high.u32 %v2079
        %v2082 = vmul.u32 %v2075, %v2066
        %v2083 = vadd.s32 %v2078, %v2080
        %vm2084 = vc.u32 %v2078, %v2080
        %v2085 = vadd.s32 %v2081, 1
        %v2086 = vsel %vm2084, %v2085, %v2081
        %v2087 = vadd.s32 %v2082, %v2086
        %v2088 = vadd.s32 %v2087, 536870912
        %v2089 = vshrl.u32 %v2088, 30
        %v2090 = vshll.u32 %v2089, 30
        %v2091 = vsub.s32 %v2087, %v2090
        %vm2092 = vcmp.lt.s32.totalorder %v2091, 0
        %v2093 = vsub.s32 0, %v2091
        %v2094 = vsel %vm2092, %v2093, %v2091
        %v2095 = vclz %v2094
        %v2096 = vsub.s32 %v2095, 2
        %vm2097 = vcmp.gt.s32.totalorder 0, %v2096
        %v2098 = vsel %vm2097, 0, %v2096
        %v2099 = vsub.s32 32, %v2098
        %v2100 = vshll.u32 %v2091, %v2098
        %v2101 = vshrl.u32 %v2083, %v2099
        %v2102 = vor.u32 %v2100, %v2101
        %v2103 = vsub.s32 4294967266, %v2098
        %v2104 = vadd.s32 %v2103, 127
        %v2105 = vshll.u32 %v2104, 23
        %v2106 = vor.u32 4788187, %v2105
        %v2107 = vand.u32 2147483647, %v2106
        %v2109 = vcvt.s32.f32 %v2102
        %v2110 = vmul.f32 %v2109, %v2107
        %v2111 = vxor.u32 %v2110, 2147483648
        %v2112 = vsel %vm2029, %v2111, %v2110
        %v2113 = vsub.s32 4, %v2089
        %v2114 = vsel %vm2029, %v2113, %v2089
        %v2115 = vsel %vm2028, %v553, %v2112
        %v2116 = vsel %vm2028, 0, %v2114
        %v2117 = vcosq.f32.pop %v2115
        %v2118 = vsinq.f32.pop %v2115
        %vm2119 = vweird.f32 %v553
        %v2120 = vadd.s32 %v2116, 3
        %v2121 = vand.u32 %v2120, 3
        %vm2122 = vcmp.lt.s32.totalorder %v2121, 2
        %vm2123 = vcmp.eq.s32.totalorder %v2121, 0
        %v2124 = vxor.u32 %v2118, 2147483648
        %v2125 = vsel %vm2123, %v2117, %v2124
        %vm2126 = vcmp.eq.s32.totalorder %v2121, 2
        %v2127 = vxor.u32 %v2117, 2147483648
        %v2128 = vsel %vm2126, %v2127, %v2118
        %v2129 = vsel %vm2122, %v2125, %v2128
        %v2130 = vsel %vm2119, nan, %v2129
        %v2131 = vand.u32 2147483647, %v554
        %vm2132 = vcmp.le.f32.partialorder %v2131, 0.7853982
        %vm2133 = vcmp.lt.s32.totalorder %v554, 0
        %v2134 = vand.u32 %v554, 2139095040
        %v2135 = vshrl.u32 %v2134, 23
        %v2136 = vsub.s32 %v2135, 127
        %v2137 = vand.u32 2147483647, %v554
        %v2138 = vand.u32 %v2137, 8388607
        %v2139 = vor.u32 %v2138, 8388608
        %v2140 = vsub.s32 0, %v2139
        %v2141 = vadd.s32 %v2136, 1
        %vm2142 = vcmp.gt.s32.totalorder %v2141, 0
        %v2143 = vsel %vm2142, %v2141, 0
        %v2144 = vshrl.u32 %v2143, 5
        %v2145 = vand.u32 %v2143, 31
        %v2146 = vsub.s32 32, %v2145
        %v2147 = vshrl.u32 683565275, %v2146
        %v2148 = vshll.u32 683565275, %v2145
        %v2149 = vshrl.u32 2475754826, %v2146
        %v2150 = vor.u32 %v2148, %v2149
        %v2151 = vshll.u32 2475754826, %v2145
        %v2152 = vshrl.u32 2131351028, %v2146
        %v2153 = vor.u32 %v2151, %v2152
        %v2154 = vshll.u32 2131351028, %v2145
        %v2155 = vshrl.u32 2102212464, %v2146
        %v2156 = vor.u32 %v2154, %v2155
        %v2157 = vshll.u32 2102212464, %v2145
        %v2158 = vshrl.u32 920167782, %v2146
        %v2159 = vor.u32 %v2157, %v2158
        %v2160 = vshll.u32 920167782, %v2145
        %v2161 = vshrl.u32 1326507024, %v2146
        %v2162 = vor.u32 %v2160, %v2161
        %vm2163 = vcmp.lt.s32.totalorder %v2144, 1
        %vm2164 = vcmp.lt.s32.totalorder %v2144, 2
        %vm2165 = vcmp.lt.s32.totalorder %v2144, 3
        %vm2166 = vcmp.lt.s32.totalorder %v2144, 4
        %v2167 = vsel %vm2163, %v2147, %v2150
        %v2168 = vsel %vm2166, %v2156, 2102212464
        %v2169 = vsel %vm2165, %v2153, %v2168
        %v2170 = vsel %vm2164, %v2167, %v2169
        %v2171 = vsel %vm2163, %v2150, %v2153
        %v2172 = vsel %vm2166, %v2159, 920167782
        %v2173 = vsel %vm2165, %v2156, %v2172
        %v2174 = vsel %vm2164, %v2171, %v2173
        %v2175 = vsel %vm2163, %v2153, %v2156
        %v2176 = vsel %vm2166, %v2162, 1326507024
        %v2177 = vsel %vm2165, %v2159, %v2176
        %v2178 = vsel %vm2164, %v2175, %v2177
        %v2179 = vshll.u32 %v2139, 8
        %v2180 = vmul.u32.u64.compose %v2179, %v2178
        %v2181 = vextract.low.u32 %v2180
        %v2182 = vextract.high.u32 %v2180
        %v2183 = vmul.u32.u64.compose %v2179, %v2174
        %v2184 = vextract.low.u32 %v2183
        %v2185 = vextract.high.u32 %v2183
        %v2186 = vmul.u32 %v2179, %v2170
        %v2187 = vadd.s32 %v2182, %v2184
        %vm2188 = vc.u32 %v2182, %v2184
        %v2189 = vadd.s32 %v2185, 1
        %v2190 = vsel %vm2188, %v2189, %v2185
        %v2191 = vadd.s32 %v2186, %v2190
        %v2192 = vadd.s32 %v2191, 536870912
        %v2193 = vshrl.u32 %v2192, 30
        %v2194 = vshll.u32 %v2193, 30
        %v2195 = vsub.s32 %v2191, %v2194
        %vm2196 = vcmp.lt.s32.totalorder %v2195, 0
        %v2197 = vsub.s32 0, %v2195
        %v2198 = vsel %vm2196, %v2197, %v2195
        %v2199 = vclz %v2198
        %v2200 = vsub.s32 %v2199, 2
        %vm2201 = vcmp.gt.s32.totalorder 0, %v2200
        %v2202 = vsel %vm2201, 0, %v2200
        %v2203 = vsub.s32 32, %v2202
        %v2204 = vshll.u32 %v2195, %v2202
        %v2205 = vshrl.u32 %v2187, %v2203
        %v2206 = vor.u32 %v2204, %v2205
        %v2207 = vsub.s32 4294967266, %v2202
        %v2208 = vadd.s32 %v2207, 127
        %v2209 = vshll.u32 %v2208, 23
        %v2210 = vor.u32 4788187, %v2209
        %v2211 = vand.u32 2147483647, %v2210
        %v2213 = vcvt.s32.f32 %v2206
        %v2214 = vmul.f32 %v2213, %v2211
        %v2215 = vxor.u32 %v2214, 2147483648
        %v2216 = vsel %vm2133, %v2215, %v2214
        %v2217 = vsub.s32 4, %v2193
        %v2218 = vsel %vm2133, %v2217, %v2193
        %v2219 = vsel %vm2132, %v554, %v2216
        %v2220 = vsel %vm2132, 0, %v2218
        %v2221 = vcosq.f32.pop %v2219
        %v2222 = vsinq.f32.pop %v2219
        %vm2223 = vweird.f32 %v554
        %v2224 = vadd.s32 %v2220, 3
        %v2225 = vand.u32 %v2224, 3
        %vm2226 = vcmp.lt.s32.totalorder %v2225, 2
        %vm2227 = vcmp.eq.s32.totalorder %v2225, 0
        %v2228 = vxor.u32 %v2222, 2147483648
        %v2229 = vsel %vm2227, %v2221, %v2228
        %vm2230 = vcmp.eq.s32.totalorder %v2225, 2
        %v2231 = vxor.u32 %v2221, 2147483648
        %v2232 = vsel %vm2230, %v2231, %v2222
        %v2233 = vsel %vm2226, %v2229, %v2232
        %v2234 = vsel %vm2223, nan, %v2233
        %v2235 = vand.u32 2147483647, %v555
        %vm2236 = vcmp.le.f32.partialorder %v2235, 0.7853982
        %vm2237 = vcmp.lt.s32.totalorder %v555, 0
        %v2238 = vand.u32 %v555, 2139095040
        %v2239 = vshrl.u32 %v2238, 23
        %v2240 = vsub.s32 %v2239, 127
        %v2241 = vand.u32 2147483647, %v555
        %v2242 = vand.u32 %v2241, 8388607
        %v2243 = vor.u32 %v2242, 8388608
        %v2244 = vsub.s32 0, %v2243
        %v2245 = vadd.s32 %v2240, 1
        %vm2246 = vcmp.gt.s32.totalorder %v2245, 0
        %v2247 = vsel %vm2246, %v2245, 0
        %v2248 = vshrl.u32 %v2247, 5
        %v2249 = vand.u32 %v2247, 31
        %v2250 = vsub.s32 32, %v2249
        %v2251 = vshrl.u32 683565275, %v2250
        %v2252 = vshll.u32 683565275, %v2249
        %v2253 = vshrl.u32 2475754826, %v2250
        %v2254 = vor.u32 %v2252, %v2253
        %v2255 = vshll.u32 2475754826, %v2249
        %v2256 = vshrl.u32 2131351028, %v2250
        %v2257 = vor.u32 %v2255, %v2256
        %v2258 = vshll.u32 2131351028, %v2249
        %v2259 = vshrl.u32 2102212464, %v2250
        %v2260 = vor.u32 %v2258, %v2259
        %v2261 = vshll.u32 2102212464, %v2249
        %v2262 = vshrl.u32 920167782, %v2250
        %v2263 = vor.u32 %v2261, %v2262
        %v2264 = vshll.u32 920167782, %v2249
        %v2265 = vshrl.u32 1326507024, %v2250
        %v2266 = vor.u32 %v2264, %v2265
        %vm2267 = vcmp.lt.s32.totalorder %v2248, 1
        %vm2268 = vcmp.lt.s32.totalorder %v2248, 2
        %vm2269 = vcmp.lt.s32.totalorder %v2248, 3
        %vm2270 = vcmp.lt.s32.totalorder %v2248, 4
        %v2271 = vsel %vm2267, %v2251, %v2254
        %v2272 = vsel %vm2270, %v2260, 2102212464
        %v2273 = vsel %vm2269, %v2257, %v2272
        %v2274 = vsel %vm2268, %v2271, %v2273
        %v2275 = vsel %vm2267, %v2254, %v2257
        %v2276 = vsel %vm2270, %v2263, 920167782
        %v2277 = vsel %vm2269, %v2260, %v2276
        %v2278 = vsel %vm2268, %v2275, %v2277
        %v2279 = vsel %vm2267, %v2257, %v2260
        %v2280 = vsel %vm2270, %v2266, 1326507024
        %v2281 = vsel %vm2269, %v2263, %v2280
        %v2282 = vsel %vm2268, %v2279, %v2281
        %v2283 = vshll.u32 %v2243, 8
        %v2284 = vmul.u32.u64.compose %v2283, %v2282
        %v2285 = vextract.low.u32 %v2284
        %v2286 = vextract.high.u32 %v2284
        %v2287 = vmul.u32.u64.compose %v2283, %v2278
        %v2288 = vextract.low.u32 %v2287
        %v2289 = vextract.high.u32 %v2287
        %v2290 = vmul.u32 %v2283, %v2274
        %v2291 = vadd.s32 %v2286, %v2288
        %vm2292 = vc.u32 %v2286, %v2288
        %v2293 = vadd.s32 %v2289, 1
        %v2294 = vsel %vm2292, %v2293, %v2289
        %v2295 = vadd.s32 %v2290, %v2294
        %v2296 = vadd.s32 %v2295, 536870912
        %v2297 = vshrl.u32 %v2296, 30
        %v2298 = vshll.u32 %v2297, 30
        %v2299 = vsub.s32 %v2295, %v2298
        %vm2300 = vcmp.lt.s32.totalorder %v2299, 0
        %v2301 = vsub.s32 0, %v2299
        %v2302 = vsel %vm2300, %v2301, %v2299
        %v2303 = vclz %v2302
        %v2304 = vsub.s32 %v2303, 2
        %vm2305 = vcmp.gt.s32.totalorder 0, %v2304
        %v2306 = vsel %vm2305, 0, %v2304
        %v2307 = vsub.s32 32, %v2306
        %v2308 = vshll.u32 %v2299, %v2306
        %v2309 = vshrl.u32 %v2291, %v2307
        %v2310 = vor.u32 %v2308, %v2309
        %v2311 = vsub.s32 4294967266, %v2306
        %v2312 = vadd.s32 %v2311, 127
        %v2313 = vshll.u32 %v2312, 23
        %v2314 = vor.u32 4788187, %v2313
        %v2315 = vand.u32 2147483647, %v2314
        %v2317 = vcvt.s32.f32 %v2310
        %v2318 = vmul.f32 %v2317, %v2315
        %v2319 = vxor.u32 %v2318, 2147483648
        %v2320 = vsel %vm2237, %v2319, %v2318
        %v2321 = vsub.s32 4, %v2297
        %v2322 = vsel %vm2237, %v2321, %v2297
        %v2323 = vsel %vm2236, %v555, %v2320
        %v2324 = vsel %vm2236, 0, %v2322
        %v2325 = vcosq.f32.pop %v2323
        %v2326 = vsinq.f32.pop %v2323
        %vm2327 = vweird.f32 %v555
        %v2328 = vadd.s32 %v2324, 3
        %v2329 = vand.u32 %v2328, 3
        %vm2330 = vcmp.lt.s32.totalorder %v2329, 2
        %vm2331 = vcmp.eq.s32.totalorder %v2329, 0
        %v2332 = vxor.u32 %v2326, 2147483648
        %v2333 = vsel %vm2331, %v2325, %v2332
        %vm2334 = vcmp.eq.s32.totalorder %v2329, 2
        %v2335 = vxor.u32 %v2325, 2147483648
        %v2336 = vsel %vm2334, %v2335, %v2326
        %v2337 = vsel %vm2330, %v2333, %v2336
        %v2338 = vsel %vm2327, nan, %v2337
        %v2339 = vand.u32 2147483647, %v556
        %vm2340 = vcmp.le.f32.partialorder %v2339, 0.7853982
        %vm2341 = vcmp.lt.s32.totalorder %v556, 0
        %v2342 = vand.u32 %v556, 2139095040
        %v2343 = vshrl.u32 %v2342, 23
        %v2344 = vsub.s32 %v2343, 127
        %v2345 = vand.u32 2147483647, %v556
        %v2346 = vand.u32 %v2345, 8388607
        %v2347 = vor.u32 %v2346, 8388608
        %v2348 = vsub.s32 0, %v2347
        %v2349 = vadd.s32 %v2344, 1
        %vm2350 = vcmp.gt.s32.totalorder %v2349, 0
        %v2351 = vsel %vm2350, %v2349, 0
        %v2352 = vshrl.u32 %v2351, 5
        %v2353 = vand.u32 %v2351, 31
        %v2354 = vsub.s32 32, %v2353
        %v2355 = vshrl.u32 683565275, %v2354
        %v2356 = vshll.u32 683565275, %v2353
        %v2357 = vshrl.u32 2475754826, %v2354
        %v2358 = vor.u32 %v2356, %v2357
        %v2359 = vshll.u32 2475754826, %v2353
        %v2360 = vshrl.u32 2131351028, %v2354
        %v2361 = vor.u32 %v2359, %v2360
        %v2362 = vshll.u32 2131351028, %v2353
        %v2363 = vshrl.u32 2102212464, %v2354
        %v2364 = vor.u32 %v2362, %v2363
        %v2365 = vshll.u32 2102212464, %v2353
        %v2366 = vshrl.u32 920167782, %v2354
        %v2367 = vor.u32 %v2365, %v2366
        %v2368 = vshll.u32 920167782, %v2353
        %v2369 = vshrl.u32 1326507024, %v2354
        %v2370 = vor.u32 %v2368, %v2369
        %vm2371 = vcmp.lt.s32.totalorder %v2352, 1
        %vm2372 = vcmp.lt.s32.totalorder %v2352, 2
        %vm2373 = vcmp.lt.s32.totalorder %v2352, 3
        %vm2374 = vcmp.lt.s32.totalorder %v2352, 4
        %v2375 = vsel %vm2371, %v2355, %v2358
        %v2376 = vsel %vm2374, %v2364, 2102212464
        %v2377 = vsel %vm2373, %v2361, %v2376
        %v2378 = vsel %vm2372, %v2375, %v2377
        %v2379 = vsel %vm2371, %v2358, %v2361
        %v2380 = vsel %vm2374, %v2367, 920167782
        %v2381 = vsel %vm2373, %v2364, %v2380
        %v2382 = vsel %vm2372, %v2379, %v2381
        %v2383 = vsel %vm2371, %v2361, %v2364
        %v2384 = vsel %vm2374, %v2370, 1326507024
        %v2385 = vsel %vm2373, %v2367, %v2384
        %v2386 = vsel %vm2372, %v2383, %v2385
        %v2387 = vshll.u32 %v2347, 8
        %v2388 = vmul.u32.u64.compose %v2387, %v2386
        %v2389 = vextract.low.u32 %v2388
        %v2390 = vextract.high.u32 %v2388
        %v2391 = vmul.u32.u64.compose %v2387, %v2382
        %v2392 = vextract.low.u32 %v2391
        %v2393 = vextract.high.u32 %v2391
        %v2394 = vmul.u32 %v2387, %v2378
        %v2395 = vadd.s32 %v2390, %v2392
        %vm2396 = vc.u32 %v2390, %v2392
        %v2397 = vadd.s32 %v2393, 1
        %v2398 = vsel %vm2396, %v2397, %v2393
        %v2399 = vadd.s32 %v2394, %v2398
        %v2400 = vadd.s32 %v2399, 536870912
        %v2401 = vshrl.u32 %v2400, 30
        %v2402 = vshll.u32 %v2401, 30
        %v2403 = vsub.s32 %v2399, %v2402
        %vm2404 = vcmp.lt.s32.totalorder %v2403, 0
        %v2405 = vsub.s32 0, %v2403
        %v2406 = vsel %vm2404, %v2405, %v2403
        %v2407 = vclz %v2406
        %v2408 = vsub.s32 %v2407, 2
        %vm2409 = vcmp.gt.s32.totalorder 0, %v2408
        %v2410 = vsel %vm2409, 0, %v2408
        %v2411 = vsub.s32 32, %v2410
        %v2412 = vshll.u32 %v2403, %v2410
        %v2413 = vshrl.u32 %v2395, %v2411
        %v2414 = vor.u32 %v2412, %v2413
        %v2415 = vsub.s32 4294967266, %v2410
        %v2416 = vadd.s32 %v2415, 127
        %v2417 = vshll.u32 %v2416, 23
        %v2418 = vor.u32 4788187, %v2417
        %v2419 = vand.u32 2147483647, %v2418
        %v2421 = vcvt.s32.f32 %v2414
        %v2422 = vmul.f32 %v2421, %v2419
        %v2423 = vxor.u32 %v2422, 2147483648
        %v2424 = vsel %vm2341, %v2423, %v2422
        %v2425 = vsub.s32 4, %v2401
        %v2426 = vsel %vm2341, %v2425, %v2401
        %v2427 = vsel %vm2340, %v556, %v2424
        %v2428 = vsel %vm2340, 0, %v2426
        %v2429 = vcosq.f32.pop %v2427
        %v2430 = vsinq.f32.pop %v2427
        %vm2431 = vweird.f32 %v556
        %v2432 = vadd.s32 %v2428, 3
        %v2433 = vand.u32 %v2432, 3
        %vm2434 = vcmp.lt.s32.totalorder %v2433, 2
        %vm2435 = vcmp.eq.s32.totalorder %v2433, 0
        %v2436 = vxor.u32 %v2430, 2147483648
        %v2437 = vsel %vm2435, %v2429, %v2436
        %vm2438 = vcmp.eq.s32.totalorder %v2433, 2
        %v2439 = vxor.u32 %v2429, 2147483648
        %v2440 = vsel %vm2438, %v2439, %v2430
        %v2441 = vsel %vm2434, %v2437, %v2440
        %v2442 = vsel %vm2431, nan, %v2441
        %v2443 = vand.u32 2147483647, %v557
        %vm2444 = vcmp.le.f32.partialorder %v2443, 0.7853982
        %vm2445 = vcmp.lt.s32.totalorder %v557, 0
        %v2446 = vand.u32 %v557, 2139095040
        %v2447 = vshrl.u32 %v2446, 23
        %v2448 = vsub.s32 %v2447, 127
        %v2449 = vand.u32 2147483647, %v557
        %v2450 = vand.u32 %v2449, 8388607
        %v2451 = vor.u32 %v2450, 8388608
        %v2452 = vsub.s32 0, %v2451
        %v2453 = vadd.s32 %v2448, 1
        %vm2454 = vcmp.gt.s32.totalorder %v2453, 0
        %v2455 = vsel %vm2454, %v2453, 0
        %v2456 = vshrl.u32 %v2455, 5
        %v2457 = vand.u32 %v2455, 31
        %v2458 = vsub.s32 32, %v2457
        %v2459 = vshrl.u32 683565275, %v2458
        %v2460 = vshll.u32 683565275, %v2457
        %v2461 = vshrl.u32 2475754826, %v2458
        %v2462 = vor.u32 %v2460, %v2461
        %v2463 = vshll.u32 2475754826, %v2457
        %v2464 = vshrl.u32 2131351028, %v2458
        %v2465 = vor.u32 %v2463, %v2464
        %v2466 = vshll.u32 2131351028, %v2457
        %v2467 = vshrl.u32 2102212464, %v2458
        %v2468 = vor.u32 %v2466, %v2467
        %v2469 = vshll.u32 2102212464, %v2457
        %v2470 = vshrl.u32 920167782, %v2458
        %v2471 = vor.u32 %v2469, %v2470
        %v2472 = vshll.u32 920167782, %v2457
        %v2473 = vshrl.u32 1326507024, %v2458
        %v2474 = vor.u32 %v2472, %v2473
        %vm2475 = vcmp.lt.s32.totalorder %v2456, 1
        %vm2476 = vcmp.lt.s32.totalorder %v2456, 2
        %vm2477 = vcmp.lt.s32.totalorder %v2456, 3
        %vm2478 = vcmp.lt.s32.totalorder %v2456, 4
        %v2479 = vsel %vm2475, %v2459, %v2462
        %v2480 = vsel %vm2478, %v2468, 2102212464
        %v2481 = vsel %vm2477, %v2465, %v2480
        %v2482 = vsel %vm2476, %v2479, %v2481
        %v2483 = vsel %vm2475, %v2462, %v2465
        %v2484 = vsel %vm2478, %v2471, 920167782
        %v2485 = vsel %vm2477, %v2468, %v2484
        %v2486 = vsel %vm2476, %v2483, %v2485
        %v2487 = vsel %vm2475, %v2465, %v2468
        %v2488 = vsel %vm2478, %v2474, 1326507024
        %v2489 = vsel %vm2477, %v2471, %v2488
        %v2490 = vsel %vm2476, %v2487, %v2489
        %v2491 = vshll.u32 %v2451, 8
        %v2492 = vmul.u32.u64.compose %v2491, %v2490
        %v2493 = vextract.low.u32 %v2492
        %v2494 = vextract.high.u32 %v2492
        %v2495 = vmul.u32.u64.compose %v2491, %v2486
        %v2496 = vextract.low.u32 %v2495
        %v2497 = vextract.high.u32 %v2495
        %v2498 = vmul.u32 %v2491, %v2482
        %v2499 = vadd.s32 %v2494, %v2496
        %vm2500 = vc.u32 %v2494, %v2496
        %v2501 = vadd.s32 %v2497, 1
        %v2502 = vsel %vm2500, %v2501, %v2497
        %v2503 = vadd.s32 %v2498, %v2502
        %v2504 = vadd.s32 %v2503, 536870912
        %v2505 = vshrl.u32 %v2504, 30
        %v2506 = vshll.u32 %v2505, 30
        %v2507 = vsub.s32 %v2503, %v2506
        %vm2508 = vcmp.lt.s32.totalorder %v2507, 0
        %v2509 = vsub.s32 0, %v2507
        %v2510 = vsel %vm2508, %v2509, %v2507
        %v2511 = vclz %v2510
        %v2512 = vsub.s32 %v2511, 2
        %vm2513 = vcmp.gt.s32.totalorder 0, %v2512
        %v2514 = vsel %vm2513, 0, %v2512
        %v2515 = vsub.s32 32, %v2514
        %v2516 = vshll.u32 %v2507, %v2514
        %v2517 = vshrl.u32 %v2499, %v2515
        %v2518 = vor.u32 %v2516, %v2517
        %v2519 = vsub.s32 4294967266, %v2514
        %v2520 = vadd.s32 %v2519, 127
        %v2521 = vshll.u32 %v2520, 23
        %v2522 = vor.u32 4788187, %v2521
        %v2523 = vand.u32 2147483647, %v2522
        %v2525 = vcvt.s32.f32 %v2518
        %v2526 = vmul.f32 %v2525, %v2523
        %v2527 = vxor.u32 %v2526, 2147483648
        %v2528 = vsel %vm2445, %v2527, %v2526
        %v2529 = vsub.s32 4, %v2505
        %v2530 = vsel %vm2445, %v2529, %v2505
        %v2531 = vsel %vm2444, %v557, %v2528
        %v2532 = vsel %vm2444, 0, %v2530
        %v2533 = vcosq.f32.pop %v2531
        %v2534 = vsinq.f32.pop %v2531
        %vm2535 = vweird.f32 %v557
        %v2536 = vadd.s32 %v2532, 3
        %v2537 = vand.u32 %v2536, 3
        %vm2538 = vcmp.lt.s32.totalorder %v2537, 2
        %vm2539 = vcmp.eq.s32.totalorder %v2537, 0
        %v2540 = vxor.u32 %v2534, 2147483648
        %v2541 = vsel %vm2539, %v2533, %v2540
        %vm2542 = vcmp.eq.s32.totalorder %v2537, 2
        %v2543 = vxor.u32 %v2533, 2147483648
        %v2544 = vsel %vm2542, %v2543, %v2534
        %v2545 = vsel %vm2538, %v2541, %v2544
        %v2546 = vsel %vm2535, nan, %v2545
        %v2547 = vand.u32 2147483647, %v558
        %vm2548 = vcmp.le.f32.partialorder %v2547, 0.7853982
        %vm2549 = vcmp.lt.s32.totalorder %v558, 0
        %v2550 = vand.u32 %v558, 2139095040
        %v2551 = vshrl.u32 %v2550, 23
        %v2552 = vsub.s32 %v2551, 127
        %v2553 = vand.u32 2147483647, %v558
        %v2554 = vand.u32 %v2553, 8388607
        %v2555 = vor.u32 %v2554, 8388608
        %v2556 = vsub.s32 0, %v2555
        %v2557 = vadd.s32 %v2552, 1
        %vm2558 = vcmp.gt.s32.totalorder %v2557, 0
        %v2559 = vsel %vm2558, %v2557, 0
        %v2560 = vshrl.u32 %v2559, 5
        %v2561 = vand.u32 %v2559, 31
        %v2562 = vsub.s32 32, %v2561
        %v2563 = vshrl.u32 683565275, %v2562
        %v2564 = vshll.u32 683565275, %v2561
        %v2565 = vshrl.u32 2475754826, %v2562
        %v2566 = vor.u32 %v2564, %v2565
        %v2567 = vshll.u32 2475754826, %v2561
        %v2568 = vshrl.u32 2131351028, %v2562
        %v2569 = vor.u32 %v2567, %v2568
        %v2570 = vshll.u32 2131351028, %v2561
        %v2571 = vshrl.u32 2102212464, %v2562
        %v2572 = vor.u32 %v2570, %v2571
        %v2573 = vshll.u32 2102212464, %v2561
        %v2574 = vshrl.u32 920167782, %v2562
        %v2575 = vor.u32 %v2573, %v2574
        %v2576 = vshll.u32 920167782, %v2561
        %v2577 = vshrl.u32 1326507024, %v2562
        %v2578 = vor.u32 %v2576, %v2577
        %vm2579 = vcmp.lt.s32.totalorder %v2560, 1
        %vm2580 = vcmp.lt.s32.totalorder %v2560, 2
        %vm2581 = vcmp.lt.s32.totalorder %v2560, 3
        %vm2582 = vcmp.lt.s32.totalorder %v2560, 4
        %v2583 = vsel %vm2579, %v2563, %v2566
        %v2584 = vsel %vm2582, %v2572, 2102212464
        %v2585 = vsel %vm2581, %v2569, %v2584
        %v2586 = vsel %vm2580, %v2583, %v2585
        %v2587 = vsel %vm2579, %v2566, %v2569
        %v2588 = vsel %vm2582, %v2575, 920167782
        %v2589 = vsel %vm2581, %v2572, %v2588
        %v2590 = vsel %vm2580, %v2587, %v2589
        %v2591 = vsel %vm2579, %v2569, %v2572
        %v2592 = vsel %vm2582, %v2578, 1326507024
        %v2593 = vsel %vm2581, %v2575, %v2592
        %v2594 = vsel %vm2580, %v2591, %v2593
        %v2595 = vshll.u32 %v2555, 8
        %v2596 = vmul.u32.u64.compose %v2595, %v2594
        %v2597 = vextract.low.u32 %v2596
        %v2598 = vextract.high.u32 %v2596
        %v2599 = vmul.u32.u64.compose %v2595, %v2590
        %v2600 = vextract.low.u32 %v2599
        %v2601 = vextract.high.u32 %v2599
        %v2602 = vmul.u32 %v2595, %v2586
        %v2603 = vadd.s32 %v2598, %v2600
        %vm2604 = vc.u32 %v2598, %v2600
        %v2605 = vadd.s32 %v2601, 1
        %v2606 = vsel %vm2604, %v2605, %v2601
        %v2607 = vadd.s32 %v2602, %v2606
        %v2608 = vadd.s32 %v2607, 536870912
        %v2609 = vshrl.u32 %v2608, 30
        %v2610 = vshll.u32 %v2609, 30
        %v2611 = vsub.s32 %v2607, %v2610
        %vm2612 = vcmp.lt.s32.totalorder %v2611, 0
        %v2613 = vsub.s32 0, %v2611
        %v2614 = vsel %vm2612, %v2613, %v2611
        %v2615 = vclz %v2614
        %v2616 = vsub.s32 %v2615, 2
        %vm2617 = vcmp.gt.s32.totalorder 0, %v2616
        %v2618 = vsel %vm2617, 0, %v2616
        %v2619 = vsub.s32 32, %v2618
        %v2620 = vshll.u32 %v2611, %v2618
        %v2621 = vshrl.u32 %v2603, %v2619
        %v2622 = vor.u32 %v2620, %v2621
        %v2623 = vsub.s32 4294967266, %v2618
        %v2624 = vadd.s32 %v2623, 127
        %v2625 = vshll.u32 %v2624, 23
        %v2626 = vor.u32 4788187, %v2625
        %v2627 = vand.u32 2147483647, %v2626
        %v2629 = vcvt.s32.f32 %v2622
        %v2630 = vmul.f32 %v2629, %v2627
        %v2631 = vxor.u32 %v2630, 2147483648
        %v2632 = vsel %vm2549, %v2631, %v2630
        %v2633 = vsub.s32 4, %v2609
        %v2634 = vsel %vm2549, %v2633, %v2609
        %v2635 = vsel %vm2548, %v558, %v2632
        %v2636 = vsel %vm2548, 0, %v2634
        %v2637 = vcosq.f32.pop %v2635
        %v2638 = vsinq.f32.pop %v2635
        %vm2639 = vweird.f32 %v558
        %v2640 = vadd.s32 %v2636, 3
        %v2641 = vand.u32 %v2640, 3
        %vm2642 = vcmp.lt.s32.totalorder %v2641, 2
        %vm2643 = vcmp.eq.s32.totalorder %v2641, 0
        %v2644 = vxor.u32 %v2638, 2147483648
        %v2645 = vsel %vm2643, %v2637, %v2644
        %vm2646 = vcmp.eq.s32.totalorder %v2641, 2
        %v2647 = vxor.u32 %v2637, 2147483648
        %v2648 = vsel %vm2646, %v2647, %v2638
        %v2649 = vsel %vm2642, %v2645, %v2648
        %v2650 = vsel %vm2639, nan, %v2649
        %v2651 = vand.u32 2147483647, %v559
        %vm2652 = vcmp.le.f32.partialorder %v2651, 0.7853982
        %vm2653 = vcmp.lt.s32.totalorder %v559, 0
        %v2654 = vand.u32 %v559, 2139095040
        %v2655 = vshrl.u32 %v2654, 23
        %v2656 = vsub.s32 %v2655, 127
        %v2657 = vand.u32 2147483647, %v559
        %v2658 = vand.u32 %v2657, 8388607
        %v2659 = vor.u32 %v2658, 8388608
        %v2660 = vsub.s32 0, %v2659
        %v2661 = vadd.s32 %v2656, 1
        %vm2662 = vcmp.gt.s32.totalorder %v2661, 0
        %v2663 = vsel %vm2662, %v2661, 0
        %v2664 = vshrl.u32 %v2663, 5
        %v2665 = vand.u32 %v2663, 31
        %v2666 = vsub.s32 32, %v2665
        %v2667 = vshrl.u32 683565275, %v2666
        %v2668 = vshll.u32 683565275, %v2665
        %v2669 = vshrl.u32 2475754826, %v2666
        %v2670 = vor.u32 %v2668, %v2669
        %v2671 = vshll.u32 2475754826, %v2665
        %v2672 = vshrl.u32 2131351028, %v2666
        %v2673 = vor.u32 %v2671, %v2672
        %v2674 = vshll.u32 2131351028, %v2665
        %v2675 = vshrl.u32 2102212464, %v2666
        %v2676 = vor.u32 %v2674, %v2675
        %v2677 = vshll.u32 2102212464, %v2665
        %v2678 = vshrl.u32 920167782, %v2666
        %v2679 = vor.u32 %v2677, %v2678
        %v2680 = vshll.u32 920167782, %v2665
        %v2681 = vshrl.u32 1326507024, %v2666
        %v2682 = vor.u32 %v2680, %v2681
        %vm2683 = vcmp.lt.s32.totalorder %v2664, 1
        %vm2684 = vcmp.lt.s32.totalorder %v2664, 2
        %vm2685 = vcmp.lt.s32.totalorder %v2664, 3
        %vm2686 = vcmp.lt.s32.totalorder %v2664, 4
        %v2687 = vsel %vm2683, %v2667, %v2670
        %v2688 = vsel %vm2686, %v2676, 2102212464
        %v2689 = vsel %vm2685, %v2673, %v2688
        %v2690 = vsel %vm2684, %v2687, %v2689
        %v2691 = vsel %vm2683, %v2670, %v2673
        %v2692 = vsel %vm2686, %v2679, 920167782
        %v2693 = vsel %vm2685, %v2676, %v2692
        %v2694 = vsel %vm2684, %v2691, %v2693
        %v2695 = vsel %vm2683, %v2673, %v2676
        %v2696 = vsel %vm2686, %v2682, 1326507024
        %v2697 = vsel %vm2685, %v2679, %v2696
        %v2698 = vsel %vm2684, %v2695, %v2697
        %v2699 = vshll.u32 %v2659, 8
        %v2700 = vmul.u32.u64.compose %v2699, %v2698
        %v2701 = vextract.low.u32 %v2700
        %v2702 = vextract.high.u32 %v2700
        %v2703 = vmul.u32.u64.compose %v2699, %v2694
        %v2704 = vextract.low.u32 %v2703
        %v2705 = vextract.high.u32 %v2703
        %v2706 = vmul.u32 %v2699, %v2690
        %v2707 = vadd.s32 %v2702, %v2704
        %vm2708 = vc.u32 %v2702, %v2704
        %v2709 = vadd.s32 %v2705, 1
        %v2710 = vsel %vm2708, %v2709, %v2705
        %v2711 = vadd.s32 %v2706, %v2710
        %v2712 = vadd.s32 %v2711, 536870912
        %v2713 = vshrl.u32 %v2712, 30
        %v2714 = vshll.u32 %v2713, 30
        %v2715 = vsub.s32 %v2711, %v2714
        %vm2716 = vcmp.lt.s32.totalorder %v2715, 0
        %v2717 = vsub.s32 0, %v2715
        %v2718 = vsel %vm2716, %v2717, %v2715
        %v2719 = vclz %v2718
        %v2720 = vsub.s32 %v2719, 2
        %vm2721 = vcmp.gt.s32.totalorder 0, %v2720
        %v2722 = vsel %vm2721, 0, %v2720
        %v2723 = vsub.s32 32, %v2722
        %v2724 = vshll.u32 %v2715, %v2722
        %v2725 = vshrl.u32 %v2707, %v2723
        %v2726 = vor.u32 %v2724, %v2725
        %v2727 = vsub.s32 4294967266, %v2722
        %v2728 = vadd.s32 %v2727, 127
        %v2729 = vshll.u32 %v2728, 23
        %v2730 = vor.u32 4788187, %v2729
        %v2731 = vand.u32 2147483647, %v2730
        %v2733 = vcvt.s32.f32 %v2726
        %v2734 = vmul.f32 %v2733, %v2731
        %v2735 = vxor.u32 %v2734, 2147483648
        %v2736 = vsel %vm2653, %v2735, %v2734
        %v2737 = vsub.s32 4, %v2713
        %v2738 = vsel %vm2653, %v2737, %v2713
        %v2739 = vsel %vm2652, %v559, %v2736
        %v2740 = vsel %vm2652, 0, %v2738
        %v2741 = vcosq.f32.pop %v2739
        %v2742 = vsinq.f32.pop %v2739
        %vm2743 = vweird.f32 %v559
        %v2744 = vadd.s32 %v2740, 3
        %v2745 = vand.u32 %v2744, 3
        %vm2746 = vcmp.lt.s32.totalorder %v2745, 2
        %vm2747 = vcmp.eq.s32.totalorder %v2745, 0
        %v2748 = vxor.u32 %v2742, 2147483648
        %v2749 = vsel %vm2747, %v2741, %v2748
        %vm2750 = vcmp.eq.s32.totalorder %v2745, 2
        %v2751 = vxor.u32 %v2741, 2147483648
        %v2752 = vsel %vm2750, %v2751, %v2742
        %v2753 = vsel %vm2746, %v2749, %v2752
        %v2754 = vsel %vm2743, nan, %v2753
        %v2755 = vand.u32 2147483647, %v560
        %vm2756 = vcmp.le.f32.partialorder %v2755, 0.7853982
        %vm2757 = vcmp.lt.s32.totalorder %v560, 0
        %v2758 = vand.u32 %v560, 2139095040
        %v2759 = vshrl.u32 %v2758, 23
        %v2760 = vsub.s32 %v2759, 127
        %v2761 = vand.u32 2147483647, %v560
        %v2762 = vand.u32 %v2761, 8388607
        %v2763 = vor.u32 %v2762, 8388608
        %v2764 = vsub.s32 0, %v2763
        %v2765 = vadd.s32 %v2760, 1
        %vm2766 = vcmp.gt.s32.totalorder %v2765, 0
        %v2767 = vsel %vm2766, %v2765, 0
        %v2768 = vshrl.u32 %v2767, 5
        %v2769 = vand.u32 %v2767, 31
        %v2770 = vsub.s32 32, %v2769
        %v2771 = vshrl.u32 683565275, %v2770
        %v2772 = vshll.u32 683565275, %v2769
        %v2773 = vshrl.u32 2475754826, %v2770
        %v2774 = vor.u32 %v2772, %v2773
        %v2775 = vshll.u32 2475754826, %v2769
        %v2776 = vshrl.u32 2131351028, %v2770
        %v2777 = vor.u32 %v2775, %v2776
        %v2778 = vshll.u32 2131351028, %v2769
        %v2779 = vshrl.u32 2102212464, %v2770
        %v2780 = vor.u32 %v2778, %v2779
        %v2781 = vshll.u32 2102212464, %v2769
        %v2782 = vshrl.u32 920167782, %v2770
        %v2783 = vor.u32 %v2781, %v2782
        %v2784 = vshll.u32 920167782, %v2769
        %v2785 = vshrl.u32 1326507024, %v2770
        %v2786 = vor.u32 %v2784, %v2785
        %vm2787 = vcmp.lt.s32.totalorder %v2768, 1
        %vm2788 = vcmp.lt.s32.totalorder %v2768, 2
        %vm2789 = vcmp.lt.s32.totalorder %v2768, 3
        %vm2790 = vcmp.lt.s32.totalorder %v2768, 4
        %v2791 = vsel %vm2787, %v2771, %v2774
        %v2792 = vsel %vm2790, %v2780, 2102212464
        %v2793 = vsel %vm2789, %v2777, %v2792
        %v2794 = vsel %vm2788, %v2791, %v2793
        %v2795 = vsel %vm2787, %v2774, %v2777
        %v2796 = vsel %vm2790, %v2783, 920167782
        %v2797 = vsel %vm2789, %v2780, %v2796
        %v2798 = vsel %vm2788, %v2795, %v2797
        %v2799 = vsel %vm2787, %v2777, %v2780
        %v2800 = vsel %vm2790, %v2786, 1326507024
        %v2801 = vsel %vm2789, %v2783, %v2800
        %v2802 = vsel %vm2788, %v2799, %v2801
        %v2803 = vshll.u32 %v2763, 8
        %v2804 = vmul.u32.u64.compose %v2803, %v2802
        %v2805 = vextract.low.u32 %v2804
        %v2806 = vextract.high.u32 %v2804
        %v2807 = vmul.u32.u64.compose %v2803, %v2798
        %v2808 = vextract.low.u32 %v2807
        %v2809 = vextract.high.u32 %v2807
        %v2810 = vmul.u32 %v2803, %v2794
        %v2811 = vadd.s32 %v2806, %v2808
        %vm2812 = vc.u32 %v2806, %v2808
        %v2813 = vadd.s32 %v2809, 1
        %v2814 = vsel %vm2812, %v2813, %v2809
        %v2815 = vadd.s32 %v2810, %v2814
        %v2816 = vadd.s32 %v2815, 536870912
        %v2817 = vshrl.u32 %v2816, 30
        %v2818 = vshll.u32 %v2817, 30
        %v2819 = vsub.s32 %v2815, %v2818
        %vm2820 = vcmp.lt.s32.totalorder %v2819, 0
        %v2821 = vsub.s32 0, %v2819
        %v2822 = vsel %vm2820, %v2821, %v2819
        %v2823 = vclz %v2822
        %v2824 = vsub.s32 %v2823, 2
        %vm2825 = vcmp.gt.s32.totalorder 0, %v2824
        %v2826 = vsel %vm2825, 0, %v2824
        %v2827 = vsub.s32 32, %v2826
        %v2828 = vshll.u32 %v2819, %v2826
        %v2829 = vshrl.u32 %v2811, %v2827
        %v2830 = vor.u32 %v2828, %v2829
        %v2831 = vsub.s32 4294967266, %v2826
        %v2832 = vadd.s32 %v2831, 127
        %v2833 = vshll.u32 %v2832, 23
        %v2834 = vor.u32 4788187, %v2833
        %v2835 = vand.u32 2147483647, %v2834
        %v2837 = vcvt.s32.f32 %v2830
        %v2838 = vmul.f32 %v2837, %v2835
        %v2839 = vxor.u32 %v2838, 2147483648
        %v2840 = vsel %vm2757, %v2839, %v2838
        %v2841 = vsub.s32 4, %v2817
        %v2842 = vsel %vm2757, %v2841, %v2817
        %v2843 = vsel %vm2756, %v560, %v2840
        %v2844 = vsel %vm2756, 0, %v2842
        %v2845 = vcosq.f32.pop %v2843
        %v2846 = vsinq.f32.pop %v2843
        %vm2847 = vweird.f32 %v560
        %v2848 = vadd.s32 %v2844, 3
        %v2849 = vand.u32 %v2848, 3
        %vm2850 = vcmp.lt.s32.totalorder %v2849, 2
        %vm2851 = vcmp.eq.s32.totalorder %v2849, 0
        %v2852 = vxor.u32 %v2846, 2147483648
        %v2853 = vsel %vm2851, %v2845, %v2852
        %vm2854 = vcmp.eq.s32.totalorder %v2849, 2
        %v2855 = vxor.u32 %v2845, 2147483648
        %v2856 = vsel %vm2854, %v2855, %v2846
        %v2857 = vsel %vm2850, %v2853, %v2856
        %v2858 = vsel %vm2847, nan, %v2857
        %v2859 = vand.u32 2147483647, %v561
        %vm2860 = vcmp.le.f32.partialorder %v2859, 0.7853982
        %vm2861 = vcmp.lt.s32.totalorder %v561, 0
        %v2862 = vand.u32 %v561, 2139095040
        %v2863 = vshrl.u32 %v2862, 23
        %v2864 = vsub.s32 %v2863, 127
        %v2865 = vand.u32 2147483647, %v561
        %v2866 = vand.u32 %v2865, 8388607
        %v2867 = vor.u32 %v2866, 8388608
        %v2868 = vsub.s32 0, %v2867
        %v2869 = vadd.s32 %v2864, 1
        %vm2870 = vcmp.gt.s32.totalorder %v2869, 0
        %v2871 = vsel %vm2870, %v2869, 0
        %v2872 = vshrl.u32 %v2871, 5
        %v2873 = vand.u32 %v2871, 31
        %v2874 = vsub.s32 32, %v2873
        %v2875 = vshrl.u32 683565275, %v2874
        %v2876 = vshll.u32 683565275, %v2873
        %v2877 = vshrl.u32 2475754826, %v2874
        %v2878 = vor.u32 %v2876, %v2877
        %v2879 = vshll.u32 2475754826, %v2873
        %v2880 = vshrl.u32 2131351028, %v2874
        %v2881 = vor.u32 %v2879, %v2880
        %v2882 = vshll.u32 2131351028, %v2873
        %v2883 = vshrl.u32 2102212464, %v2874
        %v2884 = vor.u32 %v2882, %v2883
        %v2885 = vshll.u32 2102212464, %v2873
        %v2886 = vshrl.u32 920167782, %v2874
        %v2887 = vor.u32 %v2885, %v2886
        %v2888 = vshll.u32 920167782, %v2873
        %v2889 = vshrl.u32 1326507024, %v2874
        %v2890 = vor.u32 %v2888, %v2889
        %vm2891 = vcmp.lt.s32.totalorder %v2872, 1
        %vm2892 = vcmp.lt.s32.totalorder %v2872, 2
        %vm2893 = vcmp.lt.s32.totalorder %v2872, 3
        %vm2894 = vcmp.lt.s32.totalorder %v2872, 4
        %v2895 = vsel %vm2891, %v2875, %v2878
        %v2896 = vsel %vm2894, %v2884, 2102212464
        %v2897 = vsel %vm2893, %v2881, %v2896
        %v2898 = vsel %vm2892, %v2895, %v2897
        %v2899 = vsel %vm2891, %v2878, %v2881
        %v2900 = vsel %vm2894, %v2887, 920167782
        %v2901 = vsel %vm2893, %v2884, %v2900
        %v2902 = vsel %vm2892, %v2899, %v2901
        %v2903 = vsel %vm2891, %v2881, %v2884
        %v2904 = vsel %vm2894, %v2890, 1326507024
        %v2905 = vsel %vm2893, %v2887, %v2904
        %v2906 = vsel %vm2892, %v2903, %v2905
        %v2907 = vshll.u32 %v2867, 8
        %v2908 = vmul.u32.u64.compose %v2907, %v2906
        %v2909 = vextract.low.u32 %v2908
        %v2910 = vextract.high.u32 %v2908
        %v2911 = vmul.u32.u64.compose %v2907, %v2902
        %v2912 = vextract.low.u32 %v2911
        %v2913 = vextract.high.u32 %v2911
        %v2914 = vmul.u32 %v2907, %v2898
        %v2915 = vadd.s32 %v2910, %v2912
        %vm2916 = vc.u32 %v2910, %v2912
        %v2917 = vadd.s32 %v2913, 1
        %v2918 = vsel %vm2916, %v2917, %v2913
        %v2919 = vadd.s32 %v2914, %v2918
        %v2920 = vadd.s32 %v2919, 536870912
        %v2921 = vshrl.u32 %v2920, 30
        %v2922 = vshll.u32 %v2921, 30
        %v2923 = vsub.s32 %v2919, %v2922
        %vm2924 = vcmp.lt.s32.totalorder %v2923, 0
        %v2925 = vsub.s32 0, %v2923
        %v2926 = vsel %vm2924, %v2925, %v2923
        %v2927 = vclz %v2926
        %v2928 = vsub.s32 %v2927, 2
        %vm2929 = vcmp.gt.s32.totalorder 0, %v2928
        %v2930 = vsel %vm2929, 0, %v2928
        %v2931 = vsub.s32 32, %v2930
        %v2932 = vshll.u32 %v2923, %v2930
        %v2933 = vshrl.u32 %v2915, %v2931
        %v2934 = vor.u32 %v2932, %v2933
        %v2935 = vsub.s32 4294967266, %v2930
        %v2936 = vadd.s32 %v2935, 127
        %v2937 = vshll.u32 %v2936, 23
        %v2938 = vor.u32 4788187, %v2937
        %v2939 = vand.u32 2147483647, %v2938
        %v2941 = vcvt.s32.f32 %v2934
        %v2942 = vmul.f32 %v2941, %v2939
        %v2943 = vxor.u32 %v2942, 2147483648
        %v2944 = vsel %vm2861, %v2943, %v2942
        %v2945 = vsub.s32 4, %v2921
        %v2946 = vsel %vm2861, %v2945, %v2921
        %v2947 = vsel %vm2860, %v561, %v2944
        %v2948 = vsel %vm2860, 0, %v2946
        %v2949 = vcosq.f32.pop %v2947
        %v2950 = vsinq.f32.pop %v2947
        %vm2951 = vweird.f32 %v561
        %v2952 = vadd.s32 %v2948, 3
        %v2953 = vand.u32 %v2952, 3
        %vm2954 = vcmp.lt.s32.totalorder %v2953, 2
        %vm2955 = vcmp.eq.s32.totalorder %v2953, 0
        %v2956 = vxor.u32 %v2950, 2147483648
        %v2957 = vsel %vm2955, %v2949, %v2956
        %vm2958 = vcmp.eq.s32.totalorder %v2953, 2
        %v2959 = vxor.u32 %v2949, 2147483648
        %v2960 = vsel %vm2958, %v2959, %v2950
        %v2961 = vsel %vm2954, %v2957, %v2960
        %v2962 = vsel %vm2951, nan, %v2961
        %v2963 = vand.u32 2147483647, %v562
        %vm2964 = vcmp.le.f32.partialorder %v2963, 0.7853982
        %vm2965 = vcmp.lt.s32.totalorder %v562, 0
        %v2966 = vand.u32 %v562, 2139095040
        %v2967 = vshrl.u32 %v2966, 23
        %v2968 = vsub.s32 %v2967, 127
        %v2969 = vand.u32 2147483647, %v562
        %v2970 = vand.u32 %v2969, 8388607
        %v2971 = vor.u32 %v2970, 8388608
        %v2972 = vsub.s32 0, %v2971
        %v2973 = vadd.s32 %v2968, 1
        %vm2974 = vcmp.gt.s32.totalorder %v2973, 0
        %v2975 = vsel %vm2974, %v2973, 0
        %v2976 = vshrl.u32 %v2975, 5
        %v2977 = vand.u32 %v2975, 31
        %v2978 = vsub.s32 32, %v2977
        %v2979 = vshrl.u32 683565275, %v2978
        %v2980 = vshll.u32 683565275, %v2977
        %v2981 = vshrl.u32 2475754826, %v2978
        %v2982 = vor.u32 %v2980, %v2981
        %v2983 = vshll.u32 2475754826, %v2977
        %v2984 = vshrl.u32 2131351028, %v2978
        %v2985 = vor.u32 %v2983, %v2984
        %v2986 = vshll.u32 2131351028, %v2977
        %v2987 = vshrl.u32 2102212464, %v2978
        %v2988 = vor.u32 %v2986, %v2987
        %v2989 = vshll.u32 2102212464, %v2977
        %v2990 = vshrl.u32 920167782, %v2978
        %v2991 = vor.u32 %v2989, %v2990
        %v2992 = vshll.u32 920167782, %v2977
        %v2993 = vshrl.u32 1326507024, %v2978
        %v2994 = vor.u32 %v2992, %v2993
        %vm2995 = vcmp.lt.s32.totalorder %v2976, 1
        %vm2996 = vcmp.lt.s32.totalorder %v2976, 2
        %vm2997 = vcmp.lt.s32.totalorder %v2976, 3
        %vm2998 = vcmp.lt.s32.totalorder %v2976, 4
        %v2999 = vsel %vm2995, %v2979, %v2982
        %v3000 = vsel %vm2998, %v2988, 2102212464
        %v3001 = vsel %vm2997, %v2985, %v3000
        %v3002 = vsel %vm2996, %v2999, %v3001
        %v3003 = vsel %vm2995, %v2982, %v2985
        %v3004 = vsel %vm2998, %v2991, 920167782
        %v3005 = vsel %vm2997, %v2988, %v3004
        %v3006 = vsel %vm2996, %v3003, %v3005
        %v3007 = vsel %vm2995, %v2985, %v2988
        %v3008 = vsel %vm2998, %v2994, 1326507024
        %v3009 = vsel %vm2997, %v2991, %v3008
        %v3010 = vsel %vm2996, %v3007, %v3009
        %v3011 = vshll.u32 %v2971, 8
        %v3012 = vmul.u32.u64.compose %v3011, %v3010
        %v3013 = vextract.low.u32 %v3012
        %v3014 = vextract.high.u32 %v3012
        %v3015 = vmul.u32.u64.compose %v3011, %v3006
        %v3016 = vextract.low.u32 %v3015
        %v3017 = vextract.high.u32 %v3015
        %v3018 = vmul.u32 %v3011, %v3002
        %v3019 = vadd.s32 %v3014, %v3016
        %vm3020 = vc.u32 %v3014, %v3016
        %v3021 = vadd.s32 %v3017, 1
        %v3022 = vsel %vm3020, %v3021, %v3017
        %v3023 = vadd.s32 %v3018, %v3022
        %v3024 = vadd.s32 %v3023, 536870912
        %v3025 = vshrl.u32 %v3024, 30
        %v3026 = vshll.u32 %v3025, 30
        %v3027 = vsub.s32 %v3023, %v3026
        %vm3028 = vcmp.lt.s32.totalorder %v3027, 0
        %v3029 = vsub.s32 0, %v3027
        %v3030 = vsel %vm3028, %v3029, %v3027
        %v3031 = vclz %v3030
        %v3032 = vsub.s32 %v3031, 2
        %vm3033 = vcmp.gt.s32.totalorder 0, %v3032
        %v3034 = vsel %vm3033, 0, %v3032
        %v3035 = vsub.s32 32, %v3034
        %v3036 = vshll.u32 %v3027, %v3034
        %v3037 = vshrl.u32 %v3019, %v3035
        %v3038 = vor.u32 %v3036, %v3037
        %v3039 = vsub.s32 4294967266, %v3034
        %v3040 = vadd.s32 %v3039, 127
        %v3041 = vshll.u32 %v3040, 23
        %v3042 = vor.u32 4788187, %v3041
        %v3043 = vand.u32 2147483647, %v3042
        %v3045 = vcvt.s32.f32 %v3038
        %v3046 = vmul.f32 %v3045, %v3043
        %v3047 = vxor.u32 %v3046, 2147483648
        %v3048 = vsel %vm2965, %v3047, %v3046
        %v3049 = vsub.s32 4, %v3025
        %v3050 = vsel %vm2965, %v3049, %v3025
        %v3051 = vsel %vm2964, %v562, %v3048
        %v3052 = vsel %vm2964, 0, %v3050
        %v3053 = vcosq.f32.pop %v3051
        %v3054 = vsinq.f32.pop %v3051
        %vm3055 = vweird.f32 %v562
        %v3056 = vadd.s32 %v3052, 3
        %v3057 = vand.u32 %v3056, 3
        %vm3058 = vcmp.lt.s32.totalorder %v3057, 2
        %vm3059 = vcmp.eq.s32.totalorder %v3057, 0
        %v3060 = vxor.u32 %v3054, 2147483648
        %v3061 = vsel %vm3059, %v3053, %v3060
        %vm3062 = vcmp.eq.s32.totalorder %v3057, 2
        %v3063 = vxor.u32 %v3053, 2147483648
        %v3064 = vsel %vm3062, %v3063, %v3054
        %v3065 = vsel %vm3058, %v3061, %v3064
        %v3066 = vsel %vm3055, nan, %v3065
        %v3067 = vand.u32 2147483647, %v563
        %vm3068 = vcmp.le.f32.partialorder %v3067, 0.7853982
        %vm3069 = vcmp.lt.s32.totalorder %v563, 0
        %v3070 = vand.u32 %v563, 2139095040
        %v3071 = vshrl.u32 %v3070, 23
        %v3072 = vsub.s32 %v3071, 127
        %v3073 = vand.u32 2147483647, %v563
        %v3074 = vand.u32 %v3073, 8388607
        %v3075 = vor.u32 %v3074, 8388608
        %v3076 = vsub.s32 0, %v3075
        %v3077 = vadd.s32 %v3072, 1
        %vm3078 = vcmp.gt.s32.totalorder %v3077, 0
        %v3079 = vsel %vm3078, %v3077, 0
        %v3080 = vshrl.u32 %v3079, 5
        %v3081 = vand.u32 %v3079, 31
        %v3082 = vsub.s32 32, %v3081
        %v3083 = vshrl.u32 683565275, %v3082
        %v3084 = vshll.u32 683565275, %v3081
        %v3085 = vshrl.u32 2475754826, %v3082
        %v3086 = vor.u32 %v3084, %v3085
        %v3087 = vshll.u32 2475754826, %v3081
        %v3088 = vshrl.u32 2131351028, %v3082
        %v3089 = vor.u32 %v3087, %v3088
        %v3090 = vshll.u32 2131351028, %v3081
        %v3091 = vshrl.u32 2102212464, %v3082
        %v3092 = vor.u32 %v3090, %v3091
        %v3093 = vshll.u32 2102212464, %v3081
        %v3094 = vshrl.u32 920167782, %v3082
        %v3095 = vor.u32 %v3093, %v3094
        %v3096 = vshll.u32 920167782, %v3081
        %v3097 = vshrl.u32 1326507024, %v3082
        %v3098 = vor.u32 %v3096, %v3097
        %vm3099 = vcmp.lt.s32.totalorder %v3080, 1
        %vm3100 = vcmp.lt.s32.totalorder %v3080, 2
        %vm3101 = vcmp.lt.s32.totalorder %v3080, 3
        %vm3102 = vcmp.lt.s32.totalorder %v3080, 4
        %v3103 = vsel %vm3099, %v3083, %v3086
        %v3104 = vsel %vm3102, %v3092, 2102212464
        %v3105 = vsel %vm3101, %v3089, %v3104
        %v3106 = vsel %vm3100, %v3103, %v3105
        %v3107 = vsel %vm3099, %v3086, %v3089
        %v3108 = vsel %vm3102, %v3095, 920167782
        %v3109 = vsel %vm3101, %v3092, %v3108
        %v3110 = vsel %vm3100, %v3107, %v3109
        %v3111 = vsel %vm3099, %v3089, %v3092
        %v3112 = vsel %vm3102, %v3098, 1326507024
        %v3113 = vsel %vm3101, %v3095, %v3112
        %v3114 = vsel %vm3100, %v3111, %v3113
        %v3115 = vshll.u32 %v3075, 8
        %v3116 = vmul.u32.u64.compose %v3115, %v3114
        %v3117 = vextract.low.u32 %v3116
        %v3118 = vextract.high.u32 %v3116
        %v3119 = vmul.u32.u64.compose %v3115, %v3110
        %v3120 = vextract.low.u32 %v3119
        %v3121 = vextract.high.u32 %v3119
        %v3122 = vmul.u32 %v3115, %v3106
        %v3123 = vadd.s32 %v3118, %v3120
        %vm3124 = vc.u32 %v3118, %v3120
        %v3125 = vadd.s32 %v3121, 1
        %v3126 = vsel %vm3124, %v3125, %v3121
        %v3127 = vadd.s32 %v3122, %v3126
        %v3128 = vadd.s32 %v3127, 536870912
        %v3129 = vshrl.u32 %v3128, 30
        %v3130 = vshll.u32 %v3129, 30
        %v3131 = vsub.s32 %v3127, %v3130
        %vm3132 = vcmp.lt.s32.totalorder %v3131, 0
        %v3133 = vsub.s32 0, %v3131
        %v3134 = vsel %vm3132, %v3133, %v3131
        %v3135 = vclz %v3134
        %v3136 = vsub.s32 %v3135, 2
        %vm3137 = vcmp.gt.s32.totalorder 0, %v3136
        %v3138 = vsel %vm3137, 0, %v3136
        %v3139 = vsub.s32 32, %v3138
        %v3140 = vshll.u32 %v3131, %v3138
        %v3141 = vshrl.u32 %v3123, %v3139
        %v3142 = vor.u32 %v3140, %v3141
        %v3143 = vsub.s32 4294967266, %v3138
        %v3144 = vadd.s32 %v3143, 127
        %v3145 = vshll.u32 %v3144, 23
        %v3146 = vor.u32 4788187, %v3145
        %v3147 = vand.u32 2147483647, %v3146
        %v3149 = vcvt.s32.f32 %v3142
        %v3150 = vmul.f32 %v3149, %v3147
        %v3151 = vxor.u32 %v3150, 2147483648
        %v3152 = vsel %vm3069, %v3151, %v3150
        %v3153 = vsub.s32 4, %v3129
        %v3154 = vsel %vm3069, %v3153, %v3129
        %v3155 = vsel %vm3068, %v563, %v3152
        %v3156 = vsel %vm3068, 0, %v3154
        %v3157 = vcosq.f32.pop %v3155
        %v3158 = vsinq.f32.pop %v3155
        %vm3159 = vweird.f32 %v563
        %v3160 = vadd.s32 %v3156, 3
        %v3161 = vand.u32 %v3160, 3
        %vm3162 = vcmp.lt.s32.totalorder %v3161, 2
        %vm3163 = vcmp.eq.s32.totalorder %v3161, 0
        %v3164 = vxor.u32 %v3158, 2147483648
        %v3165 = vsel %vm3163, %v3157, %v3164
        %vm3166 = vcmp.eq.s32.totalorder %v3161, 2
        %v3167 = vxor.u32 %v3157, 2147483648
        %v3168 = vsel %vm3166, %v3167, %v3158
        %v3169 = vsel %vm3162, %v3165, %v3168
        %v3170 = vsel %vm3159, nan, %v3169
        %v3171 = vand.u32 2147483647, %v564
        %vm3172 = vcmp.le.f32.partialorder %v3171, 0.7853982
        %vm3173 = vcmp.lt.s32.totalorder %v564, 0
        %v3174 = vand.u32 %v564, 2139095040
        %v3175 = vshrl.u32 %v3174, 23
        %v3176 = vsub.s32 %v3175, 127
        %v3177 = vand.u32 2147483647, %v564
        %v3178 = vand.u32 %v3177, 8388607
        %v3179 = vor.u32 %v3178, 8388608
        %v3180 = vsub.s32 0, %v3179
        %v3181 = vadd.s32 %v3176, 1
        %vm3182 = vcmp.gt.s32.totalorder %v3181, 0
        %v3183 = vsel %vm3182, %v3181, 0
        %v3184 = vshrl.u32 %v3183, 5
        %v3185 = vand.u32 %v3183, 31
        %v3186 = vsub.s32 32, %v3185
        %v3187 = vshrl.u32 683565275, %v3186
        %v3188 = vshll.u32 683565275, %v3185
        %v3189 = vshrl.u32 2475754826, %v3186
        %v3190 = vor.u32 %v3188, %v3189
        %v3191 = vshll.u32 2475754826, %v3185
        %v3192 = vshrl.u32 2131351028, %v3186
        %v3193 = vor.u32 %v3191, %v3192
        %v3194 = vshll.u32 2131351028, %v3185
        %v3195 = vshrl.u32 2102212464, %v3186
        %v3196 = vor.u32 %v3194, %v3195
        %v3197 = vshll.u32 2102212464, %v3185
        %v3198 = vshrl.u32 920167782, %v3186
        %v3199 = vor.u32 %v3197, %v3198
        %v3200 = vshll.u32 920167782, %v3185
        %v3201 = vshrl.u32 1326507024, %v3186
        %v3202 = vor.u32 %v3200, %v3201
        %vm3203 = vcmp.lt.s32.totalorder %v3184, 1
        %vm3204 = vcmp.lt.s32.totalorder %v3184, 2
        %vm3205 = vcmp.lt.s32.totalorder %v3184, 3
        %vm3206 = vcmp.lt.s32.totalorder %v3184, 4
        %v3207 = vsel %vm3203, %v3187, %v3190
        %v3208 = vsel %vm3206, %v3196, 2102212464
        %v3209 = vsel %vm3205, %v3193, %v3208
        %v3210 = vsel %vm3204, %v3207, %v3209
        %v3211 = vsel %vm3203, %v3190, %v3193
        %v3212 = vsel %vm3206, %v3199, 920167782
        %v3213 = vsel %vm3205, %v3196, %v3212
        %v3214 = vsel %vm3204, %v3211, %v3213
        %v3215 = vsel %vm3203, %v3193, %v3196
        %v3216 = vsel %vm3206, %v3202, 1326507024
        %v3217 = vsel %vm3205, %v3199, %v3216
        %v3218 = vsel %vm3204, %v3215, %v3217
        %v3219 = vshll.u32 %v3179, 8
        %v3220 = vmul.u32.u64.compose %v3219, %v3218
        %v3221 = vextract.low.u32 %v3220
        %v3222 = vextract.high.u32 %v3220
        %v3223 = vmul.u32.u64.compose %v3219, %v3214
        %v3224 = vextract.low.u32 %v3223
        %v3225 = vextract.high.u32 %v3223
        %v3226 = vmul.u32 %v3219, %v3210
        %v3227 = vadd.s32 %v3222, %v3224
        %vm3228 = vc.u32 %v3222, %v3224
        %v3229 = vadd.s32 %v3225, 1
        %v3230 = vsel %vm3228, %v3229, %v3225
        %v3231 = vadd.s32 %v3226, %v3230
        %v3232 = vadd.s32 %v3231, 536870912
        %v3233 = vshrl.u32 %v3232, 30
        %v3234 = vshll.u32 %v3233, 30
        %v3235 = vsub.s32 %v3231, %v3234
        %vm3236 = vcmp.lt.s32.totalorder %v3235, 0
        %v3237 = vsub.s32 0, %v3235
        %v3238 = vsel %vm3236, %v3237, %v3235
        %v3239 = vclz %v3238
        %v3240 = vsub.s32 %v3239, 2
        %vm3241 = vcmp.gt.s32.totalorder 0, %v3240
        %v3242 = vsel %vm3241, 0, %v3240
        %v3243 = vsub.s32 32, %v3242
        %v3244 = vshll.u32 %v3235, %v3242
        %v3245 = vshrl.u32 %v3227, %v3243
        %v3246 = vor.u32 %v3244, %v3245
        %v3247 = vsub.s32 4294967266, %v3242
        %v3248 = vadd.s32 %v3247, 127
        %v3249 = vshll.u32 %v3248, 23
        %v3250 = vor.u32 4788187, %v3249
        %v3251 = vand.u32 2147483647, %v3250
        %v3253 = vcvt.s32.f32 %v3246
        %v3254 = vmul.f32 %v3253, %v3251
        %v3255 = vxor.u32 %v3254, 2147483648
        %v3256 = vsel %vm3173, %v3255, %v3254
        %v3257 = vsub.s32 4, %v3233
        %v3258 = vsel %vm3173, %v3257, %v3233
        %v3259 = vsel %vm3172, %v564, %v3256
        %v3260 = vsel %vm3172, 0, %v3258
        %v3261 = vcosq.f32.pop %v3259
        %v3262 = vsinq.f32.pop %v3259
        %vm3263 = vweird.f32 %v564
        %v3264 = vadd.s32 %v3260, 3
        %v3265 = vand.u32 %v3264, 3
        %vm3266 = vcmp.lt.s32.totalorder %v3265, 2
        %vm3267 = vcmp.eq.s32.totalorder %v3265, 0
        %v3268 = vxor.u32 %v3262, 2147483648
        %v3269 = vsel %vm3267, %v3261, %v3268
        %vm3270 = vcmp.eq.s32.totalorder %v3265, 2
        %v3271 = vxor.u32 %v3261, 2147483648
        %v3272 = vsel %vm3270, %v3271, %v3262
        %v3273 = vsel %vm3266, %v3269, %v3272
        %v3274 = vsel %vm3263, nan, %v3273
        %v3275 = vand.u32 2147483647, %v565
        %vm3276 = vcmp.le.f32.partialorder %v3275, 0.7853982
        %vm3277 = vcmp.lt.s32.totalorder %v565, 0
        %v3278 = vand.u32 %v565, 2139095040
        %v3279 = vshrl.u32 %v3278, 23
        %v3280 = vsub.s32 %v3279, 127
        %v3281 = vand.u32 2147483647, %v565
        %v3282 = vand.u32 %v3281, 8388607
        %v3283 = vor.u32 %v3282, 8388608
        %v3284 = vsub.s32 0, %v3283
        %v3285 = vadd.s32 %v3280, 1
        %vm3286 = vcmp.gt.s32.totalorder %v3285, 0
        %v3287 = vsel %vm3286, %v3285, 0
        %v3288 = vshrl.u32 %v3287, 5
        %v3289 = vand.u32 %v3287, 31
        %v3290 = vsub.s32 32, %v3289
        %v3291 = vshrl.u32 683565275, %v3290
        %v3292 = vshll.u32 683565275, %v3289
        %v3293 = vshrl.u32 2475754826, %v3290
        %v3294 = vor.u32 %v3292, %v3293
        %v3295 = vshll.u32 2475754826, %v3289
        %v3296 = vshrl.u32 2131351028, %v3290
        %v3297 = vor.u32 %v3295, %v3296
        %v3298 = vshll.u32 2131351028, %v3289
        %v3299 = vshrl.u32 2102212464, %v3290
        %v3300 = vor.u32 %v3298, %v3299
        %v3301 = vshll.u32 2102212464, %v3289
        %v3302 = vshrl.u32 920167782, %v3290
        %v3303 = vor.u32 %v3301, %v3302
        %v3304 = vshll.u32 920167782, %v3289
        %v3305 = vshrl.u32 1326507024, %v3290
        %v3306 = vor.u32 %v3304, %v3305
        %vm3307 = vcmp.lt.s32.totalorder %v3288, 1
        %vm3308 = vcmp.lt.s32.totalorder %v3288, 2
        %vm3309 = vcmp.lt.s32.totalorder %v3288, 3
        %vm3310 = vcmp.lt.s32.totalorder %v3288, 4
        %v3311 = vsel %vm3307, %v3291, %v3294
        %v3312 = vsel %vm3310, %v3300, 2102212464
        %v3313 = vsel %vm3309, %v3297, %v3312
        %v3314 = vsel %vm3308, %v3311, %v3313
        %v3315 = vsel %vm3307, %v3294, %v3297
        %v3316 = vsel %vm3310, %v3303, 920167782
        %v3317 = vsel %vm3309, %v3300, %v3316
        %v3318 = vsel %vm3308, %v3315, %v3317
        %v3319 = vsel %vm3307, %v3297, %v3300
        %v3320 = vsel %vm3310, %v3306, 1326507024
        %v3321 = vsel %vm3309, %v3303, %v3320
        %v3322 = vsel %vm3308, %v3319, %v3321
        %v3323 = vshll.u32 %v3283, 8
        %v3324 = vmul.u32.u64.compose %v3323, %v3322
        %v3325 = vextract.low.u32 %v3324
        %v3326 = vextract.high.u32 %v3324
        %v3327 = vmul.u32.u64.compose %v3323, %v3318
        %v3328 = vextract.low.u32 %v3327
        %v3329 = vextract.high.u32 %v3327
        %v3330 = vmul.u32 %v3323, %v3314
        %v3331 = vadd.s32 %v3326, %v3328
        %vm3332 = vc.u32 %v3326, %v3328
        %v3333 = vadd.s32 %v3329, 1
        %v3334 = vsel %vm3332, %v3333, %v3329
        %v3335 = vadd.s32 %v3330, %v3334
        %v3336 = vadd.s32 %v3335, 536870912
        %v3337 = vshrl.u32 %v3336, 30
        %v3338 = vshll.u32 %v3337, 30
        %v3339 = vsub.s32 %v3335, %v3338
        %vm3340 = vcmp.lt.s32.totalorder %v3339, 0
        %v3341 = vsub.s32 0, %v3339
        %v3342 = vsel %vm3340, %v3341, %v3339
        %v3343 = vclz %v3342
        %v3344 = vsub.s32 %v3343, 2
        %vm3345 = vcmp.gt.s32.totalorder 0, %v3344
        %v3346 = vsel %vm3345, 0, %v3344
        %v3347 = vsub.s32 32, %v3346
        %v3348 = vshll.u32 %v3339, %v3346
        %v3349 = vshrl.u32 %v3331, %v3347
        %v3350 = vor.u32 %v3348, %v3349
        %v3351 = vsub.s32 4294967266, %v3346
        %v3352 = vadd.s32 %v3351, 127
        %v3353 = vshll.u32 %v3352, 23
        %v3354 = vor.u32 4788187, %v3353
        %v3355 = vand.u32 2147483647, %v3354
        %v3357 = vcvt.s32.f32 %v3350
        %v3358 = vmul.f32 %v3357, %v3355
        %v3359 = vxor.u32 %v3358, 2147483648
        %v3360 = vsel %vm3277, %v3359, %v3358
        %v3361 = vsub.s32 4, %v3337
        %v3362 = vsel %vm3277, %v3361, %v3337
        %v3363 = vsel %vm3276, %v565, %v3360
        %v3364 = vsel %vm3276, 0, %v3362
        %v3365 = vcosq.f32.pop %v3363
        %v3366 = vsinq.f32.pop %v3363
        %vm3367 = vweird.f32 %v565
        %v3368 = vadd.s32 %v3364, 3
        %v3369 = vand.u32 %v3368, 3
        %vm3370 = vcmp.lt.s32.totalorder %v3369, 2
        %vm3371 = vcmp.eq.s32.totalorder %v3369, 0
        %v3372 = vxor.u32 %v3366, 2147483648
        %v3373 = vsel %vm3371, %v3365, %v3372
        %vm3374 = vcmp.eq.s32.totalorder %v3369, 2
        %v3375 = vxor.u32 %v3365, 2147483648
        %v3376 = vsel %vm3374, %v3375, %v3366
        %v3377 = vsel %vm3370, %v3373, %v3376
        %v3378 = vsel %vm3367, nan, %v3377
        %v3379 = vand.u32 2147483647, %v566
        %vm3380 = vcmp.le.f32.partialorder %v3379, 0.7853982
        %vm3381 = vcmp.lt.s32.totalorder %v566, 0
        %v3382 = vand.u32 %v566, 2139095040
        %v3383 = vshrl.u32 %v3382, 23
        %v3384 = vsub.s32 %v3383, 127
        %v3385 = vand.u32 2147483647, %v566
        %v3386 = vand.u32 %v3385, 8388607
        %v3387 = vor.u32 %v3386, 8388608
        %v3388 = vsub.s32 0, %v3387
        %v3389 = vadd.s32 %v3384, 1
        %vm3390 = vcmp.gt.s32.totalorder %v3389, 0
        %v3391 = vsel %vm3390, %v3389, 0
        %v3392 = vshrl.u32 %v3391, 5
        %v3393 = vand.u32 %v3391, 31
        %v3394 = vsub.s32 32, %v3393
        %v3395 = vshrl.u32 683565275, %v3394
        %v3396 = vshll.u32 683565275, %v3393
        %v3397 = vshrl.u32 2475754826, %v3394
        %v3398 = vor.u32 %v3396, %v3397
        %v3399 = vshll.u32 2475754826, %v3393
        %v3400 = vshrl.u32 2131351028, %v3394
        %v3401 = vor.u32 %v3399, %v3400
        %v3402 = vshll.u32 2131351028, %v3393
        %v3403 = vshrl.u32 2102212464, %v3394
        %v3404 = vor.u32 %v3402, %v3403
        %v3405 = vshll.u32 2102212464, %v3393
        %v3406 = vshrl.u32 920167782, %v3394
        %v3407 = vor.u32 %v3405, %v3406
        %v3408 = vshll.u32 920167782, %v3393
        %v3409 = vshrl.u32 1326507024, %v3394
        %v3410 = vor.u32 %v3408, %v3409
        %vm3411 = vcmp.lt.s32.totalorder %v3392, 1
        %vm3412 = vcmp.lt.s32.totalorder %v3392, 2
        %vm3413 = vcmp.lt.s32.totalorder %v3392, 3
        %vm3414 = vcmp.lt.s32.totalorder %v3392, 4
        %v3415 = vsel %vm3411, %v3395, %v3398
        %v3416 = vsel %vm3414, %v3404, 2102212464
        %v3417 = vsel %vm3413, %v3401, %v3416
        %v3418 = vsel %vm3412, %v3415, %v3417
        %v3419 = vsel %vm3411, %v3398, %v3401
        %v3420 = vsel %vm3414, %v3407, 920167782
        %v3421 = vsel %vm3413, %v3404, %v3420
        %v3422 = vsel %vm3412, %v3419, %v3421
        %v3423 = vsel %vm3411, %v3401, %v3404
        %v3424 = vsel %vm3414, %v3410, 1326507024
        %v3425 = vsel %vm3413, %v3407, %v3424
        %v3426 = vsel %vm3412, %v3423, %v3425
        %v3427 = vshll.u32 %v3387, 8
        %v3428 = vmul.u32.u64.compose %v3427, %v3426
        %v3429 = vextract.low.u32 %v3428
        %v3430 = vextract.high.u32 %v3428
        %v3431 = vmul.u32.u64.compose %v3427, %v3422
        %v3432 = vextract.low.u32 %v3431
        %v3433 = vextract.high.u32 %v3431
        %v3434 = vmul.u32 %v3427, %v3418
        %v3435 = vadd.s32 %v3430, %v3432
        %vm3436 = vc.u32 %v3430, %v3432
        %v3437 = vadd.s32 %v3433, 1
        %v3438 = vsel %vm3436, %v3437, %v3433
        %v3439 = vadd.s32 %v3434, %v3438
        %v3440 = vadd.s32 %v3439, 536870912
        %v3441 = vshrl.u32 %v3440, 30
        %v3442 = vshll.u32 %v3441, 30
        %v3443 = vsub.s32 %v3439, %v3442
        %vm3444 = vcmp.lt.s32.totalorder %v3443, 0
        %v3445 = vsub.s32 0, %v3443
        %v3446 = vsel %vm3444, %v3445, %v3443
        %v3447 = vclz %v3446
        %v3448 = vsub.s32 %v3447, 2
        %vm3449 = vcmp.gt.s32.totalorder 0, %v3448
        %v3450 = vsel %vm3449, 0, %v3448
        %v3451 = vsub.s32 32, %v3450
        %v3452 = vshll.u32 %v3443, %v3450
        %v3453 = vshrl.u32 %v3435, %v3451
        %v3454 = vor.u32 %v3452, %v3453
        %v3455 = vsub.s32 4294967266, %v3450
        %v3456 = vadd.s32 %v3455, 127
        %v3457 = vshll.u32 %v3456, 23
        %v3458 = vor.u32 4788187, %v3457
        %v3459 = vand.u32 2147483647, %v3458
        %v3461 = vcvt.s32.f32 %v3454
        %v3462 = vmul.f32 %v3461, %v3459
        %v3463 = vxor.u32 %v3462, 2147483648
        %v3464 = vsel %vm3381, %v3463, %v3462
        %v3465 = vsub.s32 4, %v3441
        %v3466 = vsel %vm3381, %v3465, %v3441
        %v3467 = vsel %vm3380, %v566, %v3464
        %v3468 = vsel %vm3380, 0, %v3466
        %v3469 = vcosq.f32.pop %v3467
        %v3470 = vsinq.f32.pop %v3467
        %vm3471 = vweird.f32 %v566
        %v3472 = vadd.s32 %v3468, 3
        %v3473 = vand.u32 %v3472, 3
        %vm3474 = vcmp.lt.s32.totalorder %v3473, 2
        %vm3475 = vcmp.eq.s32.totalorder %v3473, 0
        %v3476 = vxor.u32 %v3470, 2147483648
        %v3477 = vsel %vm3475, %v3469, %v3476
        %vm3478 = vcmp.eq.s32.totalorder %v3473, 2
        %v3479 = vxor.u32 %v3469, 2147483648
        %v3480 = vsel %vm3478, %v3479, %v3470
        %v3481 = vsel %vm3474, %v3477, %v3480
        %v3482 = vsel %vm3471, nan, %v3481
        %v3483 = vand.u32 2147483647, %v567
        %vm3484 = vcmp.le.f32.partialorder %v3483, 0.7853982
        %vm3485 = vcmp.lt.s32.totalorder %v567, 0
        %v3486 = vand.u32 %v567, 2139095040
        %v3487 = vshrl.u32 %v3486, 23
        %v3488 = vsub.s32 %v3487, 127
        %v3489 = vand.u32 2147483647, %v567
        %v3490 = vand.u32 %v3489, 8388607
        %v3491 = vor.u32 %v3490, 8388608
        %v3492 = vsub.s32 0, %v3491
        %v3493 = vadd.s32 %v3488, 1
        %vm3494 = vcmp.gt.s32.totalorder %v3493, 0
        %v3495 = vsel %vm3494, %v3493, 0
        %v3496 = vshrl.u32 %v3495, 5
        %v3497 = vand.u32 %v3495, 31
        %v3498 = vsub.s32 32, %v3497
        %v3499 = vshrl.u32 683565275, %v3498
        %v3500 = vshll.u32 683565275, %v3497
        %v3501 = vshrl.u32 2475754826, %v3498
        %v3502 = vor.u32 %v3500, %v3501
        %v3503 = vshll.u32 2475754826, %v3497
        %v3504 = vshrl.u32 2131351028, %v3498
        %v3505 = vor.u32 %v3503, %v3504
        %v3506 = vshll.u32 2131351028, %v3497
        %v3507 = vshrl.u32 2102212464, %v3498
        %v3508 = vor.u32 %v3506, %v3507
        %v3509 = vshll.u32 2102212464, %v3497
        %v3510 = vshrl.u32 920167782, %v3498
        %v3511 = vor.u32 %v3509, %v3510
        %v3512 = vshll.u32 920167782, %v3497
        %v3513 = vshrl.u32 1326507024, %v3498
        %v3514 = vor.u32 %v3512, %v3513
        %vm3515 = vcmp.lt.s32.totalorder %v3496, 1
        %vm3516 = vcmp.lt.s32.totalorder %v3496, 2
        %vm3517 = vcmp.lt.s32.totalorder %v3496, 3
        %vm3518 = vcmp.lt.s32.totalorder %v3496, 4
        %v3519 = vsel %vm3515, %v3499, %v3502
        %v3520 = vsel %vm3518, %v3508, 2102212464
        %v3521 = vsel %vm3517, %v3505, %v3520
        %v3522 = vsel %vm3516, %v3519, %v3521
        %v3523 = vsel %vm3515, %v3502, %v3505
        %v3524 = vsel %vm3518, %v3511, 920167782
        %v3525 = vsel %vm3517, %v3508, %v3524
        %v3526 = vsel %vm3516, %v3523, %v3525
        %v3527 = vsel %vm3515, %v3505, %v3508
        %v3528 = vsel %vm3518, %v3514, 1326507024
        %v3529 = vsel %vm3517, %v3511, %v3528
        %v3530 = vsel %vm3516, %v3527, %v3529
        %v3531 = vshll.u32 %v3491, 8
        %v3532 = vmul.u32.u64.compose %v3531, %v3530
        %v3533 = vextract.low.u32 %v3532
        %v3534 = vextract.high.u32 %v3532
        %v3535 = vmul.u32.u64.compose %v3531, %v3526
        %v3536 = vextract.low.u32 %v3535
        %v3537 = vextract.high.u32 %v3535
        %v3538 = vmul.u32 %v3531, %v3522
        %v3539 = vadd.s32 %v3534, %v3536
        %vm3540 = vc.u32 %v3534, %v3536
        %v3541 = vadd.s32 %v3537, 1
        %v3542 = vsel %vm3540, %v3541, %v3537
        %v3543 = vadd.s32 %v3538, %v3542
        %v3544 = vadd.s32 %v3543, 536870912
        %v3545 = vshrl.u32 %v3544, 30
        %v3546 = vshll.u32 %v3545, 30
        %v3547 = vsub.s32 %v3543, %v3546
        %vm3548 = vcmp.lt.s32.totalorder %v3547, 0
        %v3549 = vsub.s32 0, %v3547
        %v3550 = vsel %vm3548, %v3549, %v3547
        %v3551 = vclz %v3550
        %v3552 = vsub.s32 %v3551, 2
        %vm3553 = vcmp.gt.s32.totalorder 0, %v3552
        %v3554 = vsel %vm3553, 0, %v3552
        %v3555 = vsub.s32 32, %v3554
        %v3556 = vshll.u32 %v3547, %v3554
        %v3557 = vshrl.u32 %v3539, %v3555
        %v3558 = vor.u32 %v3556, %v3557
        %v3559 = vsub.s32 4294967266, %v3554
        %v3560 = vadd.s32 %v3559, 127
        %v3561 = vshll.u32 %v3560, 23
        %v3562 = vor.u32 4788187, %v3561
        %v3563 = vand.u32 2147483647, %v3562
        %v3565 = vcvt.s32.f32 %v3558
        %v3566 = vmul.f32 %v3565, %v3563
        %v3567 = vxor.u32 %v3566, 2147483648
        %v3568 = vsel %vm3485, %v3567, %v3566
        %v3569 = vsub.s32 4, %v3545
        %v3570 = vsel %vm3485, %v3569, %v3545
        %v3571 = vsel %vm3484, %v567, %v3568
        %v3572 = vsel %vm3484, 0, %v3570
        %v3573 = vcosq.f32.pop %v3571
        %v3574 = vsinq.f32.pop %v3571
        %vm3575 = vweird.f32 %v567
        %v3576 = vadd.s32 %v3572, 3
        %v3577 = vand.u32 %v3576, 3
        %vm3578 = vcmp.lt.s32.totalorder %v3577, 2
        %vm3579 = vcmp.eq.s32.totalorder %v3577, 0
        %v3580 = vxor.u32 %v3574, 2147483648
        %v3581 = vsel %vm3579, %v3573, %v3580
        %vm3582 = vcmp.eq.s32.totalorder %v3577, 2
        %v3583 = vxor.u32 %v3573, 2147483648
        %v3584 = vsel %vm3582, %v3583, %v3574
        %v3585 = vsel %vm3578, %v3581, %v3584
        %v3586 = vsel %vm3575, nan, %v3585
        %v3587 = vand.u32 2147483647, %v568
        %vm3588 = vcmp.le.f32.partialorder %v3587, 0.7853982
        %vm3589 = vcmp.lt.s32.totalorder %v568, 0
        %v3590 = vand.u32 %v568, 2139095040
        %v3591 = vshrl.u32 %v3590, 23
        %v3592 = vsub.s32 %v3591, 127
        %v3593 = vand.u32 2147483647, %v568
        %v3594 = vand.u32 %v3593, 8388607
        %v3595 = vor.u32 %v3594, 8388608
        %v3596 = vsub.s32 0, %v3595
        %v3597 = vadd.s32 %v3592, 1
        %vm3598 = vcmp.gt.s32.totalorder %v3597, 0
        %v3599 = vsel %vm3598, %v3597, 0
        %v3600 = vshrl.u32 %v3599, 5
        %v3601 = vand.u32 %v3599, 31
        %v3602 = vsub.s32 32, %v3601
        %v3603 = vshrl.u32 683565275, %v3602
        %v3604 = vshll.u32 683565275, %v3601
        %v3605 = vshrl.u32 2475754826, %v3602
        %v3606 = vor.u32 %v3604, %v3605
        %v3607 = vshll.u32 2475754826, %v3601
        %v3608 = vshrl.u32 2131351028, %v3602
        %v3609 = vor.u32 %v3607, %v3608
        %v3610 = vshll.u32 2131351028, %v3601
        %v3611 = vshrl.u32 2102212464, %v3602
        %v3612 = vor.u32 %v3610, %v3611
        %v3613 = vshll.u32 2102212464, %v3601
        %v3614 = vshrl.u32 920167782, %v3602
        %v3615 = vor.u32 %v3613, %v3614
        %v3616 = vshll.u32 920167782, %v3601
        %v3617 = vshrl.u32 1326507024, %v3602
        %v3618 = vor.u32 %v3616, %v3617
        %vm3619 = vcmp.lt.s32.totalorder %v3600, 1
        %vm3620 = vcmp.lt.s32.totalorder %v3600, 2
        %vm3621 = vcmp.lt.s32.totalorder %v3600, 3
        %vm3622 = vcmp.lt.s32.totalorder %v3600, 4
        %v3623 = vsel %vm3619, %v3603, %v3606
        %v3624 = vsel %vm3622, %v3612, 2102212464
        %v3625 = vsel %vm3621, %v3609, %v3624
        %v3626 = vsel %vm3620, %v3623, %v3625
        %v3627 = vsel %vm3619, %v3606, %v3609
        %v3628 = vsel %vm3622, %v3615, 920167782
        %v3629 = vsel %vm3621, %v3612, %v3628
        %v3630 = vsel %vm3620, %v3627, %v3629
        %v3631 = vsel %vm3619, %v3609, %v3612
        %v3632 = vsel %vm3622, %v3618, 1326507024
        %v3633 = vsel %vm3621, %v3615, %v3632
        %v3634 = vsel %vm3620, %v3631, %v3633
        %v3635 = vshll.u32 %v3595, 8
        %v3636 = vmul.u32.u64.compose %v3635, %v3634
        %v3637 = vextract.low.u32 %v3636
        %v3638 = vextract.high.u32 %v3636
        %v3639 = vmul.u32.u64.compose %v3635, %v3630
        %v3640 = vextract.low.u32 %v3639
        %v3641 = vextract.high.u32 %v3639
        %v3642 = vmul.u32 %v3635, %v3626
        %v3643 = vadd.s32 %v3638, %v3640
        %vm3644 = vc.u32 %v3638, %v3640
        %v3645 = vadd.s32 %v3641, 1
        %v3646 = vsel %vm3644, %v3645, %v3641
        %v3647 = vadd.s32 %v3642, %v3646
        %v3648 = vadd.s32 %v3647, 536870912
        %v3649 = vshrl.u32 %v3648, 30
        %v3650 = vshll.u32 %v3649, 30
        %v3651 = vsub.s32 %v3647, %v3650
        %vm3652 = vcmp.lt.s32.totalorder %v3651, 0
        %v3653 = vsub.s32 0, %v3651
        %v3654 = vsel %vm3652, %v3653, %v3651
        %v3655 = vclz %v3654
        %v3656 = vsub.s32 %v3655, 2
        %vm3657 = vcmp.gt.s32.totalorder 0, %v3656
        %v3658 = vsel %vm3657, 0, %v3656
        %v3659 = vsub.s32 32, %v3658
        %v3660 = vshll.u32 %v3651, %v3658
        %v3661 = vshrl.u32 %v3643, %v3659
        %v3662 = vor.u32 %v3660, %v3661
        %v3663 = vsub.s32 4294967266, %v3658
        %v3664 = vadd.s32 %v3663, 127
        %v3665 = vshll.u32 %v3664, 23
        %v3666 = vor.u32 4788187, %v3665
        %v3667 = vand.u32 2147483647, %v3666
        %v3669 = vcvt.s32.f32 %v3662
        %v3670 = vmul.f32 %v3669, %v3667
        %v3671 = vxor.u32 %v3670, 2147483648
        %v3672 = vsel %vm3589, %v3671, %v3670
        %v3673 = vsub.s32 4, %v3649
        %v3674 = vsel %vm3589, %v3673, %v3649
        %v3675 = vsel %vm3588, %v568, %v3672
        %v3676 = vsel %vm3588, 0, %v3674
        %v3677 = vcosq.f32.pop %v3675
        %v3678 = vsinq.f32.pop %v3675
        %vm3679 = vweird.f32 %v568
        %v3680 = vadd.s32 %v3676, 3
        %v3681 = vand.u32 %v3680, 3
        %vm3682 = vcmp.lt.s32.totalorder %v3681, 2
        %vm3683 = vcmp.eq.s32.totalorder %v3681, 0
        %v3684 = vxor.u32 %v3678, 2147483648
        %v3685 = vsel %vm3683, %v3677, %v3684
        %vm3686 = vcmp.eq.s32.totalorder %v3681, 2
        %v3687 = vxor.u32 %v3677, 2147483648
        %v3688 = vsel %vm3686, %v3687, %v3678
        %v3689 = vsel %vm3682, %v3685, %v3688
        %v3690 = vsel %vm3679, nan, %v3689
        %v3691 = vand.u32 2147483647, %v569
        %vm3692 = vcmp.le.f32.partialorder %v3691, 0.7853982
        %vm3693 = vcmp.lt.s32.totalorder %v569, 0
        %v3694 = vand.u32 %v569, 2139095040
        %v3695 = vshrl.u32 %v3694, 23
        %v3696 = vsub.s32 %v3695, 127
        %v3697 = vand.u32 2147483647, %v569
        %v3698 = vand.u32 %v3697, 8388607
        %v3699 = vor.u32 %v3698, 8388608
        %v3700 = vsub.s32 0, %v3699
        %v3701 = vadd.s32 %v3696, 1
        %vm3702 = vcmp.gt.s32.totalorder %v3701, 0
        %v3703 = vsel %vm3702, %v3701, 0
        %v3704 = vshrl.u32 %v3703, 5
        %v3705 = vand.u32 %v3703, 31
        %v3706 = vsub.s32 32, %v3705
        %v3707 = vshrl.u32 683565275, %v3706
        %v3708 = vshll.u32 683565275, %v3705
        %v3709 = vshrl.u32 2475754826, %v3706
        %v3710 = vor.u32 %v3708, %v3709
        %v3711 = vshll.u32 2475754826, %v3705
        %v3712 = vshrl.u32 2131351028, %v3706
        %v3713 = vor.u32 %v3711, %v3712
        %v3714 = vshll.u32 2131351028, %v3705
        %v3715 = vshrl.u32 2102212464, %v3706
        %v3716 = vor.u32 %v3714, %v3715
        %v3717 = vshll.u32 2102212464, %v3705
        %v3718 = vshrl.u32 920167782, %v3706
        %v3719 = vor.u32 %v3717, %v3718
        %v3720 = vshll.u32 920167782, %v3705
        %v3721 = vshrl.u32 1326507024, %v3706
        %v3722 = vor.u32 %v3720, %v3721
        %vm3723 = vcmp.lt.s32.totalorder %v3704, 1
        %vm3724 = vcmp.lt.s32.totalorder %v3704, 2
        %vm3725 = vcmp.lt.s32.totalorder %v3704, 3
        %vm3726 = vcmp.lt.s32.totalorder %v3704, 4
        %v3727 = vsel %vm3723, %v3707, %v3710
        %v3728 = vsel %vm3726, %v3716, 2102212464
        %v3729 = vsel %vm3725, %v3713, %v3728
        %v3730 = vsel %vm3724, %v3727, %v3729
        %v3731 = vsel %vm3723, %v3710, %v3713
        %v3732 = vsel %vm3726, %v3719, 920167782
        %v3733 = vsel %vm3725, %v3716, %v3732
        %v3734 = vsel %vm3724, %v3731, %v3733
        %v3735 = vsel %vm3723, %v3713, %v3716
        %v3736 = vsel %vm3726, %v3722, 1326507024
        %v3737 = vsel %vm3725, %v3719, %v3736
        %v3738 = vsel %vm3724, %v3735, %v3737
        %v3739 = vshll.u32 %v3699, 8
        %v3740 = vmul.u32.u64.compose %v3739, %v3738
        %v3741 = vextract.low.u32 %v3740
        %v3742 = vextract.high.u32 %v3740
        %v3743 = vmul.u32.u64.compose %v3739, %v3734
        %v3744 = vextract.low.u32 %v3743
        %v3745 = vextract.high.u32 %v3743
        %v3746 = vmul.u32 %v3739, %v3730
        %v3747 = vadd.s32 %v3742, %v3744
        %vm3748 = vc.u32 %v3742, %v3744
        %v3749 = vadd.s32 %v3745, 1
        %v3750 = vsel %vm3748, %v3749, %v3745
        %v3751 = vadd.s32 %v3746, %v3750
        %v3752 = vadd.s32 %v3751, 536870912
        %v3753 = vshrl.u32 %v3752, 30
        %v3754 = vshll.u32 %v3753, 30
        %v3755 = vsub.s32 %v3751, %v3754
        %vm3756 = vcmp.lt.s32.totalorder %v3755, 0
        %v3757 = vsub.s32 0, %v3755
        %v3758 = vsel %vm3756, %v3757, %v3755
        %v3759 = vclz %v3758
        %v3760 = vsub.s32 %v3759, 2
        %vm3761 = vcmp.gt.s32.totalorder 0, %v3760
        %v3762 = vsel %vm3761, 0, %v3760
        %v3763 = vsub.s32 32, %v3762
        %v3764 = vshll.u32 %v3755, %v3762
        %v3765 = vshrl.u32 %v3747, %v3763
        %v3766 = vor.u32 %v3764, %v3765
        %v3767 = vsub.s32 4294967266, %v3762
        %v3768 = vadd.s32 %v3767, 127
        %v3769 = vshll.u32 %v3768, 23
        %v3770 = vor.u32 4788187, %v3769
        %v3771 = vand.u32 2147483647, %v3770
        %v3773 = vcvt.s32.f32 %v3766
        %v3774 = vmul.f32 %v3773, %v3771
        %v3775 = vxor.u32 %v3774, 2147483648
        %v3776 = vsel %vm3693, %v3775, %v3774
        %v3777 = vsub.s32 4, %v3753
        %v3778 = vsel %vm3693, %v3777, %v3753
        %v3779 = vsel %vm3692, %v569, %v3776
        %v3780 = vsel %vm3692, 0, %v3778
        %v3781 = vcosq.f32.pop %v3779
        %v3782 = vsinq.f32.pop %v3779
        %vm3783 = vweird.f32 %v569
        %v3784 = vadd.s32 %v3780, 3
        %v3785 = vand.u32 %v3784, 3
        %vm3786 = vcmp.lt.s32.totalorder %v3785, 2
        %vm3787 = vcmp.eq.s32.totalorder %v3785, 0
        %v3788 = vxor.u32 %v3782, 2147483648
        %v3789 = vsel %vm3787, %v3781, %v3788
        %vm3790 = vcmp.eq.s32.totalorder %v3785, 2
        %v3791 = vxor.u32 %v3781, 2147483648
        %v3792 = vsel %vm3790, %v3791, %v3782
        %v3793 = vsel %vm3786, %v3789, %v3792
        %v3794 = vsel %vm3783, nan, %v3793
        %v3795 = vand.u32 2147483647, %v570
        %vm3796 = vcmp.le.f32.partialorder %v3795, 0.7853982
        %vm3797 = vcmp.lt.s32.totalorder %v570, 0
        %v3798 = vand.u32 %v570, 2139095040
        %v3799 = vshrl.u32 %v3798, 23
        %v3800 = vsub.s32 %v3799, 127
        %v3801 = vand.u32 2147483647, %v570
        %v3802 = vand.u32 %v3801, 8388607
        %v3803 = vor.u32 %v3802, 8388608
        %v3804 = vsub.s32 0, %v3803
        %v3805 = vadd.s32 %v3800, 1
        %vm3806 = vcmp.gt.s32.totalorder %v3805, 0
        %v3807 = vsel %vm3806, %v3805, 0
        %v3808 = vshrl.u32 %v3807, 5
        %v3809 = vand.u32 %v3807, 31
        %v3810 = vsub.s32 32, %v3809
        %v3811 = vshrl.u32 683565275, %v3810
        %v3812 = vshll.u32 683565275, %v3809
        %v3813 = vshrl.u32 2475754826, %v3810
        %v3814 = vor.u32 %v3812, %v3813
        %v3815 = vshll.u32 2475754826, %v3809
        %v3816 = vshrl.u32 2131351028, %v3810
        %v3817 = vor.u32 %v3815, %v3816
        %v3818 = vshll.u32 2131351028, %v3809
        %v3819 = vshrl.u32 2102212464, %v3810
        %v3820 = vor.u32 %v3818, %v3819
        %v3821 = vshll.u32 2102212464, %v3809
        %v3822 = vshrl.u32 920167782, %v3810
        %v3823 = vor.u32 %v3821, %v3822
        %v3824 = vshll.u32 920167782, %v3809
        %v3825 = vshrl.u32 1326507024, %v3810
        %v3826 = vor.u32 %v3824, %v3825
        %vm3827 = vcmp.lt.s32.totalorder %v3808, 1
        %vm3828 = vcmp.lt.s32.totalorder %v3808, 2
        %vm3829 = vcmp.lt.s32.totalorder %v3808, 3
        %vm3830 = vcmp.lt.s32.totalorder %v3808, 4
        %v3831 = vsel %vm3827, %v3811, %v3814
        %v3832 = vsel %vm3830, %v3820, 2102212464
        %v3833 = vsel %vm3829, %v3817, %v3832
        %v3834 = vsel %vm3828, %v3831, %v3833
        %v3835 = vsel %vm3827, %v3814, %v3817
        %v3836 = vsel %vm3830, %v3823, 920167782
        %v3837 = vsel %vm3829, %v3820, %v3836
        %v3838 = vsel %vm3828, %v3835, %v3837
        %v3839 = vsel %vm3827, %v3817, %v3820
        %v3840 = vsel %vm3830, %v3826, 1326507024
        %v3841 = vsel %vm3829, %v3823, %v3840
        %v3842 = vsel %vm3828, %v3839, %v3841
        %v3843 = vshll.u32 %v3803, 8
        %v3844 = vmul.u32.u64.compose %v3843, %v3842
        %v3845 = vextract.low.u32 %v3844
        %v3846 = vextract.high.u32 %v3844
        %v3847 = vmul.u32.u64.compose %v3843, %v3838
        %v3848 = vextract.low.u32 %v3847
        %v3849 = vextract.high.u32 %v3847
        %v3850 = vmul.u32 %v3843, %v3834
        %v3851 = vadd.s32 %v3846, %v3848
        %vm3852 = vc.u32 %v3846, %v3848
        %v3853 = vadd.s32 %v3849, 1
        %v3854 = vsel %vm3852, %v3853, %v3849
        %v3855 = vadd.s32 %v3850, %v3854
        %v3856 = vadd.s32 %v3855, 536870912
        %v3857 = vshrl.u32 %v3856, 30
        %v3858 = vshll.u32 %v3857, 30
        %v3859 = vsub.s32 %v3855, %v3858
        %vm3860 = vcmp.lt.s32.totalorder %v3859, 0
        %v3861 = vsub.s32 0, %v3859
        %v3862 = vsel %vm3860, %v3861, %v3859
        %v3863 = vclz %v3862
        %v3864 = vsub.s32 %v3863, 2
        %vm3865 = vcmp.gt.s32.totalorder 0, %v3864
        %v3866 = vsel %vm3865, 0, %v3864
        %v3867 = vsub.s32 32, %v3866
        %v3868 = vshll.u32 %v3859, %v3866
        %v3869 = vshrl.u32 %v3851, %v3867
        %v3870 = vor.u32 %v3868, %v3869
        %v3871 = vsub.s32 4294967266, %v3866
        %v3872 = vadd.s32 %v3871, 127
        %v3873 = vshll.u32 %v3872, 23
        %v3874 = vor.u32 4788187, %v3873
        %v3875 = vand.u32 2147483647, %v3874
        %v3877 = vcvt.s32.f32 %v3870
        %v3878 = vmul.f32 %v3877, %v3875
        %v3879 = vxor.u32 %v3878, 2147483648
        %v3880 = vsel %vm3797, %v3879, %v3878
        %v3881 = vsub.s32 4, %v3857
        %v3882 = vsel %vm3797, %v3881, %v3857
        %v3883 = vsel %vm3796, %v570, %v3880
        %v3884 = vsel %vm3796, 0, %v3882
        %v3885 = vcosq.f32.pop %v3883
        %v3886 = vsinq.f32.pop %v3883
        %vm3887 = vweird.f32 %v570
        %v3888 = vadd.s32 %v3884, 3
        %v3889 = vand.u32 %v3888, 3
        %vm3890 = vcmp.lt.s32.totalorder %v3889, 2
        %vm3891 = vcmp.eq.s32.totalorder %v3889, 0
        %v3892 = vxor.u32 %v3886, 2147483648
        %v3893 = vsel %vm3891, %v3885, %v3892
        %vm3894 = vcmp.eq.s32.totalorder %v3889, 2
        %v3895 = vxor.u32 %v3885, 2147483648
        %v3896 = vsel %vm3894, %v3895, %v3886
        %v3897 = vsel %vm3890, %v3893, %v3896
        %v3898 = vsel %vm3887, nan, %v3897
        %v3899 = vand.u32 2147483647, %v539
        %vm3900 = vcmp.le.f32.partialorder %v3899, 0.7853982
        %vm3901 = vcmp.lt.s32.totalorder %v539, 0
        %v3902 = vand.u32 %v539, 2139095040
        %v3903 = vshrl.u32 %v3902, 23
        %v3904 = vsub.s32 %v3903, 127
        %v3905 = vand.u32 2147483647, %v539
        %v3906 = vand.u32 %v3905, 8388607
        %v3907 = vor.u32 %v3906, 8388608
        %v3908 = vsub.s32 0, %v3907
        %v3909 = vadd.s32 %v3904, 1
        %vm3910 = vcmp.gt.s32.totalorder %v3909, 0
        %v3911 = vsel %vm3910, %v3909, 0
        %v3912 = vshrl.u32 %v3911, 5
        %v3913 = vand.u32 %v3911, 31
        %v3914 = vsub.s32 32, %v3913
        %v3915 = vshrl.u32 683565275, %v3914
        %v3916 = vshll.u32 683565275, %v3913
        %v3917 = vshrl.u32 2475754826, %v3914
        %v3918 = vor.u32 %v3916, %v3917
        %v3919 = vshll.u32 2475754826, %v3913
        %v3920 = vshrl.u32 2131351028, %v3914
        %v3921 = vor.u32 %v3919, %v3920
        %v3922 = vshll.u32 2131351028, %v3913
        %v3923 = vshrl.u32 2102212464, %v3914
        %v3924 = vor.u32 %v3922, %v3923
        %v3925 = vshll.u32 2102212464, %v3913
        %v3926 = vshrl.u32 920167782, %v3914
        %v3927 = vor.u32 %v3925, %v3926
        %v3928 = vshll.u32 920167782, %v3913
        %v3929 = vshrl.u32 1326507024, %v3914
        %v3930 = vor.u32 %v3928, %v3929
        %vm3931 = vcmp.lt.s32.totalorder %v3912, 1
        %vm3932 = vcmp.lt.s32.totalorder %v3912, 2
        %vm3933 = vcmp.lt.s32.totalorder %v3912, 3
        %vm3934 = vcmp.lt.s32.totalorder %v3912, 4
        %v3935 = vsel %vm3931, %v3915, %v3918
        %v3936 = vsel %vm3934, %v3924, 2102212464
        %v3937 = vsel %vm3933, %v3921, %v3936
        %v3938 = vsel %vm3932, %v3935, %v3937
        %v3939 = vsel %vm3931, %v3918, %v3921
        %v3940 = vsel %vm3934, %v3927, 920167782
        %v3941 = vsel %vm3933, %v3924, %v3940
        %v3942 = vsel %vm3932, %v3939, %v3941
        %v3943 = vsel %vm3931, %v3921, %v3924
        %v3944 = vsel %vm3934, %v3930, 1326507024
        %v3945 = vsel %vm3933, %v3927, %v3944
        %v3946 = vsel %vm3932, %v3943, %v3945
        %v3947 = vshll.u32 %v3907, 8
        %v3948 = vmul.u32.u64.compose %v3947, %v3946
        %v3949 = vextract.low.u32 %v3948
        %v3950 = vextract.high.u32 %v3948
        %v3951 = vmul.u32.u64.compose %v3947, %v3942
        %v3952 = vextract.low.u32 %v3951
        %v3953 = vextract.high.u32 %v3951
        %v3954 = vmul.u32 %v3947, %v3938
        %v3955 = vadd.s32 %v3950, %v3952
        %vm3956 = vc.u32 %v3950, %v3952
        %v3957 = vadd.s32 %v3953, 1
        %v3958 = vsel %vm3956, %v3957, %v3953
        %v3959 = vadd.s32 %v3954, %v3958
        %v3960 = vadd.s32 %v3959, 536870912
        %v3961 = vshrl.u32 %v3960, 30
        %v3962 = vshll.u32 %v3961, 30
        %v3963 = vsub.s32 %v3959, %v3962
        %vm3964 = vcmp.lt.s32.totalorder %v3963, 0
        %v3965 = vsub.s32 0, %v3963
        %v3966 = vsel %vm3964, %v3965, %v3963
        %v3967 = vclz %v3966
        %v3968 = vsub.s32 %v3967, 2
        %vm3969 = vcmp.gt.s32.totalorder 0, %v3968
        %v3970 = vsel %vm3969, 0, %v3968
        %v3971 = vsub.s32 32, %v3970
        %v3972 = vshll.u32 %v3963, %v3970
        %v3973 = vshrl.u32 %v3955, %v3971
        %v3974 = vor.u32 %v3972, %v3973
        %v3975 = vsub.s32 4294967266, %v3970
        %v3976 = vadd.s32 %v3975, 127
        %v3977 = vshll.u32 %v3976, 23
        %v3978 = vor.u32 4788187, %v3977
        %v3979 = vand.u32 2147483647, %v3978
        %v3981 = vcvt.s32.f32 %v3974
        %v3982 = vmul.f32 %v3981, %v3979
        %v3983 = vxor.u32 %v3982, 2147483648
        %v3984 = vsel %vm3901, %v3983, %v3982
        %v3985 = vsub.s32 4, %v3961
        %v3986 = vsel %vm3901, %v3985, %v3961
        %v3987 = vsel %vm3900, %v539, %v3984
        %v3988 = vsel %vm3900, 0, %v3986
        %v3989 = vcosq.f32.pop %v3987
        %v3990 = vsinq.f32.pop %v3987
        %vm3991 = vweird.f32 %v539
        %v3992 = vand.u32 %v3988, 3
        %vm3993 = vcmp.lt.s32.totalorder %v3992, 2
        %vm3994 = vcmp.eq.s32.totalorder %v3992, 0
        %v3995 = vxor.u32 %v3990, 2147483648
        %v3996 = vsel %vm3994, %v3989, %v3995
        %vm3997 = vcmp.eq.s32.totalorder %v3992, 2
        %v3998 = vxor.u32 %v3989, 2147483648
        %v3999 = vsel %vm3997, %v3998, %v3990
        %v4000 = vsel %vm3993, %v3996, %v3999
        %v4001 = vsel %vm3991, nan, %v4000
        %v4002 = vand.u32 2147483647, %v540
        %vm4003 = vcmp.le.f32.partialorder %v4002, 0.7853982
        %vm4004 = vcmp.lt.s32.totalorder %v540, 0
        %v4005 = vand.u32 %v540, 2139095040
        %v4006 = vshrl.u32 %v4005, 23
        %v4007 = vsub.s32 %v4006, 127
        %v4008 = vand.u32 2147483647, %v540
        %v4009 = vand.u32 %v4008, 8388607
        %v4010 = vor.u32 %v4009, 8388608
        %v4011 = vsub.s32 0, %v4010
        %v4012 = vadd.s32 %v4007, 1
        %vm4013 = vcmp.gt.s32.totalorder %v4012, 0
        %v4014 = vsel %vm4013, %v4012, 0
        %v4015 = vshrl.u32 %v4014, 5
        %v4016 = vand.u32 %v4014, 31
        %v4017 = vsub.s32 32, %v4016
        %v4018 = vshrl.u32 683565275, %v4017
        %v4019 = vshll.u32 683565275, %v4016
        %v4020 = vshrl.u32 2475754826, %v4017
        %v4021 = vor.u32 %v4019, %v4020
        %v4022 = vshll.u32 2475754826, %v4016
        %v4023 = vshrl.u32 2131351028, %v4017
        %v4024 = vor.u32 %v4022, %v4023
        %v4025 = vshll.u32 2131351028, %v4016
        %v4026 = vshrl.u32 2102212464, %v4017
        %v4027 = vor.u32 %v4025, %v4026
        %v4028 = vshll.u32 2102212464, %v4016
        %v4029 = vshrl.u32 920167782, %v4017
        %v4030 = vor.u32 %v4028, %v4029
        %v4031 = vshll.u32 920167782, %v4016
        %v4032 = vshrl.u32 1326507024, %v4017
        %v4033 = vor.u32 %v4031, %v4032
        %vm4034 = vcmp.lt.s32.totalorder %v4015, 1
        %vm4035 = vcmp.lt.s32.totalorder %v4015, 2
        %vm4036 = vcmp.lt.s32.totalorder %v4015, 3
        %vm4037 = vcmp.lt.s32.totalorder %v4015, 4
        %v4038 = vsel %vm4034, %v4018, %v4021
        %v4039 = vsel %vm4037, %v4027, 2102212464
        %v4040 = vsel %vm4036, %v4024, %v4039
        %v4041 = vsel %vm4035, %v4038, %v4040
        %v4042 = vsel %vm4034, %v4021, %v4024
        %v4043 = vsel %vm4037, %v4030, 920167782
        %v4044 = vsel %vm4036, %v4027, %v4043
        %v4045 = vsel %vm4035, %v4042, %v4044
        %v4046 = vsel %vm4034, %v4024, %v4027
        %v4047 = vsel %vm4037, %v4033, 1326507024
        %v4048 = vsel %vm4036, %v4030, %v4047
        %v4049 = vsel %vm4035, %v4046, %v4048
        %v4050 = vshll.u32 %v4010, 8
        %v4051 = vmul.u32.u64.compose %v4050, %v4049
        %v4052 = vextract.low.u32 %v4051
        %v4053 = vextract.high.u32 %v4051
        %v4054 = vmul.u32.u64.compose %v4050, %v4045
        %v4055 = vextract.low.u32 %v4054
        %v4056 = vextract.high.u32 %v4054
        %v4057 = vmul.u32 %v4050, %v4041
        %v4058 = vadd.s32 %v4053, %v4055
        %vm4059 = vc.u32 %v4053, %v4055
        %v4060 = vadd.s32 %v4056, 1
        %v4061 = vsel %vm4059, %v4060, %v4056
        %v4062 = vadd.s32 %v4057, %v4061
        %v4063 = vadd.s32 %v4062, 536870912
        %v4064 = vshrl.u32 %v4063, 30
        %v4065 = vshll.u32 %v4064, 30
        %v4066 = vsub.s32 %v4062, %v4065
        %vm4067 = vcmp.lt.s32.totalorder %v4066, 0
        %v4068 = vsub.s32 0, %v4066
        %v4069 = vsel %vm4067, %v4068, %v4066
        %v4070 = vclz %v4069
        %v4071 = vsub.s32 %v4070, 2
        %vm4072 = vcmp.gt.s32.totalorder 0, %v4071
        %v4073 = vsel %vm4072, 0, %v4071
        %v4074 = vsub.s32 32, %v4073
        %v4075 = vshll.u32 %v4066, %v4073
        %v4076 = vshrl.u32 %v4058, %v4074
        %v4077 = vor.u32 %v4075, %v4076
        %v4078 = vsub.s32 4294967266, %v4073
        %v4079 = vadd.s32 %v4078, 127
        %v4080 = vshll.u32 %v4079, 23
        %v4081 = vor.u32 4788187, %v4080
        %v4082 = vand.u32 2147483647, %v4081
        %v4084 = vcvt.s32.f32 %v4077
        %v4085 = vmul.f32 %v4084, %v4082
        %v4086 = vxor.u32 %v4085, 2147483648
        %v4087 = vsel %vm4004, %v4086, %v4085
        %v4088 = vsub.s32 4, %v4064
        %v4089 = vsel %vm4004, %v4088, %v4064
        %v4090 = vsel %vm4003, %v540, %v4087
        %v4091 = vsel %vm4003, 0, %v4089
        %v4092 = vcosq.f32.pop %v4090
        %v4093 = vsinq.f32.pop %v4090
        %vm4094 = vweird.f32 %v540
        %v4095 = vand.u32 %v4091, 3
        %vm4096 = vcmp.lt.s32.totalorder %v4095, 2
        %vm4097 = vcmp.eq.s32.totalorder %v4095, 0
        %v4098 = vxor.u32 %v4093, 2147483648
        %v4099 = vsel %vm4097, %v4092, %v4098
        %vm4100 = vcmp.eq.s32.totalorder %v4095, 2
        %v4101 = vxor.u32 %v4092, 2147483648
        %v4102 = vsel %vm4100, %v4101, %v4093
        %v4103 = vsel %vm4096, %v4099, %v4102
        %v4104 = vsel %vm4094, nan, %v4103
        %v4105 = vand.u32 2147483647, %v541
        %vm4106 = vcmp.le.f32.partialorder %v4105, 0.7853982
        %vm4107 = vcmp.lt.s32.totalorder %v541, 0
        %v4108 = vand.u32 %v541, 2139095040
        %v4109 = vshrl.u32 %v4108, 23
        %v4110 = vsub.s32 %v4109, 127
        %v4111 = vand.u32 2147483647, %v541
        %v4112 = vand.u32 %v4111, 8388607
        %v4113 = vor.u32 %v4112, 8388608
        %v4114 = vsub.s32 0, %v4113
        %v4115 = vadd.s32 %v4110, 1
        %vm4116 = vcmp.gt.s32.totalorder %v4115, 0
        %v4117 = vsel %vm4116, %v4115, 0
        %v4118 = vshrl.u32 %v4117, 5
        %v4119 = vand.u32 %v4117, 31
        %v4120 = vsub.s32 32, %v4119
        %v4121 = vshrl.u32 683565275, %v4120
        %v4122 = vshll.u32 683565275, %v4119
        %v4123 = vshrl.u32 2475754826, %v4120
        %v4124 = vor.u32 %v4122, %v4123
        %v4125 = vshll.u32 2475754826, %v4119
        %v4126 = vshrl.u32 2131351028, %v4120
        %v4127 = vor.u32 %v4125, %v4126
        %v4128 = vshll.u32 2131351028, %v4119
        %v4129 = vshrl.u32 2102212464, %v4120
        %v4130 = vor.u32 %v4128, %v4129
        %v4131 = vshll.u32 2102212464, %v4119
        %v4132 = vshrl.u32 920167782, %v4120
        %v4133 = vor.u32 %v4131, %v4132
        %v4134 = vshll.u32 920167782, %v4119
        %v4135 = vshrl.u32 1326507024, %v4120
        %v4136 = vor.u32 %v4134, %v4135
        %vm4137 = vcmp.lt.s32.totalorder %v4118, 1
        %vm4138 = vcmp.lt.s32.totalorder %v4118, 2
        %vm4139 = vcmp.lt.s32.totalorder %v4118, 3
        %vm4140 = vcmp.lt.s32.totalorder %v4118, 4
        %v4141 = vsel %vm4137, %v4121, %v4124
        %v4142 = vsel %vm4140, %v4130, 2102212464
        %v4143 = vsel %vm4139, %v4127, %v4142
        %v4144 = vsel %vm4138, %v4141, %v4143
        %v4145 = vsel %vm4137, %v4124, %v4127
        %v4146 = vsel %vm4140, %v4133, 920167782
        %v4147 = vsel %vm4139, %v4130, %v4146
        %v4148 = vsel %vm4138, %v4145, %v4147
        %v4149 = vsel %vm4137, %v4127, %v4130
        %v4150 = vsel %vm4140, %v4136, 1326507024
        %v4151 = vsel %vm4139, %v4133, %v4150
        %v4152 = vsel %vm4138, %v4149, %v4151
        %v4153 = vshll.u32 %v4113, 8
        %v4154 = vmul.u32.u64.compose %v4153, %v4152
        %v4155 = vextract.low.u32 %v4154
        %v4156 = vextract.high.u32 %v4154
        %v4157 = vmul.u32.u64.compose %v4153, %v4148
        %v4158 = vextract.low.u32 %v4157
        %v4159 = vextract.high.u32 %v4157
        %v4160 = vmul.u32 %v4153, %v4144
        %v4161 = vadd.s32 %v4156, %v4158
        %vm4162 = vc.u32 %v4156, %v4158
        %v4163 = vadd.s32 %v4159, 1
        %v4164 = vsel %vm4162, %v4163, %v4159
        %v4165 = vadd.s32 %v4160, %v4164
        %v4166 = vadd.s32 %v4165, 536870912
        %v4167 = vshrl.u32 %v4166, 30
        %v4168 = vshll.u32 %v4167, 30
        %v4169 = vsub.s32 %v4165, %v4168
        %vm4170 = vcmp.lt.s32.totalorder %v4169, 0
        %v4171 = vsub.s32 0, %v4169
        %v4172 = vsel %vm4170, %v4171, %v4169
        %v4173 = vclz %v4172
        %v4174 = vsub.s32 %v4173, 2
        %vm4175 = vcmp.gt.s32.totalorder 0, %v4174
        %v4176 = vsel %vm4175, 0, %v4174
        %v4177 = vsub.s32 32, %v4176
        %v4178 = vshll.u32 %v4169, %v4176
        %v4179 = vshrl.u32 %v4161, %v4177
        %v4180 = vor.u32 %v4178, %v4179
        %v4181 = vsub.s32 4294967266, %v4176
        %v4182 = vadd.s32 %v4181, 127
        %v4183 = vshll.u32 %v4182, 23
        %v4184 = vor.u32 4788187, %v4183
        %v4185 = vand.u32 2147483647, %v4184
        %v4187 = vcvt.s32.f32 %v4180
        %v4188 = vmul.f32 %v4187, %v4185
        %v4189 = vxor.u32 %v4188, 2147483648
        %v4190 = vsel %vm4107, %v4189, %v4188
        %v4191 = vsub.s32 4, %v4167
        %v4192 = vsel %vm4107, %v4191, %v4167
        %v4193 = vsel %vm4106, %v541, %v4190
        %v4194 = vsel %vm4106, 0, %v4192
        %v4195 = vcosq.f32.pop %v4193
        %v4196 = vsinq.f32.pop %v4193
        %vm4197 = vweird.f32 %v541
        %v4198 = vand.u32 %v4194, 3
        %vm4199 = vcmp.lt.s32.totalorder %v4198, 2
        %vm4200 = vcmp.eq.s32.totalorder %v4198, 0
        %v4201 = vxor.u32 %v4196, 2147483648
        %v4202 = vsel %vm4200, %v4195, %v4201
        %vm4203 = vcmp.eq.s32.totalorder %v4198, 2
        %v4204 = vxor.u32 %v4195, 2147483648
        %v4205 = vsel %vm4203, %v4204, %v4196
        %v4206 = vsel %vm4199, %v4202, %v4205
        %v4207 = vsel %vm4197, nan, %v4206
        %v4208 = vand.u32 2147483647, %v542
        %vm4209 = vcmp.le.f32.partialorder %v4208, 0.7853982
        %vm4210 = vcmp.lt.s32.totalorder %v542, 0
        %v4211 = vand.u32 %v542, 2139095040
        %v4212 = vshrl.u32 %v4211, 23
        %v4213 = vsub.s32 %v4212, 127
        %v4214 = vand.u32 2147483647, %v542
        %v4215 = vand.u32 %v4214, 8388607
        %v4216 = vor.u32 %v4215, 8388608
        %v4217 = vsub.s32 0, %v4216
        %v4218 = vadd.s32 %v4213, 1
        %vm4219 = vcmp.gt.s32.totalorder %v4218, 0
        %v4220 = vsel %vm4219, %v4218, 0
        %v4221 = vshrl.u32 %v4220, 5
        %v4222 = vand.u32 %v4220, 31
        %v4223 = vsub.s32 32, %v4222
        %v4224 = vshrl.u32 683565275, %v4223
        %v4225 = vshll.u32 683565275, %v4222
        %v4226 = vshrl.u32 2475754826, %v4223
        %v4227 = vor.u32 %v4225, %v4226
        %v4228 = vshll.u32 2475754826, %v4222
        %v4229 = vshrl.u32 2131351028, %v4223
        %v4230 = vor.u32 %v4228, %v4229
        %v4231 = vshll.u32 2131351028, %v4222
        %v4232 = vshrl.u32 2102212464, %v4223
        %v4233 = vor.u32 %v4231, %v4232
        %v4234 = vshll.u32 2102212464, %v4222
        %v4235 = vshrl.u32 920167782, %v4223
        %v4236 = vor.u32 %v4234, %v4235
        %v4237 = vshll.u32 920167782, %v4222
        %v4238 = vshrl.u32 1326507024, %v4223
        %v4239 = vor.u32 %v4237, %v4238
        %vm4240 = vcmp.lt.s32.totalorder %v4221, 1
        %vm4241 = vcmp.lt.s32.totalorder %v4221, 2
        %vm4242 = vcmp.lt.s32.totalorder %v4221, 3
        %vm4243 = vcmp.lt.s32.totalorder %v4221, 4
        %v4244 = vsel %vm4240, %v4224, %v4227
        %v4245 = vsel %vm4243, %v4233, 2102212464
        %v4246 = vsel %vm4242, %v4230, %v4245
        %v4247 = vsel %vm4241, %v4244, %v4246
        %v4248 = vsel %vm4240, %v4227, %v4230
        %v4249 = vsel %vm4243, %v4236, 920167782
        %v4250 = vsel %vm4242, %v4233, %v4249
        %v4251 = vsel %vm4241, %v4248, %v4250
        %v4252 = vsel %vm4240, %v4230, %v4233
        %v4253 = vsel %vm4243, %v4239, 1326507024
        %v4254 = vsel %vm4242, %v4236, %v4253
        %v4255 = vsel %vm4241, %v4252, %v4254
        %v4256 = vshll.u32 %v4216, 8
        %v4257 = vmul.u32.u64.compose %v4256, %v4255
        %v4258 = vextract.low.u32 %v4257
        %v4259 = vextract.high.u32 %v4257
        %v4260 = vmul.u32.u64.compose %v4256, %v4251
        %v4261 = vextract.low.u32 %v4260
        %v4262 = vextract.high.u32 %v4260
        %v4263 = vmul.u32 %v4256, %v4247
        %v4264 = vadd.s32 %v4259, %v4261
        %vm4265 = vc.u32 %v4259, %v4261
        %v4266 = vadd.s32 %v4262, 1
        %v4267 = vsel %vm4265, %v4266, %v4262
        %v4268 = vadd.s32 %v4263, %v4267
        %v4269 = vadd.s32 %v4268, 536870912
        %v4270 = vshrl.u32 %v4269, 30
        %v4271 = vshll.u32 %v4270, 30
        %v4272 = vsub.s32 %v4268, %v4271
        %vm4273 = vcmp.lt.s32.totalorder %v4272, 0
        %v4274 = vsub.s32 0, %v4272
        %v4275 = vsel %vm4273, %v4274, %v4272
        %v4276 = vclz %v4275
        %v4277 = vsub.s32 %v4276, 2
        %vm4278 = vcmp.gt.s32.totalorder 0, %v4277
        %v4279 = vsel %vm4278, 0, %v4277
        %v4280 = vsub.s32 32, %v4279
        %v4281 = vshll.u32 %v4272, %v4279
        %v4282 = vshrl.u32 %v4264, %v4280
        %v4283 = vor.u32 %v4281, %v4282
        %v4284 = vsub.s32 4294967266, %v4279
        %v4285 = vadd.s32 %v4284, 127
        %v4286 = vshll.u32 %v4285, 23
        %v4287 = vor.u32 4788187, %v4286
        %v4288 = vand.u32 2147483647, %v4287
        %v4290 = vcvt.s32.f32 %v4283
        %v4291 = vmul.f32 %v4290, %v4288
        %v4292 = vxor.u32 %v4291, 2147483648
        %v4293 = vsel %vm4210, %v4292, %v4291
        %v4294 = vsub.s32 4, %v4270
        %v4295 = vsel %vm4210, %v4294, %v4270
        %v4296 = vsel %vm4209, %v542, %v4293
        %v4297 = vsel %vm4209, 0, %v4295
        %v4298 = vcosq.f32.pop %v4296
        %v4299 = vsinq.f32.pop %v4296
        %vm4300 = vweird.f32 %v542
        %v4301 = vand.u32 %v4297, 3
        %vm4302 = vcmp.lt.s32.totalorder %v4301, 2
        %vm4303 = vcmp.eq.s32.totalorder %v4301, 0
        %v4304 = vxor.u32 %v4299, 2147483648
        %v4305 = vsel %vm4303, %v4298, %v4304
        %vm4306 = vcmp.eq.s32.totalorder %v4301, 2
        %v4307 = vxor.u32 %v4298, 2147483648
        %v4308 = vsel %vm4306, %v4307, %v4299
        %v4309 = vsel %vm4302, %v4305, %v4308
        %v4310 = vsel %vm4300, nan, %v4309
        %v4311 = vand.u32 2147483647, %v543
        %vm4312 = vcmp.le.f32.partialorder %v4311, 0.7853982
        %vm4313 = vcmp.lt.s32.totalorder %v543, 0
        %v4314 = vand.u32 %v543, 2139095040
        %v4315 = vshrl.u32 %v4314, 23
        %v4316 = vsub.s32 %v4315, 127
        %v4317 = vand.u32 2147483647, %v543
        %v4318 = vand.u32 %v4317, 8388607
        %v4319 = vor.u32 %v4318, 8388608
        %v4320 = vsub.s32 0, %v4319
        %v4321 = vadd.s32 %v4316, 1
        %vm4322 = vcmp.gt.s32.totalorder %v4321, 0
        %v4323 = vsel %vm4322, %v4321, 0
        %v4324 = vshrl.u32 %v4323, 5
        %v4325 = vand.u32 %v4323, 31
        %v4326 = vsub.s32 32, %v4325
        %v4327 = vshrl.u32 683565275, %v4326
        %v4328 = vshll.u32 683565275, %v4325
        %v4329 = vshrl.u32 2475754826, %v4326
        %v4330 = vor.u32 %v4328, %v4329
        %v4331 = vshll.u32 2475754826, %v4325
        %v4332 = vshrl.u32 2131351028, %v4326
        %v4333 = vor.u32 %v4331, %v4332
        %v4334 = vshll.u32 2131351028, %v4325
        %v4335 = vshrl.u32 2102212464, %v4326
        %v4336 = vor.u32 %v4334, %v4335
        %v4337 = vshll.u32 2102212464, %v4325
        %v4338 = vshrl.u32 920167782, %v4326
        %v4339 = vor.u32 %v4337, %v4338
        %v4340 = vshll.u32 920167782, %v4325
        %v4341 = vshrl.u32 1326507024, %v4326
        %v4342 = vor.u32 %v4340, %v4341
        %vm4343 = vcmp.lt.s32.totalorder %v4324, 1
        %vm4344 = vcmp.lt.s32.totalorder %v4324, 2
        %vm4345 = vcmp.lt.s32.totalorder %v4324, 3
        %vm4346 = vcmp.lt.s32.totalorder %v4324, 4
        %v4347 = vsel %vm4343, %v4327, %v4330
        %v4348 = vsel %vm4346, %v4336, 2102212464
        %v4349 = vsel %vm4345, %v4333, %v4348
        %v4350 = vsel %vm4344, %v4347, %v4349
        %v4351 = vsel %vm4343, %v4330, %v4333
        %v4352 = vsel %vm4346, %v4339, 920167782
        %v4353 = vsel %vm4345, %v4336, %v4352
        %v4354 = vsel %vm4344, %v4351, %v4353
        %v4355 = vsel %vm4343, %v4333, %v4336
        %v4356 = vsel %vm4346, %v4342, 1326507024
        %v4357 = vsel %vm4345, %v4339, %v4356
        %v4358 = vsel %vm4344, %v4355, %v4357
        %v4359 = vshll.u32 %v4319, 8
        %v4360 = vmul.u32.u64.compose %v4359, %v4358
        %v4361 = vextract.low.u32 %v4360
        %v4362 = vextract.high.u32 %v4360
        %v4363 = vmul.u32.u64.compose %v4359, %v4354
        %v4364 = vextract.low.u32 %v4363
        %v4365 = vextract.high.u32 %v4363
        %v4366 = vmul.u32 %v4359, %v4350
        %v4367 = vadd.s32 %v4362, %v4364
        %vm4368 = vc.u32 %v4362, %v4364
        %v4369 = vadd.s32 %v4365, 1
        %v4370 = vsel %vm4368, %v4369, %v4365
        %v4371 = vadd.s32 %v4366, %v4370
        %v4372 = vadd.s32 %v4371, 536870912
        %v4373 = vshrl.u32 %v4372, 30
        %v4374 = vshll.u32 %v4373, 30
        %v4375 = vsub.s32 %v4371, %v4374
        %vm4376 = vcmp.lt.s32.totalorder %v4375, 0
        %v4377 = vsub.s32 0, %v4375
        %v4378 = vsel %vm4376, %v4377, %v4375
        %v4379 = vclz %v4378
        %v4380 = vsub.s32 %v4379, 2
        %vm4381 = vcmp.gt.s32.totalorder 0, %v4380
        %v4382 = vsel %vm4381, 0, %v4380
        %v4383 = vsub.s32 32, %v4382
        %v4384 = vshll.u32 %v4375, %v4382
        %v4385 = vshrl.u32 %v4367, %v4383
        %v4386 = vor.u32 %v4384, %v4385
        %v4387 = vsub.s32 4294967266, %v4382
        %v4388 = vadd.s32 %v4387, 127
        %v4389 = vshll.u32 %v4388, 23
        %v4390 = vor.u32 4788187, %v4389
        %v4391 = vand.u32 2147483647, %v4390
        %v4393 = vcvt.s32.f32 %v4386
        %v4394 = vmul.f32 %v4393, %v4391
        %v4395 = vxor.u32 %v4394, 2147483648
        %v4396 = vsel %vm4313, %v4395, %v4394
        %v4397 = vsub.s32 4, %v4373
        %v4398 = vsel %vm4313, %v4397, %v4373
        %v4399 = vsel %vm4312, %v543, %v4396
        %v4400 = vsel %vm4312, 0, %v4398
        %v4401 = vcosq.f32.pop %v4399
        %v4402 = vsinq.f32.pop %v4399
        %vm4403 = vweird.f32 %v543
        %v4404 = vand.u32 %v4400, 3
        %vm4405 = vcmp.lt.s32.totalorder %v4404, 2
        %vm4406 = vcmp.eq.s32.totalorder %v4404, 0
        %v4407 = vxor.u32 %v4402, 2147483648
        %v4408 = vsel %vm4406, %v4401, %v4407
        %vm4409 = vcmp.eq.s32.totalorder %v4404, 2
        %v4410 = vxor.u32 %v4401, 2147483648
        %v4411 = vsel %vm4409, %v4410, %v4402
        %v4412 = vsel %vm4405, %v4408, %v4411
        %v4413 = vsel %vm4403, nan, %v4412
        %v4414 = vand.u32 2147483647, %v544
        %vm4415 = vcmp.le.f32.partialorder %v4414, 0.7853982
        %vm4416 = vcmp.lt.s32.totalorder %v544, 0
        %v4417 = vand.u32 %v544, 2139095040
        %v4418 = vshrl.u32 %v4417, 23
        %v4419 = vsub.s32 %v4418, 127
        %v4420 = vand.u32 2147483647, %v544
        %v4421 = vand.u32 %v4420, 8388607
        %v4422 = vor.u32 %v4421, 8388608
        %v4423 = vsub.s32 0, %v4422
        %v4424 = vadd.s32 %v4419, 1
        %vm4425 = vcmp.gt.s32.totalorder %v4424, 0
        %v4426 = vsel %vm4425, %v4424, 0
        %v4427 = vshrl.u32 %v4426, 5
        %v4428 = vand.u32 %v4426, 31
        %v4429 = vsub.s32 32, %v4428
        %v4430 = vshrl.u32 683565275, %v4429
        %v4431 = vshll.u32 683565275, %v4428
        %v4432 = vshrl.u32 2475754826, %v4429
        %v4433 = vor.u32 %v4431, %v4432
        %v4434 = vshll.u32 2475754826, %v4428
        %v4435 = vshrl.u32 2131351028, %v4429
        %v4436 = vor.u32 %v4434, %v4435
        %v4437 = vshll.u32 2131351028, %v4428
        %v4438 = vshrl.u32 2102212464, %v4429
        %v4439 = vor.u32 %v4437, %v4438
        %v4440 = vshll.u32 2102212464, %v4428
        %v4441 = vshrl.u32 920167782, %v4429
        %v4442 = vor.u32 %v4440, %v4441
        %v4443 = vshll.u32 920167782, %v4428
        %v4444 = vshrl.u32 1326507024, %v4429
        %v4445 = vor.u32 %v4443, %v4444
        %vm4446 = vcmp.lt.s32.totalorder %v4427, 1
        %vm4447 = vcmp.lt.s32.totalorder %v4427, 2
        %vm4448 = vcmp.lt.s32.totalorder %v4427, 3
        %vm4449 = vcmp.lt.s32.totalorder %v4427, 4
        %v4450 = vsel %vm4446, %v4430, %v4433
        %v4451 = vsel %vm4449, %v4439, 2102212464
        %v4452 = vsel %vm4448, %v4436, %v4451
        %v4453 = vsel %vm4447, %v4450, %v4452
        %v4454 = vsel %vm4446, %v4433, %v4436
        %v4455 = vsel %vm4449, %v4442, 920167782
        %v4456 = vsel %vm4448, %v4439, %v4455
        %v4457 = vsel %vm4447, %v4454, %v4456
        %v4458 = vsel %vm4446, %v4436, %v4439
        %v4459 = vsel %vm4449, %v4445, 1326507024
        %v4460 = vsel %vm4448, %v4442, %v4459
        %v4461 = vsel %vm4447, %v4458, %v4460
        %v4462 = vshll.u32 %v4422, 8
        %v4463 = vmul.u32.u64.compose %v4462, %v4461
        %v4464 = vextract.low.u32 %v4463
        %v4465 = vextract.high.u32 %v4463
        %v4466 = vmul.u32.u64.compose %v4462, %v4457
        %v4467 = vextract.low.u32 %v4466
        %v4468 = vextract.high.u32 %v4466
        %v4469 = vmul.u32 %v4462, %v4453
        %v4470 = vadd.s32 %v4465, %v4467
        %vm4471 = vc.u32 %v4465, %v4467
        %v4472 = vadd.s32 %v4468, 1
        %v4473 = vsel %vm4471, %v4472, %v4468
        %v4474 = vadd.s32 %v4469, %v4473
        %v4475 = vadd.s32 %v4474, 536870912
        %v4476 = vshrl.u32 %v4475, 30
        %v4477 = vshll.u32 %v4476, 30
        %v4478 = vsub.s32 %v4474, %v4477
        %vm4479 = vcmp.lt.s32.totalorder %v4478, 0
        %v4480 = vsub.s32 0, %v4478
        %v4481 = vsel %vm4479, %v4480, %v4478
        %v4482 = vclz %v4481
        %v4483 = vsub.s32 %v4482, 2
        %vm4484 = vcmp.gt.s32.totalorder 0, %v4483
        %v4485 = vsel %vm4484, 0, %v4483
        %v4486 = vsub.s32 32, %v4485
        %v4487 = vshll.u32 %v4478, %v4485
        %v4488 = vshrl.u32 %v4470, %v4486
        %v4489 = vor.u32 %v4487, %v4488
        %v4490 = vsub.s32 4294967266, %v4485
        %v4491 = vadd.s32 %v4490, 127
        %v4492 = vshll.u32 %v4491, 23
        %v4493 = vor.u32 4788187, %v4492
        %v4494 = vand.u32 2147483647, %v4493
        %v4496 = vcvt.s32.f32 %v4489
        %v4497 = vmul.f32 %v4496, %v4494
        %v4498 = vxor.u32 %v4497, 2147483648
        %v4499 = vsel %vm4416, %v4498, %v4497
        %v4500 = vsub.s32 4, %v4476
        %v4501 = vsel %vm4416, %v4500, %v4476
        %v4502 = vsel %vm4415, %v544, %v4499
        %v4503 = vsel %vm4415, 0, %v4501
        %v4504 = vcosq.f32.pop %v4502
        %v4505 = vsinq.f32.pop %v4502
        %vm4506 = vweird.f32 %v544
        %v4507 = vand.u32 %v4503, 3
        %vm4508 = vcmp.lt.s32.totalorder %v4507, 2
        %vm4509 = vcmp.eq.s32.totalorder %v4507, 0
        %v4510 = vxor.u32 %v4505, 2147483648
        %v4511 = vsel %vm4509, %v4504, %v4510
        %vm4512 = vcmp.eq.s32.totalorder %v4507, 2
        %v4513 = vxor.u32 %v4504, 2147483648
        %v4514 = vsel %vm4512, %v4513, %v4505
        %v4515 = vsel %vm4508, %v4511, %v4514
        %v4516 = vsel %vm4506, nan, %v4515
        %v4517 = vand.u32 2147483647, %v545
        %vm4518 = vcmp.le.f32.partialorder %v4517, 0.7853982
        %vm4519 = vcmp.lt.s32.totalorder %v545, 0
        %v4520 = vand.u32 %v545, 2139095040
        %v4521 = vshrl.u32 %v4520, 23
        %v4522 = vsub.s32 %v4521, 127
        %v4523 = vand.u32 2147483647, %v545
        %v4524 = vand.u32 %v4523, 8388607
        %v4525 = vor.u32 %v4524, 8388608
        %v4526 = vsub.s32 0, %v4525
        %v4527 = vadd.s32 %v4522, 1
        %vm4528 = vcmp.gt.s32.totalorder %v4527, 0
        %v4529 = vsel %vm4528, %v4527, 0
        %v4530 = vshrl.u32 %v4529, 5
        %v4531 = vand.u32 %v4529, 31
        %v4532 = vsub.s32 32, %v4531
        %v4533 = vshrl.u32 683565275, %v4532
        %v4534 = vshll.u32 683565275, %v4531
        %v4535 = vshrl.u32 2475754826, %v4532
        %v4536 = vor.u32 %v4534, %v4535
        %v4537 = vshll.u32 2475754826, %v4531
        %v4538 = vshrl.u32 2131351028, %v4532
        %v4539 = vor.u32 %v4537, %v4538
        %v4540 = vshll.u32 2131351028, %v4531
        %v4541 = vshrl.u32 2102212464, %v4532
        %v4542 = vor.u32 %v4540, %v4541
        %v4543 = vshll.u32 2102212464, %v4531
        %v4544 = vshrl.u32 920167782, %v4532
        %v4545 = vor.u32 %v4543, %v4544
        %v4546 = vshll.u32 920167782, %v4531
        %v4547 = vshrl.u32 1326507024, %v4532
        %v4548 = vor.u32 %v4546, %v4547
        %vm4549 = vcmp.lt.s32.totalorder %v4530, 1
        %vm4550 = vcmp.lt.s32.totalorder %v4530, 2
        %vm4551 = vcmp.lt.s32.totalorder %v4530, 3
        %vm4552 = vcmp.lt.s32.totalorder %v4530, 4
        %v4553 = vsel %vm4549, %v4533, %v4536
        %v4554 = vsel %vm4552, %v4542, 2102212464
        %v4555 = vsel %vm4551, %v4539, %v4554
        %v4556 = vsel %vm4550, %v4553, %v4555
        %v4557 = vsel %vm4549, %v4536, %v4539
        %v4558 = vsel %vm4552, %v4545, 920167782
        %v4559 = vsel %vm4551, %v4542, %v4558
        %v4560 = vsel %vm4550, %v4557, %v4559
        %v4561 = vsel %vm4549, %v4539, %v4542
        %v4562 = vsel %vm4552, %v4548, 1326507024
        %v4563 = vsel %vm4551, %v4545, %v4562
        %v4564 = vsel %vm4550, %v4561, %v4563
        %v4565 = vshll.u32 %v4525, 8
        %v4566 = vmul.u32.u64.compose %v4565, %v4564
        %v4567 = vextract.low.u32 %v4566
        %v4568 = vextract.high.u32 %v4566
        %v4569 = vmul.u32.u64.compose %v4565, %v4560
        %v4570 = vextract.low.u32 %v4569
        %v4571 = vextract.high.u32 %v4569
        %v4572 = vmul.u32 %v4565, %v4556
        %v4573 = vadd.s32 %v4568, %v4570
        %vm4574 = vc.u32 %v4568, %v4570
        %v4575 = vadd.s32 %v4571, 1
        %v4576 = vsel %vm4574, %v4575, %v4571
        %v4577 = vadd.s32 %v4572, %v4576
        %v4578 = vadd.s32 %v4577, 536870912
        %v4579 = vshrl.u32 %v4578, 30
        %v4580 = vshll.u32 %v4579, 30
        %v4581 = vsub.s32 %v4577, %v4580
        %vm4582 = vcmp.lt.s32.totalorder %v4581, 0
        %v4583 = vsub.s32 0, %v4581
        %v4584 = vsel %vm4582, %v4583, %v4581
        %v4585 = vclz %v4584
        %v4586 = vsub.s32 %v4585, 2
        %vm4587 = vcmp.gt.s32.totalorder 0, %v4586
        %v4588 = vsel %vm4587, 0, %v4586
        %v4589 = vsub.s32 32, %v4588
        %v4590 = vshll.u32 %v4581, %v4588
        %v4591 = vshrl.u32 %v4573, %v4589
        %v4592 = vor.u32 %v4590, %v4591
        %v4593 = vsub.s32 4294967266, %v4588
        %v4594 = vadd.s32 %v4593, 127
        %v4595 = vshll.u32 %v4594, 23
        %v4596 = vor.u32 4788187, %v4595
        %v4597 = vand.u32 2147483647, %v4596
        %v4599 = vcvt.s32.f32 %v4592
        %v4600 = vmul.f32 %v4599, %v4597
        %v4601 = vxor.u32 %v4600, 2147483648
        %v4602 = vsel %vm4519, %v4601, %v4600
        %v4603 = vsub.s32 4, %v4579
        %v4604 = vsel %vm4519, %v4603, %v4579
        %v4605 = vsel %vm4518, %v545, %v4602
        %v4606 = vsel %vm4518, 0, %v4604
        %v4607 = vcosq.f32.pop %v4605
        %v4608 = vsinq.f32.pop %v4605
        %vm4609 = vweird.f32 %v545
        %v4610 = vand.u32 %v4606, 3
        %vm4611 = vcmp.lt.s32.totalorder %v4610, 2
        %vm4612 = vcmp.eq.s32.totalorder %v4610, 0
        %v4613 = vxor.u32 %v4608, 2147483648
        %v4614 = vsel %vm4612, %v4607, %v4613
        %vm4615 = vcmp.eq.s32.totalorder %v4610, 2
        %v4616 = vxor.u32 %v4607, 2147483648
        %v4617 = vsel %vm4615, %v4616, %v4608
        %v4618 = vsel %vm4611, %v4614, %v4617
        %v4619 = vsel %vm4609, nan, %v4618
        %v4620 = vand.u32 2147483647, %v546
        %vm4621 = vcmp.le.f32.partialorder %v4620, 0.7853982
        %vm4622 = vcmp.lt.s32.totalorder %v546, 0
        %v4623 = vand.u32 %v546, 2139095040
        %v4624 = vshrl.u32 %v4623, 23
        %v4625 = vsub.s32 %v4624, 127
        %v4626 = vand.u32 2147483647, %v546
        %v4627 = vand.u32 %v4626, 8388607
        %v4628 = vor.u32 %v4627, 8388608
        %v4629 = vsub.s32 0, %v4628
        %v4630 = vadd.s32 %v4625, 1
        %vm4631 = vcmp.gt.s32.totalorder %v4630, 0
        %v4632 = vsel %vm4631, %v4630, 0
        %v4633 = vshrl.u32 %v4632, 5
        %v4634 = vand.u32 %v4632, 31
        %v4635 = vsub.s32 32, %v4634
        %v4636 = vshrl.u32 683565275, %v4635
        %v4637 = vshll.u32 683565275, %v4634
        %v4638 = vshrl.u32 2475754826, %v4635
        %v4639 = vor.u32 %v4637, %v4638
        %v4640 = vshll.u32 2475754826, %v4634
        %v4641 = vshrl.u32 2131351028, %v4635
        %v4642 = vor.u32 %v4640, %v4641
        %v4643 = vshll.u32 2131351028, %v4634
        %v4644 = vshrl.u32 2102212464, %v4635
        %v4645 = vor.u32 %v4643, %v4644
        %v4646 = vshll.u32 2102212464, %v4634
        %v4647 = vshrl.u32 920167782, %v4635
        %v4648 = vor.u32 %v4646, %v4647
        %v4649 = vshll.u32 920167782, %v4634
        %v4650 = vshrl.u32 1326507024, %v4635
        %v4651 = vor.u32 %v4649, %v4650
        %vm4652 = vcmp.lt.s32.totalorder %v4633, 1
        %vm4653 = vcmp.lt.s32.totalorder %v4633, 2
        %vm4654 = vcmp.lt.s32.totalorder %v4633, 3
        %vm4655 = vcmp.lt.s32.totalorder %v4633, 4
        %v4656 = vsel %vm4652, %v4636, %v4639
        %v4657 = vsel %vm4655, %v4645, 2102212464
        %v4658 = vsel %vm4654, %v4642, %v4657
        %v4659 = vsel %vm4653, %v4656, %v4658
        %v4660 = vsel %vm4652, %v4639, %v4642
        %v4661 = vsel %vm4655, %v4648, 920167782
        %v4662 = vsel %vm4654, %v4645, %v4661
        %v4663 = vsel %vm4653, %v4660, %v4662
        %v4664 = vsel %vm4652, %v4642, %v4645
        %v4665 = vsel %vm4655, %v4651, 1326507024
        %v4666 = vsel %vm4654, %v4648, %v4665
        %v4667 = vsel %vm4653, %v4664, %v4666
        %v4668 = vshll.u32 %v4628, 8
        %v4669 = vmul.u32.u64.compose %v4668, %v4667
        %v4670 = vextract.low.u32 %v4669
        %v4671 = vextract.high.u32 %v4669
        %v4672 = vmul.u32.u64.compose %v4668, %v4663
        %v4673 = vextract.low.u32 %v4672
        %v4674 = vextract.high.u32 %v4672
        %v4675 = vmul.u32 %v4668, %v4659
        %v4676 = vadd.s32 %v4671, %v4673
        %vm4677 = vc.u32 %v4671, %v4673
        %v4678 = vadd.s32 %v4674, 1
        %v4679 = vsel %vm4677, %v4678, %v4674
        %v4680 = vadd.s32 %v4675, %v4679
        %v4681 = vadd.s32 %v4680, 536870912
        %v4682 = vshrl.u32 %v4681, 30
        %v4683 = vshll.u32 %v4682, 30
        %v4684 = vsub.s32 %v4680, %v4683
        %vm4685 = vcmp.lt.s32.totalorder %v4684, 0
        %v4686 = vsub.s32 0, %v4684
        %v4687 = vsel %vm4685, %v4686, %v4684
        %v4688 = vclz %v4687
        %v4689 = vsub.s32 %v4688, 2
        %vm4690 = vcmp.gt.s32.totalorder 0, %v4689
        %v4691 = vsel %vm4690, 0, %v4689
        %v4692 = vsub.s32 32, %v4691
        %v4693 = vshll.u32 %v4684, %v4691
        %v4694 = vshrl.u32 %v4676, %v4692
        %v4695 = vor.u32 %v4693, %v4694
        %v4696 = vsub.s32 4294967266, %v4691
        %v4697 = vadd.s32 %v4696, 127
        %v4698 = vshll.u32 %v4697, 23
        %v4699 = vor.u32 4788187, %v4698
        %v4700 = vand.u32 2147483647, %v4699
        %v4702 = vcvt.s32.f32 %v4695
        %v4703 = vmul.f32 %v4702, %v4700
        %v4704 = vxor.u32 %v4703, 2147483648
        %v4705 = vsel %vm4622, %v4704, %v4703
        %v4706 = vsub.s32 4, %v4682
        %v4707 = vsel %vm4622, %v4706, %v4682
        %v4708 = vsel %vm4621, %v546, %v4705
        %v4709 = vsel %vm4621, 0, %v4707
        %v4710 = vcosq.f32.pop %v4708
        %v4711 = vsinq.f32.pop %v4708
        %vm4712 = vweird.f32 %v546
        %v4713 = vand.u32 %v4709, 3
        %vm4714 = vcmp.lt.s32.totalorder %v4713, 2
        %vm4715 = vcmp.eq.s32.totalorder %v4713, 0
        %v4716 = vxor.u32 %v4711, 2147483648
        %v4717 = vsel %vm4715, %v4710, %v4716
        %vm4718 = vcmp.eq.s32.totalorder %v4713, 2
        %v4719 = vxor.u32 %v4710, 2147483648
        %v4720 = vsel %vm4718, %v4719, %v4711
        %v4721 = vsel %vm4714, %v4717, %v4720
        %v4722 = vsel %vm4712, nan, %v4721
        %v4723 = vand.u32 2147483647, %v547
        %vm4724 = vcmp.le.f32.partialorder %v4723, 0.7853982
        %vm4725 = vcmp.lt.s32.totalorder %v547, 0
        %v4726 = vand.u32 %v547, 2139095040
        %v4727 = vshrl.u32 %v4726, 23
        %v4728 = vsub.s32 %v4727, 127
        %v4729 = vand.u32 2147483647, %v547
        %v4730 = vand.u32 %v4729, 8388607
        %v4731 = vor.u32 %v4730, 8388608
        %v4732 = vsub.s32 0, %v4731
        %v4733 = vadd.s32 %v4728, 1
        %vm4734 = vcmp.gt.s32.totalorder %v4733, 0
        %v4735 = vsel %vm4734, %v4733, 0
        %v4736 = vshrl.u32 %v4735, 5
        %v4737 = vand.u32 %v4735, 31
        %v4738 = vsub.s32 32, %v4737
        %v4739 = vshrl.u32 683565275, %v4738
        %v4740 = vshll.u32 683565275, %v4737
        %v4741 = vshrl.u32 2475754826, %v4738
        %v4742 = vor.u32 %v4740, %v4741
        %v4743 = vshll.u32 2475754826, %v4737
        %v4744 = vshrl.u32 2131351028, %v4738
        %v4745 = vor.u32 %v4743, %v4744
        %v4746 = vshll.u32 2131351028, %v4737
        %v4747 = vshrl.u32 2102212464, %v4738
        %v4748 = vor.u32 %v4746, %v4747
        %v4749 = vshll.u32 2102212464, %v4737
        %v4750 = vshrl.u32 920167782, %v4738
        %v4751 = vor.u32 %v4749, %v4750
        %v4752 = vshll.u32 920167782, %v4737
        %v4753 = vshrl.u32 1326507024, %v4738
        %v4754 = vor.u32 %v4752, %v4753
        %vm4755 = vcmp.lt.s32.totalorder %v4736, 1
        %vm4756 = vcmp.lt.s32.totalorder %v4736, 2
        %vm4757 = vcmp.lt.s32.totalorder %v4736, 3
        %vm4758 = vcmp.lt.s32.totalorder %v4736, 4
        %v4759 = vsel %vm4755, %v4739, %v4742
        %v4760 = vsel %vm4758, %v4748, 2102212464
        %v4761 = vsel %vm4757, %v4745, %v4760
        %v4762 = vsel %vm4756, %v4759, %v4761
        %v4763 = vsel %vm4755, %v4742, %v4745
        %v4764 = vsel %vm4758, %v4751, 920167782
        %v4765 = vsel %vm4757, %v4748, %v4764
        %v4766 = vsel %vm4756, %v4763, %v4765
        %v4767 = vsel %vm4755, %v4745, %v4748
        %v4768 = vsel %vm4758, %v4754, 1326507024
        %v4769 = vsel %vm4757, %v4751, %v4768
        %v4770 = vsel %vm4756, %v4767, %v4769
        %v4771 = vshll.u32 %v4731, 8
        %v4772 = vmul.u32.u64.compose %v4771, %v4770
        %v4773 = vextract.low.u32 %v4772
        %v4774 = vextract.high.u32 %v4772
        %v4775 = vmul.u32.u64.compose %v4771, %v4766
        %v4776 = vextract.low.u32 %v4775
        %v4777 = vextract.high.u32 %v4775
        %v4778 = vmul.u32 %v4771, %v4762
        %v4779 = vadd.s32 %v4774, %v4776
        %vm4780 = vc.u32 %v4774, %v4776
        %v4781 = vadd.s32 %v4777, 1
        %v4782 = vsel %vm4780, %v4781, %v4777
        %v4783 = vadd.s32 %v4778, %v4782
        %v4784 = vadd.s32 %v4783, 536870912
        %v4785 = vshrl.u32 %v4784, 30
        %v4786 = vshll.u32 %v4785, 30
        %v4787 = vsub.s32 %v4783, %v4786
        %vm4788 = vcmp.lt.s32.totalorder %v4787, 0
        %v4789 = vsub.s32 0, %v4787
        %v4790 = vsel %vm4788, %v4789, %v4787
        %v4791 = vclz %v4790
        %v4792 = vsub.s32 %v4791, 2
        %vm4793 = vcmp.gt.s32.totalorder 0, %v4792
        %v4794 = vsel %vm4793, 0, %v4792
        %v4795 = vsub.s32 32, %v4794
        %v4796 = vshll.u32 %v4787, %v4794
        %v4797 = vshrl.u32 %v4779, %v4795
        %v4798 = vor.u32 %v4796, %v4797
        %v4799 = vsub.s32 4294967266, %v4794
        %v4800 = vadd.s32 %v4799, 127
        %v4801 = vshll.u32 %v4800, 23
        %v4802 = vor.u32 4788187, %v4801
        %v4803 = vand.u32 2147483647, %v4802
        %v4805 = vcvt.s32.f32 %v4798
        %v4806 = vmul.f32 %v4805, %v4803
        %v4807 = vxor.u32 %v4806, 2147483648
        %v4808 = vsel %vm4725, %v4807, %v4806
        %v4809 = vsub.s32 4, %v4785
        %v4810 = vsel %vm4725, %v4809, %v4785
        %v4811 = vsel %vm4724, %v547, %v4808
        %v4812 = vsel %vm4724, 0, %v4810
        %v4813 = vcosq.f32.pop %v4811
        %v4814 = vsinq.f32.pop %v4811
        %vm4815 = vweird.f32 %v547
        %v4816 = vand.u32 %v4812, 3
        %vm4817 = vcmp.lt.s32.totalorder %v4816, 2
        %vm4818 = vcmp.eq.s32.totalorder %v4816, 0
        %v4819 = vxor.u32 %v4814, 2147483648
        %v4820 = vsel %vm4818, %v4813, %v4819
        %vm4821 = vcmp.eq.s32.totalorder %v4816, 2
        %v4822 = vxor.u32 %v4813, 2147483648
        %v4823 = vsel %vm4821, %v4822, %v4814
        %v4824 = vsel %vm4817, %v4820, %v4823
        %v4825 = vsel %vm4815, nan, %v4824
        %v4826 = vand.u32 2147483647, %v548
        %vm4827 = vcmp.le.f32.partialorder %v4826, 0.7853982
        %vm4828 = vcmp.lt.s32.totalorder %v548, 0
        %v4829 = vand.u32 %v548, 2139095040
        %v4830 = vshrl.u32 %v4829, 23
        %v4831 = vsub.s32 %v4830, 127
        %v4832 = vand.u32 2147483647, %v548
        %v4833 = vand.u32 %v4832, 8388607
        %v4834 = vor.u32 %v4833, 8388608
        %v4835 = vsub.s32 0, %v4834
        %v4836 = vadd.s32 %v4831, 1
        %vm4837 = vcmp.gt.s32.totalorder %v4836, 0
        %v4838 = vsel %vm4837, %v4836, 0
        %v4839 = vshrl.u32 %v4838, 5
        %v4840 = vand.u32 %v4838, 31
        %v4841 = vsub.s32 32, %v4840
        %v4842 = vshrl.u32 683565275, %v4841
        %v4843 = vshll.u32 683565275, %v4840
        %v4844 = vshrl.u32 2475754826, %v4841
        %v4845 = vor.u32 %v4843, %v4844
        %v4846 = vshll.u32 2475754826, %v4840
        %v4847 = vshrl.u32 2131351028, %v4841
        %v4848 = vor.u32 %v4846, %v4847
        %v4849 = vshll.u32 2131351028, %v4840
        %v4850 = vshrl.u32 2102212464, %v4841
        %v4851 = vor.u32 %v4849, %v4850
        %v4852 = vshll.u32 2102212464, %v4840
        %v4853 = vshrl.u32 920167782, %v4841
        %v4854 = vor.u32 %v4852, %v4853
        %v4855 = vshll.u32 920167782, %v4840
        %v4856 = vshrl.u32 1326507024, %v4841
        %v4857 = vor.u32 %v4855, %v4856
        %vm4858 = vcmp.lt.s32.totalorder %v4839, 1
        %vm4859 = vcmp.lt.s32.totalorder %v4839, 2
        %vm4860 = vcmp.lt.s32.totalorder %v4839, 3
        %vm4861 = vcmp.lt.s32.totalorder %v4839, 4
        %v4862 = vsel %vm4858, %v4842, %v4845
        %v4863 = vsel %vm4861, %v4851, 2102212464
        %v4864 = vsel %vm4860, %v4848, %v4863
        %v4865 = vsel %vm4859, %v4862, %v4864
        %v4866 = vsel %vm4858, %v4845, %v4848
        %v4867 = vsel %vm4861, %v4854, 920167782
        %v4868 = vsel %vm4860, %v4851, %v4867
        %v4869 = vsel %vm4859, %v4866, %v4868
        %v4870 = vsel %vm4858, %v4848, %v4851
        %v4871 = vsel %vm4861, %v4857, 1326507024
        %v4872 = vsel %vm4860, %v4854, %v4871
        %v4873 = vsel %vm4859, %v4870, %v4872
        %v4874 = vshll.u32 %v4834, 8
        %v4875 = vmul.u32.u64.compose %v4874, %v4873
        %v4876 = vextract.low.u32 %v4875
        %v4877 = vextract.high.u32 %v4875
        %v4878 = vmul.u32.u64.compose %v4874, %v4869
        %v4879 = vextract.low.u32 %v4878
        %v4880 = vextract.high.u32 %v4878
        %v4881 = vmul.u32 %v4874, %v4865
        %v4882 = vadd.s32 %v4877, %v4879
        %vm4883 = vc.u32 %v4877, %v4879
        %v4884 = vadd.s32 %v4880, 1
        %v4885 = vsel %vm4883, %v4884, %v4880
        %v4886 = vadd.s32 %v4881, %v4885
        %v4887 = vadd.s32 %v4886, 536870912
        %v4888 = vshrl.u32 %v4887, 30
        %v4889 = vshll.u32 %v4888, 30
        %v4890 = vsub.s32 %v4886, %v4889
        %vm4891 = vcmp.lt.s32.totalorder %v4890, 0
        %v4892 = vsub.s32 0, %v4890
        %v4893 = vsel %vm4891, %v4892, %v4890
        %v4894 = vclz %v4893
        %v4895 = vsub.s32 %v4894, 2
        %vm4896 = vcmp.gt.s32.totalorder 0, %v4895
        %v4897 = vsel %vm4896, 0, %v4895
        %v4898 = vsub.s32 32, %v4897
        %v4899 = vshll.u32 %v4890, %v4897
        %v4900 = vshrl.u32 %v4882, %v4898
        %v4901 = vor.u32 %v4899, %v4900
        %v4902 = vsub.s32 4294967266, %v4897
        %v4903 = vadd.s32 %v4902, 127
        %v4904 = vshll.u32 %v4903, 23
        %v4905 = vor.u32 4788187, %v4904
        %v4906 = vand.u32 2147483647, %v4905
        %v4908 = vcvt.s32.f32 %v4901
        %v4909 = vmul.f32 %v4908, %v4906
        %v4910 = vxor.u32 %v4909, 2147483648
        %v4911 = vsel %vm4828, %v4910, %v4909
        %v4912 = vsub.s32 4, %v4888
        %v4913 = vsel %vm4828, %v4912, %v4888
        %v4914 = vsel %vm4827, %v548, %v4911
        %v4915 = vsel %vm4827, 0, %v4913
        %v4916 = vcosq.f32.pop %v4914
        %v4917 = vsinq.f32.pop %v4914
        %vm4918 = vweird.f32 %v548
        %v4919 = vand.u32 %v4915, 3
        %vm4920 = vcmp.lt.s32.totalorder %v4919, 2
        %vm4921 = vcmp.eq.s32.totalorder %v4919, 0
        %v4922 = vxor.u32 %v4917, 2147483648
        %v4923 = vsel %vm4921, %v4916, %v4922
        %vm4924 = vcmp.eq.s32.totalorder %v4919, 2
        %v4925 = vxor.u32 %v4916, 2147483648
        %v4926 = vsel %vm4924, %v4925, %v4917
        %v4927 = vsel %vm4920, %v4923, %v4926
        %v4928 = vsel %vm4918, nan, %v4927
        %v4929 = vand.u32 2147483647, %v549
        %vm4930 = vcmp.le.f32.partialorder %v4929, 0.7853982
        %vm4931 = vcmp.lt.s32.totalorder %v549, 0
        %v4932 = vand.u32 %v549, 2139095040
        %v4933 = vshrl.u32 %v4932, 23
        %v4934 = vsub.s32 %v4933, 127
        %v4935 = vand.u32 2147483647, %v549
        %v4936 = vand.u32 %v4935, 8388607
        %v4937 = vor.u32 %v4936, 8388608
        %v4938 = vsub.s32 0, %v4937
        %v4939 = vadd.s32 %v4934, 1
        %vm4940 = vcmp.gt.s32.totalorder %v4939, 0
        %v4941 = vsel %vm4940, %v4939, 0
        %v4942 = vshrl.u32 %v4941, 5
        %v4943 = vand.u32 %v4941, 31
        %v4944 = vsub.s32 32, %v4943
        %v4945 = vshrl.u32 683565275, %v4944
        %v4946 = vshll.u32 683565275, %v4943
        %v4947 = vshrl.u32 2475754826, %v4944
        %v4948 = vor.u32 %v4946, %v4947
        %v4949 = vshll.u32 2475754826, %v4943
        %v4950 = vshrl.u32 2131351028, %v4944
        %v4951 = vor.u32 %v4949, %v4950
        %v4952 = vshll.u32 2131351028, %v4943
        %v4953 = vshrl.u32 2102212464, %v4944
        %v4954 = vor.u32 %v4952, %v4953
        %v4955 = vshll.u32 2102212464, %v4943
        %v4956 = vshrl.u32 920167782, %v4944
        %v4957 = vor.u32 %v4955, %v4956
        %v4958 = vshll.u32 920167782, %v4943
        %v4959 = vshrl.u32 1326507024, %v4944
        %v4960 = vor.u32 %v4958, %v4959
        %vm4961 = vcmp.lt.s32.totalorder %v4942, 1
        %vm4962 = vcmp.lt.s32.totalorder %v4942, 2
        %vm4963 = vcmp.lt.s32.totalorder %v4942, 3
        %vm4964 = vcmp.lt.s32.totalorder %v4942, 4
        %v4965 = vsel %vm4961, %v4945, %v4948
        %v4966 = vsel %vm4964, %v4954, 2102212464
        %v4967 = vsel %vm4963, %v4951, %v4966
        %v4968 = vsel %vm4962, %v4965, %v4967
        %v4969 = vsel %vm4961, %v4948, %v4951
        %v4970 = vsel %vm4964, %v4957, 920167782
        %v4971 = vsel %vm4963, %v4954, %v4970
        %v4972 = vsel %vm4962, %v4969, %v4971
        %v4973 = vsel %vm4961, %v4951, %v4954
        %v4974 = vsel %vm4964, %v4960, 1326507024
        %v4975 = vsel %vm4963, %v4957, %v4974
        %v4976 = vsel %vm4962, %v4973, %v4975
        %v4977 = vshll.u32 %v4937, 8
        %v4978 = vmul.u32.u64.compose %v4977, %v4976
        %v4979 = vextract.low.u32 %v4978
        %v4980 = vextract.high.u32 %v4978
        %v4981 = vmul.u32.u64.compose %v4977, %v4972
        %v4982 = vextract.low.u32 %v4981
        %v4983 = vextract.high.u32 %v4981
        %v4984 = vmul.u32 %v4977, %v4968
        %v4985 = vadd.s32 %v4980, %v4982
        %vm4986 = vc.u32 %v4980, %v4982
        %v4987 = vadd.s32 %v4983, 1
        %v4988 = vsel %vm4986, %v4987, %v4983
        %v4989 = vadd.s32 %v4984, %v4988
        %v4990 = vadd.s32 %v4989, 536870912
        %v4991 = vshrl.u32 %v4990, 30
        %v4992 = vshll.u32 %v4991, 30
        %v4993 = vsub.s32 %v4989, %v4992
        %vm4994 = vcmp.lt.s32.totalorder %v4993, 0
        %v4995 = vsub.s32 0, %v4993
        %v4996 = vsel %vm4994, %v4995, %v4993
        %v4997 = vclz %v4996
        %v4998 = vsub.s32 %v4997, 2
        %vm4999 = vcmp.gt.s32.totalorder 0, %v4998
        %v5000 = vsel %vm4999, 0, %v4998
        %v5001 = vsub.s32 32, %v5000
        %v5002 = vshll.u32 %v4993, %v5000
        %v5003 = vshrl.u32 %v4985, %v5001
        %v5004 = vor.u32 %v5002, %v5003
        %v5005 = vsub.s32 4294967266, %v5000
        %v5006 = vadd.s32 %v5005, 127
        %v5007 = vshll.u32 %v5006, 23
        %v5008 = vor.u32 4788187, %v5007
        %v5009 = vand.u32 2147483647, %v5008
        %v5011 = vcvt.s32.f32 %v5004
        %v5012 = vmul.f32 %v5011, %v5009
        %v5013 = vxor.u32 %v5012, 2147483648
        %v5014 = vsel %vm4931, %v5013, %v5012
        %v5015 = vsub.s32 4, %v4991
        %v5016 = vsel %vm4931, %v5015, %v4991
        %v5017 = vsel %vm4930, %v549, %v5014
        %v5018 = vsel %vm4930, 0, %v5016
        %v5019 = vcosq.f32.pop %v5017
        %v5020 = vsinq.f32.pop %v5017
        %vm5021 = vweird.f32 %v549
        %v5022 = vand.u32 %v5018, 3
        %vm5023 = vcmp.lt.s32.totalorder %v5022, 2
        %vm5024 = vcmp.eq.s32.totalorder %v5022, 0
        %v5025 = vxor.u32 %v5020, 2147483648
        %v5026 = vsel %vm5024, %v5019, %v5025
        %vm5027 = vcmp.eq.s32.totalorder %v5022, 2
        %v5028 = vxor.u32 %v5019, 2147483648
        %v5029 = vsel %vm5027, %v5028, %v5020
        %v5030 = vsel %vm5023, %v5026, %v5029
        %v5031 = vsel %vm5021, nan, %v5030
        %v5032 = vand.u32 2147483647, %v550
        %vm5033 = vcmp.le.f32.partialorder %v5032, 0.7853982
        %vm5034 = vcmp.lt.s32.totalorder %v550, 0
        %v5035 = vand.u32 %v550, 2139095040
        %v5036 = vshrl.u32 %v5035, 23
        %v5037 = vsub.s32 %v5036, 127
        %v5038 = vand.u32 2147483647, %v550
        %v5039 = vand.u32 %v5038, 8388607
        %v5040 = vor.u32 %v5039, 8388608
        %v5041 = vsub.s32 0, %v5040
        %v5042 = vadd.s32 %v5037, 1
        %vm5043 = vcmp.gt.s32.totalorder %v5042, 0
        %v5044 = vsel %vm5043, %v5042, 0
        %v5045 = vshrl.u32 %v5044, 5
        %v5046 = vand.u32 %v5044, 31
        %v5047 = vsub.s32 32, %v5046
        %v5048 = vshrl.u32 683565275, %v5047
        %v5049 = vshll.u32 683565275, %v5046
        %v5050 = vshrl.u32 2475754826, %v5047
        %v5051 = vor.u32 %v5049, %v5050
        %v5052 = vshll.u32 2475754826, %v5046
        %v5053 = vshrl.u32 2131351028, %v5047
        %v5054 = vor.u32 %v5052, %v5053
        %v5055 = vshll.u32 2131351028, %v5046
        %v5056 = vshrl.u32 2102212464, %v5047
        %v5057 = vor.u32 %v5055, %v5056
        %v5058 = vshll.u32 2102212464, %v5046
        %v5059 = vshrl.u32 920167782, %v5047
        %v5060 = vor.u32 %v5058, %v5059
        %v5061 = vshll.u32 920167782, %v5046
        %v5062 = vshrl.u32 1326507024, %v5047
        %v5063 = vor.u32 %v5061, %v5062
        %vm5064 = vcmp.lt.s32.totalorder %v5045, 1
        %vm5065 = vcmp.lt.s32.totalorder %v5045, 2
        %vm5066 = vcmp.lt.s32.totalorder %v5045, 3
        %vm5067 = vcmp.lt.s32.totalorder %v5045, 4
        %v5068 = vsel %vm5064, %v5048, %v5051
        %v5069 = vsel %vm5067, %v5057, 2102212464
        %v5070 = vsel %vm5066, %v5054, %v5069
        %v5071 = vsel %vm5065, %v5068, %v5070
        %v5072 = vsel %vm5064, %v5051, %v5054
        %v5073 = vsel %vm5067, %v5060, 920167782
        %v5074 = vsel %vm5066, %v5057, %v5073
        %v5075 = vsel %vm5065, %v5072, %v5074
        %v5076 = vsel %vm5064, %v5054, %v5057
        %v5077 = vsel %vm5067, %v5063, 1326507024
        %v5078 = vsel %vm5066, %v5060, %v5077
        %v5079 = vsel %vm5065, %v5076, %v5078
        %v5080 = vshll.u32 %v5040, 8
        %v5081 = vmul.u32.u64.compose %v5080, %v5079
        %v5082 = vextract.low.u32 %v5081
        %v5083 = vextract.high.u32 %v5081
        %v5084 = vmul.u32.u64.compose %v5080, %v5075
        %v5085 = vextract.low.u32 %v5084
        %v5086 = vextract.high.u32 %v5084
        %v5087 = vmul.u32 %v5080, %v5071
        %v5088 = vadd.s32 %v5083, %v5085
        %vm5089 = vc.u32 %v5083, %v5085
        %v5090 = vadd.s32 %v5086, 1
        %v5091 = vsel %vm5089, %v5090, %v5086
        %v5092 = vadd.s32 %v5087, %v5091
        %v5093 = vadd.s32 %v5092, 536870912
        %v5094 = vshrl.u32 %v5093, 30
        %v5095 = vshll.u32 %v5094, 30
        %v5096 = vsub.s32 %v5092, %v5095
        %vm5097 = vcmp.lt.s32.totalorder %v5096, 0
        %v5098 = vsub.s32 0, %v5096
        %v5099 = vsel %vm5097, %v5098, %v5096
        %v5100 = vclz %v5099
        %v5101 = vsub.s32 %v5100, 2
        %vm5102 = vcmp.gt.s32.totalorder 0, %v5101
        %v5103 = vsel %vm5102, 0, %v5101
        %v5104 = vsub.s32 32, %v5103
        %v5105 = vshll.u32 %v5096, %v5103
        %v5106 = vshrl.u32 %v5088, %v5104
        %v5107 = vor.u32 %v5105, %v5106
        %v5108 = vsub.s32 4294967266, %v5103
        %v5109 = vadd.s32 %v5108, 127
        %v5110 = vshll.u32 %v5109, 23
        %v5111 = vor.u32 4788187, %v5110
        %v5112 = vand.u32 2147483647, %v5111
        %v5114 = vcvt.s32.f32 %v5107
        %v5115 = vmul.f32 %v5114, %v5112
        %v5116 = vxor.u32 %v5115, 2147483648
        %v5117 = vsel %vm5034, %v5116, %v5115
        %v5118 = vsub.s32 4, %v5094
        %v5119 = vsel %vm5034, %v5118, %v5094
        %v5120 = vsel %vm5033, %v550, %v5117
        %v5121 = vsel %vm5033, 0, %v5119
        %v5122 = vcosq.f32.pop %v5120
        %v5123 = vsinq.f32.pop %v5120
        %vm5124 = vweird.f32 %v550
        %v5125 = vand.u32 %v5121, 3
        %vm5126 = vcmp.lt.s32.totalorder %v5125, 2
        %vm5127 = vcmp.eq.s32.totalorder %v5125, 0
        %v5128 = vxor.u32 %v5123, 2147483648
        %v5129 = vsel %vm5127, %v5122, %v5128
        %vm5130 = vcmp.eq.s32.totalorder %v5125, 2
        %v5131 = vxor.u32 %v5122, 2147483648
        %v5132 = vsel %vm5130, %v5131, %v5123
        %v5133 = vsel %vm5126, %v5129, %v5132
        %v5134 = vsel %vm5124, nan, %v5133
        %v5135 = vand.u32 2147483647, %v551
        %vm5136 = vcmp.le.f32.partialorder %v5135, 0.7853982
        %vm5137 = vcmp.lt.s32.totalorder %v551, 0
        %v5138 = vand.u32 %v551, 2139095040
        %v5139 = vshrl.u32 %v5138, 23
        %v5140 = vsub.s32 %v5139, 127
        %v5141 = vand.u32 2147483647, %v551
        %v5142 = vand.u32 %v5141, 8388607
        %v5143 = vor.u32 %v5142, 8388608
        %v5144 = vsub.s32 0, %v5143
        %v5145 = vadd.s32 %v5140, 1
        %vm5146 = vcmp.gt.s32.totalorder %v5145, 0
        %v5147 = vsel %vm5146, %v5145, 0
        %v5148 = vshrl.u32 %v5147, 5
        %v5149 = vand.u32 %v5147, 31
        %v5150 = vsub.s32 32, %v5149
        %v5151 = vshrl.u32 683565275, %v5150
        %v5152 = vshll.u32 683565275, %v5149
        %v5153 = vshrl.u32 2475754826, %v5150
        %v5154 = vor.u32 %v5152, %v5153
        %v5155 = vshll.u32 2475754826, %v5149
        %v5156 = vshrl.u32 2131351028, %v5150
        %v5157 = vor.u32 %v5155, %v5156
        %v5158 = vshll.u32 2131351028, %v5149
        %v5159 = vshrl.u32 2102212464, %v5150
        %v5160 = vor.u32 %v5158, %v5159
        %v5161 = vshll.u32 2102212464, %v5149
        %v5162 = vshrl.u32 920167782, %v5150
        %v5163 = vor.u32 %v5161, %v5162
        %v5164 = vshll.u32 920167782, %v5149
        %v5165 = vshrl.u32 1326507024, %v5150
        %v5166 = vor.u32 %v5164, %v5165
        %vm5167 = vcmp.lt.s32.totalorder %v5148, 1
        %vm5168 = vcmp.lt.s32.totalorder %v5148, 2
        %vm5169 = vcmp.lt.s32.totalorder %v5148, 3
        %vm5170 = vcmp.lt.s32.totalorder %v5148, 4
        %v5171 = vsel %vm5167, %v5151, %v5154
        %v5172 = vsel %vm5170, %v5160, 2102212464
        %v5173 = vsel %vm5169, %v5157, %v5172
        %v5174 = vsel %vm5168, %v5171, %v5173
        %v5175 = vsel %vm5167, %v5154, %v5157
        %v5176 = vsel %vm5170, %v5163, 920167782
        %v5177 = vsel %vm5169, %v5160, %v5176
        %v5178 = vsel %vm5168, %v5175, %v5177
        %v5179 = vsel %vm5167, %v5157, %v5160
        %v5180 = vsel %vm5170, %v5166, 1326507024
        %v5181 = vsel %vm5169, %v5163, %v5180
        %v5182 = vsel %vm5168, %v5179, %v5181
        %v5183 = vshll.u32 %v5143, 8
        %v5184 = vmul.u32.u64.compose %v5183, %v5182
        %v5185 = vextract.low.u32 %v5184
        %v5186 = vextract.high.u32 %v5184
        %v5187 = vmul.u32.u64.compose %v5183, %v5178
        %v5188 = vextract.low.u32 %v5187
        %v5189 = vextract.high.u32 %v5187
        %v5190 = vmul.u32 %v5183, %v5174
        %v5191 = vadd.s32 %v5186, %v5188
        %vm5192 = vc.u32 %v5186, %v5188
        %v5193 = vadd.s32 %v5189, 1
        %v5194 = vsel %vm5192, %v5193, %v5189
        %v5195 = vadd.s32 %v5190, %v5194
        %v5196 = vadd.s32 %v5195, 536870912
        %v5197 = vshrl.u32 %v5196, 30
        %v5198 = vshll.u32 %v5197, 30
        %v5199 = vsub.s32 %v5195, %v5198
        %vm5200 = vcmp.lt.s32.totalorder %v5199, 0
        %v5201 = vsub.s32 0, %v5199
        %v5202 = vsel %vm5200, %v5201, %v5199
        %v5203 = vclz %v5202
        %v5204 = vsub.s32 %v5203, 2
        %vm5205 = vcmp.gt.s32.totalorder 0, %v5204
        %v5206 = vsel %vm5205, 0, %v5204
        %v5207 = vsub.s32 32, %v5206
        %v5208 = vshll.u32 %v5199, %v5206
        %v5209 = vshrl.u32 %v5191, %v5207
        %v5210 = vor.u32 %v5208, %v5209
        %v5211 = vsub.s32 4294967266, %v5206
        %v5212 = vadd.s32 %v5211, 127
        %v5213 = vshll.u32 %v5212, 23
        %v5214 = vor.u32 4788187, %v5213
        %v5215 = vand.u32 2147483647, %v5214
        %v5217 = vcvt.s32.f32 %v5210
        %v5218 = vmul.f32 %v5217, %v5215
        %v5219 = vxor.u32 %v5218, 2147483648
        %v5220 = vsel %vm5137, %v5219, %v5218
        %v5221 = vsub.s32 4, %v5197
        %v5222 = vsel %vm5137, %v5221, %v5197
        %v5223 = vsel %vm5136, %v551, %v5220
        %v5224 = vsel %vm5136, 0, %v5222
        %v5225 = vcosq.f32.pop %v5223
        %v5226 = vsinq.f32.pop %v5223
        %vm5227 = vweird.f32 %v551
        %v5228 = vand.u32 %v5224, 3
        %vm5229 = vcmp.lt.s32.totalorder %v5228, 2
        %vm5230 = vcmp.eq.s32.totalorder %v5228, 0
        %v5231 = vxor.u32 %v5226, 2147483648
        %v5232 = vsel %vm5230, %v5225, %v5231
        %vm5233 = vcmp.eq.s32.totalorder %v5228, 2
        %v5234 = vxor.u32 %v5225, 2147483648
        %v5235 = vsel %vm5233, %v5234, %v5226
        %v5236 = vsel %vm5229, %v5232, %v5235
        %v5237 = vsel %vm5227, nan, %v5236
        %v5238 = vand.u32 2147483647, %v552
        %vm5239 = vcmp.le.f32.partialorder %v5238, 0.7853982
        %vm5240 = vcmp.lt.s32.totalorder %v552, 0
        %v5241 = vand.u32 %v552, 2139095040
        %v5242 = vshrl.u32 %v5241, 23
        %v5243 = vsub.s32 %v5242, 127
        %v5244 = vand.u32 2147483647, %v552
        %v5245 = vand.u32 %v5244, 8388607
        %v5246 = vor.u32 %v5245, 8388608
        %v5247 = vsub.s32 0, %v5246
        %v5248 = vadd.s32 %v5243, 1
        %vm5249 = vcmp.gt.s32.totalorder %v5248, 0
        %v5250 = vsel %vm5249, %v5248, 0
        %v5251 = vshrl.u32 %v5250, 5
        %v5252 = vand.u32 %v5250, 31
        %v5253 = vsub.s32 32, %v5252
        %v5254 = vshrl.u32 683565275, %v5253
        %v5255 = vshll.u32 683565275, %v5252
        %v5256 = vshrl.u32 2475754826, %v5253
        %v5257 = vor.u32 %v5255, %v5256
        %v5258 = vshll.u32 2475754826, %v5252
        %v5259 = vshrl.u32 2131351028, %v5253
        %v5260 = vor.u32 %v5258, %v5259
        %v5261 = vshll.u32 2131351028, %v5252
        %v5262 = vshrl.u32 2102212464, %v5253
        %v5263 = vor.u32 %v5261, %v5262
        %v5264 = vshll.u32 2102212464, %v5252
        %v5265 = vshrl.u32 920167782, %v5253
        %v5266 = vor.u32 %v5264, %v5265
        %v5267 = vshll.u32 920167782, %v5252
        %v5268 = vshrl.u32 1326507024, %v5253
        %v5269 = vor.u32 %v5267, %v5268
        %vm5270 = vcmp.lt.s32.totalorder %v5251, 1
        %vm5271 = vcmp.lt.s32.totalorder %v5251, 2
        %vm5272 = vcmp.lt.s32.totalorder %v5251, 3
        %vm5273 = vcmp.lt.s32.totalorder %v5251, 4
        %v5274 = vsel %vm5270, %v5254, %v5257
        %v5275 = vsel %vm5273, %v5263, 2102212464
        %v5276 = vsel %vm5272, %v5260, %v5275
        %v5277 = vsel %vm5271, %v5274, %v5276
        %v5278 = vsel %vm5270, %v5257, %v5260
        %v5279 = vsel %vm5273, %v5266, 920167782
        %v5280 = vsel %vm5272, %v5263, %v5279
        %v5281 = vsel %vm5271, %v5278, %v5280
        %v5282 = vsel %vm5270, %v5260, %v5263
        %v5283 = vsel %vm5273, %v5269, 1326507024
        %v5284 = vsel %vm5272, %v5266, %v5283
        %v5285 = vsel %vm5271, %v5282, %v5284
        %v5286 = vshll.u32 %v5246, 8
        %v5287 = vmul.u32.u64.compose %v5286, %v5285
        %v5288 = vextract.low.u32 %v5287
        %v5289 = vextract.high.u32 %v5287
        %v5290 = vmul.u32.u64.compose %v5286, %v5281
        %v5291 = vextract.low.u32 %v5290
        %v5292 = vextract.high.u32 %v5290
        %v5293 = vmul.u32 %v5286, %v5277
        %v5294 = vadd.s32 %v5289, %v5291
        %vm5295 = vc.u32 %v5289, %v5291
        %v5296 = vadd.s32 %v5292, 1
        %v5297 = vsel %vm5295, %v5296, %v5292
        %v5298 = vadd.s32 %v5293, %v5297
        %v5299 = vadd.s32 %v5298, 536870912
        %v5300 = vshrl.u32 %v5299, 30
        %v5301 = vshll.u32 %v5300, 30
        %v5302 = vsub.s32 %v5298, %v5301
        %vm5303 = vcmp.lt.s32.totalorder %v5302, 0
        %v5304 = vsub.s32 0, %v5302
        %v5305 = vsel %vm5303, %v5304, %v5302
        %v5306 = vclz %v5305
        %v5307 = vsub.s32 %v5306, 2
        %vm5308 = vcmp.gt.s32.totalorder 0, %v5307
        %v5309 = vsel %vm5308, 0, %v5307
        %v5310 = vsub.s32 32, %v5309
        %v5311 = vshll.u32 %v5302, %v5309
        %v5312 = vshrl.u32 %v5294, %v5310
        %v5313 = vor.u32 %v5311, %v5312
        %v5314 = vsub.s32 4294967266, %v5309
        %v5315 = vadd.s32 %v5314, 127
        %v5316 = vshll.u32 %v5315, 23
        %v5317 = vor.u32 4788187, %v5316
        %v5318 = vand.u32 2147483647, %v5317
        %v5320 = vcvt.s32.f32 %v5313
        %v5321 = vmul.f32 %v5320, %v5318
        %v5322 = vxor.u32 %v5321, 2147483648
        %v5323 = vsel %vm5240, %v5322, %v5321
        %v5324 = vsub.s32 4, %v5300
        %v5325 = vsel %vm5240, %v5324, %v5300
        %v5326 = vsel %vm5239, %v552, %v5323
        %v5327 = vsel %vm5239, 0, %v5325
        %v5328 = vcosq.f32.pop %v5326
        %v5329 = vsinq.f32.pop %v5326
        %vm5330 = vweird.f32 %v552
        %v5331 = vand.u32 %v5327, 3
        %vm5332 = vcmp.lt.s32.totalorder %v5331, 2
        %vm5333 = vcmp.eq.s32.totalorder %v5331, 0
        %v5334 = vxor.u32 %v5329, 2147483648
        %v5335 = vsel %vm5333, %v5328, %v5334
        %vm5336 = vcmp.eq.s32.totalorder %v5331, 2
        %v5337 = vxor.u32 %v5328, 2147483648
        %v5338 = vsel %vm5336, %v5337, %v5329
        %v5339 = vsel %vm5332, %v5335, %v5338
        %v5340 = vsel %vm5330, nan, %v5339
        %v5341 = vand.u32 2147483647, %v553
        %vm5342 = vcmp.le.f32.partialorder %v5341, 0.7853982
        %vm5343 = vcmp.lt.s32.totalorder %v553, 0
        %v5344 = vand.u32 %v553, 2139095040
        %v5345 = vshrl.u32 %v5344, 23
        %v5346 = vsub.s32 %v5345, 127
        %v5347 = vand.u32 2147483647, %v553
        %v5348 = vand.u32 %v5347, 8388607
        %v5349 = vor.u32 %v5348, 8388608
        %v5350 = vsub.s32 0, %v5349
        %v5351 = vadd.s32 %v5346, 1
        %vm5352 = vcmp.gt.s32.totalorder %v5351, 0
        %v5353 = vsel %vm5352, %v5351, 0
        %v5354 = vshrl.u32 %v5353, 5
        %v5355 = vand.u32 %v5353, 31
        %v5356 = vsub.s32 32, %v5355
        %v5357 = vshrl.u32 683565275, %v5356
        %v5358 = vshll.u32 683565275, %v5355
        %v5359 = vshrl.u32 2475754826, %v5356
        %v5360 = vor.u32 %v5358, %v5359
        %v5361 = vshll.u32 2475754826, %v5355
        %v5362 = vshrl.u32 2131351028, %v5356
        %v5363 = vor.u32 %v5361, %v5362
        %v5364 = vshll.u32 2131351028, %v5355
        %v5365 = vshrl.u32 2102212464, %v5356
        %v5366 = vor.u32 %v5364, %v5365
        %v5367 = vshll.u32 2102212464, %v5355
        %v5368 = vshrl.u32 920167782, %v5356
        %v5369 = vor.u32 %v5367, %v5368
        %v5370 = vshll.u32 920167782, %v5355
        %v5371 = vshrl.u32 1326507024, %v5356
        %v5372 = vor.u32 %v5370, %v5371
        %vm5373 = vcmp.lt.s32.totalorder %v5354, 1
        %vm5374 = vcmp.lt.s32.totalorder %v5354, 2
        %vm5375 = vcmp.lt.s32.totalorder %v5354, 3
        %vm5376 = vcmp.lt.s32.totalorder %v5354, 4
        %v5377 = vsel %vm5373, %v5357, %v5360
        %v5378 = vsel %vm5376, %v5366, 2102212464
        %v5379 = vsel %vm5375, %v5363, %v5378
        %v5380 = vsel %vm5374, %v5377, %v5379
        %v5381 = vsel %vm5373, %v5360, %v5363
        %v5382 = vsel %vm5376, %v5369, 920167782
        %v5383 = vsel %vm5375, %v5366, %v5382
        %v5384 = vsel %vm5374, %v5381, %v5383
        %v5385 = vsel %vm5373, %v5363, %v5366
        %v5386 = vsel %vm5376, %v5372, 1326507024
        %v5387 = vsel %vm5375, %v5369, %v5386
        %v5388 = vsel %vm5374, %v5385, %v5387
        %v5389 = vshll.u32 %v5349, 8
        %v5390 = vmul.u32.u64.compose %v5389, %v5388
        %v5391 = vextract.low.u32 %v5390
        %v5392 = vextract.high.u32 %v5390
        %v5393 = vmul.u32.u64.compose %v5389, %v5384
        %v5394 = vextract.low.u32 %v5393
        %v5395 = vextract.high.u32 %v5393
        %v5396 = vmul.u32 %v5389, %v5380
        %v5397 = vadd.s32 %v5392, %v5394
        %vm5398 = vc.u32 %v5392, %v5394
        %v5399 = vadd.s32 %v5395, 1
        %v5400 = vsel %vm5398, %v5399, %v5395
        %v5401 = vadd.s32 %v5396, %v5400
        %v5402 = vadd.s32 %v5401, 536870912
        %v5403 = vshrl.u32 %v5402, 30
        %v5404 = vshll.u32 %v5403, 30
        %v5405 = vsub.s32 %v5401, %v5404
        %vm5406 = vcmp.lt.s32.totalorder %v5405, 0
        %v5407 = vsub.s32 0, %v5405
        %v5408 = vsel %vm5406, %v5407, %v5405
        %v5409 = vclz %v5408
        %v5410 = vsub.s32 %v5409, 2
        %vm5411 = vcmp.gt.s32.totalorder 0, %v5410
        %v5412 = vsel %vm5411, 0, %v5410
        %v5413 = vsub.s32 32, %v5412
        %v5414 = vshll.u32 %v5405, %v5412
        %v5415 = vshrl.u32 %v5397, %v5413
        %v5416 = vor.u32 %v5414, %v5415
        %v5417 = vsub.s32 4294967266, %v5412
        %v5418 = vadd.s32 %v5417, 127
        %v5419 = vshll.u32 %v5418, 23
        %v5420 = vor.u32 4788187, %v5419
        %v5421 = vand.u32 2147483647, %v5420
        %v5423 = vcvt.s32.f32 %v5416
        %v5424 = vmul.f32 %v5423, %v5421
        %v5425 = vxor.u32 %v5424, 2147483648
        %v5426 = vsel %vm5343, %v5425, %v5424
        %v5427 = vsub.s32 4, %v5403
        %v5428 = vsel %vm5343, %v5427, %v5403
        %v5429 = vsel %vm5342, %v553, %v5426
        %v5430 = vsel %vm5342, 0, %v5428
        %v5431 = vcosq.f32.pop %v5429
        %v5432 = vsinq.f32.pop %v5429
        %vm5433 = vweird.f32 %v553
        %v5434 = vand.u32 %v5430, 3
        %vm5435 = vcmp.lt.s32.totalorder %v5434, 2
        %vm5436 = vcmp.eq.s32.totalorder %v5434, 0
        %v5437 = vxor.u32 %v5432, 2147483648
        %v5438 = vsel %vm5436, %v5431, %v5437
        %vm5439 = vcmp.eq.s32.totalorder %v5434, 2
        %v5440 = vxor.u32 %v5431, 2147483648
        %v5441 = vsel %vm5439, %v5440, %v5432
        %v5442 = vsel %vm5435, %v5438, %v5441
        %v5443 = vsel %vm5433, nan, %v5442
        %v5444 = vand.u32 2147483647, %v554
        %vm5445 = vcmp.le.f32.partialorder %v5444, 0.7853982
        %vm5446 = vcmp.lt.s32.totalorder %v554, 0
        %v5447 = vand.u32 %v554, 2139095040
        %v5448 = vshrl.u32 %v5447, 23
        %v5449 = vsub.s32 %v5448, 127
        %v5450 = vand.u32 2147483647, %v554
        %v5451 = vand.u32 %v5450, 8388607
        %v5452 = vor.u32 %v5451, 8388608
        %v5453 = vsub.s32 0, %v5452
        %v5454 = vadd.s32 %v5449, 1
        %vm5455 = vcmp.gt.s32.totalorder %v5454, 0
        %v5456 = vsel %vm5455, %v5454, 0
        %v5457 = vshrl.u32 %v5456, 5
        %v5458 = vand.u32 %v5456, 31
        %v5459 = vsub.s32 32, %v5458
        %v5460 = vshrl.u32 683565275, %v5459
        %v5461 = vshll.u32 683565275, %v5458
        %v5462 = vshrl.u32 2475754826, %v5459
        %v5463 = vor.u32 %v5461, %v5462
        %v5464 = vshll.u32 2475754826, %v5458
        %v5465 = vshrl.u32 2131351028, %v5459
        %v5466 = vor.u32 %v5464, %v5465
        %v5467 = vshll.u32 2131351028, %v5458
        %v5468 = vshrl.u32 2102212464, %v5459
        %v5469 = vor.u32 %v5467, %v5468
        %v5470 = vshll.u32 2102212464, %v5458
        %v5471 = vshrl.u32 920167782, %v5459
        %v5472 = vor.u32 %v5470, %v5471
        %v5473 = vshll.u32 920167782, %v5458
        %v5474 = vshrl.u32 1326507024, %v5459
        %v5475 = vor.u32 %v5473, %v5474
        %vm5476 = vcmp.lt.s32.totalorder %v5457, 1
        %vm5477 = vcmp.lt.s32.totalorder %v5457, 2
        %vm5478 = vcmp.lt.s32.totalorder %v5457, 3
        %vm5479 = vcmp.lt.s32.totalorder %v5457, 4
        %v5480 = vsel %vm5476, %v5460, %v5463
        %v5481 = vsel %vm5479, %v5469, 2102212464
        %v5482 = vsel %vm5478, %v5466, %v5481
        %v5483 = vsel %vm5477, %v5480, %v5482
        %v5484 = vsel %vm5476, %v5463, %v5466
        %v5485 = vsel %vm5479, %v5472, 920167782
        %v5486 = vsel %vm5478, %v5469, %v5485
        %v5487 = vsel %vm5477, %v5484, %v5486
        %v5488 = vsel %vm5476, %v5466, %v5469
        %v5489 = vsel %vm5479, %v5475, 1326507024
        %v5490 = vsel %vm5478, %v5472, %v5489
        %v5491 = vsel %vm5477, %v5488, %v5490
        %v5492 = vshll.u32 %v5452, 8
        %v5493 = vmul.u32.u64.compose %v5492, %v5491
        %v5494 = vextract.low.u32 %v5493
        %v5495 = vextract.high.u32 %v5493
        %v5496 = vmul.u32.u64.compose %v5492, %v5487
        %v5497 = vextract.low.u32 %v5496
        %v5498 = vextract.high.u32 %v5496
        %v5499 = vmul.u32 %v5492, %v5483
        %v5500 = vadd.s32 %v5495, %v5497
        %vm5501 = vc.u32 %v5495, %v5497
        %v5502 = vadd.s32 %v5498, 1
        %v5503 = vsel %vm5501, %v5502, %v5498
        %v5504 = vadd.s32 %v5499, %v5503
        %v5505 = vadd.s32 %v5504, 536870912
        %v5506 = vshrl.u32 %v5505, 30
        %v5507 = vshll.u32 %v5506, 30
        %v5508 = vsub.s32 %v5504, %v5507
        %vm5509 = vcmp.lt.s32.totalorder %v5508, 0
        %v5510 = vsub.s32 0, %v5508
        %v5511 = vsel %vm5509, %v5510, %v5508
        %v5512 = vclz %v5511
        %v5513 = vsub.s32 %v5512, 2
        %vm5514 = vcmp.gt.s32.totalorder 0, %v5513
        %v5515 = vsel %vm5514, 0, %v5513
        %v5516 = vsub.s32 32, %v5515
        %v5517 = vshll.u32 %v5508, %v5515
        %v5518 = vshrl.u32 %v5500, %v5516
        %v5519 = vor.u32 %v5517, %v5518
        %v5520 = vsub.s32 4294967266, %v5515
        %v5521 = vadd.s32 %v5520, 127
        %v5522 = vshll.u32 %v5521, 23
        %v5523 = vor.u32 4788187, %v5522
        %v5524 = vand.u32 2147483647, %v5523
        %v5526 = vcvt.s32.f32 %v5519
        %v5527 = vmul.f32 %v5526, %v5524
        %v5528 = vxor.u32 %v5527, 2147483648
        %v5529 = vsel %vm5446, %v5528, %v5527
        %v5530 = vsub.s32 4, %v5506
        %v5531 = vsel %vm5446, %v5530, %v5506
        %v5532 = vsel %vm5445, %v554, %v5529
        %v5533 = vsel %vm5445, 0, %v5531
        %v5534 = vcosq.f32.pop %v5532
        %v5535 = vsinq.f32.pop %v5532
        %vm5536 = vweird.f32 %v554
        %v5537 = vand.u32 %v5533, 3
        %vm5538 = vcmp.lt.s32.totalorder %v5537, 2
        %vm5539 = vcmp.eq.s32.totalorder %v5537, 0
        %v5540 = vxor.u32 %v5535, 2147483648
        %v5541 = vsel %vm5539, %v5534, %v5540
        %vm5542 = vcmp.eq.s32.totalorder %v5537, 2
        %v5543 = vxor.u32 %v5534, 2147483648
        %v5544 = vsel %vm5542, %v5543, %v5535
        %v5545 = vsel %vm5538, %v5541, %v5544
        %v5546 = vsel %vm5536, nan, %v5545
        %v5547 = vand.u32 2147483647, %v555
        %vm5548 = vcmp.le.f32.partialorder %v5547, 0.7853982
        %vm5549 = vcmp.lt.s32.totalorder %v555, 0
        %v5550 = vand.u32 %v555, 2139095040
        %v5551 = vshrl.u32 %v5550, 23
        %v5552 = vsub.s32 %v5551, 127
        %v5553 = vand.u32 2147483647, %v555
        %v5554 = vand.u32 %v5553, 8388607
        %v5555 = vor.u32 %v5554, 8388608
        %v5556 = vsub.s32 0, %v5555
        %v5557 = vadd.s32 %v5552, 1
        %vm5558 = vcmp.gt.s32.totalorder %v5557, 0
        %v5559 = vsel %vm5558, %v5557, 0
        %v5560 = vshrl.u32 %v5559, 5
        %v5561 = vand.u32 %v5559, 31
        %v5562 = vsub.s32 32, %v5561
        %v5563 = vshrl.u32 683565275, %v5562
        %v5564 = vshll.u32 683565275, %v5561
        %v5565 = vshrl.u32 2475754826, %v5562
        %v5566 = vor.u32 %v5564, %v5565
        %v5567 = vshll.u32 2475754826, %v5561
        %v5568 = vshrl.u32 2131351028, %v5562
        %v5569 = vor.u32 %v5567, %v5568
        %v5570 = vshll.u32 2131351028, %v5561
        %v5571 = vshrl.u32 2102212464, %v5562
        %v5572 = vor.u32 %v5570, %v5571
        %v5573 = vshll.u32 2102212464, %v5561
        %v5574 = vshrl.u32 920167782, %v5562
        %v5575 = vor.u32 %v5573, %v5574
        %v5576 = vshll.u32 920167782, %v5561
        %v5577 = vshrl.u32 1326507024, %v5562
        %v5578 = vor.u32 %v5576, %v5577
        %vm5579 = vcmp.lt.s32.totalorder %v5560, 1
        %vm5580 = vcmp.lt.s32.totalorder %v5560, 2
        %vm5581 = vcmp.lt.s32.totalorder %v5560, 3
        %vm5582 = vcmp.lt.s32.totalorder %v5560, 4
        %v5583 = vsel %vm5579, %v5563, %v5566
        %v5584 = vsel %vm5582, %v5572, 2102212464
        %v5585 = vsel %vm5581, %v5569, %v5584
        %v5586 = vsel %vm5580, %v5583, %v5585
        %v5587 = vsel %vm5579, %v5566, %v5569
        %v5588 = vsel %vm5582, %v5575, 920167782
        %v5589 = vsel %vm5581, %v5572, %v5588
        %v5590 = vsel %vm5580, %v5587, %v5589
        %v5591 = vsel %vm5579, %v5569, %v5572
        %v5592 = vsel %vm5582, %v5578, 1326507024
        %v5593 = vsel %vm5581, %v5575, %v5592
        %v5594 = vsel %vm5580, %v5591, %v5593
        %v5595 = vshll.u32 %v5555, 8
        %v5596 = vmul.u32.u64.compose %v5595, %v5594
        %v5597 = vextract.low.u32 %v5596
        %v5598 = vextract.high.u32 %v5596
        %v5599 = vmul.u32.u64.compose %v5595, %v5590
        %v5600 = vextract.low.u32 %v5599
        %v5601 = vextract.high.u32 %v5599
        %v5602 = vmul.u32 %v5595, %v5586
        %v5603 = vadd.s32 %v5598, %v5600
        %vm5604 = vc.u32 %v5598, %v5600
        %v5605 = vadd.s32 %v5601, 1
        %v5606 = vsel %vm5604, %v5605, %v5601
        %v5607 = vadd.s32 %v5602, %v5606
        %v5608 = vadd.s32 %v5607, 536870912
        %v5609 = vshrl.u32 %v5608, 30
        %v5610 = vshll.u32 %v5609, 30
        %v5611 = vsub.s32 %v5607, %v5610
        %vm5612 = vcmp.lt.s32.totalorder %v5611, 0
        %v5613 = vsub.s32 0, %v5611
        %v5614 = vsel %vm5612, %v5613, %v5611
        %v5615 = vclz %v5614
        %v5616 = vsub.s32 %v5615, 2
        %vm5617 = vcmp.gt.s32.totalorder 0, %v5616
        %v5618 = vsel %vm5617, 0, %v5616
        %v5619 = vsub.s32 32, %v5618
        %v5620 = vshll.u32 %v5611, %v5618
        %v5621 = vshrl.u32 %v5603, %v5619
        %v5622 = vor.u32 %v5620, %v5621
        %v5623 = vsub.s32 4294967266, %v5618
        %v5624 = vadd.s32 %v5623, 127
        %v5625 = vshll.u32 %v5624, 23
        %v5626 = vor.u32 4788187, %v5625
        %v5627 = vand.u32 2147483647, %v5626
        %v5629 = vcvt.s32.f32 %v5622
        %v5630 = vmul.f32 %v5629, %v5627
        %v5631 = vxor.u32 %v5630, 2147483648
        %v5632 = vsel %vm5549, %v5631, %v5630
        %v5633 = vsub.s32 4, %v5609
        %v5634 = vsel %vm5549, %v5633, %v5609
        %v5635 = vsel %vm5548, %v555, %v5632
        %v5636 = vsel %vm5548, 0, %v5634
        %v5637 = vcosq.f32.pop %v5635
        %v5638 = vsinq.f32.pop %v5635
        %vm5639 = vweird.f32 %v555
        %v5640 = vand.u32 %v5636, 3
        %vm5641 = vcmp.lt.s32.totalorder %v5640, 2
        %vm5642 = vcmp.eq.s32.totalorder %v5640, 0
        %v5643 = vxor.u32 %v5638, 2147483648
        %v5644 = vsel %vm5642, %v5637, %v5643
        %vm5645 = vcmp.eq.s32.totalorder %v5640, 2
        %v5646 = vxor.u32 %v5637, 2147483648
        %v5647 = vsel %vm5645, %v5646, %v5638
        %v5648 = vsel %vm5641, %v5644, %v5647
        %v5649 = vsel %vm5639, nan, %v5648
        %v5650 = vand.u32 2147483647, %v556
        %vm5651 = vcmp.le.f32.partialorder %v5650, 0.7853982
        %vm5652 = vcmp.lt.s32.totalorder %v556, 0
        %v5653 = vand.u32 %v556, 2139095040
        %v5654 = vshrl.u32 %v5653, 23
        %v5655 = vsub.s32 %v5654, 127
        %v5656 = vand.u32 2147483647, %v556
        %v5657 = vand.u32 %v5656, 8388607
        %v5658 = vor.u32 %v5657, 8388608
        %v5659 = vsub.s32 0, %v5658
        %v5660 = vadd.s32 %v5655, 1
        %vm5661 = vcmp.gt.s32.totalorder %v5660, 0
        %v5662 = vsel %vm5661, %v5660, 0
        %v5663 = vshrl.u32 %v5662, 5
        %v5664 = vand.u32 %v5662, 31
        %v5665 = vsub.s32 32, %v5664
        %v5666 = vshrl.u32 683565275, %v5665
        %v5667 = vshll.u32 683565275, %v5664
        %v5668 = vshrl.u32 2475754826, %v5665
        %v5669 = vor.u32 %v5667, %v5668
        %v5670 = vshll.u32 2475754826, %v5664
        %v5671 = vshrl.u32 2131351028, %v5665
        %v5672 = vor.u32 %v5670, %v5671
        %v5673 = vshll.u32 2131351028, %v5664
        %v5674 = vshrl.u32 2102212464, %v5665
        %v5675 = vor.u32 %v5673, %v5674
        %v5676 = vshll.u32 2102212464, %v5664
        %v5677 = vshrl.u32 920167782, %v5665
        %v5678 = vor.u32 %v5676, %v5677
        %v5679 = vshll.u32 920167782, %v5664
        %v5680 = vshrl.u32 1326507024, %v5665
        %v5681 = vor.u32 %v5679, %v5680
        %vm5682 = vcmp.lt.s32.totalorder %v5663, 1
        %vm5683 = vcmp.lt.s32.totalorder %v5663, 2
        %vm5684 = vcmp.lt.s32.totalorder %v5663, 3
        %vm5685 = vcmp.lt.s32.totalorder %v5663, 4
        %v5686 = vsel %vm5682, %v5666, %v5669
        %v5687 = vsel %vm5685, %v5675, 2102212464
        %v5688 = vsel %vm5684, %v5672, %v5687
        %v5689 = vsel %vm5683, %v5686, %v5688
        %v5690 = vsel %vm5682, %v5669, %v5672
        %v5691 = vsel %vm5685, %v5678, 920167782
        %v5692 = vsel %vm5684, %v5675, %v5691
        %v5693 = vsel %vm5683, %v5690, %v5692
        %v5694 = vsel %vm5682, %v5672, %v5675
        %v5695 = vsel %vm5685, %v5681, 1326507024
        %v5696 = vsel %vm5684, %v5678, %v5695
        %v5697 = vsel %vm5683, %v5694, %v5696
        %v5698 = vshll.u32 %v5658, 8
        %v5699 = vmul.u32.u64.compose %v5698, %v5697
        %v5700 = vextract.low.u32 %v5699
        %v5701 = vextract.high.u32 %v5699
        %v5702 = vmul.u32.u64.compose %v5698, %v5693
        %v5703 = vextract.low.u32 %v5702
        %v5704 = vextract.high.u32 %v5702
        %v5705 = vmul.u32 %v5698, %v5689
        %v5706 = vadd.s32 %v5701, %v5703
        %vm5707 = vc.u32 %v5701, %v5703
        %v5708 = vadd.s32 %v5704, 1
        %v5709 = vsel %vm5707, %v5708, %v5704
        %v5710 = vadd.s32 %v5705, %v5709
        %v5711 = vadd.s32 %v5710, 536870912
        %v5712 = vshrl.u32 %v5711, 30
        %v5713 = vshll.u32 %v5712, 30
        %v5714 = vsub.s32 %v5710, %v5713
        %vm5715 = vcmp.lt.s32.totalorder %v5714, 0
        %v5716 = vsub.s32 0, %v5714
        %v5717 = vsel %vm5715, %v5716, %v5714
        %v5718 = vclz %v5717
        %v5719 = vsub.s32 %v5718, 2
        %vm5720 = vcmp.gt.s32.totalorder 0, %v5719
        %v5721 = vsel %vm5720, 0, %v5719
        %v5722 = vsub.s32 32, %v5721
        %v5723 = vshll.u32 %v5714, %v5721
        %v5724 = vshrl.u32 %v5706, %v5722
        %v5725 = vor.u32 %v5723, %v5724
        %v5726 = vsub.s32 4294967266, %v5721
        %v5727 = vadd.s32 %v5726, 127
        %v5728 = vshll.u32 %v5727, 23
        %v5729 = vor.u32 4788187, %v5728
        %v5730 = vand.u32 2147483647, %v5729
        %v5732 = vcvt.s32.f32 %v5725
        %v5733 = vmul.f32 %v5732, %v5730
        %v5734 = vxor.u32 %v5733, 2147483648
        %v5735 = vsel %vm5652, %v5734, %v5733
        %v5736 = vsub.s32 4, %v5712
        %v5737 = vsel %vm5652, %v5736, %v5712
        %v5738 = vsel %vm5651, %v556, %v5735
        %v5739 = vsel %vm5651, 0, %v5737
        %v5740 = vcosq.f32.pop %v5738
        %v5741 = vsinq.f32.pop %v5738
        %vm5742 = vweird.f32 %v556
        %v5743 = vand.u32 %v5739, 3
        %vm5744 = vcmp.lt.s32.totalorder %v5743, 2
        %vm5745 = vcmp.eq.s32.totalorder %v5743, 0
        %v5746 = vxor.u32 %v5741, 2147483648
        %v5747 = vsel %vm5745, %v5740, %v5746
        %vm5748 = vcmp.eq.s32.totalorder %v5743, 2
        %v5749 = vxor.u32 %v5740, 2147483648
        %v5750 = vsel %vm5748, %v5749, %v5741
        %v5751 = vsel %vm5744, %v5747, %v5750
        %v5752 = vsel %vm5742, nan, %v5751
        %v5753 = vand.u32 2147483647, %v557
        %vm5754 = vcmp.le.f32.partialorder %v5753, 0.7853982
        %vm5755 = vcmp.lt.s32.totalorder %v557, 0
        %v5756 = vand.u32 %v557, 2139095040
        %v5757 = vshrl.u32 %v5756, 23
        %v5758 = vsub.s32 %v5757, 127
        %v5759 = vand.u32 2147483647, %v557
        %v5760 = vand.u32 %v5759, 8388607
        %v5761 = vor.u32 %v5760, 8388608
        %v5762 = vsub.s32 0, %v5761
        %v5763 = vadd.s32 %v5758, 1
        %vm5764 = vcmp.gt.s32.totalorder %v5763, 0
        %v5765 = vsel %vm5764, %v5763, 0
        %v5766 = vshrl.u32 %v5765, 5
        %v5767 = vand.u32 %v5765, 31
        %v5768 = vsub.s32 32, %v5767
        %v5769 = vshrl.u32 683565275, %v5768
        %v5770 = vshll.u32 683565275, %v5767
        %v5771 = vshrl.u32 2475754826, %v5768
        %v5772 = vor.u32 %v5770, %v5771
        %v5773 = vshll.u32 2475754826, %v5767
        %v5774 = vshrl.u32 2131351028, %v5768
        %v5775 = vor.u32 %v5773, %v5774
        %v5776 = vshll.u32 2131351028, %v5767
        %v5777 = vshrl.u32 2102212464, %v5768
        %v5778 = vor.u32 %v5776, %v5777
        %v5779 = vshll.u32 2102212464, %v5767
        %v5780 = vshrl.u32 920167782, %v5768
        %v5781 = vor.u32 %v5779, %v5780
        %v5782 = vshll.u32 920167782, %v5767
        %v5783 = vshrl.u32 1326507024, %v5768
        %v5784 = vor.u32 %v5782, %v5783
        %vm5785 = vcmp.lt.s32.totalorder %v5766, 1
        %vm5786 = vcmp.lt.s32.totalorder %v5766, 2
        %vm5787 = vcmp.lt.s32.totalorder %v5766, 3
        %vm5788 = vcmp.lt.s32.totalorder %v5766, 4
        %v5789 = vsel %vm5785, %v5769, %v5772
        %v5790 = vsel %vm5788, %v5778, 2102212464
        %v5791 = vsel %vm5787, %v5775, %v5790
        %v5792 = vsel %vm5786, %v5789, %v5791
        %v5793 = vsel %vm5785, %v5772, %v5775
        %v5794 = vsel %vm5788, %v5781, 920167782
        %v5795 = vsel %vm5787, %v5778, %v5794
        %v5796 = vsel %vm5786, %v5793, %v5795
        %v5797 = vsel %vm5785, %v5775, %v5778
        %v5798 = vsel %vm5788, %v5784, 1326507024
        %v5799 = vsel %vm5787, %v5781, %v5798
        %v5800 = vsel %vm5786, %v5797, %v5799
        %v5801 = vshll.u32 %v5761, 8
        %v5802 = vmul.u32.u64.compose %v5801, %v5800
        %v5803 = vextract.low.u32 %v5802
        %v5804 = vextract.high.u32 %v5802
        %v5805 = vmul.u32.u64.compose %v5801, %v5796
        %v5806 = vextract.low.u32 %v5805
        %v5807 = vextract.high.u32 %v5805
        %v5808 = vmul.u32 %v5801, %v5792
        %v5809 = vadd.s32 %v5804, %v5806
        %vm5810 = vc.u32 %v5804, %v5806
        %v5811 = vadd.s32 %v5807, 1
        %v5812 = vsel %vm5810, %v5811, %v5807
        %v5813 = vadd.s32 %v5808, %v5812
        %v5814 = vadd.s32 %v5813, 536870912
        %v5815 = vshrl.u32 %v5814, 30
        %v5816 = vshll.u32 %v5815, 30
        %v5817 = vsub.s32 %v5813, %v5816
        %vm5818 = vcmp.lt.s32.totalorder %v5817, 0
        %v5819 = vsub.s32 0, %v5817
        %v5820 = vsel %vm5818, %v5819, %v5817
        %v5821 = vclz %v5820
        %v5822 = vsub.s32 %v5821, 2
        %vm5823 = vcmp.gt.s32.totalorder 0, %v5822
        %v5824 = vsel %vm5823, 0, %v5822
        %v5825 = vsub.s32 32, %v5824
        %v5826 = vshll.u32 %v5817, %v5824
        %v5827 = vshrl.u32 %v5809, %v5825
        %v5828 = vor.u32 %v5826, %v5827
        %v5829 = vsub.s32 4294967266, %v5824
        %v5830 = vadd.s32 %v5829, 127
        %v5831 = vshll.u32 %v5830, 23
        %v5832 = vor.u32 4788187, %v5831
        %v5833 = vand.u32 2147483647, %v5832
        %v5835 = vcvt.s32.f32 %v5828
        %v5836 = vmul.f32 %v5835, %v5833
        %v5837 = vxor.u32 %v5836, 2147483648
        %v5838 = vsel %vm5755, %v5837, %v5836
        %v5839 = vsub.s32 4, %v5815
        %v5840 = vsel %vm5755, %v5839, %v5815
        %v5841 = vsel %vm5754, %v557, %v5838
        %v5842 = vsel %vm5754, 0, %v5840
        %v5843 = vcosq.f32.pop %v5841
        %v5844 = vsinq.f32.pop %v5841
        %vm5845 = vweird.f32 %v557
        %v5846 = vand.u32 %v5842, 3
        %vm5847 = vcmp.lt.s32.totalorder %v5846, 2
        %vm5848 = vcmp.eq.s32.totalorder %v5846, 0
        %v5849 = vxor.u32 %v5844, 2147483648
        %v5850 = vsel %vm5848, %v5843, %v5849
        %vm5851 = vcmp.eq.s32.totalorder %v5846, 2
        %v5852 = vxor.u32 %v5843, 2147483648
        %v5853 = vsel %vm5851, %v5852, %v5844
        %v5854 = vsel %vm5847, %v5850, %v5853
        %v5855 = vsel %vm5845, nan, %v5854
        %v5856 = vand.u32 2147483647, %v558
        %vm5857 = vcmp.le.f32.partialorder %v5856, 0.7853982
        %vm5858 = vcmp.lt.s32.totalorder %v558, 0
        %v5859 = vand.u32 %v558, 2139095040
        %v5860 = vshrl.u32 %v5859, 23
        %v5861 = vsub.s32 %v5860, 127
        %v5862 = vand.u32 2147483647, %v558
        %v5863 = vand.u32 %v5862, 8388607
        %v5864 = vor.u32 %v5863, 8388608
        %v5865 = vsub.s32 0, %v5864
        %v5866 = vadd.s32 %v5861, 1
        %vm5867 = vcmp.gt.s32.totalorder %v5866, 0
        %v5868 = vsel %vm5867, %v5866, 0
        %v5869 = vshrl.u32 %v5868, 5
        %v5870 = vand.u32 %v5868, 31
        %v5871 = vsub.s32 32, %v5870
        %v5872 = vshrl.u32 683565275, %v5871
        %v5873 = vshll.u32 683565275, %v5870
        %v5874 = vshrl.u32 2475754826, %v5871
        %v5875 = vor.u32 %v5873, %v5874
        %v5876 = vshll.u32 2475754826, %v5870
        %v5877 = vshrl.u32 2131351028, %v5871
        %v5878 = vor.u32 %v5876, %v5877
        %v5879 = vshll.u32 2131351028, %v5870
        %v5880 = vshrl.u32 2102212464, %v5871
        %v5881 = vor.u32 %v5879, %v5880
        %v5882 = vshll.u32 2102212464, %v5870
        %v5883 = vshrl.u32 920167782, %v5871
        %v5884 = vor.u32 %v5882, %v5883
        %v5885 = vshll.u32 920167782, %v5870
        %v5886 = vshrl.u32 1326507024, %v5871
        %v5887 = vor.u32 %v5885, %v5886
        %vm5888 = vcmp.lt.s32.totalorder %v5869, 1
        %vm5889 = vcmp.lt.s32.totalorder %v5869, 2
        %vm5890 = vcmp.lt.s32.totalorder %v5869, 3
        %vm5891 = vcmp.lt.s32.totalorder %v5869, 4
        %v5892 = vsel %vm5888, %v5872, %v5875
        %v5893 = vsel %vm5891, %v5881, 2102212464
        %v5894 = vsel %vm5890, %v5878, %v5893
        %v5895 = vsel %vm5889, %v5892, %v5894
        %v5896 = vsel %vm5888, %v5875, %v5878
        %v5897 = vsel %vm5891, %v5884, 920167782
        %v5898 = vsel %vm5890, %v5881, %v5897
        %v5899 = vsel %vm5889, %v5896, %v5898
        %v5900 = vsel %vm5888, %v5878, %v5881
        %v5901 = vsel %vm5891, %v5887, 1326507024
        %v5902 = vsel %vm5890, %v5884, %v5901
        %v5903 = vsel %vm5889, %v5900, %v5902
        %v5904 = vshll.u32 %v5864, 8
        %v5905 = vmul.u32.u64.compose %v5904, %v5903
        %v5906 = vextract.low.u32 %v5905
        %v5907 = vextract.high.u32 %v5905
        %v5908 = vmul.u32.u64.compose %v5904, %v5899
        %v5909 = vextract.low.u32 %v5908
        %v5910 = vextract.high.u32 %v5908
        %v5911 = vmul.u32 %v5904, %v5895
        %v5912 = vadd.s32 %v5907, %v5909
        %vm5913 = vc.u32 %v5907, %v5909
        %v5914 = vadd.s32 %v5910, 1
        %v5915 = vsel %vm5913, %v5914, %v5910
        %v5916 = vadd.s32 %v5911, %v5915
        %v5917 = vadd.s32 %v5916, 536870912
        %v5918 = vshrl.u32 %v5917, 30
        %v5919 = vshll.u32 %v5918, 30
        %v5920 = vsub.s32 %v5916, %v5919
        %vm5921 = vcmp.lt.s32.totalorder %v5920, 0
        %v5922 = vsub.s32 0, %v5920
        %v5923 = vsel %vm5921, %v5922, %v5920
        %v5924 = vclz %v5923
        %v5925 = vsub.s32 %v5924, 2
        %vm5926 = vcmp.gt.s32.totalorder 0, %v5925
        %v5927 = vsel %vm5926, 0, %v5925
        %v5928 = vsub.s32 32, %v5927
        %v5929 = vshll.u32 %v5920, %v5927
        %v5930 = vshrl.u32 %v5912, %v5928
        %v5931 = vor.u32 %v5929, %v5930
        %v5932 = vsub.s32 4294967266, %v5927
        %v5933 = vadd.s32 %v5932, 127
        %v5934 = vshll.u32 %v5933, 23
        %v5935 = vor.u32 4788187, %v5934
        %v5936 = vand.u32 2147483647, %v5935
        %v5938 = vcvt.s32.f32 %v5931
        %v5939 = vmul.f32 %v5938, %v5936
        %v5940 = vxor.u32 %v5939, 2147483648
        %v5941 = vsel %vm5858, %v5940, %v5939
        %v5942 = vsub.s32 4, %v5918
        %v5943 = vsel %vm5858, %v5942, %v5918
        %v5944 = vsel %vm5857, %v558, %v5941
        %v5945 = vsel %vm5857, 0, %v5943
        %v5946 = vcosq.f32.pop %v5944
        %v5947 = vsinq.f32.pop %v5944
        %vm5948 = vweird.f32 %v558
        %v5949 = vand.u32 %v5945, 3
        %vm5950 = vcmp.lt.s32.totalorder %v5949, 2
        %vm5951 = vcmp.eq.s32.totalorder %v5949, 0
        %v5952 = vxor.u32 %v5947, 2147483648
        %v5953 = vsel %vm5951, %v5946, %v5952
        %vm5954 = vcmp.eq.s32.totalorder %v5949, 2
        %v5955 = vxor.u32 %v5946, 2147483648
        %v5956 = vsel %vm5954, %v5955, %v5947
        %v5957 = vsel %vm5950, %v5953, %v5956
        %v5958 = vsel %vm5948, nan, %v5957
        %v5959 = vand.u32 2147483647, %v559
        %vm5960 = vcmp.le.f32.partialorder %v5959, 0.7853982
        %vm5961 = vcmp.lt.s32.totalorder %v559, 0
        %v5962 = vand.u32 %v559, 2139095040
        %v5963 = vshrl.u32 %v5962, 23
        %v5964 = vsub.s32 %v5963, 127
        %v5965 = vand.u32 2147483647, %v559
        %v5966 = vand.u32 %v5965, 8388607
        %v5967 = vor.u32 %v5966, 8388608
        %v5968 = vsub.s32 0, %v5967
        %v5969 = vadd.s32 %v5964, 1
        %vm5970 = vcmp.gt.s32.totalorder %v5969, 0
        %v5971 = vsel %vm5970, %v5969, 0
        %v5972 = vshrl.u32 %v5971, 5
        %v5973 = vand.u32 %v5971, 31
        %v5974 = vsub.s32 32, %v5973
        %v5975 = vshrl.u32 683565275, %v5974
        %v5976 = vshll.u32 683565275, %v5973
        %v5977 = vshrl.u32 2475754826, %v5974
        %v5978 = vor.u32 %v5976, %v5977
        %v5979 = vshll.u32 2475754826, %v5973
        %v5980 = vshrl.u32 2131351028, %v5974
        %v5981 = vor.u32 %v5979, %v5980
        %v5982 = vshll.u32 2131351028, %v5973
        %v5983 = vshrl.u32 2102212464, %v5974
        %v5984 = vor.u32 %v5982, %v5983
        %v5985 = vshll.u32 2102212464, %v5973
        %v5986 = vshrl.u32 920167782, %v5974
        %v5987 = vor.u32 %v5985, %v5986
        %v5988 = vshll.u32 920167782, %v5973
        %v5989 = vshrl.u32 1326507024, %v5974
        %v5990 = vor.u32 %v5988, %v5989
        %vm5991 = vcmp.lt.s32.totalorder %v5972, 1
        %vm5992 = vcmp.lt.s32.totalorder %v5972, 2
        %vm5993 = vcmp.lt.s32.totalorder %v5972, 3
        %vm5994 = vcmp.lt.s32.totalorder %v5972, 4
        %v5995 = vsel %vm5991, %v5975, %v5978
        %v5996 = vsel %vm5994, %v5984, 2102212464
        %v5997 = vsel %vm5993, %v5981, %v5996
        %v5998 = vsel %vm5992, %v5995, %v5997
        %v5999 = vsel %vm5991, %v5978, %v5981
        %v6000 = vsel %vm5994, %v5987, 920167782
        %v6001 = vsel %vm5993, %v5984, %v6000
        %v6002 = vsel %vm5992, %v5999, %v6001
        %v6003 = vsel %vm5991, %v5981, %v5984
        %v6004 = vsel %vm5994, %v5990, 1326507024
        %v6005 = vsel %vm5993, %v5987, %v6004
        %v6006 = vsel %vm5992, %v6003, %v6005
        %v6007 = vshll.u32 %v5967, 8
        %v6008 = vmul.u32.u64.compose %v6007, %v6006
        %v6009 = vextract.low.u32 %v6008
        %v6010 = vextract.high.u32 %v6008
        %v6011 = vmul.u32.u64.compose %v6007, %v6002
        %v6012 = vextract.low.u32 %v6011
        %v6013 = vextract.high.u32 %v6011
        %v6014 = vmul.u32 %v6007, %v5998
        %v6015 = vadd.s32 %v6010, %v6012
        %vm6016 = vc.u32 %v6010, %v6012
        %v6017 = vadd.s32 %v6013, 1
        %v6018 = vsel %vm6016, %v6017, %v6013
        %v6019 = vadd.s32 %v6014, %v6018
        %v6020 = vadd.s32 %v6019, 536870912
        %v6021 = vshrl.u32 %v6020, 30
        %v6022 = vshll.u32 %v6021, 30
        %v6023 = vsub.s32 %v6019, %v6022
        %vm6024 = vcmp.lt.s32.totalorder %v6023, 0
        %v6025 = vsub.s32 0, %v6023
        %v6026 = vsel %vm6024, %v6025, %v6023
        %v6027 = vclz %v6026
        %v6028 = vsub.s32 %v6027, 2
        %vm6029 = vcmp.gt.s32.totalorder 0, %v6028
        %v6030 = vsel %vm6029, 0, %v6028
        %v6031 = vsub.s32 32, %v6030
        %v6032 = vshll.u32 %v6023, %v6030
        %v6033 = vshrl.u32 %v6015, %v6031
        %v6034 = vor.u32 %v6032, %v6033
        %v6035 = vsub.s32 4294967266, %v6030
        %v6036 = vadd.s32 %v6035, 127
        %v6037 = vshll.u32 %v6036, 23
        %v6038 = vor.u32 4788187, %v6037
        %v6039 = vand.u32 2147483647, %v6038
        %v6041 = vcvt.s32.f32 %v6034
        %v6042 = vmul.f32 %v6041, %v6039
        %v6043 = vxor.u32 %v6042, 2147483648
        %v6044 = vsel %vm5961, %v6043, %v6042
        %v6045 = vsub.s32 4, %v6021
        %v6046 = vsel %vm5961, %v6045, %v6021
        %v6047 = vsel %vm5960, %v559, %v6044
        %v6048 = vsel %vm5960, 0, %v6046
        %v6049 = vcosq.f32.pop %v6047
        %v6050 = vsinq.f32.pop %v6047
        %vm6051 = vweird.f32 %v559
        %v6052 = vand.u32 %v6048, 3
        %vm6053 = vcmp.lt.s32.totalorder %v6052, 2
        %vm6054 = vcmp.eq.s32.totalorder %v6052, 0
        %v6055 = vxor.u32 %v6050, 2147483648
        %v6056 = vsel %vm6054, %v6049, %v6055
        %vm6057 = vcmp.eq.s32.totalorder %v6052, 2
        %v6058 = vxor.u32 %v6049, 2147483648
        %v6059 = vsel %vm6057, %v6058, %v6050
        %v6060 = vsel %vm6053, %v6056, %v6059
        %v6061 = vsel %vm6051, nan, %v6060
        %v6062 = vand.u32 2147483647, %v560
        %vm6063 = vcmp.le.f32.partialorder %v6062, 0.7853982
        %vm6064 = vcmp.lt.s32.totalorder %v560, 0
        %v6065 = vand.u32 %v560, 2139095040
        %v6066 = vshrl.u32 %v6065, 23
        %v6067 = vsub.s32 %v6066, 127
        %v6068 = vand.u32 2147483647, %v560
        %v6069 = vand.u32 %v6068, 8388607
        %v6070 = vor.u32 %v6069, 8388608
        %v6071 = vsub.s32 0, %v6070
        %v6072 = vadd.s32 %v6067, 1
        %vm6073 = vcmp.gt.s32.totalorder %v6072, 0
        %v6074 = vsel %vm6073, %v6072, 0
        %v6075 = vshrl.u32 %v6074, 5
        %v6076 = vand.u32 %v6074, 31
        %v6077 = vsub.s32 32, %v6076
        %v6078 = vshrl.u32 683565275, %v6077
        %v6079 = vshll.u32 683565275, %v6076
        %v6080 = vshrl.u32 2475754826, %v6077
        %v6081 = vor.u32 %v6079, %v6080
        %v6082 = vshll.u32 2475754826, %v6076
        %v6083 = vshrl.u32 2131351028, %v6077
        %v6084 = vor.u32 %v6082, %v6083
        %v6085 = vshll.u32 2131351028, %v6076
        %v6086 = vshrl.u32 2102212464, %v6077
        %v6087 = vor.u32 %v6085, %v6086
        %v6088 = vshll.u32 2102212464, %v6076
        %v6089 = vshrl.u32 920167782, %v6077
        %v6090 = vor.u32 %v6088, %v6089
        %v6091 = vshll.u32 920167782, %v6076
        %v6092 = vshrl.u32 1326507024, %v6077
        %v6093 = vor.u32 %v6091, %v6092
        %vm6094 = vcmp.lt.s32.totalorder %v6075, 1
        %vm6095 = vcmp.lt.s32.totalorder %v6075, 2
        %vm6096 = vcmp.lt.s32.totalorder %v6075, 3
        %vm6097 = vcmp.lt.s32.totalorder %v6075, 4
        %v6098 = vsel %vm6094, %v6078, %v6081
        %v6099 = vsel %vm6097, %v6087, 2102212464
        %v6100 = vsel %vm6096, %v6084, %v6099
        %v6101 = vsel %vm6095, %v6098, %v6100
        %v6102 = vsel %vm6094, %v6081, %v6084
        %v6103 = vsel %vm6097, %v6090, 920167782
        %v6104 = vsel %vm6096, %v6087, %v6103
        %v6105 = vsel %vm6095, %v6102, %v6104
        %v6106 = vsel %vm6094, %v6084, %v6087
        %v6107 = vsel %vm6097, %v6093, 1326507024
        %v6108 = vsel %vm6096, %v6090, %v6107
        %v6109 = vsel %vm6095, %v6106, %v6108
        %v6110 = vshll.u32 %v6070, 8
        %v6111 = vmul.u32.u64.compose %v6110, %v6109
        %v6112 = vextract.low.u32 %v6111
        %v6113 = vextract.high.u32 %v6111
        %v6114 = vmul.u32.u64.compose %v6110, %v6105
        %v6115 = vextract.low.u32 %v6114
        %v6116 = vextract.high.u32 %v6114
        %v6117 = vmul.u32 %v6110, %v6101
        %v6118 = vadd.s32 %v6113, %v6115
        %vm6119 = vc.u32 %v6113, %v6115
        %v6120 = vadd.s32 %v6116, 1
        %v6121 = vsel %vm6119, %v6120, %v6116
        %v6122 = vadd.s32 %v6117, %v6121
        %v6123 = vadd.s32 %v6122, 536870912
        %v6124 = vshrl.u32 %v6123, 30
        %v6125 = vshll.u32 %v6124, 30
        %v6126 = vsub.s32 %v6122, %v6125
        %vm6127 = vcmp.lt.s32.totalorder %v6126, 0
        %v6128 = vsub.s32 0, %v6126
        %v6129 = vsel %vm6127, %v6128, %v6126
        %v6130 = vclz %v6129
        %v6131 = vsub.s32 %v6130, 2
        %vm6132 = vcmp.gt.s32.totalorder 0, %v6131
        %v6133 = vsel %vm6132, 0, %v6131
        %v6134 = vsub.s32 32, %v6133
        %v6135 = vshll.u32 %v6126, %v6133
        %v6136 = vshrl.u32 %v6118, %v6134
        %v6137 = vor.u32 %v6135, %v6136
        %v6138 = vsub.s32 4294967266, %v6133
        %v6139 = vadd.s32 %v6138, 127
        %v6140 = vshll.u32 %v6139, 23
        %v6141 = vor.u32 4788187, %v6140
        %v6142 = vand.u32 2147483647, %v6141
        %v6144 = vcvt.s32.f32 %v6137
        %v6145 = vmul.f32 %v6144, %v6142
        %v6146 = vxor.u32 %v6145, 2147483648
        %v6147 = vsel %vm6064, %v6146, %v6145
        %v6148 = vsub.s32 4, %v6124
        %v6149 = vsel %vm6064, %v6148, %v6124
        %v6150 = vsel %vm6063, %v560, %v6147
        %v6151 = vsel %vm6063, 0, %v6149
        %v6152 = vcosq.f32.pop %v6150
        %v6153 = vsinq.f32.pop %v6150
        %vm6154 = vweird.f32 %v560
        %v6155 = vand.u32 %v6151, 3
        %vm6156 = vcmp.lt.s32.totalorder %v6155, 2
        %vm6157 = vcmp.eq.s32.totalorder %v6155, 0
        %v6158 = vxor.u32 %v6153, 2147483648
        %v6159 = vsel %vm6157, %v6152, %v6158
        %vm6160 = vcmp.eq.s32.totalorder %v6155, 2
        %v6161 = vxor.u32 %v6152, 2147483648
        %v6162 = vsel %vm6160, %v6161, %v6153
        %v6163 = vsel %vm6156, %v6159, %v6162
        %v6164 = vsel %vm6154, nan, %v6163
        %v6165 = vand.u32 2147483647, %v561
        %vm6166 = vcmp.le.f32.partialorder %v6165, 0.7853982
        %vm6167 = vcmp.lt.s32.totalorder %v561, 0
        %v6168 = vand.u32 %v561, 2139095040
        %v6169 = vshrl.u32 %v6168, 23
        %v6170 = vsub.s32 %v6169, 127
        %v6171 = vand.u32 2147483647, %v561
        %v6172 = vand.u32 %v6171, 8388607
        %v6173 = vor.u32 %v6172, 8388608
        %v6174 = vsub.s32 0, %v6173
        %v6175 = vadd.s32 %v6170, 1
        %vm6176 = vcmp.gt.s32.totalorder %v6175, 0
        %v6177 = vsel %vm6176, %v6175, 0
        %v6178 = vshrl.u32 %v6177, 5
        %v6179 = vand.u32 %v6177, 31
        %v6180 = vsub.s32 32, %v6179
        %v6181 = vshrl.u32 683565275, %v6180
        %v6182 = vshll.u32 683565275, %v6179
        %v6183 = vshrl.u32 2475754826, %v6180
        %v6184 = vor.u32 %v6182, %v6183
        %v6185 = vshll.u32 2475754826, %v6179
        %v6186 = vshrl.u32 2131351028, %v6180
        %v6187 = vor.u32 %v6185, %v6186
        %v6188 = vshll.u32 2131351028, %v6179
        %v6189 = vshrl.u32 2102212464, %v6180
        %v6190 = vor.u32 %v6188, %v6189
        %v6191 = vshll.u32 2102212464, %v6179
        %v6192 = vshrl.u32 920167782, %v6180
        %v6193 = vor.u32 %v6191, %v6192
        %v6194 = vshll.u32 920167782, %v6179
        %v6195 = vshrl.u32 1326507024, %v6180
        %v6196 = vor.u32 %v6194, %v6195
        %vm6197 = vcmp.lt.s32.totalorder %v6178, 1
        %vm6198 = vcmp.lt.s32.totalorder %v6178, 2
        %vm6199 = vcmp.lt.s32.totalorder %v6178, 3
        %vm6200 = vcmp.lt.s32.totalorder %v6178, 4
        %v6201 = vsel %vm6197, %v6181, %v6184
        %v6202 = vsel %vm6200, %v6190, 2102212464
        %v6203 = vsel %vm6199, %v6187, %v6202
        %v6204 = vsel %vm6198, %v6201, %v6203
        %v6205 = vsel %vm6197, %v6184, %v6187
        %v6206 = vsel %vm6200, %v6193, 920167782
        %v6207 = vsel %vm6199, %v6190, %v6206
        %v6208 = vsel %vm6198, %v6205, %v6207
        %v6209 = vsel %vm6197, %v6187, %v6190
        %v6210 = vsel %vm6200, %v6196, 1326507024
        %v6211 = vsel %vm6199, %v6193, %v6210
        %v6212 = vsel %vm6198, %v6209, %v6211
        %v6213 = vshll.u32 %v6173, 8
        %v6214 = vmul.u32.u64.compose %v6213, %v6212
        %v6215 = vextract.low.u32 %v6214
        %v6216 = vextract.high.u32 %v6214
        %v6217 = vmul.u32.u64.compose %v6213, %v6208
        %v6218 = vextract.low.u32 %v6217
        %v6219 = vextract.high.u32 %v6217
        %v6220 = vmul.u32 %v6213, %v6204
        %v6221 = vadd.s32 %v6216, %v6218
        %vm6222 = vc.u32 %v6216, %v6218
        %v6223 = vadd.s32 %v6219, 1
        %v6224 = vsel %vm6222, %v6223, %v6219
        %v6225 = vadd.s32 %v6220, %v6224
        %v6226 = vadd.s32 %v6225, 536870912
        %v6227 = vshrl.u32 %v6226, 30
        %v6228 = vshll.u32 %v6227, 30
        %v6229 = vsub.s32 %v6225, %v6228
        %vm6230 = vcmp.lt.s32.totalorder %v6229, 0
        %v6231 = vsub.s32 0, %v6229
        %v6232 = vsel %vm6230, %v6231, %v6229
        %v6233 = vclz %v6232
        %v6234 = vsub.s32 %v6233, 2
        %vm6235 = vcmp.gt.s32.totalorder 0, %v6234
        %v6236 = vsel %vm6235, 0, %v6234
        %v6237 = vsub.s32 32, %v6236
        %v6238 = vshll.u32 %v6229, %v6236
        %v6239 = vshrl.u32 %v6221, %v6237
        %v6240 = vor.u32 %v6238, %v6239
        %v6241 = vsub.s32 4294967266, %v6236
        %v6242 = vadd.s32 %v6241, 127
        %v6243 = vshll.u32 %v6242, 23
        %v6244 = vor.u32 4788187, %v6243
        %v6245 = vand.u32 2147483647, %v6244
        %v6247 = vcvt.s32.f32 %v6240
        %v6248 = vmul.f32 %v6247, %v6245
        %v6249 = vxor.u32 %v6248, 2147483648
        %v6250 = vsel %vm6167, %v6249, %v6248
        %v6251 = vsub.s32 4, %v6227
        %v6252 = vsel %vm6167, %v6251, %v6227
        %v6253 = vsel %vm6166, %v561, %v6250
        %v6254 = vsel %vm6166, 0, %v6252
        %v6255 = vcosq.f32.pop %v6253
        %v6256 = vsinq.f32.pop %v6253
        %vm6257 = vweird.f32 %v561
        %v6258 = vand.u32 %v6254, 3
        %vm6259 = vcmp.lt.s32.totalorder %v6258, 2
        %vm6260 = vcmp.eq.s32.totalorder %v6258, 0
        %v6261 = vxor.u32 %v6256, 2147483648
        %v6262 = vsel %vm6260, %v6255, %v6261
        %vm6263 = vcmp.eq.s32.totalorder %v6258, 2
        %v6264 = vxor.u32 %v6255, 2147483648
        %v6265 = vsel %vm6263, %v6264, %v6256
        %v6266 = vsel %vm6259, %v6262, %v6265
        %v6267 = vsel %vm6257, nan, %v6266
        %v6268 = vand.u32 2147483647, %v562
        %vm6269 = vcmp.le.f32.partialorder %v6268, 0.7853982
        %vm6270 = vcmp.lt.s32.totalorder %v562, 0
        %v6271 = vand.u32 %v562, 2139095040
        %v6272 = vshrl.u32 %v6271, 23
        %v6273 = vsub.s32 %v6272, 127
        %v6274 = vand.u32 2147483647, %v562
        %v6275 = vand.u32 %v6274, 8388607
        %v6276 = vor.u32 %v6275, 8388608
        %v6277 = vsub.s32 0, %v6276
        %v6278 = vadd.s32 %v6273, 1
        %vm6279 = vcmp.gt.s32.totalorder %v6278, 0
        %v6280 = vsel %vm6279, %v6278, 0
        %v6281 = vshrl.u32 %v6280, 5
        %v6282 = vand.u32 %v6280, 31
        %v6283 = vsub.s32 32, %v6282
        %v6284 = vshrl.u32 683565275, %v6283
        %v6285 = vshll.u32 683565275, %v6282
        %v6286 = vshrl.u32 2475754826, %v6283
        %v6287 = vor.u32 %v6285, %v6286
        %v6288 = vshll.u32 2475754826, %v6282
        %v6289 = vshrl.u32 2131351028, %v6283
        %v6290 = vor.u32 %v6288, %v6289
        %v6291 = vshll.u32 2131351028, %v6282
        %v6292 = vshrl.u32 2102212464, %v6283
        %v6293 = vor.u32 %v6291, %v6292
        %v6294 = vshll.u32 2102212464, %v6282
        %v6295 = vshrl.u32 920167782, %v6283
        %v6296 = vor.u32 %v6294, %v6295
        %v6297 = vshll.u32 920167782, %v6282
        %v6298 = vshrl.u32 1326507024, %v6283
        %v6299 = vor.u32 %v6297, %v6298
        %vm6300 = vcmp.lt.s32.totalorder %v6281, 1
        %vm6301 = vcmp.lt.s32.totalorder %v6281, 2
        %vm6302 = vcmp.lt.s32.totalorder %v6281, 3
        %vm6303 = vcmp.lt.s32.totalorder %v6281, 4
        %v6304 = vsel %vm6300, %v6284, %v6287
        %v6305 = vsel %vm6303, %v6293, 2102212464
        %v6306 = vsel %vm6302, %v6290, %v6305
        %v6307 = vsel %vm6301, %v6304, %v6306
        %v6308 = vsel %vm6300, %v6287, %v6290
        %v6309 = vsel %vm6303, %v6296, 920167782
        %v6310 = vsel %vm6302, %v6293, %v6309
        %v6311 = vsel %vm6301, %v6308, %v6310
        %v6312 = vsel %vm6300, %v6290, %v6293
        %v6313 = vsel %vm6303, %v6299, 1326507024
        %v6314 = vsel %vm6302, %v6296, %v6313
        %v6315 = vsel %vm6301, %v6312, %v6314
        %v6316 = vshll.u32 %v6276, 8
        %v6317 = vmul.u32.u64.compose %v6316, %v6315
        %v6318 = vextract.low.u32 %v6317
        %v6319 = vextract.high.u32 %v6317
        %v6320 = vmul.u32.u64.compose %v6316, %v6311
        %v6321 = vextract.low.u32 %v6320
        %v6322 = vextract.high.u32 %v6320
        %v6323 = vmul.u32 %v6316, %v6307
        %v6324 = vadd.s32 %v6319, %v6321
        %vm6325 = vc.u32 %v6319, %v6321
        %v6326 = vadd.s32 %v6322, 1
        %v6327 = vsel %vm6325, %v6326, %v6322
        %v6328 = vadd.s32 %v6323, %v6327
        %v6329 = vadd.s32 %v6328, 536870912
        %v6330 = vshrl.u32 %v6329, 30
        %v6331 = vshll.u32 %v6330, 30
        %v6332 = vsub.s32 %v6328, %v6331
        %vm6333 = vcmp.lt.s32.totalorder %v6332, 0
        %v6334 = vsub.s32 0, %v6332
        %v6335 = vsel %vm6333, %v6334, %v6332
        %v6336 = vclz %v6335
        %v6337 = vsub.s32 %v6336, 2
        %vm6338 = vcmp.gt.s32.totalorder 0, %v6337
        %v6339 = vsel %vm6338, 0, %v6337
        %v6340 = vsub.s32 32, %v6339
        %v6341 = vshll.u32 %v6332, %v6339
        %v6342 = vshrl.u32 %v6324, %v6340
        %v6343 = vor.u32 %v6341, %v6342
        %v6344 = vsub.s32 4294967266, %v6339
        %v6345 = vadd.s32 %v6344, 127
        %v6346 = vshll.u32 %v6345, 23
        %v6347 = vor.u32 4788187, %v6346
        %v6348 = vand.u32 2147483647, %v6347
        %v6350 = vcvt.s32.f32 %v6343
        %v6351 = vmul.f32 %v6350, %v6348
        %v6352 = vxor.u32 %v6351, 2147483648
        %v6353 = vsel %vm6270, %v6352, %v6351
        %v6354 = vsub.s32 4, %v6330
        %v6355 = vsel %vm6270, %v6354, %v6330
        %v6356 = vsel %vm6269, %v562, %v6353
        %v6357 = vsel %vm6269, 0, %v6355
        %v6358 = vcosq.f32.pop %v6356
        %v6359 = vsinq.f32.pop %v6356
        %vm6360 = vweird.f32 %v562
        %v6361 = vand.u32 %v6357, 3
        %vm6362 = vcmp.lt.s32.totalorder %v6361, 2
        %vm6363 = vcmp.eq.s32.totalorder %v6361, 0
        %v6364 = vxor.u32 %v6359, 2147483648
        %v6365 = vsel %vm6363, %v6358, %v6364
        %vm6366 = vcmp.eq.s32.totalorder %v6361, 2
        %v6367 = vxor.u32 %v6358, 2147483648
        %v6368 = vsel %vm6366, %v6367, %v6359
        %v6369 = vsel %vm6362, %v6365, %v6368
        %v6370 = vsel %vm6360, nan, %v6369
        %v6371 = vand.u32 2147483647, %v563
        %vm6372 = vcmp.le.f32.partialorder %v6371, 0.7853982
        %vm6373 = vcmp.lt.s32.totalorder %v563, 0
        %v6374 = vand.u32 %v563, 2139095040
        %v6375 = vshrl.u32 %v6374, 23
        %v6376 = vsub.s32 %v6375, 127
        %v6377 = vand.u32 2147483647, %v563
        %v6378 = vand.u32 %v6377, 8388607
        %v6379 = vor.u32 %v6378, 8388608
        %v6380 = vsub.s32 0, %v6379
        %v6381 = vadd.s32 %v6376, 1
        %vm6382 = vcmp.gt.s32.totalorder %v6381, 0
        %v6383 = vsel %vm6382, %v6381, 0
        %v6384 = vshrl.u32 %v6383, 5
        %v6385 = vand.u32 %v6383, 31
        %v6386 = vsub.s32 32, %v6385
        %v6387 = vshrl.u32 683565275, %v6386
        %v6388 = vshll.u32 683565275, %v6385
        %v6389 = vshrl.u32 2475754826, %v6386
        %v6390 = vor.u32 %v6388, %v6389
        %v6391 = vshll.u32 2475754826, %v6385
        %v6392 = vshrl.u32 2131351028, %v6386
        %v6393 = vor.u32 %v6391, %v6392
        %v6394 = vshll.u32 2131351028, %v6385
        %v6395 = vshrl.u32 2102212464, %v6386
        %v6396 = vor.u32 %v6394, %v6395
        %v6397 = vshll.u32 2102212464, %v6385
        %v6398 = vshrl.u32 920167782, %v6386
        %v6399 = vor.u32 %v6397, %v6398
        %v6400 = vshll.u32 920167782, %v6385
        %v6401 = vshrl.u32 1326507024, %v6386
        %v6402 = vor.u32 %v6400, %v6401
        %vm6403 = vcmp.lt.s32.totalorder %v6384, 1
        %vm6404 = vcmp.lt.s32.totalorder %v6384, 2
        %vm6405 = vcmp.lt.s32.totalorder %v6384, 3
        %vm6406 = vcmp.lt.s32.totalorder %v6384, 4
        %v6407 = vsel %vm6403, %v6387, %v6390
        %v6408 = vsel %vm6406, %v6396, 2102212464
        %v6409 = vsel %vm6405, %v6393, %v6408
        %v6410 = vsel %vm6404, %v6407, %v6409
        %v6411 = vsel %vm6403, %v6390, %v6393
        %v6412 = vsel %vm6406, %v6399, 920167782
        %v6413 = vsel %vm6405, %v6396, %v6412
        %v6414 = vsel %vm6404, %v6411, %v6413
        %v6415 = vsel %vm6403, %v6393, %v6396
        %v6416 = vsel %vm6406, %v6402, 1326507024
        %v6417 = vsel %vm6405, %v6399, %v6416
        %v6418 = vsel %vm6404, %v6415, %v6417
        %v6419 = vshll.u32 %v6379, 8
        %v6420 = vmul.u32.u64.compose %v6419, %v6418
        %v6421 = vextract.low.u32 %v6420
        %v6422 = vextract.high.u32 %v6420
        %v6423 = vmul.u32.u64.compose %v6419, %v6414
        %v6424 = vextract.low.u32 %v6423
        %v6425 = vextract.high.u32 %v6423
        %v6426 = vmul.u32 %v6419, %v6410
        %v6427 = vadd.s32 %v6422, %v6424
        %vm6428 = vc.u32 %v6422, %v6424
        %v6429 = vadd.s32 %v6425, 1
        %v6430 = vsel %vm6428, %v6429, %v6425
        %v6431 = vadd.s32 %v6426, %v6430
        %v6432 = vadd.s32 %v6431, 536870912
        %v6433 = vshrl.u32 %v6432, 30
        %v6434 = vshll.u32 %v6433, 30
        %v6435 = vsub.s32 %v6431, %v6434
        %vm6436 = vcmp.lt.s32.totalorder %v6435, 0
        %v6437 = vsub.s32 0, %v6435
        %v6438 = vsel %vm6436, %v6437, %v6435
        %v6439 = vclz %v6438
        %v6440 = vsub.s32 %v6439, 2
        %vm6441 = vcmp.gt.s32.totalorder 0, %v6440
        %v6442 = vsel %vm6441, 0, %v6440
        %v6443 = vsub.s32 32, %v6442
        %v6444 = vshll.u32 %v6435, %v6442
        %v6445 = vshrl.u32 %v6427, %v6443
        %v6446 = vor.u32 %v6444, %v6445
        %v6447 = vsub.s32 4294967266, %v6442
        %v6448 = vadd.s32 %v6447, 127
        %v6449 = vshll.u32 %v6448, 23
        %v6450 = vor.u32 4788187, %v6449
        %v6451 = vand.u32 2147483647, %v6450
        %v6453 = vcvt.s32.f32 %v6446
        %v6454 = vmul.f32 %v6453, %v6451
        %v6455 = vxor.u32 %v6454, 2147483648
        %v6456 = vsel %vm6373, %v6455, %v6454
        %v6457 = vsub.s32 4, %v6433
        %v6458 = vsel %vm6373, %v6457, %v6433
        %v6459 = vsel %vm6372, %v563, %v6456
        %v6460 = vsel %vm6372, 0, %v6458
        %v6461 = vcosq.f32.pop %v6459
        %v6462 = vsinq.f32.pop %v6459
        %vm6463 = vweird.f32 %v563
        %v6464 = vand.u32 %v6460, 3
        %vm6465 = vcmp.lt.s32.totalorder %v6464, 2
        %vm6466 = vcmp.eq.s32.totalorder %v6464, 0
        %v6467 = vxor.u32 %v6462, 2147483648
        %v6468 = vsel %vm6466, %v6461, %v6467
        %vm6469 = vcmp.eq.s32.totalorder %v6464, 2
        %v6470 = vxor.u32 %v6461, 2147483648
        %v6471 = vsel %vm6469, %v6470, %v6462
        %v6472 = vsel %vm6465, %v6468, %v6471
        %v6473 = vsel %vm6463, nan, %v6472
        %v6474 = vand.u32 2147483647, %v564
        %vm6475 = vcmp.le.f32.partialorder %v6474, 0.7853982
        %vm6476 = vcmp.lt.s32.totalorder %v564, 0
        %v6477 = vand.u32 %v564, 2139095040
        %v6478 = vshrl.u32 %v6477, 23
        %v6479 = vsub.s32 %v6478, 127
        %v6480 = vand.u32 2147483647, %v564
        %v6481 = vand.u32 %v6480, 8388607
        %v6482 = vor.u32 %v6481, 8388608
        %v6483 = vsub.s32 0, %v6482
        %v6484 = vadd.s32 %v6479, 1
        %vm6485 = vcmp.gt.s32.totalorder %v6484, 0
        %v6486 = vsel %vm6485, %v6484, 0
        %v6487 = vshrl.u32 %v6486, 5
        %v6488 = vand.u32 %v6486, 31
        %v6489 = vsub.s32 32, %v6488
        %v6490 = vshrl.u32 683565275, %v6489
        %v6491 = vshll.u32 683565275, %v6488
        %v6492 = vshrl.u32 2475754826, %v6489
        %v6493 = vor.u32 %v6491, %v6492
        %v6494 = vshll.u32 2475754826, %v6488
        %v6495 = vshrl.u32 2131351028, %v6489
        %v6496 = vor.u32 %v6494, %v6495
        %v6497 = vshll.u32 2131351028, %v6488
        %v6498 = vshrl.u32 2102212464, %v6489
        %v6499 = vor.u32 %v6497, %v6498
        %v6500 = vshll.u32 2102212464, %v6488
        %v6501 = vshrl.u32 920167782, %v6489
        %v6502 = vor.u32 %v6500, %v6501
        %v6503 = vshll.u32 920167782, %v6488
        %v6504 = vshrl.u32 1326507024, %v6489
        %v6505 = vor.u32 %v6503, %v6504
        %vm6506 = vcmp.lt.s32.totalorder %v6487, 1
        %vm6507 = vcmp.lt.s32.totalorder %v6487, 2
        %vm6508 = vcmp.lt.s32.totalorder %v6487, 3
        %vm6509 = vcmp.lt.s32.totalorder %v6487, 4
        %v6510 = vsel %vm6506, %v6490, %v6493
        %v6511 = vsel %vm6509, %v6499, 2102212464
        %v6512 = vsel %vm6508, %v6496, %v6511
        %v6513 = vsel %vm6507, %v6510, %v6512
        %v6514 = vsel %vm6506, %v6493, %v6496
        %v6515 = vsel %vm6509, %v6502, 920167782
        %v6516 = vsel %vm6508, %v6499, %v6515
        %v6517 = vsel %vm6507, %v6514, %v6516
        %v6518 = vsel %vm6506, %v6496, %v6499
        %v6519 = vsel %vm6509, %v6505, 1326507024
        %v6520 = vsel %vm6508, %v6502, %v6519
        %v6521 = vsel %vm6507, %v6518, %v6520
        %v6522 = vshll.u32 %v6482, 8
        %v6523 = vmul.u32.u64.compose %v6522, %v6521
        %v6524 = vextract.low.u32 %v6523
        %v6525 = vextract.high.u32 %v6523
        %v6526 = vmul.u32.u64.compose %v6522, %v6517
        %v6527 = vextract.low.u32 %v6526
        %v6528 = vextract.high.u32 %v6526
        %v6529 = vmul.u32 %v6522, %v6513
        %v6530 = vadd.s32 %v6525, %v6527
        %vm6531 = vc.u32 %v6525, %v6527
        %v6532 = vadd.s32 %v6528, 1
        %v6533 = vsel %vm6531, %v6532, %v6528
        %v6534 = vadd.s32 %v6529, %v6533
        %v6535 = vadd.s32 %v6534, 536870912
        %v6536 = vshrl.u32 %v6535, 30
        %v6537 = vshll.u32 %v6536, 30
        %v6538 = vsub.s32 %v6534, %v6537
        %vm6539 = vcmp.lt.s32.totalorder %v6538, 0
        %v6540 = vsub.s32 0, %v6538
        %v6541 = vsel %vm6539, %v6540, %v6538
        %v6542 = vclz %v6541
        %v6543 = vsub.s32 %v6542, 2
        %vm6544 = vcmp.gt.s32.totalorder 0, %v6543
        %v6545 = vsel %vm6544, 0, %v6543
        %v6546 = vsub.s32 32, %v6545
        %v6547 = vshll.u32 %v6538, %v6545
        %v6548 = vshrl.u32 %v6530, %v6546
        %v6549 = vor.u32 %v6547, %v6548
        %v6550 = vsub.s32 4294967266, %v6545
        %v6551 = vadd.s32 %v6550, 127
        %v6552 = vshll.u32 %v6551, 23
        %v6553 = vor.u32 4788187, %v6552
        %v6554 = vand.u32 2147483647, %v6553
        %v6556 = vcvt.s32.f32 %v6549
        %v6557 = vmul.f32 %v6556, %v6554
        %v6558 = vxor.u32 %v6557, 2147483648
        %v6559 = vsel %vm6476, %v6558, %v6557
        %v6560 = vsub.s32 4, %v6536
        %v6561 = vsel %vm6476, %v6560, %v6536
        %v6562 = vsel %vm6475, %v564, %v6559
        %v6563 = vsel %vm6475, 0, %v6561
        %v6564 = vcosq.f32.pop %v6562
        %v6565 = vsinq.f32.pop %v6562
        %vm6566 = vweird.f32 %v564
        %v6567 = vand.u32 %v6563, 3
        %vm6568 = vcmp.lt.s32.totalorder %v6567, 2
        %vm6569 = vcmp.eq.s32.totalorder %v6567, 0
        %v6570 = vxor.u32 %v6565, 2147483648
        %v6571 = vsel %vm6569, %v6564, %v6570
        %vm6572 = vcmp.eq.s32.totalorder %v6567, 2
        %v6573 = vxor.u32 %v6564, 2147483648
        %v6574 = vsel %vm6572, %v6573, %v6565
        %v6575 = vsel %vm6568, %v6571, %v6574
        %v6576 = vsel %vm6566, nan, %v6575
        %v6577 = vand.u32 2147483647, %v565
        %vm6578 = vcmp.le.f32.partialorder %v6577, 0.7853982
        %vm6579 = vcmp.lt.s32.totalorder %v565, 0
        %v6580 = vand.u32 %v565, 2139095040
        %v6581 = vshrl.u32 %v6580, 23
        %v6582 = vsub.s32 %v6581, 127
        %v6583 = vand.u32 2147483647, %v565
        %v6584 = vand.u32 %v6583, 8388607
        %v6585 = vor.u32 %v6584, 8388608
        %v6586 = vsub.s32 0, %v6585
        %v6587 = vadd.s32 %v6582, 1
        %vm6588 = vcmp.gt.s32.totalorder %v6587, 0
        %v6589 = vsel %vm6588, %v6587, 0
        %v6590 = vshrl.u32 %v6589, 5
        %v6591 = vand.u32 %v6589, 31
        %v6592 = vsub.s32 32, %v6591
        %v6593 = vshrl.u32 683565275, %v6592
        %v6594 = vshll.u32 683565275, %v6591
        %v6595 = vshrl.u32 2475754826, %v6592
        %v6596 = vor.u32 %v6594, %v6595
        %v6597 = vshll.u32 2475754826, %v6591
        %v6598 = vshrl.u32 2131351028, %v6592
        %v6599 = vor.u32 %v6597, %v6598
        %v6600 = vshll.u32 2131351028, %v6591
        %v6601 = vshrl.u32 2102212464, %v6592
        %v6602 = vor.u32 %v6600, %v6601
        %v6603 = vshll.u32 2102212464, %v6591
        %v6604 = vshrl.u32 920167782, %v6592
        %v6605 = vor.u32 %v6603, %v6604
        %v6606 = vshll.u32 920167782, %v6591
        %v6607 = vshrl.u32 1326507024, %v6592
        %v6608 = vor.u32 %v6606, %v6607
        %vm6609 = vcmp.lt.s32.totalorder %v6590, 1
        %vm6610 = vcmp.lt.s32.totalorder %v6590, 2
        %vm6611 = vcmp.lt.s32.totalorder %v6590, 3
        %vm6612 = vcmp.lt.s32.totalorder %v6590, 4
        %v6613 = vsel %vm6609, %v6593, %v6596
        %v6614 = vsel %vm6612, %v6602, 2102212464
        %v6615 = vsel %vm6611, %v6599, %v6614
        %v6616 = vsel %vm6610, %v6613, %v6615
        %v6617 = vsel %vm6609, %v6596, %v6599
        %v6618 = vsel %vm6612, %v6605, 920167782
        %v6619 = vsel %vm6611, %v6602, %v6618
        %v6620 = vsel %vm6610, %v6617, %v6619
        %v6621 = vsel %vm6609, %v6599, %v6602
        %v6622 = vsel %vm6612, %v6608, 1326507024
        %v6623 = vsel %vm6611, %v6605, %v6622
        %v6624 = vsel %vm6610, %v6621, %v6623
        %v6625 = vshll.u32 %v6585, 8
        %v6626 = vmul.u32.u64.compose %v6625, %v6624
        %v6627 = vextract.low.u32 %v6626
        %v6628 = vextract.high.u32 %v6626
        %v6629 = vmul.u32.u64.compose %v6625, %v6620
        %v6630 = vextract.low.u32 %v6629
        %v6631 = vextract.high.u32 %v6629
        %v6632 = vmul.u32 %v6625, %v6616
        %v6633 = vadd.s32 %v6628, %v6630
        %vm6634 = vc.u32 %v6628, %v6630
        %v6635 = vadd.s32 %v6631, 1
        %v6636 = vsel %vm6634, %v6635, %v6631
        %v6637 = vadd.s32 %v6632, %v6636
        %v6638 = vadd.s32 %v6637, 536870912
        %v6639 = vshrl.u32 %v6638, 30
        %v6640 = vshll.u32 %v6639, 30
        %v6641 = vsub.s32 %v6637, %v6640
        %vm6642 = vcmp.lt.s32.totalorder %v6641, 0
        %v6643 = vsub.s32 0, %v6641
        %v6644 = vsel %vm6642, %v6643, %v6641
        %v6645 = vclz %v6644
        %v6646 = vsub.s32 %v6645, 2
        %vm6647 = vcmp.gt.s32.totalorder 0, %v6646
        %v6648 = vsel %vm6647, 0, %v6646
        %v6649 = vsub.s32 32, %v6648
        %v6650 = vshll.u32 %v6641, %v6648
        %v6651 = vshrl.u32 %v6633, %v6649
        %v6652 = vor.u32 %v6650, %v6651
        %v6653 = vsub.s32 4294967266, %v6648
        %v6654 = vadd.s32 %v6653, 127
        %v6655 = vshll.u32 %v6654, 23
        %v6656 = vor.u32 4788187, %v6655
        %v6657 = vand.u32 2147483647, %v6656
        %v6659 = vcvt.s32.f32 %v6652
        %v6660 = vmul.f32 %v6659, %v6657
        %v6661 = vxor.u32 %v6660, 2147483648
        %v6662 = vsel %vm6579, %v6661, %v6660
        %v6663 = vsub.s32 4, %v6639
        %v6664 = vsel %vm6579, %v6663, %v6639
        %v6665 = vsel %vm6578, %v565, %v6662
        %v6666 = vsel %vm6578, 0, %v6664
        %v6667 = vcosq.f32.pop %v6665
        %v6668 = vsinq.f32.pop %v6665
        %vm6669 = vweird.f32 %v565
        %v6670 = vand.u32 %v6666, 3
        %vm6671 = vcmp.lt.s32.totalorder %v6670, 2
        %vm6672 = vcmp.eq.s32.totalorder %v6670, 0
        %v6673 = vxor.u32 %v6668, 2147483648
        %v6674 = vsel %vm6672, %v6667, %v6673
        %vm6675 = vcmp.eq.s32.totalorder %v6670, 2
        %v6676 = vxor.u32 %v6667, 2147483648
        %v6677 = vsel %vm6675, %v6676, %v6668
        %v6678 = vsel %vm6671, %v6674, %v6677
        %v6679 = vsel %vm6669, nan, %v6678
        %v6680 = vand.u32 2147483647, %v566
        %vm6681 = vcmp.le.f32.partialorder %v6680, 0.7853982
        %vm6682 = vcmp.lt.s32.totalorder %v566, 0
        %v6683 = vand.u32 %v566, 2139095040
        %v6684 = vshrl.u32 %v6683, 23
        %v6685 = vsub.s32 %v6684, 127
        %v6686 = vand.u32 2147483647, %v566
        %v6687 = vand.u32 %v6686, 8388607
        %v6688 = vor.u32 %v6687, 8388608
        %v6689 = vsub.s32 0, %v6688
        %v6690 = vadd.s32 %v6685, 1
        %vm6691 = vcmp.gt.s32.totalorder %v6690, 0
        %v6692 = vsel %vm6691, %v6690, 0
        %v6693 = vshrl.u32 %v6692, 5
        %v6694 = vand.u32 %v6692, 31
        %v6695 = vsub.s32 32, %v6694
        %v6696 = vshrl.u32 683565275, %v6695
        %v6697 = vshll.u32 683565275, %v6694
        %v6698 = vshrl.u32 2475754826, %v6695
        %v6699 = vor.u32 %v6697, %v6698
        %v6700 = vshll.u32 2475754826, %v6694
        %v6701 = vshrl.u32 2131351028, %v6695
        %v6702 = vor.u32 %v6700, %v6701
        %v6703 = vshll.u32 2131351028, %v6694
        %v6704 = vshrl.u32 2102212464, %v6695
        %v6705 = vor.u32 %v6703, %v6704
        %v6706 = vshll.u32 2102212464, %v6694
        %v6707 = vshrl.u32 920167782, %v6695
        %v6708 = vor.u32 %v6706, %v6707
        %v6709 = vshll.u32 920167782, %v6694
        %v6710 = vshrl.u32 1326507024, %v6695
        %v6711 = vor.u32 %v6709, %v6710
        %vm6712 = vcmp.lt.s32.totalorder %v6693, 1
        %vm6713 = vcmp.lt.s32.totalorder %v6693, 2
        %vm6714 = vcmp.lt.s32.totalorder %v6693, 3
        %vm6715 = vcmp.lt.s32.totalorder %v6693, 4
        %v6716 = vsel %vm6712, %v6696, %v6699
        %v6717 = vsel %vm6715, %v6705, 2102212464
        %v6718 = vsel %vm6714, %v6702, %v6717
        %v6719 = vsel %vm6713, %v6716, %v6718
        %v6720 = vsel %vm6712, %v6699, %v6702
        %v6721 = vsel %vm6715, %v6708, 920167782
        %v6722 = vsel %vm6714, %v6705, %v6721
        %v6723 = vsel %vm6713, %v6720, %v6722
        %v6724 = vsel %vm6712, %v6702, %v6705
        %v6725 = vsel %vm6715, %v6711, 1326507024
        %v6726 = vsel %vm6714, %v6708, %v6725
        %v6727 = vsel %vm6713, %v6724, %v6726
        %v6728 = vshll.u32 %v6688, 8
        %v6729 = vmul.u32.u64.compose %v6728, %v6727
        %v6730 = vextract.low.u32 %v6729
        %v6731 = vextract.high.u32 %v6729
        %v6732 = vmul.u32.u64.compose %v6728, %v6723
        %v6733 = vextract.low.u32 %v6732
        %v6734 = vextract.high.u32 %v6732
        %v6735 = vmul.u32 %v6728, %v6719
        %v6736 = vadd.s32 %v6731, %v6733
        %vm6737 = vc.u32 %v6731, %v6733
        %v6738 = vadd.s32 %v6734, 1
        %v6739 = vsel %vm6737, %v6738, %v6734
        %v6740 = vadd.s32 %v6735, %v6739
        %v6741 = vadd.s32 %v6740, 536870912
        %v6742 = vshrl.u32 %v6741, 30
        %v6743 = vshll.u32 %v6742, 30
        %v6744 = vsub.s32 %v6740, %v6743
        %vm6745 = vcmp.lt.s32.totalorder %v6744, 0
        %v6746 = vsub.s32 0, %v6744
        %v6747 = vsel %vm6745, %v6746, %v6744
        %v6748 = vclz %v6747
        %v6749 = vsub.s32 %v6748, 2
        %vm6750 = vcmp.gt.s32.totalorder 0, %v6749
        %v6751 = vsel %vm6750, 0, %v6749
        %v6752 = vsub.s32 32, %v6751
        %v6753 = vshll.u32 %v6744, %v6751
        %v6754 = vshrl.u32 %v6736, %v6752
        %v6755 = vor.u32 %v6753, %v6754
        %v6756 = vsub.s32 4294967266, %v6751
        %v6757 = vadd.s32 %v6756, 127
        %v6758 = vshll.u32 %v6757, 23
        %v6759 = vor.u32 4788187, %v6758
        %v6760 = vand.u32 2147483647, %v6759
        %v6762 = vcvt.s32.f32 %v6755
        %v6763 = vmul.f32 %v6762, %v6760
        %v6764 = vxor.u32 %v6763, 2147483648
        %v6765 = vsel %vm6682, %v6764, %v6763
        %v6766 = vsub.s32 4, %v6742
        %v6767 = vsel %vm6682, %v6766, %v6742
        %v6768 = vsel %vm6681, %v566, %v6765
        %v6769 = vsel %vm6681, 0, %v6767
        %v6770 = vcosq.f32.pop %v6768
        %v6771 = vsinq.f32.pop %v6768
        %vm6772 = vweird.f32 %v566
        %v6773 = vand.u32 %v6769, 3
        %vm6774 = vcmp.lt.s32.totalorder %v6773, 2
        %vm6775 = vcmp.eq.s32.totalorder %v6773, 0
        %v6776 = vxor.u32 %v6771, 2147483648
        %v6777 = vsel %vm6775, %v6770, %v6776
        %vm6778 = vcmp.eq.s32.totalorder %v6773, 2
        %v6779 = vxor.u32 %v6770, 2147483648
        %v6780 = vsel %vm6778, %v6779, %v6771
        %v6781 = vsel %vm6774, %v6777, %v6780
        %v6782 = vsel %vm6772, nan, %v6781
        %v6783 = vand.u32 2147483647, %v567
        %vm6784 = vcmp.le.f32.partialorder %v6783, 0.7853982
        %vm6785 = vcmp.lt.s32.totalorder %v567, 0
        %v6786 = vand.u32 %v567, 2139095040
        %v6787 = vshrl.u32 %v6786, 23
        %v6788 = vsub.s32 %v6787, 127
        %v6789 = vand.u32 2147483647, %v567
        %v6790 = vand.u32 %v6789, 8388607
        %v6791 = vor.u32 %v6790, 8388608
        %v6792 = vsub.s32 0, %v6791
        %v6793 = vadd.s32 %v6788, 1
        %vm6794 = vcmp.gt.s32.totalorder %v6793, 0
        %v6795 = vsel %vm6794, %v6793, 0
        %v6796 = vshrl.u32 %v6795, 5
        %v6797 = vand.u32 %v6795, 31
        %v6798 = vsub.s32 32, %v6797
        %v6799 = vshrl.u32 683565275, %v6798
        %v6800 = vshll.u32 683565275, %v6797
        %v6801 = vshrl.u32 2475754826, %v6798
        %v6802 = vor.u32 %v6800, %v6801
        %v6803 = vshll.u32 2475754826, %v6797
        %v6804 = vshrl.u32 2131351028, %v6798
        %v6805 = vor.u32 %v6803, %v6804
        %v6806 = vshll.u32 2131351028, %v6797
        %v6807 = vshrl.u32 2102212464, %v6798
        %v6808 = vor.u32 %v6806, %v6807
        %v6809 = vshll.u32 2102212464, %v6797
        %v6810 = vshrl.u32 920167782, %v6798
        %v6811 = vor.u32 %v6809, %v6810
        %v6812 = vshll.u32 920167782, %v6797
        %v6813 = vshrl.u32 1326507024, %v6798
        %v6814 = vor.u32 %v6812, %v6813
        %vm6815 = vcmp.lt.s32.totalorder %v6796, 1
        %vm6816 = vcmp.lt.s32.totalorder %v6796, 2
        %vm6817 = vcmp.lt.s32.totalorder %v6796, 3
        %vm6818 = vcmp.lt.s32.totalorder %v6796, 4
        %v6819 = vsel %vm6815, %v6799, %v6802
        %v6820 = vsel %vm6818, %v6808, 2102212464
        %v6821 = vsel %vm6817, %v6805, %v6820
        %v6822 = vsel %vm6816, %v6819, %v6821
        %v6823 = vsel %vm6815, %v6802, %v6805
        %v6824 = vsel %vm6818, %v6811, 920167782
        %v6825 = vsel %vm6817, %v6808, %v6824
        %v6826 = vsel %vm6816, %v6823, %v6825
        %v6827 = vsel %vm6815, %v6805, %v6808
        %v6828 = vsel %vm6818, %v6814, 1326507024
        %v6829 = vsel %vm6817, %v6811, %v6828
        %v6830 = vsel %vm6816, %v6827, %v6829
        %v6831 = vshll.u32 %v6791, 8
        %v6832 = vmul.u32.u64.compose %v6831, %v6830
        %v6833 = vextract.low.u32 %v6832
        %v6834 = vextract.high.u32 %v6832
        %v6835 = vmul.u32.u64.compose %v6831, %v6826
        %v6836 = vextract.low.u32 %v6835
        %v6837 = vextract.high.u32 %v6835
        %v6838 = vmul.u32 %v6831, %v6822
        %v6839 = vadd.s32 %v6834, %v6836
        %vm6840 = vc.u32 %v6834, %v6836
        %v6841 = vadd.s32 %v6837, 1
        %v6842 = vsel %vm6840, %v6841, %v6837
        %v6843 = vadd.s32 %v6838, %v6842
        %v6844 = vadd.s32 %v6843, 536870912
        %v6845 = vshrl.u32 %v6844, 30
        %v6846 = vshll.u32 %v6845, 30
        %v6847 = vsub.s32 %v6843, %v6846
        %vm6848 = vcmp.lt.s32.totalorder %v6847, 0
        %v6849 = vsub.s32 0, %v6847
        %v6850 = vsel %vm6848, %v6849, %v6847
        %v6851 = vclz %v6850
        %v6852 = vsub.s32 %v6851, 2
        %vm6853 = vcmp.gt.s32.totalorder 0, %v6852
        %v6854 = vsel %vm6853, 0, %v6852
        %v6855 = vsub.s32 32, %v6854
        %v6856 = vshll.u32 %v6847, %v6854
        %v6857 = vshrl.u32 %v6839, %v6855
        %v6858 = vor.u32 %v6856, %v6857
        %v6859 = vsub.s32 4294967266, %v6854
        %v6860 = vadd.s32 %v6859, 127
        %v6861 = vshll.u32 %v6860, 23
        %v6862 = vor.u32 4788187, %v6861
        %v6863 = vand.u32 2147483647, %v6862
        %v6865 = vcvt.s32.f32 %v6858
        %v6866 = vmul.f32 %v6865, %v6863
        %v6867 = vxor.u32 %v6866, 2147483648
        %v6868 = vsel %vm6785, %v6867, %v6866
        %v6869 = vsub.s32 4, %v6845
        %v6870 = vsel %vm6785, %v6869, %v6845
        %v6871 = vsel %vm6784, %v567, %v6868
        %v6872 = vsel %vm6784, 0, %v6870
        %v6873 = vcosq.f32.pop %v6871
        %v6874 = vsinq.f32.pop %v6871
        %vm6875 = vweird.f32 %v567
        %v6876 = vand.u32 %v6872, 3
        %vm6877 = vcmp.lt.s32.totalorder %v6876, 2
        %vm6878 = vcmp.eq.s32.totalorder %v6876, 0
        %v6879 = vxor.u32 %v6874, 2147483648
        %v6880 = vsel %vm6878, %v6873, %v6879
        %vm6881 = vcmp.eq.s32.totalorder %v6876, 2
        %v6882 = vxor.u32 %v6873, 2147483648
        %v6883 = vsel %vm6881, %v6882, %v6874
        %v6884 = vsel %vm6877, %v6880, %v6883
        %v6885 = vsel %vm6875, nan, %v6884
        %v6886 = vand.u32 2147483647, %v568
        %vm6887 = vcmp.le.f32.partialorder %v6886, 0.7853982
        %vm6888 = vcmp.lt.s32.totalorder %v568, 0
        %v6889 = vand.u32 %v568, 2139095040
        %v6890 = vshrl.u32 %v6889, 23
        %v6891 = vsub.s32 %v6890, 127
        %v6892 = vand.u32 2147483647, %v568
        %v6893 = vand.u32 %v6892, 8388607
        %v6894 = vor.u32 %v6893, 8388608
        %v6895 = vsub.s32 0, %v6894
        %v6896 = vadd.s32 %v6891, 1
        %vm6897 = vcmp.gt.s32.totalorder %v6896, 0
        %v6898 = vsel %vm6897, %v6896, 0
        %v6899 = vshrl.u32 %v6898, 5
        %v6900 = vand.u32 %v6898, 31
        %v6901 = vsub.s32 32, %v6900
        %v6902 = vshrl.u32 683565275, %v6901
        %v6903 = vshll.u32 683565275, %v6900
        %v6904 = vshrl.u32 2475754826, %v6901
        %v6905 = vor.u32 %v6903, %v6904
        %v6906 = vshll.u32 2475754826, %v6900
        %v6907 = vshrl.u32 2131351028, %v6901
        %v6908 = vor.u32 %v6906, %v6907
        %v6909 = vshll.u32 2131351028, %v6900
        %v6910 = vshrl.u32 2102212464, %v6901
        %v6911 = vor.u32 %v6909, %v6910
        %v6912 = vshll.u32 2102212464, %v6900
        %v6913 = vshrl.u32 920167782, %v6901
        %v6914 = vor.u32 %v6912, %v6913
        %v6915 = vshll.u32 920167782, %v6900
        %v6916 = vshrl.u32 1326507024, %v6901
        %v6917 = vor.u32 %v6915, %v6916
        %vm6918 = vcmp.lt.s32.totalorder %v6899, 1
        %vm6919 = vcmp.lt.s32.totalorder %v6899, 2
        %vm6920 = vcmp.lt.s32.totalorder %v6899, 3
        %vm6921 = vcmp.lt.s32.totalorder %v6899, 4
        %v6922 = vsel %vm6918, %v6902, %v6905
        %v6923 = vsel %vm6921, %v6911, 2102212464
        %v6924 = vsel %vm6920, %v6908, %v6923
        %v6925 = vsel %vm6919, %v6922, %v6924
        %v6926 = vsel %vm6918, %v6905, %v6908
        %v6927 = vsel %vm6921, %v6914, 920167782
        %v6928 = vsel %vm6920, %v6911, %v6927
        %v6929 = vsel %vm6919, %v6926, %v6928
        %v6930 = vsel %vm6918, %v6908, %v6911
        %v6931 = vsel %vm6921, %v6917, 1326507024
        %v6932 = vsel %vm6920, %v6914, %v6931
        %v6933 = vsel %vm6919, %v6930, %v6932
        %v6934 = vshll.u32 %v6894, 8
        %v6935 = vmul.u32.u64.compose %v6934, %v6933
        %v6936 = vextract.low.u32 %v6935
        %v6937 = vextract.high.u32 %v6935
        %v6938 = vmul.u32.u64.compose %v6934, %v6929
        %v6939 = vextract.low.u32 %v6938
        %v6940 = vextract.high.u32 %v6938
        %v6941 = vmul.u32 %v6934, %v6925
        %v6942 = vadd.s32 %v6937, %v6939
        %vm6943 = vc.u32 %v6937, %v6939
        %v6944 = vadd.s32 %v6940, 1
        %v6945 = vsel %vm6943, %v6944, %v6940
        %v6946 = vadd.s32 %v6941, %v6945
        %v6947 = vadd.s32 %v6946, 536870912
        %v6948 = vshrl.u32 %v6947, 30
        %v6949 = vshll.u32 %v6948, 30
        %v6950 = vsub.s32 %v6946, %v6949
        %vm6951 = vcmp.lt.s32.totalorder %v6950, 0
        %v6952 = vsub.s32 0, %v6950
        %v6953 = vsel %vm6951, %v6952, %v6950
        %v6954 = vclz %v6953
        %v6955 = vsub.s32 %v6954, 2
        %vm6956 = vcmp.gt.s32.totalorder 0, %v6955
        %v6957 = vsel %vm6956, 0, %v6955
        %v6958 = vsub.s32 32, %v6957
        %v6959 = vshll.u32 %v6950, %v6957
        %v6960 = vshrl.u32 %v6942, %v6958
        %v6961 = vor.u32 %v6959, %v6960
        %v6962 = vsub.s32 4294967266, %v6957
        %v6963 = vadd.s32 %v6962, 127
        %v6964 = vshll.u32 %v6963, 23
        %v6965 = vor.u32 4788187, %v6964
        %v6966 = vand.u32 2147483647, %v6965
        %v6968 = vcvt.s32.f32 %v6961
        %v6969 = vmul.f32 %v6968, %v6966
        %v6970 = vxor.u32 %v6969, 2147483648
        %v6971 = vsel %vm6888, %v6970, %v6969
        %v6972 = vsub.s32 4, %v6948
        %v6973 = vsel %vm6888, %v6972, %v6948
        %v6974 = vsel %vm6887, %v568, %v6971
        %v6975 = vsel %vm6887, 0, %v6973
        %v6976 = vcosq.f32.pop %v6974
        %v6977 = vsinq.f32.pop %v6974
        %vm6978 = vweird.f32 %v568
        %v6979 = vand.u32 %v6975, 3
        %vm6980 = vcmp.lt.s32.totalorder %v6979, 2
        %vm6981 = vcmp.eq.s32.totalorder %v6979, 0
        %v6982 = vxor.u32 %v6977, 2147483648
        %v6983 = vsel %vm6981, %v6976, %v6982
        %vm6984 = vcmp.eq.s32.totalorder %v6979, 2
        %v6985 = vxor.u32 %v6976, 2147483648
        %v6986 = vsel %vm6984, %v6985, %v6977
        %v6987 = vsel %vm6980, %v6983, %v6986
        %v6988 = vsel %vm6978, nan, %v6987
        %v6989 = vand.u32 2147483647, %v569
        %vm6990 = vcmp.le.f32.partialorder %v6989, 0.7853982
        %vm6991 = vcmp.lt.s32.totalorder %v569, 0
        %v6992 = vand.u32 %v569, 2139095040
        %v6993 = vshrl.u32 %v6992, 23
        %v6994 = vsub.s32 %v6993, 127
        %v6995 = vand.u32 2147483647, %v569
        %v6996 = vand.u32 %v6995, 8388607
        %v6997 = vor.u32 %v6996, 8388608
        %v6998 = vsub.s32 0, %v6997
        %v6999 = vadd.s32 %v6994, 1
        %vm7000 = vcmp.gt.s32.totalorder %v6999, 0
        %v7001 = vsel %vm7000, %v6999, 0
        %v7002 = vshrl.u32 %v7001, 5
        %v7003 = vand.u32 %v7001, 31
        %v7004 = vsub.s32 32, %v7003
        %v7005 = vshrl.u32 683565275, %v7004
        %v7006 = vshll.u32 683565275, %v7003
        %v7007 = vshrl.u32 2475754826, %v7004
        %v7008 = vor.u32 %v7006, %v7007
        %v7009 = vshll.u32 2475754826, %v7003
        %v7010 = vshrl.u32 2131351028, %v7004
        %v7011 = vor.u32 %v7009, %v7010
        %v7012 = vshll.u32 2131351028, %v7003
        %v7013 = vshrl.u32 2102212464, %v7004
        %v7014 = vor.u32 %v7012, %v7013
        %v7015 = vshll.u32 2102212464, %v7003
        %v7016 = vshrl.u32 920167782, %v7004
        %v7017 = vor.u32 %v7015, %v7016
        %v7018 = vshll.u32 920167782, %v7003
        %v7019 = vshrl.u32 1326507024, %v7004
        %v7020 = vor.u32 %v7018, %v7019
        %vm7021 = vcmp.lt.s32.totalorder %v7002, 1
        %vm7022 = vcmp.lt.s32.totalorder %v7002, 2
        %vm7023 = vcmp.lt.s32.totalorder %v7002, 3
        %vm7024 = vcmp.lt.s32.totalorder %v7002, 4
        %v7025 = vsel %vm7021, %v7005, %v7008
        %v7026 = vsel %vm7024, %v7014, 2102212464
        %v7027 = vsel %vm7023, %v7011, %v7026
        %v7028 = vsel %vm7022, %v7025, %v7027
        %v7029 = vsel %vm7021, %v7008, %v7011
        %v7030 = vsel %vm7024, %v7017, 920167782
        %v7031 = vsel %vm7023, %v7014, %v7030
        %v7032 = vsel %vm7022, %v7029, %v7031
        %v7033 = vsel %vm7021, %v7011, %v7014
        %v7034 = vsel %vm7024, %v7020, 1326507024
        %v7035 = vsel %vm7023, %v7017, %v7034
        %v7036 = vsel %vm7022, %v7033, %v7035
        %v7037 = vshll.u32 %v6997, 8
        %v7038 = vmul.u32.u64.compose %v7037, %v7036
        %v7039 = vextract.low.u32 %v7038
        %v7040 = vextract.high.u32 %v7038
        %v7041 = vmul.u32.u64.compose %v7037, %v7032
        %v7042 = vextract.low.u32 %v7041
        %v7043 = vextract.high.u32 %v7041
        %v7044 = vmul.u32 %v7037, %v7028
        %v7045 = vadd.s32 %v7040, %v7042
        %vm7046 = vc.u32 %v7040, %v7042
        %v7047 = vadd.s32 %v7043, 1
        %v7048 = vsel %vm7046, %v7047, %v7043
        %v7049 = vadd.s32 %v7044, %v7048
        %v7050 = vadd.s32 %v7049, 536870912
        %v7051 = vshrl.u32 %v7050, 30
        %v7052 = vshll.u32 %v7051, 30
        %v7053 = vsub.s32 %v7049, %v7052
        %vm7054 = vcmp.lt.s32.totalorder %v7053, 0
        %v7055 = vsub.s32 0, %v7053
        %v7056 = vsel %vm7054, %v7055, %v7053
        %v7057 = vclz %v7056
        %v7058 = vsub.s32 %v7057, 2
        %vm7059 = vcmp.gt.s32.totalorder 0, %v7058
        %v7060 = vsel %vm7059, 0, %v7058
        %v7061 = vsub.s32 32, %v7060
        %v7062 = vshll.u32 %v7053, %v7060
        %v7063 = vshrl.u32 %v7045, %v7061
        %v7064 = vor.u32 %v7062, %v7063
        %v7065 = vsub.s32 4294967266, %v7060
        %v7066 = vadd.s32 %v7065, 127
        %v7067 = vshll.u32 %v7066, 23
        %v7068 = vor.u32 4788187, %v7067
        %v7069 = vand.u32 2147483647, %v7068
        %v7071 = vcvt.s32.f32 %v7064
        %v7072 = vmul.f32 %v7071, %v7069
        %v7073 = vxor.u32 %v7072, 2147483648
        %v7074 = vsel %vm6991, %v7073, %v7072
        %v7075 = vsub.s32 4, %v7051
        %v7076 = vsel %vm6991, %v7075, %v7051
        %v7077 = vsel %vm6990, %v569, %v7074
        %v7078 = vsel %vm6990, 0, %v7076
        %v7079 = vcosq.f32.pop %v7077
        %v7080 = vsinq.f32.pop %v7077
        %vm7081 = vweird.f32 %v569
        %v7082 = vand.u32 %v7078, 3
        %vm7083 = vcmp.lt.s32.totalorder %v7082, 2
        %vm7084 = vcmp.eq.s32.totalorder %v7082, 0
        %v7085 = vxor.u32 %v7080, 2147483648
        %v7086 = vsel %vm7084, %v7079, %v7085
        %vm7087 = vcmp.eq.s32.totalorder %v7082, 2
        %v7088 = vxor.u32 %v7079, 2147483648
        %v7089 = vsel %vm7087, %v7088, %v7080
        %v7090 = vsel %vm7083, %v7086, %v7089
        %v7091 = vsel %vm7081, nan, %v7090
        %v7092 = vand.u32 2147483647, %v570
        %vm7093 = vcmp.le.f32.partialorder %v7092, 0.7853982
        %vm7094 = vcmp.lt.s32.totalorder %v570, 0
        %v7095 = vand.u32 %v570, 2139095040
        %v7096 = vshrl.u32 %v7095, 23
        %v7097 = vsub.s32 %v7096, 127
        %v7098 = vand.u32 2147483647, %v570
        %v7099 = vand.u32 %v7098, 8388607
        %v7100 = vor.u32 %v7099, 8388608
        %v7101 = vsub.s32 0, %v7100
        %v7102 = vadd.s32 %v7097, 1
        %vm7103 = vcmp.gt.s32.totalorder %v7102, 0
        %v7104 = vsel %vm7103, %v7102, 0
        %v7105 = vshrl.u32 %v7104, 5
        %v7106 = vand.u32 %v7104, 31
        %v7107 = vsub.s32 32, %v7106
        %v7108 = vshrl.u32 683565275, %v7107
        %v7109 = vshll.u32 683565275, %v7106
        %v7110 = vshrl.u32 2475754826, %v7107
        %v7111 = vor.u32 %v7109, %v7110
        %v7112 = vshll.u32 2475754826, %v7106
        %v7113 = vshrl.u32 2131351028, %v7107
        %v7114 = vor.u32 %v7112, %v7113
        %v7115 = vshll.u32 2131351028, %v7106
        %v7116 = vshrl.u32 2102212464, %v7107
        %v7117 = vor.u32 %v7115, %v7116
        %v7118 = vshll.u32 2102212464, %v7106
        %v7119 = vshrl.u32 920167782, %v7107
        %v7120 = vor.u32 %v7118, %v7119
        %v7121 = vshll.u32 920167782, %v7106
        %v7122 = vshrl.u32 1326507024, %v7107
        %v7123 = vor.u32 %v7121, %v7122
        %vm7124 = vcmp.lt.s32.totalorder %v7105, 1
        %vm7125 = vcmp.lt.s32.totalorder %v7105, 2
        %vm7126 = vcmp.lt.s32.totalorder %v7105, 3
        %vm7127 = vcmp.lt.s32.totalorder %v7105, 4
        %v7128 = vsel %vm7124, %v7108, %v7111
        %v7129 = vsel %vm7127, %v7117, 2102212464
        %v7130 = vsel %vm7126, %v7114, %v7129
        %v7131 = vsel %vm7125, %v7128, %v7130
        %v7132 = vsel %vm7124, %v7111, %v7114
        %v7133 = vsel %vm7127, %v7120, 920167782
        %v7134 = vsel %vm7126, %v7117, %v7133
        %v7135 = vsel %vm7125, %v7132, %v7134
        %v7136 = vsel %vm7124, %v7114, %v7117
        %v7137 = vsel %vm7127, %v7123, 1326507024
        %v7138 = vsel %vm7126, %v7120, %v7137
        %v7139 = vsel %vm7125, %v7136, %v7138
        %v7140 = vshll.u32 %v7100, 8
        %v7141 = vmul.u32.u64.compose %v7140, %v7139
        %v7142 = vextract.low.u32 %v7141
        %v7143 = vextract.high.u32 %v7141
        %v7144 = vmul.u32.u64.compose %v7140, %v7135
        %v7145 = vextract.low.u32 %v7144
        %v7146 = vextract.high.u32 %v7144
        %v7147 = vmul.u32 %v7140, %v7131
        %v7148 = vadd.s32 %v7143, %v7145
        %vm7149 = vc.u32 %v7143, %v7145
        %v7150 = vadd.s32 %v7146, 1
        %v7151 = vsel %vm7149, %v7150, %v7146
        %v7152 = vadd.s32 %v7147, %v7151
        %v7153 = vadd.s32 %v7152, 536870912
        %v7154 = vshrl.u32 %v7153, 30
        %v7155 = vshll.u32 %v7154, 30
        %v7156 = vsub.s32 %v7152, %v7155
        %vm7157 = vcmp.lt.s32.totalorder %v7156, 0
        %v7158 = vsub.s32 0, %v7156
        %v7159 = vsel %vm7157, %v7158, %v7156
        %v7160 = vclz %v7159
        %v7161 = vsub.s32 %v7160, 2
        %vm7162 = vcmp.gt.s32.totalorder 0, %v7161
        %v7163 = vsel %vm7162, 0, %v7161
        %v7164 = vsub.s32 32, %v7163
        %v7165 = vshll.u32 %v7156, %v7163
        %v7166 = vshrl.u32 %v7148, %v7164
        %v7167 = vor.u32 %v7165, %v7166
        %v7168 = vsub.s32 4294967266, %v7163
        %v7169 = vadd.s32 %v7168, 127
        %v7170 = vshll.u32 %v7169, 23
        %v7171 = vor.u32 4788187, %v7170
        %v7172 = vand.u32 2147483647, %v7171
        %v7174 = vcvt.s32.f32 %v7167
        %v7175 = vmul.f32 %v7174, %v7172
        %v7176 = vxor.u32 %v7175, 2147483648
        %v7177 = vsel %vm7094, %v7176, %v7175
        %v7178 = vsub.s32 4, %v7154
        %v7179 = vsel %vm7094, %v7178, %v7154
        %v7180 = vsel %vm7093, %v570, %v7177
        %v7181 = vsel %vm7093, 0, %v7179
        %v7182 = vcosq.f32.pop %v7180
        %v7183 = vsinq.f32.pop %v7180
        %vm7184 = vweird.f32 %v570
        %v7185 = vand.u32 %v7181, 3
        %vm7186 = vcmp.lt.s32.totalorder %v7185, 2
        %vm7187 = vcmp.eq.s32.totalorder %v7185, 0
        %v7188 = vxor.u32 %v7183, 2147483648
        %v7189 = vsel %vm7187, %v7182, %v7188
        %vm7190 = vcmp.eq.s32.totalorder %v7185, 2
        %v7191 = vxor.u32 %v7182, 2147483648
        %v7192 = vsel %vm7190, %v7191, %v7183
        %v7193 = vsel %vm7186, %v7189, %v7192
        %v7194 = vsel %vm7184, nan, %v7193
        %7227 = vrot.lane.b32.xlu0 %v4001, 64
        %v7228 = vpop.permute.xlu0 %7227
        %7229 = vrot.lane.b32.xlu0 %v4104, 64
        %v7230 = vpop.permute.xlu0 %7229
        %7231 = vrot.lane.b32.xlu0 %v4207, 64
        %v7232 = vpop.permute.xlu0 %7231
        %7233 = vrot.lane.b32.xlu0 %v4310, 64
        %v7234 = vpop.permute.xlu0 %7233
        %7235 = vrot.lane.b32.xlu0 %v4413, 64
        %v7236 = vpop.permute.xlu0 %7235
        %7237 = vrot.lane.b32.xlu0 %v4516, 64
        %v7238 = vpop.permute.xlu0 %7237
        %7239 = vrot.lane.b32.xlu0 %v4619, 64
        %v7240 = vpop.permute.xlu0 %7239
        %7241 = vrot.lane.b32.xlu0 %v4722, 64
        %v7242 = vpop.permute.xlu0 %7241
        %7243 = vrot.lane.b32.xlu0 %v4825, 64
        %v7244 = vpop.permute.xlu0 %7243
        %7245 = vrot.lane.b32.xlu0 %v4928, 64
        %v7246 = vpop.permute.xlu0 %7245
        %7247 = vrot.lane.b32.xlu0 %v5031, 64
        %v7248 = vpop.permute.xlu0 %7247
        %7249 = vrot.lane.b32.xlu0 %v5134, 64
        %v7250 = vpop.permute.xlu0 %7249
        %7251 = vrot.lane.b32.xlu0 %v5237, 64
        %v7252 = vpop.permute.xlu0 %7251
        %7253 = vrot.lane.b32.xlu0 %v5340, 64
        %v7254 = vpop.permute.xlu0 %7253
        %7255 = vrot.lane.b32.xlu0 %v5443, 64
        %v7256 = vpop.permute.xlu0 %7255
        %7257 = vrot.lane.b32.xlu0 %v5546, 64
        %v7258 = vpop.permute.xlu0 %7257
        %7259 = vrot.lane.b32.xlu0 %v5649, 64
        %v7260 = vpop.permute.xlu0 %7259
        %7261 = vrot.lane.b32.xlu0 %v5752, 64
        %v7262 = vpop.permute.xlu0 %7261
        %7263 = vrot.lane.b32.xlu0 %v5855, 64
        %v7264 = vpop.permute.xlu0 %7263
        %7265 = vrot.lane.b32.xlu0 %v5958, 64
        %v7266 = vpop.permute.xlu0 %7265
        %7267 = vrot.lane.b32.xlu0 %v6061, 64
        %v7268 = vpop.permute.xlu0 %7267
        %7269 = vrot.lane.b32.xlu0 %v6164, 64
        %v7270 = vpop.permute.xlu0 %7269
        %7271 = vrot.lane.b32.xlu0 %v6267, 64
        %v7272 = vpop.permute.xlu0 %7271
        %7273 = vrot.lane.b32.xlu0 %v6370, 64
        %v7274 = vpop.permute.xlu0 %7273
        %7275 = vrot.lane.b32.xlu0 %v6473, 64
        %v7276 = vpop.permute.xlu0 %7275
        %7277 = vrot.lane.b32.xlu0 %v6576, 64
        %v7278 = vpop.permute.xlu0 %7277
        %7279 = vrot.lane.b32.xlu0 %v6679, 64
        %v7280 = vpop.permute.xlu0 %7279
        %7281 = vrot.lane.b32.xlu0 %v6782, 64
        %v7282 = vpop.permute.xlu0 %7281
        %7283 = vrot.lane.b32.xlu0 %v6885, 64
        %v7284 = vpop.permute.xlu0 %7283
        %7285 = vrot.lane.b32.xlu0 %v6988, 64
        %v7286 = vpop.permute.xlu0 %7285
        %7287 = vrot.lane.b32.xlu0 %v7091, 64
        %v7288 = vpop.permute.xlu0 %7287
        %7289 = vrot.lane.b32.xlu0 %v7194, 64
        %v7290 = vpop.permute.xlu0 %7289
        %vm7323 = vcmask 523264
        %v7324 = vsel %vm7323, %v674, %v7228
        %v7325 = vsel %vm7323, %v778, %v7230
        %v7326 = vsel %vm7323, %v882, %v7232
        %v7327 = vsel %vm7323, %v986, %v7234
        %v7328 = vsel %vm7323, %v1090, %v7236
        %v7329 = vsel %vm7323, %v1194, %v7238
        %v7330 = vsel %vm7323, %v1298, %v7240
        %v7331 = vsel %vm7323, %v1402, %v7242
        %v7332 = vsel %vm7323, %v1506, %v7244
        %v7333 = vsel %vm7323, %v1610, %v7246
        %v7334 = vsel %vm7323, %v1714, %v7248
        %v7335 = vsel %vm7323, %v1818, %v7250
        %v7336 = vsel %vm7323, %v1922, %v7252
        %v7337 = vsel %vm7323, %v2026, %v7254
        %v7338 = vsel %vm7323, %v2130, %v7256
        %v7339 = vsel %vm7323, %v2234, %v7258
        %v7340 = vsel %vm7323, %v2338, %v7260
        %v7341 = vsel %vm7323, %v2442, %v7262
        %v7342 = vsel %vm7323, %v2546, %v7264
        %v7343 = vsel %vm7323, %v2650, %v7266
        %v7344 = vsel %vm7323, %v2754, %v7268
        %v7345 = vsel %vm7323, %v2858, %v7270
        %v7346 = vsel %vm7323, %v2962, %v7272
        %v7347 = vsel %vm7323, %v3066, %v7274
        %v7348 = vsel %vm7323, %v3170, %v7276
        %v7349 = vsel %vm7323, %v3274, %v7278
        %v7350 = vsel %vm7323, %v3378, %v7280
        %v7351 = vsel %vm7323, %v3482, %v7282
        %v7352 = vsel %vm7323, %v3586, %v7284
        %v7353 = vsel %vm7323, %v3690, %v7286
        %v7354 = vsel %vm7323, %v3794, %v7288
        %v7355 = vsel %vm7323, %v3898, %v7290
        %7356 = vst [vmem:[%s137] sm:$0xff] %v7324
        %7357 = vst [vmem:[%s137 + $0x8] sm:$0xff] %v7325
        %7358 = vst [vmem:[%s137 + $0x10] sm:$0xff] %v7326
        %7359 = vst [vmem:[%s137 + $0x18] sm:$0xff] %v7327
        %7360 = vst [vmem:[%s137 + $0x20] sm:$0xff] %v7328
        %7361 = vst [vmem:[%s137 + $0x28] sm:$0xff] %v7329
        %7362 = vst [vmem:[%s137 + $0x30] sm:$0xff] %v7330
        %7363 = vst [vmem:[%s137 + $0x38] sm:$0xff] %v7331
        %7364 = vst [vmem:[%s137 + $0x40] sm:$0xff] %v7332
        %7365 = vst [vmem:[%s137 + $0x48] sm:$0xff] %v7333
        %7366 = vst [vmem:[%s137 + $0x50] sm:$0xff] %v7334
        %7367 = vst [vmem:[%s137 + $0x58] sm:$0xff] %v7335
        %7368 = vst [vmem:[%s137 + $0x60] sm:$0xff] %v7336
        %7369 = vst [vmem:[%s137 + $0x68] sm:$0xff] %v7337
        %7370 = vst [vmem:[%s137 + $0x70] sm:$0xff] %v7338
        %7371 = vst [vmem:[%s137 + $0x78] sm:$0xff] %v7339
        %7372 = vst [vmem:[%s137 + $0x80] sm:$0xff] %v7340
        %7373 = vst [vmem:[%s137 + $0x88] sm:$0xff] %v7341
        %7374 = vst [vmem:[%s137 + $0x90] sm:$0xff] %v7342
        %7375 = vst [vmem:[%s137 + $0x98] sm:$0xff] %v7343
        %7376 = vst [vmem:[%s137 + $0xa0] sm:$0xff] %v7344
        %7377 = vst [vmem:[%s137 + $0xa8] sm:$0xff] %v7345
        %7378 = vst [vmem:[%s137 + $0xb0] sm:$0xff] %v7346
        %7379 = vst [vmem:[%s137 + $0xb8] sm:$0xff] %v7347
        %7380 = vst [vmem:[%s137 + $0xc0] sm:$0xff] %v7348
        %7381 = vst [vmem:[%s137 + $0xc8] sm:$0xff] %v7349
        %7382 = vst [vmem:[%s137 + $0xd0] sm:$0xff] %v7350
        %7383 = vst [vmem:[%s137 + $0xd8] sm:$0xff] %v7351
        %7384 = vst [vmem:[%s137 + $0xe0] sm:$0xff] %v7352
        %7385 = vst [vmem:[%s137 + $0xe8] sm:$0xff] %v7353
        %7386 = vst [vmem:[%s137 + $0xf0] sm:$0xff] %v7354
        %7387 = vst [vmem:[%s137 + $0xf8] sm:$0xff] %v7355
        %s7388 = sand.u32 %s71, 1
        %s7389 = scalar_lea.sflag [#allocation3], %s7388
        %s7390 = sand.u32 %s71, 1
        %s7391 = smul.addr %s7390, 256
        %s7392 = scalar_lea.vmem [#allocation2], %s7391
        // Predicated region
        $region29: #{pos_encoding.1} parent=27 // pred_check
          %p7393 = pneg %p81
        $region30: #{pos_encoding.1} parent=27 // pred_check_branch
          %7395 = sbr.rel (%p7393) target = $region32
        $region31: #{pos_encoding.1} parent=27 // pred_region
          %s7396 = smul.u32 32, %s16
          %s7398 = ssub.s32 4096, 4096
          %7399 = vsyncadd %s7389, %s7398
          %s7400 = smul.addr %s7396, 128
          %s7401 = scalar_lea.hbm %s2, %s7400
          %s7402 = sshll.u32 %s7392, 4
          %s7403 = int_to_ptr.vmem [resolvable:$true] %s7402
          %7408 = dma.vmem_to_hbm [thread:$0]  %s7403, 4096, %s7401, %s7389, 128, 128, 8
        $region32: #{pos_encoding.1} parent=27 // pred_fallthru
          _
      $region28: #{pos_encoding.1} parent=5 // pred_fallthru
        _
      %p7409 = scmp.le.s32.totalorder 2, %s11
      // Predicated region
      $region33: #{pos_encoding.1} parent=5 // pred_check
        %p7410 = pneg %p7409
      $region34: #{pos_encoding.1} parent=5 // pred_check_branch
        %7412 = sbr.rel (%p7410) target = $region36
      $region35: #{pos_encoding.1} parent=5 // pred_region
        %s7413 = ssub.s32 %s11, 2
        // Predicated region
        $region37: #{pos_encoding.1} parent=35 // pred_check
          %p7414 = pneg %p87
        $region38: #{pos_encoding.1} parent=35 // pred_check_branch
          %7416 = sbr.rel (%p7414) target = $region40
        $region39: #{pos_encoding.1} parent=35 // pred_region
          %s7417 = sand.u32 %s72, 1
          %s7418 = scalar_lea.sflag [#allocation3], %s7417
          %s7419 = sand.u32 %s72, 1
          %s7420 = smul.addr %s7419, 256
          %s7421 = scalar_lea.vmem [#allocation2], %s7420
          %7422 = dma.done %s7418, 4096
        $region40: #{pos_encoding.1} parent=35 // pred_fallthru
          _
      $region36: #{pos_encoding.1} parent=5 // pred_fallthru
        _
    $region6: #{pos_encoding.1} parent=1 // loop_footer
      %s15 = sadd.s32 1, %s11
    $region7: #{pos_encoding.1} parent=1 // loop_footer_branch
      %10 = sbr.rel target = $region3
    $region8: #{pos_encoding.1} parent=1 // loop_exit
      _
    %7423 = vsyncpa [#allocation3], 1
    %s7424 = scalar_lea.sflag [#allocation3], 1
    %7425 = vsyncpa %s7424, 1

</llo_original>
